<compile_context>
chip_gen: v7x
topology: tpu7x:2x2x1
jax: 0.10.0
libtpu: 0.0.40
codegen_flags: <defaults>
</compile_context>

<pallas_src>
import jax
import jax.numpy as jnp
from jax.experimental import pallas as pl
from jax.experimental.pallas import tpu as pltpu

K = 5                       # conv kernel size
S = 2                       # conv stride
H0, W0, C0 = 40, 80, 3      # NHWC input (tutorial screen 40x80)
H1, W1, C1 = 18, 38, 16     # after conv1
H2, W2, C2 = 7, 17, 32      # after conv2
H3, W3, C3 = 2, 7, 32       # after conv3 -> flatten = 448
NOUT = 2                    # head outputs


# ----------------------------------------------------------------------------
# In-kernel building blocks
# ----------------------------------------------------------------------------
def _conv_bn_relu_layer(in_ref, w_ref, shift_ref, dec_ref, out_ref):
    """Conv2d(k=5, s=2) + folded BatchNorm(eval) + ReLU, one output row at a time.

    in_ref   : (H_in, W_in, C_in)   bf16  VMEM (previous activation / image)
    w_ref    : (25, C_in, C_out)    bf16  tap-major (kh*5+kw), BN scale folded in
    shift_ref: (1, C_out)           f32   folded conv bias + BN shift
    dec_ref  : (n_ow, 2*n_ow - 1)   f32   constant 0/1 stride-2 decimation matrix
    out_ref  : (n_oh, n_ow, C_out)  bf16  VMEM
    """
    n_oh = out_ref.shape[0]
    c_out = out_ref.shape[2]
    span = dec_ref.shape[1]                  # 2*n_ow - 1 (full-resolution width)
    dec = dec_ref[...]                       # hoisted out of the row loop
    shift = shift_ref[...]

    @pl.loop(0, n_oh)
    def _row(oh):
        # Accumulate the 25 taps at full column resolution (all contiguous loads).
        acc = jnp.zeros((span, c_out), jnp.float32)
        for kh in range(K):
            for kw in range(K):
                tap = in_ref[S * oh + kh, pl.ds(kw, span), :]        # (span, C_in) bf16
                acc = acc + jnp.dot(tap, w_ref[kh * K + kw],
                                    preferred_element_type=jnp.float32)
        # Stride-2 decimation along W as a tiny matmul with a constant 0/1 matrix.
        row = jnp.dot(dec, acc, preferred_element_type=jnp.float32)  # (n_ow, C_out)
        row = jnp.maximum(row + shift, 0.0)                          # BN shift + ReLU (f32)
        out_ref[oh] = row.astype(out_ref.dtype)


def _dqn_kernel(x_ref,
                w1_ref, s1_ref, d1_ref,
                w2_ref, s2_ref, d2_ref,
                w3_ref, s3_ref, d3_ref,
                wh_ref, bh_ref,
                o_ref,
                act1_ref, act2_ref, act3_ref):
    # conv1 + bn1 + relu : (40, 80, 3) -> (18, 38, 16)
    _conv_bn_relu_layer(x_ref, w1_ref, s1_ref, d1_ref, act1_ref)
    # conv2 + bn2 + relu : (18, 38, 16) -> (7, 17, 32)
    _conv_bn_relu_layer(act1_ref, w2_ref, s2_ref, d2_ref, act2_ref)
    # conv3 + bn3 + relu : (7, 17, 32) -> (2, 7, 32)
    _conv_bn_relu_layer(act2_ref, w3_ref, s3_ref, d3_ref, act3_ref)

    # head: Linear(448 -> 2); NCHW-flatten order is pre-folded into wh_ref.
    acc = jnp.zeros((1, NOUT), jnp.float32)
    for h in range(H3):
        for w in range(W3):
            vec = act3_ref[h, pl.ds(w, 1), :]                        # (1, 32) bf16
            acc = acc + jnp.dot(vec, wh_ref[h * W3 + w],
                                preferred_element_type=jnp.float32)
    o_ref[...] = acc + bh_ref[...]


# ----------------------------------------------------------------------------
# Host-side parameter folding (one-time, pure layout / algebra)
# ----------------------------------------------------------------------------
def _fold_conv_bn(w, b, gamma, beta, mean, var, eps=1e-5):
    """Fold BN(eval) into the conv: returns tap-major bf16 weights + f32 shift."""
    scale = gamma / jnp.sqrt(var + eps)                              # (OC,)
    shift = (b - mean) * scale + beta                                # (OC,)
    oc, ic = w.shape[0], w.shape[1]
    w_taps = (w * scale[:, None, None, None]).transpose(2, 3, 1, 0)  # (5,5,IC,OC)
    w_taps = w_taps.reshape(K * K, ic, oc).astype(jnp.bfloat16)
    return w_taps, shift.reshape(1, oc).astype(jnp.float32)


def _fold_head(wh, bh):
    """Permute head weight so NHWC-flat activations match torch's NCHW x.view(B,-1)."""
    wh_taps = wh.reshape(NOUT, C3, H3, W3).transpose(2, 3, 1, 0)     # (H3,W3,C3,NOUT)
    wh_taps = wh_taps.reshape(H3 * W3, C3, NOUT).astype(jnp.bfloat16)
    return wh_taps, bh.reshape(1, NOUT).astype(jnp.float32)


def _decimation(n_ow):
    """0/1 matrix D with D[i, j] = (j == 2*i); out_row = D @ full_res_row."""
    span = 2 * n_ow - 1
    return (jnp.arange(span)[None, :] == 2 * jnp.arange(n_ow)[:, None]).astype(jnp.float32)


def _const_spec(shape):
    return pl.BlockSpec(shape, lambda b: (0,) * len(shape))


# ----------------------------------------------------------------------------
# Public forward: exact DQN.forward semantics (BatchNorm in eval mode)
# ----------------------------------------------------------------------------
def dqn_forward(x_nchw, p):
    B = x_nchw.shape[0]
    x = x_nchw.transpose(0, 2, 3, 1).astype(jnp.bfloat16)            # NHWC bf16, once

    w1, s1 = _fold_conv_bn(p["w1"], p["b1"], p["g1"], p["be1"], p["m1"], p["v1"])
    w2, s2 = _fold_conv_bn(p["w2"], p["b2"], p["g2"], p["be2"], p["m2"], p["v2"])
    w3, s3 = _fold_conv_bn(p["w3"], p["b3"], p["g3"], p["be3"], p["m3"], p["v3"])
    wh, bh = _fold_head(p["wh"], p["bh"])
    d1, d2, d3 = _decimation(W1), _decimation(W2), _decimation(W3)

    grid_spec = pltpu.PrefetchScalarGridSpec(
        num_scalar_prefetch=0,
        grid=(B,),
        in_specs=[
            pl.BlockSpec((None, H0, W0, C0), lambda b: (b, 0, 0, 0)),
            _const_spec((K * K, C0, C1)), _const_spec((1, C1)), _const_spec((W1, 2 * W1 - 1)),
            _const_spec((K * K, C1, C2)), _const_spec((1, C2)), _const_spec((W2, 2 * W2 - 1)),
            _const_spec((K * K, C2, C3)), _const_spec((1, C3)), _const_spec((W3, 2 * W3 - 1)),
            _const_spec((H3 * W3, C3, NOUT)), _const_spec((1, NOUT)),
        ],
        out_specs=pl.BlockSpec((None, 1, NOUT), lambda b: (b, 0, 0)),
        scratch_shapes=[
            pltpu.VMEM((H1, W1, C1), jnp.bfloat16),   # conv1 activation
            pltpu.VMEM((H2, W2, C2), jnp.bfloat16),   # conv2 activation
            pltpu.VMEM((H3, W3, C3), jnp.bfloat16),   # conv3 activation
        ],
    )

    out = pl.pallas_call(
        _dqn_kernel,
        out_shape=jax.ShapeDtypeStruct((B, 1, NOUT), jnp.float32),
        grid_spec=grid_spec,
        compiler_params=pltpu.CompilerParams(
            dimension_semantics=("parallel",)),       # v7x: one batch elem per TC
    )(x, w1, s1, d1, w2, s2, d2, w3, s3, d3, wh, bh)
    return out.reshape(B, NOUT)


# ----------------------------------------------------------------------------
# Deterministic example parameters (shapes of the PyTorch module)
# ----------------------------------------------------------------------------
def init_params(key):
    def nrm(k, shape, std):
        return std * jax.random.normal(k, shape, dtype=jnp.float32)

    ks = jax.random.split(key, 16)
    p = {}
    # conv1: 3 -> 16, 5x5 + bn1
    p["w1"] = nrm(ks[0], (16, 3, 5, 5), 0.1)
    p["b1"] = nrm(ks[1], (16,), 0.1)
    p["g1"] = 1.0 + nrm(ks[2], (16,), 0.05)
    p["be1"] = nrm(ks[3], (16,), 0.05)
    p["m1"] = nrm(ks[4], (16,), 0.05)
    p["v1"] = 1.0 + jnp.abs(nrm(ks[5], (16,), 0.05))
    # conv2: 16 -> 32, 5x5 + bn2
    p["w2"] = nrm(ks[6], (32, 16, 5, 5), 0.05)
    p["b2"] = nrm(ks[7], (32,), 0.05)
    p["g2"] = 1.0 + nrm(ks[8], (32,), 0.05)
    p["be2"] = nrm(ks[9], (32,), 0.05)
    p["m2"] = nrm(ks[10], (32,), 0.05)
    p["v2"] = 1.0 + jnp.abs(nrm(ks[11], (32,), 0.05))
    # conv3: 32 -> 32, 5x5 + bn3
    p["w3"] = nrm(ks[12], (32, 32, 5, 5), 0.05)
    p["b3"] = nrm(ks[13], (32,), 0.05)
    p["g3"] = jnp.ones((32,), jnp.float32)
    p["be3"] = jnp.zeros((32,), jnp.float32)
    p["m3"] = jnp.zeros((32,), jnp.float32)
    p["v3"] = jnp.ones((32,), jnp.float32)
    # head: Linear(448 -> 2)
    kh = jax.random.split(ks[14], 2)
    p["wh"] = nrm(kh[0], (2, 448), 0.05)
    p["bh"] = nrm(kh[1], (2,), 0.05)
    return p


if __name__ == "__main__":
    key = jax.random.PRNGKey(0)
    kx, kp = jax.random.split(key)
    # DQN head is Linear(448, 2) => input spatial must be 40x80 (tutorial screen).
    x = jax.random.normal(kx, (2, 3, 40, 80), dtype=jnp.float32)
    params = init_params(kp)

    out = jax.jit(dqn_forward)(x, params)
    out = jax.block_until_ready(out)
    assert out.shape == (2, 2), out.shape
    print("KERNEL_OK")
</pallas_src>

<mosaic_0001>
module attributes {stable_mosaic.version = 11 : i64} {
  func.func @_dqn_kernel(%arg0: i32, %arg1: memref<1x40x80x3xbf16, #tpu.memory_space<vmem>>, %arg2: memref<25x3x16xbf16, #tpu.memory_space<vmem>>, %arg3: memref<1x16xf32, #tpu.memory_space<vmem>>, %arg4: memref<38x75xf32, #tpu.memory_space<vmem>>, %arg5: memref<25x16x32xbf16, #tpu.memory_space<vmem>>, %arg6: memref<1x32xf32, #tpu.memory_space<vmem>>, %arg7: memref<17x33xf32, #tpu.memory_space<vmem>>, %arg8: memref<25x32x32xbf16, #tpu.memory_space<vmem>>, %arg9: memref<1x32xf32, #tpu.memory_space<vmem>>, %arg10: memref<7x13xf32, #tpu.memory_space<vmem>>, %arg11: memref<14x32x2xbf16, #tpu.memory_space<vmem>>, %arg12: memref<1x2xf32, #tpu.memory_space<vmem>>, %arg13: memref<1x1x2xf32, #tpu.memory_space<vmem>>, %arg14: memref<18x38x16xbf16, #tpu.memory_space<vmem>>, %arg15: memref<7x17x32xbf16, #tpu.memory_space<vmem>>, %arg16: memref<2x7x32xbf16, #tpu.memory_space<vmem>>) attributes {dimension_semantics = [#tpu.dimension_semantics<parallel>], iteration_bounds = array<i64: 2>, scalar_prefetch = 0 : i64, scratch_operands = 3 : i64, tpu.core_type = #tpu.core_type<tc>, window_params = [{transform_indices = @transform_0, window_bounds = array<i64: 1, 40, 80, 3>}, {pipeline_mode = #tpu.pipeline_mode<synchronous>, transform_indices = @transform_1, window_bounds = array<i64: 25, 3, 16>}, {pipeline_mode = #tpu.pipeline_mode<synchronous>, transform_indices = @transform_2, window_bounds = array<i64: 1, 16>}, {pipeline_mode = #tpu.pipeline_mode<synchronous>, transform_indices = @transform_3, window_bounds = array<i64: 38, 75>}, {pipeline_mode = #tpu.pipeline_mode<synchronous>, transform_indices = @transform_4, window_bounds = array<i64: 25, 16, 32>}, {pipeline_mode = #tpu.pipeline_mode<synchronous>, transform_indices = @transform_5, window_bounds = array<i64: 1, 32>}, {pipeline_mode = #tpu.pipeline_mode<synchronous>, transform_indices = @transform_6, window_bounds = array<i64: 17, 33>}, {pipeline_mode = #tpu.pipeline_mode<synchronous>, transform_indices = @transform_7, window_bounds = array<i64: 25, 32, 32>}, {pipeline_mode = #tpu.pipeline_mode<synchronous>, transform_indices = @transform_8, window_bounds = array<i64: 1, 32>}, {pipeline_mode = #tpu.pipeline_mode<synchronous>, transform_indices = @transform_9, window_bounds = array<i64: 7, 13>}, {pipeline_mode = #tpu.pipeline_mode<synchronous>, transform_indices = @transform_10, window_bounds = array<i64: 14, 32, 2>}, {pipeline_mode = #tpu.pipeline_mode<synchronous>, transform_indices = @transform_11, window_bounds = array<i64: 1, 2>}, {transform_indices = @transform_12, window_bounds = array<i64: 1, 1, 2>}]} {
    %c0 = arith.constant 0 : index
    %c0_0 = arith.constant 0 : index
    %0 = vector.load %arg4[%c0, %c0_0] : memref<38x75xf32, #tpu.memory_space<vmem>>, vector<38x75xf32>
    %c0_1 = arith.constant 0 : index
    %c0_2 = arith.constant 0 : index
    %1 = vector.load %arg3[%c0_1, %c0_2] : memref<1x16xf32, #tpu.memory_space<vmem>>, vector<1x16xf32>
    %c0_i32 = arith.constant 0 : i32
    %c18_i32 = arith.constant 18 : i32
    %2 = arith.addi %c0_i32, %c18_i32 : i32
    %c1_i32 = arith.constant 1 : i32
    scf.for %arg17 = %c0_i32 to %2 step %c1_i32  : i32 {
      %c1_i32_108 = arith.constant 1 : i32
      %99 = arith.muli %arg17, %c1_i32_108 : i32
      %c0_i32_109 = arith.constant 0 : i32
      %100 = arith.addi %c0_i32_109, %99 : i32
      %cst_110 = arith.constant 0.000000e+00 : f32
      %101 = vector.broadcast %cst_110 : f32 to vector<75x16xf32>
      %c2_i32_111 = arith.constant 2 : i32
      %102 = arith.muli %c2_i32_111, %100 : i32
      %c0_i32_112 = arith.constant 0 : i32
      %103 = arith.addi %102, %c0_i32_112 : i32
      %c0_113 = arith.constant 0 : index
      %104 = arith.index_cast %103 : i32 to index
      %c0_114 = arith.constant 0 : index
      %c0_115 = arith.constant 0 : index
      %105 = vector.load %arg1[%c0_113, %104, %c0_114, %c0_115] : memref<1x40x80x3xbf16, #tpu.memory_space<vmem>>, vector<1x1x75x3xbf16>
      %106 = vector.shape_cast %105 : vector<1x1x75x3xbf16> to vector<75x3xbf16>
      %c0_116 = arith.constant 0 : index
      %c0_117 = arith.constant 0 : index
      %c0_118 = arith.constant 0 : index
      %107 = vector.load %arg2[%c0_116, %c0_117, %c0_118] : memref<25x3x16xbf16, #tpu.memory_space<vmem>>, vector<1x3x16xbf16>
      %108 = vector.shape_cast %107 : vector<1x3x16xbf16> to vector<3x16xbf16>
      %cst_119 = arith.constant dense<0.000000e+00> : vector<75x16xf32>
      %109 = tpu.matmul %106, %108, %cst_119 {dimension_numbers = #tpu.dot_dimension_numbers<[1], [0], [0], [1], [0, 0, 1, 1], [], []>} : vector<75x3xbf16>, vector<3x16xbf16>, vector<75x16xf32> -> vector<75x16xf32>
      %110 = arith.addf %101, %109 : vector<75x16xf32>
      %c2_i32_120 = arith.constant 2 : i32
      %111 = arith.muli %c2_i32_120, %100 : i32
      %c0_i32_121 = arith.constant 0 : i32
      %112 = arith.addi %111, %c0_i32_121 : i32
      %c0_122 = arith.constant 0 : index
      %113 = arith.index_cast %112 : i32 to index
      %c1_123 = arith.constant 1 : index
      %c0_124 = arith.constant 0 : index
      %114 = vector.load %arg1[%c0_122, %113, %c1_123, %c0_124] : memref<1x40x80x3xbf16, #tpu.memory_space<vmem>>, vector<1x1x75x3xbf16>
      %115 = vector.shape_cast %114 : vector<1x1x75x3xbf16> to vector<75x3xbf16>
      %c1_125 = arith.constant 1 : index
      %c0_126 = arith.constant 0 : index
      %c0_127 = arith.constant 0 : index
      %116 = vector.load %arg2[%c1_125, %c0_126, %c0_127] : memref<25x3x16xbf16, #tpu.memory_space<vmem>>, vector<1x3x16xbf16>
      %117 = vector.shape_cast %116 : vector<1x3x16xbf16> to vector<3x16xbf16>
      %cst_128 = arith.constant dense<0.000000e+00> : vector<75x16xf32>
      %118 = tpu.matmul %115, %117, %cst_128 {dimension_numbers = #tpu.dot_dimension_numbers<[1], [0], [0], [1], [0, 0, 1, 1], [], []>} : vector<75x3xbf16>, vector<3x16xbf16>, vector<75x16xf32> -> vector<75x16xf32>
      %119 = arith.addf %110, %118 : vector<75x16xf32>
      %c2_i32_129 = arith.constant 2 : i32
      %120 = arith.muli %c2_i32_129, %100 : i32
      %c0_i32_130 = arith.constant 0 : i32
      %121 = arith.addi %120, %c0_i32_130 : i32
      %c0_131 = arith.constant 0 : index
      %122 = arith.index_cast %121 : i32 to index
      %c2_132 = arith.constant 2 : index
      %c0_133 = arith.constant 0 : index
      %123 = vector.load %arg1[%c0_131, %122, %c2_132, %c0_133] : memref<1x40x80x3xbf16, #tpu.memory_space<vmem>>, vector<1x1x75x3xbf16>
      %124 = vector.shape_cast %123 : vector<1x1x75x3xbf16> to vector<75x3xbf16>
      %c2_134 = arith.constant 2 : index
      %c0_135 = arith.constant 0 : index
      %c0_136 = arith.constant 0 : index
      %125 = vector.load %arg2[%c2_134, %c0_135, %c0_136] : memref<25x3x16xbf16, #tpu.memory_space<vmem>>, vector<1x3x16xbf16>
      %126 = vector.shape_cast %125 : vector<1x3x16xbf16> to vector<3x16xbf16>
      %cst_137 = arith.constant dense<0.000000e+00> : vector<75x16xf32>
      %127 = tpu.matmul %124, %126, %cst_137 {dimension_numbers = #tpu.dot_dimension_numbers<[1], [0], [0], [1], [0, 0, 1, 1], [], []>} : vector<75x3xbf16>, vector<3x16xbf16>, vector<75x16xf32> -> vector<75x16xf32>
      %128 = arith.addf %119, %127 : vector<75x16xf32>
      %c2_i32_138 = arith.constant 2 : i32
      %129 = arith.muli %c2_i32_138, %100 : i32
      %c0_i32_139 = arith.constant 0 : i32
      %130 = arith.addi %129, %c0_i32_139 : i32
      %c0_140 = arith.constant 0 : index
      %131 = arith.index_cast %130 : i32 to index
      %c3_141 = arith.constant 3 : index
      %c0_142 = arith.constant 0 : index
      %132 = vector.load %arg1[%c0_140, %131, %c3_141, %c0_142] : memref<1x40x80x3xbf16, #tpu.memory_space<vmem>>, vector<1x1x75x3xbf16>
      %133 = vector.shape_cast %132 : vector<1x1x75x3xbf16> to vector<75x3xbf16>
      %c3_143 = arith.constant 3 : index
      %c0_144 = arith.constant 0 : index
      %c0_145 = arith.constant 0 : index
      %134 = vector.load %arg2[%c3_143, %c0_144, %c0_145] : memref<25x3x16xbf16, #tpu.memory_space<vmem>>, vector<1x3x16xbf16>
      %135 = vector.shape_cast %134 : vector<1x3x16xbf16> to vector<3x16xbf16>
      %cst_146 = arith.constant dense<0.000000e+00> : vector<75x16xf32>
      %136 = tpu.matmul %133, %135, %cst_146 {dimension_numbers = #tpu.dot_dimension_numbers<[1], [0], [0], [1], [0, 0, 1, 1], [], []>} : vector<75x3xbf16>, vector<3x16xbf16>, vector<75x16xf32> -> vector<75x16xf32>
      %137 = arith.addf %128, %136 : vector<75x16xf32>
      %c2_i32_147 = arith.constant 2 : i32
      %138 = arith.muli %c2_i32_147, %100 : i32
      %c0_i32_148 = arith.constant 0 : i32
      %139 = arith.addi %138, %c0_i32_148 : i32
      %c0_149 = arith.constant 0 : index
      %140 = arith.index_cast %139 : i32 to index
      %c4_150 = arith.constant 4 : index
      %c0_151 = arith.constant 0 : index
      %141 = vector.load %arg1[%c0_149, %140, %c4_150, %c0_151] : memref<1x40x80x3xbf16, #tpu.memory_space<vmem>>, vector<1x1x75x3xbf16>
      %142 = vector.shape_cast %141 : vector<1x1x75x3xbf16> to vector<75x3xbf16>
      %c4_152 = arith.constant 4 : index
      %c0_153 = arith.constant 0 : index
      %c0_154 = arith.constant 0 : index
      %143 = vector.load %arg2[%c4_152, %c0_153, %c0_154] : memref<25x3x16xbf16, #tpu.memory_space<vmem>>, vector<1x3x16xbf16>
      %144 = vector.shape_cast %143 : vector<1x3x16xbf16> to vector<3x16xbf16>
      %cst_155 = arith.constant dense<0.000000e+00> : vector<75x16xf32>
      %145 = tpu.matmul %142, %144, %cst_155 {dimension_numbers = #tpu.dot_dimension_numbers<[1], [0], [0], [1], [0, 0, 1, 1], [], []>} : vector<75x3xbf16>, vector<3x16xbf16>, vector<75x16xf32> -> vector<75x16xf32>
      %146 = arith.addf %137, %145 : vector<75x16xf32>
      %c2_i32_156 = arith.constant 2 : i32
      %147 = arith.muli %c2_i32_156, %100 : i32
      %c1_i32_157 = arith.constant 1 : i32
      %148 = arith.addi %147, %c1_i32_157 : i32
      %c0_158 = arith.constant 0 : index
      %149 = arith.index_cast %148 : i32 to index
      %c0_159 = arith.constant 0 : index
      %c0_160 = arith.constant 0 : index
      %150 = vector.load %arg1[%c0_158, %149, %c0_159, %c0_160] : memref<1x40x80x3xbf16, #tpu.memory_space<vmem>>, vector<1x1x75x3xbf16>
      %151 = vector.shape_cast %150 : vector<1x1x75x3xbf16> to vector<75x3xbf16>
      %c5_161 = arith.constant 5 : index
      %c0_162 = arith.constant 0 : index
      %c0_163 = arith.constant 0 : index
      %152 = vector.load %arg2[%c5_161, %c0_162, %c0_163] : memref<25x3x16xbf16, #tpu.memory_space<vmem>>, vector<1x3x16xbf16>
      %153 = vector.shape_cast %152 : vector<1x3x16xbf16> to vector<3x16xbf16>
      %cst_164 = arith.constant dense<0.000000e+00> : vector<75x16xf32>
      %154 = tpu.matmul %151, %153, %cst_164 {dimension_numbers = #tpu.dot_dimension_numbers<[1], [0], [0], [1], [0, 0, 1, 1], [], []>} : vector<75x3xbf16>, vector<3x16xbf16>, vector<75x16xf32> -> vector<75x16xf32>
      %155 = arith.addf %146, %154 : vector<75x16xf32>
      %c2_i32_165 = arith.constant 2 : i32
      %156 = arith.muli %c2_i32_165, %100 : i32
      %c1_i32_166 = arith.constant 1 : i32
      %157 = arith.addi %156, %c1_i32_166 : i32
      %c0_167 = arith.constant 0 : index
      %158 = arith.index_cast %157 : i32 to index
      %c1_168 = arith.constant 1 : index
      %c0_169 = arith.constant 0 : index
      %159 = vector.load %arg1[%c0_167, %158, %c1_168, %c0_169] : memref<1x40x80x3xbf16, #tpu.memory_space<vmem>>, vector<1x1x75x3xbf16>
      %160 = vector.shape_cast %159 : vector<1x1x75x3xbf16> to vector<75x3xbf16>
      %c6_170 = arith.constant 6 : index
      %c0_171 = arith.constant 0 : index
      %c0_172 = arith.constant 0 : index
      %161 = vector.load %arg2[%c6_170, %c0_171, %c0_172] : memref<25x3x16xbf16, #tpu.memory_space<vmem>>, vector<1x3x16xbf16>
      %162 = vector.shape_cast %161 : vector<1x3x16xbf16> to vector<3x16xbf16>
      %cst_173 = arith.constant dense<0.000000e+00> : vector<75x16xf32>
      %163 = tpu.matmul %160, %162, %cst_173 {dimension_numbers = #tpu.dot_dimension_numbers<[1], [0], [0], [1], [0, 0, 1, 1], [], []>} : vector<75x3xbf16>, vector<3x16xbf16>, vector<75x16xf32> -> vector<75x16xf32>
      %164 = arith.addf %155, %163 : vector<75x16xf32>
      %c2_i32_174 = arith.constant 2 : i32
      %165 = arith.muli %c2_i32_174, %100 : i32
      %c1_i32_175 = arith.constant 1 : i32
      %166 = arith.addi %165, %c1_i32_175 : i32
      %c0_176 = arith.constant 0 : index
      %167 = arith.index_cast %166 : i32 to index
      %c2_177 = arith.constant 2 : index
      %c0_178 = arith.constant 0 : index
      %168 = vector.load %arg1[%c0_176, %167, %c2_177, %c0_178] : memref<1x40x80x3xbf16, #tpu.memory_space<vmem>>, vector<1x1x75x3xbf16>
      %169 = vector.shape_cast %168 : vector<1x1x75x3xbf16> to vector<75x3xbf16>
      %c7_179 = arith.constant 7 : index
      %c0_180 = arith.constant 0 : index
      %c0_181 = arith.constant 0 : index
      %170 = vector.load %arg2[%c7_179, %c0_180, %c0_181] : memref<25x3x16xbf16, #tpu.memory_space<vmem>>, vector<1x3x16xbf16>
      %171 = vector.shape_cast %170 : vector<1x3x16xbf16> to vector<3x16xbf16>
      %cst_182 = arith.constant dense<0.000000e+00> : vector<75x16xf32>
      %172 = tpu.matmul %169, %171, %cst_182 {dimension_numbers = #tpu.dot_dimension_numbers<[1], [0], [0], [1], [0, 0, 1, 1], [], []>} : vector<75x3xbf16>, vector<3x16xbf16>, vector<75x16xf32> -> vector<75x16xf32>
      %173 = arith.addf %164, %172 : vector<75x16xf32>
      %c2_i32_183 = arith.constant 2 : i32
      %174 = arith.muli %c2_i32_183, %100 : i32
      %c1_i32_184 = arith.constant 1 : i32
      %175 = arith.addi %174, %c1_i32_184 : i32
      %c0_185 = arith.constant 0 : index
      %176 = arith.index_cast %175 : i32 to index
      %c3_186 = arith.constant 3 : index
      %c0_187 = arith.constant 0 : index
      %177 = vector.load %arg1[%c0_185, %176, %c3_186, %c0_187] : memref<1x40x80x3xbf16, #tpu.memory_space<vmem>>, vector<1x1x75x3xbf16>
      %178 = vector.shape_cast %177 : vector<1x1x75x3xbf16> to vector<75x3xbf16>
      %c8_188 = arith.constant 8 : index
      %c0_189 = arith.constant 0 : index
      %c0_190 = arith.constant 0 : index
      %179 = vector.load %arg2[%c8_188, %c0_189, %c0_190] : memref<25x3x16xbf16, #tpu.memory_space<vmem>>, vector<1x3x16xbf16>
      %180 = vector.shape_cast %179 : vector<1x3x16xbf16> to vector<3x16xbf16>
      %cst_191 = arith.constant dense<0.000000e+00> : vector<75x16xf32>
      %181 = tpu.matmul %178, %180, %cst_191 {dimension_numbers = #tpu.dot_dimension_numbers<[1], [0], [0], [1], [0, 0, 1, 1], [], []>} : vector<75x3xbf16>, vector<3x16xbf16>, vector<75x16xf32> -> vector<75x16xf32>
      %182 = arith.addf %173, %181 : vector<75x16xf32>
      %c2_i32_192 = arith.constant 2 : i32
      %183 = arith.muli %c2_i32_192, %100 : i32
      %c1_i32_193 = arith.constant 1 : i32
      %184 = arith.addi %183, %c1_i32_193 : i32
      %c0_194 = arith.constant 0 : index
      %185 = arith.index_cast %184 : i32 to index
      %c4_195 = arith.constant 4 : index
      %c0_196 = arith.constant 0 : index
      %186 = vector.load %arg1[%c0_194, %185, %c4_195, %c0_196] : memref<1x40x80x3xbf16, #tpu.memory_space<vmem>>, vector<1x1x75x3xbf16>
      %187 = vector.shape_cast %186 : vector<1x1x75x3xbf16> to vector<75x3xbf16>
      %c9_197 = arith.constant 9 : index
      %c0_198 = arith.constant 0 : index
      %c0_199 = arith.constant 0 : index
      %188 = vector.load %arg2[%c9_197, %c0_198, %c0_199] : memref<25x3x16xbf16, #tpu.memory_space<vmem>>, vector<1x3x16xbf16>
      %189 = vector.shape_cast %188 : vector<1x3x16xbf16> to vector<3x16xbf16>
      %cst_200 = arith.constant dense<0.000000e+00> : vector<75x16xf32>
      %190 = tpu.matmul %187, %189, %cst_200 {dimension_numbers = #tpu.dot_dimension_numbers<[1], [0], [0], [1], [0, 0, 1, 1], [], []>} : vector<75x3xbf16>, vector<3x16xbf16>, vector<75x16xf32> -> vector<75x16xf32>
      %191 = arith.addf %182, %190 : vector<75x16xf32>
      %c2_i32_201 = arith.constant 2 : i32
      %192 = arith.muli %c2_i32_201, %100 : i32
      %c2_i32_202 = arith.constant 2 : i32
      %193 = arith.addi %192, %c2_i32_202 : i32
      %c0_203 = arith.constant 0 : index
      %194 = arith.index_cast %193 : i32 to index
      %c0_204 = arith.constant 0 : index
      %c0_205 = arith.constant 0 : index
      %195 = vector.load %arg1[%c0_203, %194, %c0_204, %c0_205] : memref<1x40x80x3xbf16, #tpu.memory_space<vmem>>, vector<1x1x75x3xbf16>
      %196 = vector.shape_cast %195 : vector<1x1x75x3xbf16> to vector<75x3xbf16>
      %c10_206 = arith.constant 10 : index
      %c0_207 = arith.constant 0 : index
      %c0_208 = arith.constant 0 : index
      %197 = vector.load %arg2[%c10_206, %c0_207, %c0_208] : memref<25x3x16xbf16, #tpu.memory_space<vmem>>, vector<1x3x16xbf16>
      %198 = vector.shape_cast %197 : vector<1x3x16xbf16> to vector<3x16xbf16>
      %cst_209 = arith.constant dense<0.000000e+00> : vector<75x16xf32>
      %199 = tpu.matmul %196, %198, %cst_209 {dimension_numbers = #tpu.dot_dimension_numbers<[1], [0], [0], [1], [0, 0, 1, 1], [], []>} : vector<75x3xbf16>, vector<3x16xbf16>, vector<75x16xf32> -> vector<75x16xf32>
      %200 = arith.addf %191, %199 : vector<75x16xf32>
      %c2_i32_210 = arith.constant 2 : i32
      %201 = arith.muli %c2_i32_210, %100 : i32
      %c2_i32_211 = arith.constant 2 : i32
      %202 = arith.addi %201, %c2_i32_211 : i32
      %c0_212 = arith.constant 0 : index
      %203 = arith.index_cast %202 : i32 to index
      %c1_213 = arith.constant 1 : index
      %c0_214 = arith.constant 0 : index
      %204 = vector.load %arg1[%c0_212, %203, %c1_213, %c0_214] : memref<1x40x80x3xbf16, #tpu.memory_space<vmem>>, vector<1x1x75x3xbf16>
      %205 = vector.shape_cast %204 : vector<1x1x75x3xbf16> to vector<75x3xbf16>
      %c11_215 = arith.constant 11 : index
      %c0_216 = arith.constant 0 : index
      %c0_217 = arith.constant 0 : index
      %206 = vector.load %arg2[%c11_215, %c0_216, %c0_217] : memref<25x3x16xbf16, #tpu.memory_space<vmem>>, vector<1x3x16xbf16>
      %207 = vector.shape_cast %206 : vector<1x3x16xbf16> to vector<3x16xbf16>
      %cst_218 = arith.constant dense<0.000000e+00> : vector<75x16xf32>
      %208 = tpu.matmul %205, %207, %cst_218 {dimension_numbers = #tpu.dot_dimension_numbers<[1], [0], [0], [1], [0, 0, 1, 1], [], []>} : vector<75x3xbf16>, vector<3x16xbf16>, vector<75x16xf32> -> vector<75x16xf32>
      %209 = arith.addf %200, %208 : vector<75x16xf32>
      %c2_i32_219 = arith.constant 2 : i32
      %210 = arith.muli %c2_i32_219, %100 : i32
      %c2_i32_220 = arith.constant 2 : i32
      %211 = arith.addi %210, %c2_i32_220 : i32
      %c0_221 = arith.constant 0 : index
      %212 = arith.index_cast %211 : i32 to index
      %c2_222 = arith.constant 2 : index
      %c0_223 = arith.constant 0 : index
      %213 = vector.load %arg1[%c0_221, %212, %c2_222, %c0_223] : memref<1x40x80x3xbf16, #tpu.memory_space<vmem>>, vector<1x1x75x3xbf16>
      %214 = vector.shape_cast %213 : vector<1x1x75x3xbf16> to vector<75x3xbf16>
      %c12_224 = arith.constant 12 : index
      %c0_225 = arith.constant 0 : index
      %c0_226 = arith.constant 0 : index
      %215 = vector.load %arg2[%c12_224, %c0_225, %c0_226] : memref<25x3x16xbf16, #tpu.memory_space<vmem>>, vector<1x3x16xbf16>
      %216 = vector.shape_cast %215 : vector<1x3x16xbf16> to vector<3x16xbf16>
      %cst_227 = arith.constant dense<0.000000e+00> : vector<75x16xf32>
      %217 = tpu.matmul %214, %216, %cst_227 {dimension_numbers = #tpu.dot_dimension_numbers<[1], [0], [0], [1], [0, 0, 1, 1], [], []>} : vector<75x3xbf16>, vector<3x16xbf16>, vector<75x16xf32> -> vector<75x16xf32>
      %218 = arith.addf %209, %217 : vector<75x16xf32>
      %c2_i32_228 = arith.constant 2 : i32
      %219 = arith.muli %c2_i32_228, %100 : i32
      %c2_i32_229 = arith.constant 2 : i32
      %220 = arith.addi %219, %c2_i32_229 : i32
      %c0_230 = arith.constant 0 : index
      %221 = arith.index_cast %220 : i32 to index
      %c3_231 = arith.constant 3 : index
      %c0_232 = arith.constant 0 : index
      %222 = vector.load %arg1[%c0_230, %221, %c3_231, %c0_232] : memref<1x40x80x3xbf16, #tpu.memory_space<vmem>>, vector<1x1x75x3xbf16>
      %223 = vector.shape_cast %222 : vector<1x1x75x3xbf16> to vector<75x3xbf16>
      %c13_233 = arith.constant 13 : index
      %c0_234 = arith.constant 0 : index
      %c0_235 = arith.constant 0 : index
      %224 = vector.load %arg2[%c13_233, %c0_234, %c0_235] : memref<25x3x16xbf16, #tpu.memory_space<vmem>>, vector<1x3x16xbf16>
      %225 = vector.shape_cast %224 : vector<1x3x16xbf16> to vector<3x16xbf16>
      %cst_236 = arith.constant dense<0.000000e+00> : vector<75x16xf32>
      %226 = tpu.matmul %223, %225, %cst_236 {dimension_numbers = #tpu.dot_dimension_numbers<[1], [0], [0], [1], [0, 0, 1, 1], [], []>} : vector<75x3xbf16>, vector<3x16xbf16>, vector<75x16xf32> -> vector<75x16xf32>
      %227 = arith.addf %218, %226 : vector<75x16xf32>
      %c2_i32_237 = arith.constant 2 : i32
      %228 = arith.muli %c2_i32_237, %100 : i32
      %c2_i32_238 = arith.constant 2 : i32
      %229 = arith.addi %228, %c2_i32_238 : i32
      %c0_239 = arith.constant 0 : index
      %230 = arith.index_cast %229 : i32 to index
      %c4_240 = arith.constant 4 : index
      %c0_241 = arith.constant 0 : index
      %231 = vector.load %arg1[%c0_239, %230, %c4_240, %c0_241] : memref<1x40x80x3xbf16, #tpu.memory_space<vmem>>, vector<1x1x75x3xbf16>
      %232 = vector.shape_cast %231 : vector<1x1x75x3xbf16> to vector<75x3xbf16>
      %c14 = arith.constant 14 : index
      %c0_242 = arith.constant 0 : index
      %c0_243 = arith.constant 0 : index
      %233 = vector.load %arg2[%c14, %c0_242, %c0_243] : memref<25x3x16xbf16, #tpu.memory_space<vmem>>, vector<1x3x16xbf16>
      %234 = vector.shape_cast %233 : vector<1x3x16xbf16> to vector<3x16xbf16>
      %cst_244 = arith.constant dense<0.000000e+00> : vector<75x16xf32>
      %235 = tpu.matmul %232, %234, %cst_244 {dimension_numbers = #tpu.dot_dimension_numbers<[1], [0], [0], [1], [0, 0, 1, 1], [], []>} : vector<75x3xbf16>, vector<3x16xbf16>, vector<75x16xf32> -> vector<75x16xf32>
      %236 = arith.addf %227, %235 : vector<75x16xf32>
      %c2_i32_245 = arith.constant 2 : i32
      %237 = arith.muli %c2_i32_245, %100 : i32
      %c3_i32 = arith.constant 3 : i32
      %238 = arith.addi %237, %c3_i32 : i32
      %c0_246 = arith.constant 0 : index
      %239 = arith.index_cast %238 : i32 to index
      %c0_247 = arith.constant 0 : index
      %c0_248 = arith.constant 0 : index
      %240 = vector.load %arg1[%c0_246, %239, %c0_247, %c0_248] : memref<1x40x80x3xbf16, #tpu.memory_space<vmem>>, vector<1x1x75x3xbf16>
      %241 = vector.shape_cast %240 : vector<1x1x75x3xbf16> to vector<75x3xbf16>
      %c15 = arith.constant 15 : index
      %c0_249 = arith.constant 0 : index
      %c0_250 = arith.constant 0 : index
      %242 = vector.load %arg2[%c15, %c0_249, %c0_250] : memref<25x3x16xbf16, #tpu.memory_space<vmem>>, vector<1x3x16xbf16>
      %243 = vector.shape_cast %242 : vector<1x3x16xbf16> to vector<3x16xbf16>
      %cst_251 = arith.constant dense<0.000000e+00> : vector<75x16xf32>
      %244 = tpu.matmul %241, %243, %cst_251 {dimension_numbers = #tpu.dot_dimension_numbers<[1], [0], [0], [1], [0, 0, 1, 1], [], []>} : vector<75x3xbf16>, vector<3x16xbf16>, vector<75x16xf32> -> vector<75x16xf32>
      %245 = arith.addf %236, %244 : vector<75x16xf32>
      %c2_i32_252 = arith.constant 2 : i32
      %246 = arith.muli %c2_i32_252, %100 : i32
      %c3_i32_253 = arith.constant 3 : i32
      %247 = arith.addi %246, %c3_i32_253 : i32
      %c0_254 = arith.constant 0 : index
      %248 = arith.index_cast %247 : i32 to index
      %c1_255 = arith.constant 1 : index
      %c0_256 = arith.constant 0 : index
      %249 = vector.load %arg1[%c0_254, %248, %c1_255, %c0_256] : memref<1x40x80x3xbf16, #tpu.memory_space<vmem>>, vector<1x1x75x3xbf16>
      %250 = vector.shape_cast %249 : vector<1x1x75x3xbf16> to vector<75x3xbf16>
      %c16 = arith.constant 16 : index
      %c0_257 = arith.constant 0 : index
      %c0_258 = arith.constant 0 : index
      %251 = vector.load %arg2[%c16, %c0_257, %c0_258] : memref<25x3x16xbf16, #tpu.memory_space<vmem>>, vector<1x3x16xbf16>
      %252 = vector.shape_cast %251 : vector<1x3x16xbf16> to vector<3x16xbf16>
      %cst_259 = arith.constant dense<0.000000e+00> : vector<75x16xf32>
      %253 = tpu.matmul %250, %252, %cst_259 {dimension_numbers = #tpu.dot_dimension_numbers<[1], [0], [0], [1], [0, 0, 1, 1], [], []>} : vector<75x3xbf16>, vector<3x16xbf16>, vector<75x16xf32> -> vector<75x16xf32>
      %254 = arith.addf %245, %253 : vector<75x16xf32>
      %c2_i32_260 = arith.constant 2 : i32
      %255 = arith.muli %c2_i32_260, %100 : i32
      %c3_i32_261 = arith.constant 3 : i32
      %256 = arith.addi %255, %c3_i32_261 : i32
      %c0_262 = arith.constant 0 : index
      %257 = arith.index_cast %256 : i32 to index
      %c2_263 = arith.constant 2 : index
      %c0_264 = arith.constant 0 : index
      %258 = vector.load %arg1[%c0_262, %257, %c2_263, %c0_264] : memref<1x40x80x3xbf16, #tpu.memory_space<vmem>>, vector<1x1x75x3xbf16>
      %259 = vector.shape_cast %258 : vector<1x1x75x3xbf16> to vector<75x3xbf16>
      %c17 = arith.constant 17 : index
      %c0_265 = arith.constant 0 : index
      %c0_266 = arith.constant 0 : index
      %260 = vector.load %arg2[%c17, %c0_265, %c0_266] : memref<25x3x16xbf16, #tpu.memory_space<vmem>>, vector<1x3x16xbf16>
      %261 = vector.shape_cast %260 : vector<1x3x16xbf16> to vector<3x16xbf16>
      %cst_267 = arith.constant dense<0.000000e+00> : vector<75x16xf32>
      %262 = tpu.matmul %259, %261, %cst_267 {dimension_numbers = #tpu.dot_dimension_numbers<[1], [0], [0], [1], [0, 0, 1, 1], [], []>} : vector<75x3xbf16>, vector<3x16xbf16>, vector<75x16xf32> -> vector<75x16xf32>
      %263 = arith.addf %254, %262 : vector<75x16xf32>
      %c2_i32_268 = arith.constant 2 : i32
      %264 = arith.muli %c2_i32_268, %100 : i32
      %c3_i32_269 = arith.constant 3 : i32
      %265 = arith.addi %264, %c3_i32_269 : i32
      %c0_270 = arith.constant 0 : index
      %266 = arith.index_cast %265 : i32 to index
      %c3_271 = arith.constant 3 : index
      %c0_272 = arith.constant 0 : index
      %267 = vector.load %arg1[%c0_270, %266, %c3_271, %c0_272] : memref<1x40x80x3xbf16, #tpu.memory_space<vmem>>, vector<1x1x75x3xbf16>
      %268 = vector.shape_cast %267 : vector<1x1x75x3xbf16> to vector<75x3xbf16>
      %c18 = arith.constant 18 : index
      %c0_273 = arith.constant 0 : index
      %c0_274 = arith.constant 0 : index
      %269 = vector.load %arg2[%c18, %c0_273, %c0_274] : memref<25x3x16xbf16, #tpu.memory_space<vmem>>, vector<1x3x16xbf16>
      %270 = vector.shape_cast %269 : vector<1x3x16xbf16> to vector<3x16xbf16>
      %cst_275 = arith.constant dense<0.000000e+00> : vector<75x16xf32>
      %271 = tpu.matmul %268, %270, %cst_275 {dimension_numbers = #tpu.dot_dimension_numbers<[1], [0], [0], [1], [0, 0, 1, 1], [], []>} : vector<75x3xbf16>, vector<3x16xbf16>, vector<75x16xf32> -> vector<75x16xf32>
      %272 = arith.addf %263, %271 : vector<75x16xf32>
      %c2_i32_276 = arith.constant 2 : i32
      %273 = arith.muli %c2_i32_276, %100 : i32
      %c3_i32_277 = arith.constant 3 : i32
      %274 = arith.addi %273, %c3_i32_277 : i32
      %c0_278 = arith.constant 0 : index
      %275 = arith.index_cast %274 : i32 to index
      %c4_279 = arith.constant 4 : index
      %c0_280 = arith.constant 0 : index
      %276 = vector.load %arg1[%c0_278, %275, %c4_279, %c0_280] : memref<1x40x80x3xbf16, #tpu.memory_space<vmem>>, vector<1x1x75x3xbf16>
      %277 = vector.shape_cast %276 : vector<1x1x75x3xbf16> to vector<75x3xbf16>
      %c19 = arith.constant 19 : index
      %c0_281 = arith.constant 0 : index
      %c0_282 = arith.constant 0 : index
      %278 = vector.load %arg2[%c19, %c0_281, %c0_282] : memref<25x3x16xbf16, #tpu.memory_space<vmem>>, vector<1x3x16xbf16>
      %279 = vector.shape_cast %278 : vector<1x3x16xbf16> to vector<3x16xbf16>
      %cst_283 = arith.constant dense<0.000000e+00> : vector<75x16xf32>
      %280 = tpu.matmul %277, %279, %cst_283 {dimension_numbers = #tpu.dot_dimension_numbers<[1], [0], [0], [1], [0, 0, 1, 1], [], []>} : vector<75x3xbf16>, vector<3x16xbf16>, vector<75x16xf32> -> vector<75x16xf32>
      %281 = arith.addf %272, %280 : vector<75x16xf32>
      %c2_i32_284 = arith.constant 2 : i32
      %282 = arith.muli %c2_i32_284, %100 : i32
      %c4_i32 = arith.constant 4 : i32
      %283 = arith.addi %282, %c4_i32 : i32
      %c0_285 = arith.constant 0 : index
      %284 = arith.index_cast %283 : i32 to index
      %c0_286 = arith.constant 0 : index
      %c0_287 = arith.constant 0 : index
      %285 = vector.load %arg1[%c0_285, %284, %c0_286, %c0_287] : memref<1x40x80x3xbf16, #tpu.memory_space<vmem>>, vector<1x1x75x3xbf16>
      %286 = vector.shape_cast %285 : vector<1x1x75x3xbf16> to vector<75x3xbf16>
      %c20 = arith.constant 20 : index
      %c0_288 = arith.constant 0 : index
      %c0_289 = arith.constant 0 : index
      %287 = vector.load %arg2[%c20, %c0_288, %c0_289] : memref<25x3x16xbf16, #tpu.memory_space<vmem>>, vector<1x3x16xbf16>
      %288 = vector.shape_cast %287 : vector<1x3x16xbf16> to vector<3x16xbf16>
      %cst_290 = arith.constant dense<0.000000e+00> : vector<75x16xf32>
      %289 = tpu.matmul %286, %288, %cst_290 {dimension_numbers = #tpu.dot_dimension_numbers<[1], [0], [0], [1], [0, 0, 1, 1], [], []>} : vector<75x3xbf16>, vector<3x16xbf16>, vector<75x16xf32> -> vector<75x16xf32>
      %290 = arith.addf %281, %289 : vector<75x16xf32>
      %c2_i32_291 = arith.constant 2 : i32
      %291 = arith.muli %c2_i32_291, %100 : i32
      %c4_i32_292 = arith.constant 4 : i32
      %292 = arith.addi %291, %c4_i32_292 : i32
      %c0_293 = arith.constant 0 : index
      %293 = arith.index_cast %292 : i32 to index
      %c1_294 = arith.constant 1 : index
      %c0_295 = arith.constant 0 : index
      %294 = vector.load %arg1[%c0_293, %293, %c1_294, %c0_295] : memref<1x40x80x3xbf16, #tpu.memory_space<vmem>>, vector<1x1x75x3xbf16>
      %295 = vector.shape_cast %294 : vector<1x1x75x3xbf16> to vector<75x3xbf16>
      %c21 = arith.constant 21 : index
      %c0_296 = arith.constant 0 : index
      %c0_297 = arith.constant 0 : index
      %296 = vector.load %arg2[%c21, %c0_296, %c0_297] : memref<25x3x16xbf16, #tpu.memory_space<vmem>>, vector<1x3x16xbf16>
      %297 = vector.shape_cast %296 : vector<1x3x16xbf16> to vector<3x16xbf16>
      %cst_298 = arith.constant dense<0.000000e+00> : vector<75x16xf32>
      %298 = tpu.matmul %295, %297, %cst_298 {dimension_numbers = #tpu.dot_dimension_numbers<[1], [0], [0], [1], [0, 0, 1, 1], [], []>} : vector<75x3xbf16>, vector<3x16xbf16>, vector<75x16xf32> -> vector<75x16xf32>
      %299 = arith.addf %290, %298 : vector<75x16xf32>
      %c2_i32_299 = arith.constant 2 : i32
      %300 = arith.muli %c2_i32_299, %100 : i32
      %c4_i32_300 = arith.constant 4 : i32
      %301 = arith.addi %300, %c4_i32_300 : i32
      %c0_301 = arith.constant 0 : index
      %302 = arith.index_cast %301 : i32 to index
      %c2_302 = arith.constant 2 : index
      %c0_303 = arith.constant 0 : index
      %303 = vector.load %arg1[%c0_301, %302, %c2_302, %c0_303] : memref<1x40x80x3xbf16, #tpu.memory_space<vmem>>, vector<1x1x75x3xbf16>
      %304 = vector.shape_cast %303 : vector<1x1x75x3xbf16> to vector<75x3xbf16>
      %c22 = arith.constant 22 : index
      %c0_304 = arith.constant 0 : index
      %c0_305 = arith.constant 0 : index
      %305 = vector.load %arg2[%c22, %c0_304, %c0_305] : memref<25x3x16xbf16, #tpu.memory_space<vmem>>, vector<1x3x16xbf16>
      %306 = vector.shape_cast %305 : vector<1x3x16xbf16> to vector<3x16xbf16>
      %cst_306 = arith.constant dense<0.000000e+00> : vector<75x16xf32>
      %307 = tpu.matmul %304, %306, %cst_306 {dimension_numbers = #tpu.dot_dimension_numbers<[1], [0], [0], [1], [0, 0, 1, 1], [], []>} : vector<75x3xbf16>, vector<3x16xbf16>, vector<75x16xf32> -> vector<75x16xf32>
      %308 = arith.addf %299, %307 : vector<75x16xf32>
      %c2_i32_307 = arith.constant 2 : i32
      %309 = arith.muli %c2_i32_307, %100 : i32
      %c4_i32_308 = arith.constant 4 : i32
      %310 = arith.addi %309, %c4_i32_308 : i32
      %c0_309 = arith.constant 0 : index
      %311 = arith.index_cast %310 : i32 to index
      %c3_310 = arith.constant 3 : index
      %c0_311 = arith.constant 0 : index
      %312 = vector.load %arg1[%c0_309, %311, %c3_310, %c0_311] : memref<1x40x80x3xbf16, #tpu.memory_space<vmem>>, vector<1x1x75x3xbf16>
      %313 = vector.shape_cast %312 : vector<1x1x75x3xbf16> to vector<75x3xbf16>
      %c23 = arith.constant 23 : index
      %c0_312 = arith.constant 0 : index
      %c0_313 = arith.constant 0 : index
      %314 = vector.load %arg2[%c23, %c0_312, %c0_313] : memref<25x3x16xbf16, #tpu.memory_space<vmem>>, vector<1x3x16xbf16>
      %315 = vector.shape_cast %314 : vector<1x3x16xbf16> to vector<3x16xbf16>
      %cst_314 = arith.constant dense<0.000000e+00> : vector<75x16xf32>
      %316 = tpu.matmul %313, %315, %cst_314 {dimension_numbers = #tpu.dot_dimension_numbers<[1], [0], [0], [1], [0, 0, 1, 1], [], []>} : vector<75x3xbf16>, vector<3x16xbf16>, vector<75x16xf32> -> vector<75x16xf32>
      %317 = arith.addf %308, %316 : vector<75x16xf32>
      %c2_i32_315 = arith.constant 2 : i32
      %318 = arith.muli %c2_i32_315, %100 : i32
      %c4_i32_316 = arith.constant 4 : i32
      %319 = arith.addi %318, %c4_i32_316 : i32
      %c0_317 = arith.constant 0 : index
      %320 = arith.index_cast %319 : i32 to index
      %c4_318 = arith.constant 4 : index
      %c0_319 = arith.constant 0 : index
      %321 = vector.load %arg1[%c0_317, %320, %c4_318, %c0_319] : memref<1x40x80x3xbf16, #tpu.memory_space<vmem>>, vector<1x1x75x3xbf16>
      %322 = vector.shape_cast %321 : vector<1x1x75x3xbf16> to vector<75x3xbf16>
      %c24 = arith.constant 24 : index
      %c0_320 = arith.constant 0 : index
      %c0_321 = arith.constant 0 : index
      %323 = vector.load %arg2[%c24, %c0_320, %c0_321] : memref<25x3x16xbf16, #tpu.memory_space<vmem>>, vector<1x3x16xbf16>
      %324 = vector.shape_cast %323 : vector<1x3x16xbf16> to vector<3x16xbf16>
      %cst_322 = arith.constant dense<0.000000e+00> : vector<75x16xf32>
      %325 = tpu.matmul %322, %324, %cst_322 {dimension_numbers = #tpu.dot_dimension_numbers<[1], [0], [0], [1], [0, 0, 1, 1], [], []>} : vector<75x3xbf16>, vector<3x16xbf16>, vector<75x16xf32> -> vector<75x16xf32>
      %326 = arith.addf %317, %325 : vector<75x16xf32>
      %cst_323 = arith.constant dense<0.000000e+00> : vector<38x16xf32>
      %327 = tpu.matmul %0, %326, %cst_323 {dimension_numbers = #tpu.dot_dimension_numbers<[1], [0], [0], [1], [0, 0, 1, 1], [], []>} : vector<38x75xf32>, vector<75x16xf32>, vector<38x16xf32> -> vector<38x16xf32>
      %328 = vector.broadcast %1 : vector<1x16xf32> to vector<38x16xf32>
      %329 = arith.addf %327, %328 : vector<38x16xf32>
      %cst_324 = arith.constant 0.000000e+00 : f32
      %330 = vector.broadcast %cst_324 : f32 to vector<38x16xf32>
      %331 = arith.maximumf %329, %330 : vector<38x16xf32>
      %332 = arith.truncf %331 : vector<38x16xf32> to vector<38x16xbf16>
      %333 = arith.index_cast %100 : i32 to index
      %c0_325 = arith.constant 0 : index
      %c0_326 = arith.constant 0 : index
      %334 = vector.load %arg14[%333, %c0_325, %c0_326] : memref<18x38x16xbf16, #tpu.memory_space<vmem>>, vector<1x38x16xbf16>
      %335 = vector.shape_cast %334 : vector<1x38x16xbf16> to vector<38x16xbf16>
      %336 = vector.shape_cast %332 : vector<38x16xbf16> to vector<1x38x16xbf16>
      tpu.vector_store %arg14[%333, %c0_325, %c0_326], %336 {strides = array<i32>} : memref<18x38x16xbf16, #tpu.memory_space<vmem>>, vector<1x38x16xbf16>,
    }
    %c18_i32_3 = arith.constant 18 : i32
    %c0_4 = arith.constant 0 : index
    %c0_5 = arith.constant 0 : index
    %3 = vector.load %arg7[%c0_4, %c0_5] : memref<17x33xf32, #tpu.memory_space<vmem>>, vector<17x33xf32>
    %c0_6 = arith.constant 0 : index
    %c0_7 = arith.constant 0 : index
    %4 = vector.load %arg6[%c0_6, %c0_7] : memref<1x32xf32, #tpu.memory_space<vmem>>, vector<1x32xf32>
    %c0_i32_8 = arith.constant 0 : i32
    %c7_i32 = arith.constant 7 : i32
    %5 = arith.addi %c0_i32_8, %c7_i32 : i32
    %c1_i32_9 = arith.constant 1 : i32
    scf.for %arg17 = %c0_i32_8 to %5 step %c1_i32_9  : i32 {
      %c1_i32_108 = arith.constant 1 : i32
      %99 = arith.muli %arg17, %c1_i32_108 : i32
      %c0_i32_109 = arith.constant 0 : i32
      %100 = arith.addi %c0_i32_109, %99 : i32
      %cst_110 = arith.constant 0.000000e+00 : f32
      %101 = vector.broadcast %cst_110 : f32 to vector<33x32xf32>
      %c2_i32_111 = arith.constant 2 : i32
      %102 = arith.muli %c2_i32_111, %100 : i32
      %c0_i32_112 = arith.constant 0 : i32
      %103 = arith.addi %102, %c0_i32_112 : i32
      %104 = arith.index_cast %103 : i32 to index
      %c0_113 = arith.constant 0 : index
      %c0_114 = arith.constant 0 : index
      %105 = vector.load %arg14[%104, %c0_113, %c0_114] : memref<18x38x16xbf16, #tpu.memory_space<vmem>>, vector<1x33x16xbf16>
      %106 = vector.shape_cast %105 : vector<1x33x16xbf16> to vector<33x16xbf16>
      %c0_115 = arith.constant 0 : index
      %c0_116 = arith.constant 0 : index
      %c0_117 = arith.constant 0 : index
      %107 = vector.load %arg5[%c0_115, %c0_116, %c0_117] : memref<25x16x32xbf16, #tpu.memory_space<vmem>>, vector<1x16x32xbf16>
      %108 = vector.shape_cast %107 : vector<1x16x32xbf16> to vector<16x32xbf16>
      %cst_118 = arith.constant dense<0.000000e+00> : vector<33x32xf32>
      %109 = tpu.matmul %106, %108, %cst_118 {dimension_numbers = #tpu.dot_dimension_numbers<[1], [0], [0], [1], [0, 0, 1, 1], [], []>} : vector<33x16xbf16>, vector<16x32xbf16>, vector<33x32xf32> -> vector<33x32xf32>
      %110 = arith.addf %101, %109 : vector<33x32xf32>
      %c2_i32_119 = arith.constant 2 : i32
      %111 = arith.muli %c2_i32_119, %100 : i32
      %c0_i32_120 = arith.constant 0 : i32
      %112 = arith.addi %111, %c0_i32_120 : i32
      %113 = arith.index_cast %112 : i32 to index
      %c1_121 = arith.constant 1 : index
      %c0_122 = arith.constant 0 : index
      %114 = vector.load %arg14[%113, %c1_121, %c0_122] : memref<18x38x16xbf16, #tpu.memory_space<vmem>>, vector<1x33x16xbf16>
      %115 = vector.shape_cast %114 : vector<1x33x16xbf16> to vector<33x16xbf16>
      %c1_123 = arith.constant 1 : index
      %c0_124 = arith.constant 0 : index
      %c0_125 = arith.constant 0 : index
      %116 = vector.load %arg5[%c1_123, %c0_124, %c0_125] : memref<25x16x32xbf16, #tpu.memory_space<vmem>>, vector<1x16x32xbf16>
      %117 = vector.shape_cast %116 : vector<1x16x32xbf16> to vector<16x32xbf16>
      %cst_126 = arith.constant dense<0.000000e+00> : vector<33x32xf32>
      %118 = tpu.matmul %115, %117, %cst_126 {dimension_numbers = #tpu.dot_dimension_numbers<[1], [0], [0], [1], [0, 0, 1, 1], [], []>} : vector<33x16xbf16>, vector<16x32xbf16>, vector<33x32xf32> -> vector<33x32xf32>
      %119 = arith.addf %110, %118 : vector<33x32xf32>
      %c2_i32_127 = arith.constant 2 : i32
      %120 = arith.muli %c2_i32_127, %100 : i32
      %c0_i32_128 = arith.constant 0 : i32
      %121 = arith.addi %120, %c0_i32_128 : i32
      %122 = arith.index_cast %121 : i32 to index
      %c2_129 = arith.constant 2 : index
      %c0_130 = arith.constant 0 : index
      %123 = vector.load %arg14[%122, %c2_129, %c0_130] : memref<18x38x16xbf16, #tpu.memory_space<vmem>>, vector<1x33x16xbf16>
      %124 = vector.shape_cast %123 : vector<1x33x16xbf16> to vector<33x16xbf16>
      %c2_131 = arith.constant 2 : index
      %c0_132 = arith.constant 0 : index
      %c0_133 = arith.constant 0 : index
      %125 = vector.load %arg5[%c2_131, %c0_132, %c0_133] : memref<25x16x32xbf16, #tpu.memory_space<vmem>>, vector<1x16x32xbf16>
      %126 = vector.shape_cast %125 : vector<1x16x32xbf16> to vector<16x32xbf16>
      %cst_134 = arith.constant dense<0.000000e+00> : vector<33x32xf32>
      %127 = tpu.matmul %124, %126, %cst_134 {dimension_numbers = #tpu.dot_dimension_numbers<[1], [0], [0], [1], [0, 0, 1, 1], [], []>} : vector<33x16xbf16>, vector<16x32xbf16>, vector<33x32xf32> -> vector<33x32xf32>
      %128 = arith.addf %119, %127 : vector<33x32xf32>
      %c2_i32_135 = arith.constant 2 : i32
      %129 = arith.muli %c2_i32_135, %100 : i32
      %c0_i32_136 = arith.constant 0 : i32
      %130 = arith.addi %129, %c0_i32_136 : i32
      %131 = arith.index_cast %130 : i32 to index
      %c3_137 = arith.constant 3 : index
      %c0_138 = arith.constant 0 : index
      %132 = vector.load %arg14[%131, %c3_137, %c0_138] : memref<18x38x16xbf16, #tpu.memory_space<vmem>>, vector<1x33x16xbf16>
      %133 = vector.shape_cast %132 : vector<1x33x16xbf16> to vector<33x16xbf16>
      %c3_139 = arith.constant 3 : index
      %c0_140 = arith.constant 0 : index
      %c0_141 = arith.constant 0 : index
      %134 = vector.load %arg5[%c3_139, %c0_140, %c0_141] : memref<25x16x32xbf16, #tpu.memory_space<vmem>>, vector<1x16x32xbf16>
      %135 = vector.shape_cast %134 : vector<1x16x32xbf16> to vector<16x32xbf16>
      %cst_142 = arith.constant dense<0.000000e+00> : vector<33x32xf32>
      %136 = tpu.matmul %133, %135, %cst_142 {dimension_numbers = #tpu.dot_dimension_numbers<[1], [0], [0], [1], [0, 0, 1, 1], [], []>} : vector<33x16xbf16>, vector<16x32xbf16>, vector<33x32xf32> -> vector<33x32xf32>
      %137 = arith.addf %128, %136 : vector<33x32xf32>
      %c2_i32_143 = arith.constant 2 : i32
      %138 = arith.muli %c2_i32_143, %100 : i32
      %c0_i32_144 = arith.constant 0 : i32
      %139 = arith.addi %138, %c0_i32_144 : i32
      %140 = arith.index_cast %139 : i32 to index
      %c4_145 = arith.constant 4 : index
      %c0_146 = arith.constant 0 : index
      %141 = vector.load %arg14[%140, %c4_145, %c0_146] : memref<18x38x16xbf16, #tpu.memory_space<vmem>>, vector<1x33x16xbf16>
      %142 = vector.shape_cast %141 : vector<1x33x16xbf16> to vector<33x16xbf16>
      %c4_147 = arith.constant 4 : index
      %c0_148 = arith.constant 0 : index
      %c0_149 = arith.constant 0 : index
      %143 = vector.load %arg5[%c4_147, %c0_148, %c0_149] : memref<25x16x32xbf16, #tpu.memory_space<vmem>>, vector<1x16x32xbf16>
      %144 = vector.shape_cast %143 : vector<1x16x32xbf16> to vector<16x32xbf16>
      %cst_150 = arith.constant dense<0.000000e+00> : vector<33x32xf32>
      %145 = tpu.matmul %142, %144, %cst_150 {dimension_numbers = #tpu.dot_dimension_numbers<[1], [0], [0], [1], [0, 0, 1, 1], [], []>} : vector<33x16xbf16>, vector<16x32xbf16>, vector<33x32xf32> -> vector<33x32xf32>
      %146 = arith.addf %137, %145 : vector<33x32xf32>
      %c2_i32_151 = arith.constant 2 : i32
      %147 = arith.muli %c2_i32_151, %100 : i32
      %c1_i32_152 = arith.constant 1 : i32
      %148 = arith.addi %147, %c1_i32_152 : i32
      %149 = arith.index_cast %148 : i32 to index
      %c0_153 = arith.constant 0 : index
      %c0_154 = arith.constant 0 : index
      %150 = vector.load %arg14[%149, %c0_153, %c0_154] : memref<18x38x16xbf16, #tpu.memory_space<vmem>>, vector<1x33x16xbf16>
      %151 = vector.shape_cast %150 : vector<1x33x16xbf16> to vector<33x16xbf16>
      %c5_155 = arith.constant 5 : index
      %c0_156 = arith.constant 0 : index
      %c0_157 = arith.constant 0 : index
      %152 = vector.load %arg5[%c5_155, %c0_156, %c0_157] : memref<25x16x32xbf16, #tpu.memory_space<vmem>>, vector<1x16x32xbf16>
      %153 = vector.shape_cast %152 : vector<1x16x32xbf16> to vector<16x32xbf16>
      %cst_158 = arith.constant dense<0.000000e+00> : vector<33x32xf32>
      %154 = tpu.matmul %151, %153, %cst_158 {dimension_numbers = #tpu.dot_dimension_numbers<[1], [0], [0], [1], [0, 0, 1, 1], [], []>} : vector<33x16xbf16>, vector<16x32xbf16>, vector<33x32xf32> -> vector<33x32xf32>
      %155 = arith.addf %146, %154 : vector<33x32xf32>
      %c2_i32_159 = arith.constant 2 : i32
      %156 = arith.muli %c2_i32_159, %100 : i32
      %c1_i32_160 = arith.constant 1 : i32
      %157 = arith.addi %156, %c1_i32_160 : i32
      %158 = arith.index_cast %157 : i32 to index
      %c1_161 = arith.constant 1 : index
      %c0_162 = arith.constant 0 : index
      %159 = vector.load %arg14[%158, %c1_161, %c0_162] : memref<18x38x16xbf16, #tpu.memory_space<vmem>>, vector<1x33x16xbf16>
      %160 = vector.shape_cast %159 : vector<1x33x16xbf16> to vector<33x16xbf16>
      %c6_163 = arith.constant 6 : index
      %c0_164 = arith.constant 0 : index
      %c0_165 = arith.constant 0 : index
      %161 = vector.load %arg5[%c6_163, %c0_164, %c0_165] : memref<25x16x32xbf16, #tpu.memory_space<vmem>>, vector<1x16x32xbf16>
      %162 = vector.shape_cast %161 : vector<1x16x32xbf16> to vector<16x32xbf16>
      %cst_166 = arith.constant dense<0.000000e+00> : vector<33x32xf32>
      %163 = tpu.matmul %160, %162, %cst_166 {dimension_numbers = #tpu.dot_dimension_numbers<[1], [0], [0], [1], [0, 0, 1, 1], [], []>} : vector<33x16xbf16>, vector<16x32xbf16>, vector<33x32xf32> -> vector<33x32xf32>
      %164 = arith.addf %155, %163 : vector<33x32xf32>
      %c2_i32_167 = arith.constant 2 : i32
      %165 = arith.muli %c2_i32_167, %100 : i32
      %c1_i32_168 = arith.constant 1 : i32
      %166 = arith.addi %165, %c1_i32_168 : i32
      %167 = arith.index_cast %166 : i32 to index
      %c2_169 = arith.constant 2 : index
      %c0_170 = arith.constant 0 : index
      %168 = vector.load %arg14[%167, %c2_169, %c0_170] : memref<18x38x16xbf16, #tpu.memory_space<vmem>>, vector<1x33x16xbf16>
      %169 = vector.shape_cast %168 : vector<1x33x16xbf16> to vector<33x16xbf16>
      %c7_171 = arith.constant 7 : index
      %c0_172 = arith.constant 0 : index
      %c0_173 = arith.constant 0 : index
      %170 = vector.load %arg5[%c7_171, %c0_172, %c0_173] : memref<25x16x32xbf16, #tpu.memory_space<vmem>>, vector<1x16x32xbf16>
      %171 = vector.shape_cast %170 : vector<1x16x32xbf16> to vector<16x32xbf16>
      %cst_174 = arith.constant dense<0.000000e+00> : vector<33x32xf32>
      %172 = tpu.matmul %169, %171, %cst_174 {dimension_numbers = #tpu.dot_dimension_numbers<[1], [0], [0], [1], [0, 0, 1, 1], [], []>} : vector<33x16xbf16>, vector<16x32xbf16>, vector<33x32xf32> -> vector<33x32xf32>
      %173 = arith.addf %164, %172 : vector<33x32xf32>
      %c2_i32_175 = arith.constant 2 : i32
      %174 = arith.muli %c2_i32_175, %100 : i32
      %c1_i32_176 = arith.constant 1 : i32
      %175 = arith.addi %174, %c1_i32_176 : i32
      %176 = arith.index_cast %175 : i32 to index
      %c3_177 = arith.constant 3 : index
      %c0_178 = arith.constant 0 : index
      %177 = vector.load %arg14[%176, %c3_177, %c0_178] : memref<18x38x16xbf16, #tpu.memory_space<vmem>>, vector<1x33x16xbf16>
      %178 = vector.shape_cast %177 : vector<1x33x16xbf16> to vector<33x16xbf16>
      %c8_179 = arith.constant 8 : index
      %c0_180 = arith.constant 0 : index
      %c0_181 = arith.constant 0 : index
      %179 = vector.load %arg5[%c8_179, %c0_180, %c0_181] : memref<25x16x32xbf16, #tpu.memory_space<vmem>>, vector<1x16x32xbf16>
      %180 = vector.shape_cast %179 : vector<1x16x32xbf16> to vector<16x32xbf16>
      %cst_182 = arith.constant dense<0.000000e+00> : vector<33x32xf32>
      %181 = tpu.matmul %178, %180, %cst_182 {dimension_numbers = #tpu.dot_dimension_numbers<[1], [0], [0], [1], [0, 0, 1, 1], [], []>} : vector<33x16xbf16>, vector<16x32xbf16>, vector<33x32xf32> -> vector<33x32xf32>
      %182 = arith.addf %173, %181 : vector<33x32xf32>
      %c2_i32_183 = arith.constant 2 : i32
      %183 = arith.muli %c2_i32_183, %100 : i32
      %c1_i32_184 = arith.constant 1 : i32
      %184 = arith.addi %183, %c1_i32_184 : i32
      %185 = arith.index_cast %184 : i32 to index
      %c4_185 = arith.constant 4 : index
      %c0_186 = arith.constant 0 : index
      %186 = vector.load %arg14[%185, %c4_185, %c0_186] : memref<18x38x16xbf16, #tpu.memory_space<vmem>>, vector<1x33x16xbf16>
      %187 = vector.shape_cast %186 : vector<1x33x16xbf16> to vector<33x16xbf16>
      %c9_187 = arith.constant 9 : index
      %c0_188 = arith.constant 0 : index
      %c0_189 = arith.constant 0 : index
      %188 = vector.load %arg5[%c9_187, %c0_188, %c0_189] : memref<25x16x32xbf16, #tpu.memory_space<vmem>>, vector<1x16x32xbf16>
      %189 = vector.shape_cast %188 : vector<1x16x32xbf16> to vector<16x32xbf16>
      %cst_190 = arith.constant dense<0.000000e+00> : vector<33x32xf32>
      %190 = tpu.matmul %187, %189, %cst_190 {dimension_numbers = #tpu.dot_dimension_numbers<[1], [0], [0], [1], [0, 0, 1, 1], [], []>} : vector<33x16xbf16>, vector<16x32xbf16>, vector<33x32xf32> -> vector<33x32xf32>
      %191 = arith.addf %182, %190 : vector<33x32xf32>
      %c2_i32_191 = arith.constant 2 : i32
      %192 = arith.muli %c2_i32_191, %100 : i32
      %c2_i32_192 = arith.constant 2 : i32
      %193 = arith.addi %192, %c2_i32_192 : i32
      %194 = arith.index_cast %193 : i32 to index
      %c0_193 = arith.constant 0 : index
      %c0_194 = arith.constant 0 : index
      %195 = vector.load %arg14[%194, %c0_193, %c0_194] : memref<18x38x16xbf16, #tpu.memory_space<vmem>>, vector<1x33x16xbf16>
      %196 = vector.shape_cast %195 : vector<1x33x16xbf16> to vector<33x16xbf16>
      %c10_195 = arith.constant 10 : index
      %c0_196 = arith.constant 0 : index
      %c0_197 = arith.constant 0 : index
      %197 = vector.load %arg5[%c10_195, %c0_196, %c0_197] : memref<25x16x32xbf16, #tpu.memory_space<vmem>>, vector<1x16x32xbf16>
      %198 = vector.shape_cast %197 : vector<1x16x32xbf16> to vector<16x32xbf16>
      %cst_198 = arith.constant dense<0.000000e+00> : vector<33x32xf32>
      %199 = tpu.matmul %196, %198, %cst_198 {dimension_numbers = #tpu.dot_dimension_numbers<[1], [0], [0], [1], [0, 0, 1, 1], [], []>} : vector<33x16xbf16>, vector<16x32xbf16>, vector<33x32xf32> -> vector<33x32xf32>
      %200 = arith.addf %191, %199 : vector<33x32xf32>
      %c2_i32_199 = arith.constant 2 : i32
      %201 = arith.muli %c2_i32_199, %100 : i32
      %c2_i32_200 = arith.constant 2 : i32
      %202 = arith.addi %201, %c2_i32_200 : i32
      %203 = arith.index_cast %202 : i32 to index
      %c1_201 = arith.constant 1 : index
      %c0_202 = arith.constant 0 : index
      %204 = vector.load %arg14[%203, %c1_201, %c0_202] : memref<18x38x16xbf16, #tpu.memory_space<vmem>>, vector<1x33x16xbf16>
      %205 = vector.shape_cast %204 : vector<1x33x16xbf16> to vector<33x16xbf16>
      %c11_203 = arith.constant 11 : index
      %c0_204 = arith.constant 0 : index
      %c0_205 = arith.constant 0 : index
      %206 = vector.load %arg5[%c11_203, %c0_204, %c0_205] : memref<25x16x32xbf16, #tpu.memory_space<vmem>>, vector<1x16x32xbf16>
      %207 = vector.shape_cast %206 : vector<1x16x32xbf16> to vector<16x32xbf16>
      %cst_206 = arith.constant dense<0.000000e+00> : vector<33x32xf32>
      %208 = tpu.matmul %205, %207, %cst_206 {dimension_numbers = #tpu.dot_dimension_numbers<[1], [0], [0], [1], [0, 0, 1, 1], [], []>} : vector<33x16xbf16>, vector<16x32xbf16>, vector<33x32xf32> -> vector<33x32xf32>
      %209 = arith.addf %200, %208 : vector<33x32xf32>
      %c2_i32_207 = arith.constant 2 : i32
      %210 = arith.muli %c2_i32_207, %100 : i32
      %c2_i32_208 = arith.constant 2 : i32
      %211 = arith.addi %210, %c2_i32_208 : i32
      %212 = arith.index_cast %211 : i32 to index
      %c2_209 = arith.constant 2 : index
      %c0_210 = arith.constant 0 : index
      %213 = vector.load %arg14[%212, %c2_209, %c0_210] : memref<18x38x16xbf16, #tpu.memory_space<vmem>>, vector<1x33x16xbf16>
      %214 = vector.shape_cast %213 : vector<1x33x16xbf16> to vector<33x16xbf16>
      %c12_211 = arith.constant 12 : index
      %c0_212 = arith.constant 0 : index
      %c0_213 = arith.constant 0 : index
      %215 = vector.load %arg5[%c12_211, %c0_212, %c0_213] : memref<25x16x32xbf16, #tpu.memory_space<vmem>>, vector<1x16x32xbf16>
      %216 = vector.shape_cast %215 : vector<1x16x32xbf16> to vector<16x32xbf16>
      %cst_214 = arith.constant dense<0.000000e+00> : vector<33x32xf32>
      %217 = tpu.matmul %214, %216, %cst_214 {dimension_numbers = #tpu.dot_dimension_numbers<[1], [0], [0], [1], [0, 0, 1, 1], [], []>} : vector<33x16xbf16>, vector<16x32xbf16>, vector<33x32xf32> -> vector<33x32xf32>
      %218 = arith.addf %209, %217 : vector<33x32xf32>
      %c2_i32_215 = arith.constant 2 : i32
      %219 = arith.muli %c2_i32_215, %100 : i32
      %c2_i32_216 = arith.constant 2 : i32
      %220 = arith.addi %219, %c2_i32_216 : i32
      %221 = arith.index_cast %220 : i32 to index
      %c3_217 = arith.constant 3 : index
      %c0_218 = arith.constant 0 : index
      %222 = vector.load %arg14[%221, %c3_217, %c0_218] : memref<18x38x16xbf16, #tpu.memory_space<vmem>>, vector<1x33x16xbf16>
      %223 = vector.shape_cast %222 : vector<1x33x16xbf16> to vector<33x16xbf16>
      %c13_219 = arith.constant 13 : index
      %c0_220 = arith.constant 0 : index
      %c0_221 = arith.constant 0 : index
      %224 = vector.load %arg5[%c13_219, %c0_220, %c0_221] : memref<25x16x32xbf16, #tpu.memory_space<vmem>>, vector<1x16x32xbf16>
      %225 = vector.shape_cast %224 : vector<1x16x32xbf16> to vector<16x32xbf16>
      %cst_222 = arith.constant dense<0.000000e+00> : vector<33x32xf32>
      %226 = tpu.matmul %223, %225, %cst_222 {dimension_numbers = #tpu.dot_dimension_numbers<[1], [0], [0], [1], [0, 0, 1, 1], [], []>} : vector<33x16xbf16>, vector<16x32xbf16>, vector<33x32xf32> -> vector<33x32xf32>
      %227 = arith.addf %218, %226 : vector<33x32xf32>
      %c2_i32_223 = arith.constant 2 : i32
      %228 = arith.muli %c2_i32_223, %100 : i32
      %c2_i32_224 = arith.constant 2 : i32
      %229 = arith.addi %228, %c2_i32_224 : i32
      %230 = arith.index_cast %229 : i32 to index
      %c4_225 = arith.constant 4 : index
      %c0_226 = arith.constant 0 : index
      %231 = vector.load %arg14[%230, %c4_225, %c0_226] : memref<18x38x16xbf16, #tpu.memory_space<vmem>>, vector<1x33x16xbf16>
      %232 = vector.shape_cast %231 : vector<1x33x16xbf16> to vector<33x16xbf16>
      %c14 = arith.constant 14 : index
      %c0_227 = arith.constant 0 : index
      %c0_228 = arith.constant 0 : index
      %233 = vector.load %arg5[%c14, %c0_227, %c0_228] : memref<25x16x32xbf16, #tpu.memory_space<vmem>>, vector<1x16x32xbf16>
      %234 = vector.shape_cast %233 : vector<1x16x32xbf16> to vector<16x32xbf16>
      %cst_229 = arith.constant dense<0.000000e+00> : vector<33x32xf32>
      %235 = tpu.matmul %232, %234, %cst_229 {dimension_numbers = #tpu.dot_dimension_numbers<[1], [0], [0], [1], [0, 0, 1, 1], [], []>} : vector<33x16xbf16>, vector<16x32xbf16>, vector<33x32xf32> -> vector<33x32xf32>
      %236 = arith.addf %227, %235 : vector<33x32xf32>
      %c2_i32_230 = arith.constant 2 : i32
      %237 = arith.muli %c2_i32_230, %100 : i32
      %c3_i32 = arith.constant 3 : i32
      %238 = arith.addi %237, %c3_i32 : i32
      %239 = arith.index_cast %238 : i32 to index
      %c0_231 = arith.constant 0 : index
      %c0_232 = arith.constant 0 : index
      %240 = vector.load %arg14[%239, %c0_231, %c0_232] : memref<18x38x16xbf16, #tpu.memory_space<vmem>>, vector<1x33x16xbf16>
      %241 = vector.shape_cast %240 : vector<1x33x16xbf16> to vector<33x16xbf16>
      %c15 = arith.constant 15 : index
      %c0_233 = arith.constant 0 : index
      %c0_234 = arith.constant 0 : index
      %242 = vector.load %arg5[%c15, %c0_233, %c0_234] : memref<25x16x32xbf16, #tpu.memory_space<vmem>>, vector<1x16x32xbf16>
      %243 = vector.shape_cast %242 : vector<1x16x32xbf16> to vector<16x32xbf16>
      %cst_235 = arith.constant dense<0.000000e+00> : vector<33x32xf32>
      %244 = tpu.matmul %241, %243, %cst_235 {dimension_numbers = #tpu.dot_dimension_numbers<[1], [0], [0], [1], [0, 0, 1, 1], [], []>} : vector<33x16xbf16>, vector<16x32xbf16>, vector<33x32xf32> -> vector<33x32xf32>
      %245 = arith.addf %236, %244 : vector<33x32xf32>
      %c2_i32_236 = arith.constant 2 : i32
      %246 = arith.muli %c2_i32_236, %100 : i32
      %c3_i32_237 = arith.constant 3 : i32
      %247 = arith.addi %246, %c3_i32_237 : i32
      %248 = arith.index_cast %247 : i32 to index
      %c1_238 = arith.constant 1 : index
      %c0_239 = arith.constant 0 : index
      %249 = vector.load %arg14[%248, %c1_238, %c0_239] : memref<18x38x16xbf16, #tpu.memory_space<vmem>>, vector<1x33x16xbf16>
      %250 = vector.shape_cast %249 : vector<1x33x16xbf16> to vector<33x16xbf16>
      %c16 = arith.constant 16 : index
      %c0_240 = arith.constant 0 : index
      %c0_241 = arith.constant 0 : index
      %251 = vector.load %arg5[%c16, %c0_240, %c0_241] : memref<25x16x32xbf16, #tpu.memory_space<vmem>>, vector<1x16x32xbf16>
      %252 = vector.shape_cast %251 : vector<1x16x32xbf16> to vector<16x32xbf16>
      %cst_242 = arith.constant dense<0.000000e+00> : vector<33x32xf32>
      %253 = tpu.matmul %250, %252, %cst_242 {dimension_numbers = #tpu.dot_dimension_numbers<[1], [0], [0], [1], [0, 0, 1, 1], [], []>} : vector<33x16xbf16>, vector<16x32xbf16>, vector<33x32xf32> -> vector<33x32xf32>
      %254 = arith.addf %245, %253 : vector<33x32xf32>
      %c2_i32_243 = arith.constant 2 : i32
      %255 = arith.muli %c2_i32_243, %100 : i32
      %c3_i32_244 = arith.constant 3 : i32
      %256 = arith.addi %255, %c3_i32_244 : i32
      %257 = arith.index_cast %256 : i32 to index
      %c2_245 = arith.constant 2 : index
      %c0_246 = arith.constant 0 : index
      %258 = vector.load %arg14[%257, %c2_245, %c0_246] : memref<18x38x16xbf16, #tpu.memory_space<vmem>>, vector<1x33x16xbf16>
      %259 = vector.shape_cast %258 : vector<1x33x16xbf16> to vector<33x16xbf16>
      %c17 = arith.constant 17 : index
      %c0_247 = arith.constant 0 : index
      %c0_248 = arith.constant 0 : index
      %260 = vector.load %arg5[%c17, %c0_247, %c0_248] : memref<25x16x32xbf16, #tpu.memory_space<vmem>>, vector<1x16x32xbf16>
      %261 = vector.shape_cast %260 : vector<1x16x32xbf16> to vector<16x32xbf16>
      %cst_249 = arith.constant dense<0.000000e+00> : vector<33x32xf32>
      %262 = tpu.matmul %259, %261, %cst_249 {dimension_numbers = #tpu.dot_dimension_numbers<[1], [0], [0], [1], [0, 0, 1, 1], [], []>} : vector<33x16xbf16>, vector<16x32xbf16>, vector<33x32xf32> -> vector<33x32xf32>
      %263 = arith.addf %254, %262 : vector<33x32xf32>
      %c2_i32_250 = arith.constant 2 : i32
      %264 = arith.muli %c2_i32_250, %100 : i32
      %c3_i32_251 = arith.constant 3 : i32
      %265 = arith.addi %264, %c3_i32_251 : i32
      %266 = arith.index_cast %265 : i32 to index
      %c3_252 = arith.constant 3 : index
      %c0_253 = arith.constant 0 : index
      %267 = vector.load %arg14[%266, %c3_252, %c0_253] : memref<18x38x16xbf16, #tpu.memory_space<vmem>>, vector<1x33x16xbf16>
      %268 = vector.shape_cast %267 : vector<1x33x16xbf16> to vector<33x16xbf16>
      %c18 = arith.constant 18 : index
      %c0_254 = arith.constant 0 : index
      %c0_255 = arith.constant 0 : index
      %269 = vector.load %arg5[%c18, %c0_254, %c0_255] : memref<25x16x32xbf16, #tpu.memory_space<vmem>>, vector<1x16x32xbf16>
      %270 = vector.shape_cast %269 : vector<1x16x32xbf16> to vector<16x32xbf16>
      %cst_256 = arith.constant dense<0.000000e+00> : vector<33x32xf32>
      %271 = tpu.matmul %268, %270, %cst_256 {dimension_numbers = #tpu.dot_dimension_numbers<[1], [0], [0], [1], [0, 0, 1, 1], [], []>} : vector<33x16xbf16>, vector<16x32xbf16>, vector<33x32xf32> -> vector<33x32xf32>
      %272 = arith.addf %263, %271 : vector<33x32xf32>
      %c2_i32_257 = arith.constant 2 : i32
      %273 = arith.muli %c2_i32_257, %100 : i32
      %c3_i32_258 = arith.constant 3 : i32
      %274 = arith.addi %273, %c3_i32_258 : i32
      %275 = arith.index_cast %274 : i32 to index
      %c4_259 = arith.constant 4 : index
      %c0_260 = arith.constant 0 : index
      %276 = vector.load %arg14[%275, %c4_259, %c0_260] : memref<18x38x16xbf16, #tpu.memory_space<vmem>>, vector<1x33x16xbf16>
      %277 = vector.shape_cast %276 : vector<1x33x16xbf16> to vector<33x16xbf16>
      %c19 = arith.constant 19 : index
      %c0_261 = arith.constant 0 : index
      %c0_262 = arith.constant 0 : index
      %278 = vector.load %arg5[%c19, %c0_261, %c0_262] : memref<25x16x32xbf16, #tpu.memory_space<vmem>>, vector<1x16x32xbf16>
      %279 = vector.shape_cast %278 : vector<1x16x32xbf16> to vector<16x32xbf16>
      %cst_263 = arith.constant dense<0.000000e+00> : vector<33x32xf32>
      %280 = tpu.matmul %277, %279, %cst_263 {dimension_numbers = #tpu.dot_dimension_numbers<[1], [0], [0], [1], [0, 0, 1, 1], [], []>} : vector<33x16xbf16>, vector<16x32xbf16>, vector<33x32xf32> -> vector<33x32xf32>
      %281 = arith.addf %272, %280 : vector<33x32xf32>
      %c2_i32_264 = arith.constant 2 : i32
      %282 = arith.muli %c2_i32_264, %100 : i32
      %c4_i32 = arith.constant 4 : i32
      %283 = arith.addi %282, %c4_i32 : i32
      %284 = arith.index_cast %283 : i32 to index
      %c0_265 = arith.constant 0 : index
      %c0_266 = arith.constant 0 : index
      %285 = vector.load %arg14[%284, %c0_265, %c0_266] : memref<18x38x16xbf16, #tpu.memory_space<vmem>>, vector<1x33x16xbf16>
      %286 = vector.shape_cast %285 : vector<1x33x16xbf16> to vector<33x16xbf16>
      %c20 = arith.constant 20 : index
      %c0_267 = arith.constant 0 : index
      %c0_268 = arith.constant 0 : index
      %287 = vector.load %arg5[%c20, %c0_267, %c0_268] : memref<25x16x32xbf16, #tpu.memory_space<vmem>>, vector<1x16x32xbf16>
      %288 = vector.shape_cast %287 : vector<1x16x32xbf16> to vector<16x32xbf16>
      %cst_269 = arith.constant dense<0.000000e+00> : vector<33x32xf32>
      %289 = tpu.matmul %286, %288, %cst_269 {dimension_numbers = #tpu.dot_dimension_numbers<[1], [0], [0], [1], [0, 0, 1, 1], [], []>} : vector<33x16xbf16>, vector<16x32xbf16>, vector<33x32xf32> -> vector<33x32xf32>
      %290 = arith.addf %281, %289 : vector<33x32xf32>
      %c2_i32_270 = arith.constant 2 : i32
      %291 = arith.muli %c2_i32_270, %100 : i32
      %c4_i32_271 = arith.constant 4 : i32
      %292 = arith.addi %291, %c4_i32_271 : i32
      %293 = arith.index_cast %292 : i32 to index
      %c1_272 = arith.constant 1 : index
      %c0_273 = arith.constant 0 : index
      %294 = vector.load %arg14[%293, %c1_272, %c0_273] : memref<18x38x16xbf16, #tpu.memory_space<vmem>>, vector<1x33x16xbf16>
      %295 = vector.shape_cast %294 : vector<1x33x16xbf16> to vector<33x16xbf16>
      %c21 = arith.constant 21 : index
      %c0_274 = arith.constant 0 : index
      %c0_275 = arith.constant 0 : index
      %296 = vector.load %arg5[%c21, %c0_274, %c0_275] : memref<25x16x32xbf16, #tpu.memory_space<vmem>>, vector<1x16x32xbf16>
      %297 = vector.shape_cast %296 : vector<1x16x32xbf16> to vector<16x32xbf16>
      %cst_276 = arith.constant dense<0.000000e+00> : vector<33x32xf32>
      %298 = tpu.matmul %295, %297, %cst_276 {dimension_numbers = #tpu.dot_dimension_numbers<[1], [0], [0], [1], [0, 0, 1, 1], [], []>} : vector<33x16xbf16>, vector<16x32xbf16>, vector<33x32xf32> -> vector<33x32xf32>
      %299 = arith.addf %290, %298 : vector<33x32xf32>
      %c2_i32_277 = arith.constant 2 : i32
      %300 = arith.muli %c2_i32_277, %100 : i32
      %c4_i32_278 = arith.constant 4 : i32
      %301 = arith.addi %300, %c4_i32_278 : i32
      %302 = arith.index_cast %301 : i32 to index
      %c2_279 = arith.constant 2 : index
      %c0_280 = arith.constant 0 : index
      %303 = vector.load %arg14[%302, %c2_279, %c0_280] : memref<18x38x16xbf16, #tpu.memory_space<vmem>>, vector<1x33x16xbf16>
      %304 = vector.shape_cast %303 : vector<1x33x16xbf16> to vector<33x16xbf16>
      %c22 = arith.constant 22 : index
      %c0_281 = arith.constant 0 : index
      %c0_282 = arith.constant 0 : index
      %305 = vector.load %arg5[%c22, %c0_281, %c0_282] : memref<25x16x32xbf16, #tpu.memory_space<vmem>>, vector<1x16x32xbf16>
      %306 = vector.shape_cast %305 : vector<1x16x32xbf16> to vector<16x32xbf16>
      %cst_283 = arith.constant dense<0.000000e+00> : vector<33x32xf32>
      %307 = tpu.matmul %304, %306, %cst_283 {dimension_numbers = #tpu.dot_dimension_numbers<[1], [0], [0], [1], [0, 0, 1, 1], [], []>} : vector<33x16xbf16>, vector<16x32xbf16>, vector<33x32xf32> -> vector<33x32xf32>
      %308 = arith.addf %299, %307 : vector<33x32xf32>
      %c2_i32_284 = arith.constant 2 : i32
      %309 = arith.muli %c2_i32_284, %100 : i32
      %c4_i32_285 = arith.constant 4 : i32
      %310 = arith.addi %309, %c4_i32_285 : i32
      %311 = arith.index_cast %310 : i32 to index
      %c3_286 = arith.constant 3 : index
      %c0_287 = arith.constant 0 : index
      %312 = vector.load %arg14[%311, %c3_286, %c0_287] : memref<18x38x16xbf16, #tpu.memory_space<vmem>>, vector<1x33x16xbf16>
      %313 = vector.shape_cast %312 : vector<1x33x16xbf16> to vector<33x16xbf16>
      %c23 = arith.constant 23 : index
      %c0_288 = arith.constant 0 : index
      %c0_289 = arith.constant 0 : index
      %314 = vector.load %arg5[%c23, %c0_288, %c0_289] : memref<25x16x32xbf16, #tpu.memory_space<vmem>>, vector<1x16x32xbf16>
      %315 = vector.shape_cast %314 : vector<1x16x32xbf16> to vector<16x32xbf16>
      %cst_290 = arith.constant dense<0.000000e+00> : vector<33x32xf32>
      %316 = tpu.matmul %313, %315, %cst_290 {dimension_numbers = #tpu.dot_dimension_numbers<[1], [0], [0], [1], [0, 0, 1, 1], [], []>} : vector<33x16xbf16>, vector<16x32xbf16>, vector<33x32xf32> -> vector<33x32xf32>
      %317 = arith.addf %308, %316 : vector<33x32xf32>
      %c2_i32_291 = arith.constant 2 : i32
      %318 = arith.muli %c2_i32_291, %100 : i32
      %c4_i32_292 = arith.constant 4 : i32
      %319 = arith.addi %318, %c4_i32_292 : i32
      %320 = arith.index_cast %319 : i32 to index
      %c4_293 = arith.constant 4 : index
      %c0_294 = arith.constant 0 : index
      %321 = vector.load %arg14[%320, %c4_293, %c0_294] : memref<18x38x16xbf16, #tpu.memory_space<vmem>>, vector<1x33x16xbf16>
      %322 = vector.shape_cast %321 : vector<1x33x16xbf16> to vector<33x16xbf16>
      %c24 = arith.constant 24 : index
      %c0_295 = arith.constant 0 : index
      %c0_296 = arith.constant 0 : index
      %323 = vector.load %arg5[%c24, %c0_295, %c0_296] : memref<25x16x32xbf16, #tpu.memory_space<vmem>>, vector<1x16x32xbf16>
      %324 = vector.shape_cast %323 : vector<1x16x32xbf16> to vector<16x32xbf16>
      %cst_297 = arith.constant dense<0.000000e+00> : vector<33x32xf32>
      %325 = tpu.matmul %322, %324, %cst_297 {dimension_numbers = #tpu.dot_dimension_numbers<[1], [0], [0], [1], [0, 0, 1, 1], [], []>} : vector<33x16xbf16>, vector<16x32xbf16>, vector<33x32xf32> -> vector<33x32xf32>
      %326 = arith.addf %317, %325 : vector<33x32xf32>
      %cst_298 = arith.constant dense<0.000000e+00> : vector<17x32xf32>
      %327 = tpu.matmul %3, %326, %cst_298 {dimension_numbers = #tpu.dot_dimension_numbers<[1], [0], [0], [1], [0, 0, 1, 1], [], []>} : vector<17x33xf32>, vector<33x32xf32>, vector<17x32xf32> -> vector<17x32xf32>
      %328 = vector.broadcast %4 : vector<1x32xf32> to vector<17x32xf32>
      %329 = arith.addf %327, %328 : vector<17x32xf32>
      %cst_299 = arith.constant 0.000000e+00 : f32
      %330 = vector.broadcast %cst_299 : f32 to vector<17x32xf32>
      %331 = arith.maximumf %329, %330 : vector<17x32xf32>
      %332 = arith.truncf %331 : vector<17x32xf32> to vector<17x32xbf16>
      %333 = arith.index_cast %100 : i32 to index
      %c0_300 = arith.constant 0 : index
      %c0_301 = arith.constant 0 : index
      %334 = vector.load %arg15[%333, %c0_300, %c0_301] : memref<7x17x32xbf16, #tpu.memory_space<vmem>>, vector<1x17x32xbf16>
      %335 = vector.shape_cast %334 : vector<1x17x32xbf16> to vector<17x32xbf16>
      %336 = vector.shape_cast %332 : vector<17x32xbf16> to vector<1x17x32xbf16>
      tpu.vector_store %arg15[%333, %c0_300, %c0_301], %336 {strides = array<i32>} : memref<7x17x32xbf16, #tpu.memory_space<vmem>>, vector<1x17x32xbf16>,
    }
    %c7_i32_10 = arith.constant 7 : i32
    %c0_11 = arith.constant 0 : index
    %c0_12 = arith.constant 0 : index
    %6 = vector.load %arg10[%c0_11, %c0_12] : memref<7x13xf32, #tpu.memory_space<vmem>>, vector<7x13xf32>
    %c0_13 = arith.constant 0 : index
    %c0_14 = arith.constant 0 : index
    %7 = vector.load %arg9[%c0_13, %c0_14] : memref<1x32xf32, #tpu.memory_space<vmem>>, vector<1x32xf32>
    %c0_i32_15 = arith.constant 0 : i32
    %c2_i32 = arith.constant 2 : i32
    %8 = arith.addi %c0_i32_15, %c2_i32 : i32
    %c1_i32_16 = arith.constant 1 : i32
    scf.for %arg17 = %c0_i32_15 to %8 step %c1_i32_16  : i32 {
      %c1_i32_108 = arith.constant 1 : i32
      %99 = arith.muli %arg17, %c1_i32_108 : i32
      %c0_i32_109 = arith.constant 0 : i32
      %100 = arith.addi %c0_i32_109, %99 : i32
      %cst_110 = arith.constant 0.000000e+00 : f32
      %101 = vector.broadcast %cst_110 : f32 to vector<13x32xf32>
      %c2_i32_111 = arith.constant 2 : i32
      %102 = arith.muli %c2_i32_111, %100 : i32
      %c0_i32_112 = arith.constant 0 : i32
      %103 = arith.addi %102, %c0_i32_112 : i32
      %104 = arith.index_cast %103 : i32 to index
      %c0_113 = arith.constant 0 : index
      %c0_114 = arith.constant 0 : index
      %105 = vector.load %arg15[%104, %c0_113, %c0_114] : memref<7x17x32xbf16, #tpu.memory_space<vmem>>, vector<1x13x32xbf16>
      %106 = vector.shape_cast %105 : vector<1x13x32xbf16> to vector<13x32xbf16>
      %c0_115 = arith.constant 0 : index
      %c0_116 = arith.constant 0 : index
      %c0_117 = arith.constant 0 : index
      %107 = vector.load %arg8[%c0_115, %c0_116, %c0_117] : memref<25x32x32xbf16, #tpu.memory_space<vmem>>, vector<1x32x32xbf16>
      %108 = vector.shape_cast %107 : vector<1x32x32xbf16> to vector<32x32xbf16>
      %cst_118 = arith.constant dense<0.000000e+00> : vector<13x32xf32>
      %109 = tpu.matmul %106, %108, %cst_118 {dimension_numbers = #tpu.dot_dimension_numbers<[1], [0], [0], [1], [0, 0, 1, 1], [], []>} : vector<13x32xbf16>, vector<32x32xbf16>, vector<13x32xf32> -> vector<13x32xf32>
      %110 = arith.addf %101, %109 : vector<13x32xf32>
      %c2_i32_119 = arith.constant 2 : i32
      %111 = arith.muli %c2_i32_119, %100 : i32
      %c0_i32_120 = arith.constant 0 : i32
      %112 = arith.addi %111, %c0_i32_120 : i32
      %113 = arith.index_cast %112 : i32 to index
      %c1_121 = arith.constant 1 : index
      %c0_122 = arith.constant 0 : index
      %114 = vector.load %arg15[%113, %c1_121, %c0_122] : memref<7x17x32xbf16, #tpu.memory_space<vmem>>, vector<1x13x32xbf16>
      %115 = vector.shape_cast %114 : vector<1x13x32xbf16> to vector<13x32xbf16>
      %c1_123 = arith.constant 1 : index
      %c0_124 = arith.constant 0 : index
      %c0_125 = arith.constant 0 : index
      %116 = vector.load %arg8[%c1_123, %c0_124, %c0_125] : memref<25x32x32xbf16, #tpu.memory_space<vmem>>, vector<1x32x32xbf16>
      %117 = vector.shape_cast %116 : vector<1x32x32xbf16> to vector<32x32xbf16>
      %cst_126 = arith.constant dense<0.000000e+00> : vector<13x32xf32>
      %118 = tpu.matmul %115, %117, %cst_126 {dimension_numbers = #tpu.dot_dimension_numbers<[1], [0], [0], [1], [0, 0, 1, 1], [], []>} : vector<13x32xbf16>, vector<32x32xbf16>, vector<13x32xf32> -> vector<13x32xf32>
      %119 = arith.addf %110, %118 : vector<13x32xf32>
      %c2_i32_127 = arith.constant 2 : i32
      %120 = arith.muli %c2_i32_127, %100 : i32
      %c0_i32_128 = arith.constant 0 : i32
      %121 = arith.addi %120, %c0_i32_128 : i32
      %122 = arith.index_cast %121 : i32 to index
      %c2_129 = arith.constant 2 : index
      %c0_130 = arith.constant 0 : index
      %123 = vector.load %arg15[%122, %c2_129, %c0_130] : memref<7x17x32xbf16, #tpu.memory_space<vmem>>, vector<1x13x32xbf16>
      %124 = vector.shape_cast %123 : vector<1x13x32xbf16> to vector<13x32xbf16>
      %c2_131 = arith.constant 2 : index
      %c0_132 = arith.constant 0 : index
      %c0_133 = arith.constant 0 : index
      %125 = vector.load %arg8[%c2_131, %c0_132, %c0_133] : memref<25x32x32xbf16, #tpu.memory_space<vmem>>, vector<1x32x32xbf16>
      %126 = vector.shape_cast %125 : vector<1x32x32xbf16> to vector<32x32xbf16>
      %cst_134 = arith.constant dense<0.000000e+00> : vector<13x32xf32>
      %127 = tpu.matmul %124, %126, %cst_134 {dimension_numbers = #tpu.dot_dimension_numbers<[1], [0], [0], [1], [0, 0, 1, 1], [], []>} : vector<13x32xbf16>, vector<32x32xbf16>, vector<13x32xf32> -> vector<13x32xf32>
      %128 = arith.addf %119, %127 : vector<13x32xf32>
      %c2_i32_135 = arith.constant 2 : i32
      %129 = arith.muli %c2_i32_135, %100 : i32
      %c0_i32_136 = arith.constant 0 : i32
      %130 = arith.addi %129, %c0_i32_136 : i32
      %131 = arith.index_cast %130 : i32 to index
      %c3_137 = arith.constant 3 : index
      %c0_138 = arith.constant 0 : index
      %132 = vector.load %arg15[%131, %c3_137, %c0_138] : memref<7x17x32xbf16, #tpu.memory_space<vmem>>, vector<1x13x32xbf16>
      %133 = vector.shape_cast %132 : vector<1x13x32xbf16> to vector<13x32xbf16>
      %c3_139 = arith.constant 3 : index
      %c0_140 = arith.constant 0 : index
      %c0_141 = arith.constant 0 : index
      %134 = vector.load %arg8[%c3_139, %c0_140, %c0_141] : memref<25x32x32xbf16, #tpu.memory_space<vmem>>, vector<1x32x32xbf16>
      %135 = vector.shape_cast %134 : vector<1x32x32xbf16> to vector<32x32xbf16>
      %cst_142 = arith.constant dense<0.000000e+00> : vector<13x32xf32>
      %136 = tpu.matmul %133, %135, %cst_142 {dimension_numbers = #tpu.dot_dimension_numbers<[1], [0], [0], [1], [0, 0, 1, 1], [], []>} : vector<13x32xbf16>, vector<32x32xbf16>, vector<13x32xf32> -> vector<13x32xf32>
      %137 = arith.addf %128, %136 : vector<13x32xf32>
      %c2_i32_143 = arith.constant 2 : i32
      %138 = arith.muli %c2_i32_143, %100 : i32
      %c0_i32_144 = arith.constant 0 : i32
      %139 = arith.addi %138, %c0_i32_144 : i32
      %140 = arith.index_cast %139 : i32 to index
      %c4_145 = arith.constant 4 : index
      %c0_146 = arith.constant 0 : index
      %141 = vector.load %arg15[%140, %c4_145, %c0_146] : memref<7x17x32xbf16, #tpu.memory_space<vmem>>, vector<1x13x32xbf16>
      %142 = vector.shape_cast %141 : vector<1x13x32xbf16> to vector<13x32xbf16>
      %c4_147 = arith.constant 4 : index
      %c0_148 = arith.constant 0 : index
      %c0_149 = arith.constant 0 : index
      %143 = vector.load %arg8[%c4_147, %c0_148, %c0_149] : memref<25x32x32xbf16, #tpu.memory_space<vmem>>, vector<1x32x32xbf16>
      %144 = vector.shape_cast %143 : vector<1x32x32xbf16> to vector<32x32xbf16>
      %cst_150 = arith.constant dense<0.000000e+00> : vector<13x32xf32>
      %145 = tpu.matmul %142, %144, %cst_150 {dimension_numbers = #tpu.dot_dimension_numbers<[1], [0], [0], [1], [0, 0, 1, 1], [], []>} : vector<13x32xbf16>, vector<32x32xbf16>, vector<13x32xf32> -> vector<13x32xf32>
      %146 = arith.addf %137, %145 : vector<13x32xf32>
      %c2_i32_151 = arith.constant 2 : i32
      %147 = arith.muli %c2_i32_151, %100 : i32
      %c1_i32_152 = arith.constant 1 : i32
      %148 = arith.addi %147, %c1_i32_152 : i32
      %149 = arith.index_cast %148 : i32 to index
      %c0_153 = arith.constant 0 : index
      %c0_154 = arith.constant 0 : index
      %150 = vector.load %arg15[%149, %c0_153, %c0_154] : memref<7x17x32xbf16, #tpu.memory_space<vmem>>, vector<1x13x32xbf16>
      %151 = vector.shape_cast %150 : vector<1x13x32xbf16> to vector<13x32xbf16>
      %c5_155 = arith.constant 5 : index
      %c0_156 = arith.constant 0 : index
      %c0_157 = arith.constant 0 : index
      %152 = vector.load %arg8[%c5_155, %c0_156, %c0_157] : memref<25x32x32xbf16, #tpu.memory_space<vmem>>, vector<1x32x32xbf16>
      %153 = vector.shape_cast %152 : vector<1x32x32xbf16> to vector<32x32xbf16>
      %cst_158 = arith.constant dense<0.000000e+00> : vector<13x32xf32>
      %154 = tpu.matmul %151, %153, %cst_158 {dimension_numbers = #tpu.dot_dimension_numbers<[1], [0], [0], [1], [0, 0, 1, 1], [], []>} : vector<13x32xbf16>, vector<32x32xbf16>, vector<13x32xf32> -> vector<13x32xf32>
      %155 = arith.addf %146, %154 : vector<13x32xf32>
      %c2_i32_159 = arith.constant 2 : i32
      %156 = arith.muli %c2_i32_159, %100 : i32
      %c1_i32_160 = arith.constant 1 : i32
      %157 = arith.addi %156, %c1_i32_160 : i32
      %158 = arith.index_cast %157 : i32 to index
      %c1_161 = arith.constant 1 : index
      %c0_162 = arith.constant 0 : index
      %159 = vector.load %arg15[%158, %c1_161, %c0_162] : memref<7x17x32xbf16, #tpu.memory_space<vmem>>, vector<1x13x32xbf16>
      %160 = vector.shape_cast %159 : vector<1x13x32xbf16> to vector<13x32xbf16>
      %c6_163 = arith.constant 6 : index
      %c0_164 = arith.constant 0 : index
      %c0_165 = arith.constant 0 : index
      %161 = vector.load %arg8[%c6_163, %c0_164, %c0_165] : memref<25x32x32xbf16, #tpu.memory_space<vmem>>, vector<1x32x32xbf16>
      %162 = vector.shape_cast %161 : vector<1x32x32xbf16> to vector<32x32xbf16>
      %cst_166 = arith.constant dense<0.000000e+00> : vector<13x32xf32>
      %163 = tpu.matmul %160, %162, %cst_166 {dimension_numbers = #tpu.dot_dimension_numbers<[1], [0], [0], [1], [0, 0, 1, 1], [], []>} : vector<13x32xbf16>, vector<32x32xbf16>, vector<13x32xf32> -> vector<13x32xf32>
      %164 = arith.addf %155, %163 : vector<13x32xf32>
      %c2_i32_167 = arith.constant 2 : i32
      %165 = arith.muli %c2_i32_167, %100 : i32
      %c1_i32_168 = arith.constant 1 : i32
      %166 = arith.addi %165, %c1_i32_168 : i32
      %167 = arith.index_cast %166 : i32 to index
      %c2_169 = arith.constant 2 : index
      %c0_170 = arith.constant 0 : index
      %168 = vector.load %arg15[%167, %c2_169, %c0_170] : memref<7x17x32xbf16, #tpu.memory_space<vmem>>, vector<1x13x32xbf16>
      %169 = vector.shape_cast %168 : vector<1x13x32xbf16> to vector<13x32xbf16>
      %c7_171 = arith.constant 7 : index
      %c0_172 = arith.constant 0 : index
      %c0_173 = arith.constant 0 : index
      %170 = vector.load %arg8[%c7_171, %c0_172, %c0_173] : memref<25x32x32xbf16, #tpu.memory_space<vmem>>, vector<1x32x32xbf16>
      %171 = vector.shape_cast %170 : vector<1x32x32xbf16> to vector<32x32xbf16>
      %cst_174 = arith.constant dense<0.000000e+00> : vector<13x32xf32>
      %172 = tpu.matmul %169, %171, %cst_174 {dimension_numbers = #tpu.dot_dimension_numbers<[1], [0], [0], [1], [0, 0, 1, 1], [], []>} : vector<13x32xbf16>, vector<32x32xbf16>, vector<13x32xf32> -> vector<13x32xf32>
      %173 = arith.addf %164, %172 : vector<13x32xf32>
      %c2_i32_175 = arith.constant 2 : i32
      %174 = arith.muli %c2_i32_175, %100 : i32
      %c1_i32_176 = arith.constant 1 : i32
      %175 = arith.addi %174, %c1_i32_176 : i32
      %176 = arith.index_cast %175 : i32 to index
      %c3_177 = arith.constant 3 : index
      %c0_178 = arith.constant 0 : index
      %177 = vector.load %arg15[%176, %c3_177, %c0_178] : memref<7x17x32xbf16, #tpu.memory_space<vmem>>, vector<1x13x32xbf16>
      %178 = vector.shape_cast %177 : vector<1x13x32xbf16> to vector<13x32xbf16>
      %c8_179 = arith.constant 8 : index
      %c0_180 = arith.constant 0 : index
      %c0_181 = arith.constant 0 : index
      %179 = vector.load %arg8[%c8_179, %c0_180, %c0_181] : memref<25x32x32xbf16, #tpu.memory_space<vmem>>, vector<1x32x32xbf16>
      %180 = vector.shape_cast %179 : vector<1x32x32xbf16> to vector<32x32xbf16>
      %cst_182 = arith.constant dense<0.000000e+00> : vector<13x32xf32>
      %181 = tpu.matmul %178, %180, %cst_182 {dimension_numbers = #tpu.dot_dimension_numbers<[1], [0], [0], [1], [0, 0, 1, 1], [], []>} : vector<13x32xbf16>, vector<32x32xbf16>, vector<13x32xf32> -> vector<13x32xf32>
      %182 = arith.addf %173, %181 : vector<13x32xf32>
      %c2_i32_183 = arith.constant 2 : i32
      %183 = arith.muli %c2_i32_183, %100 : i32
      %c1_i32_184 = arith.constant 1 : i32
      %184 = arith.addi %183, %c1_i32_184 : i32
      %185 = arith.index_cast %184 : i32 to index
      %c4_185 = arith.constant 4 : index
      %c0_186 = arith.constant 0 : index
      %186 = vector.load %arg15[%185, %c4_185, %c0_186] : memref<7x17x32xbf16, #tpu.memory_space<vmem>>, vector<1x13x32xbf16>
      %187 = vector.shape_cast %186 : vector<1x13x32xbf16> to vector<13x32xbf16>
      %c9_187 = arith.constant 9 : index
      %c0_188 = arith.constant 0 : index
      %c0_189 = arith.constant 0 : index
      %188 = vector.load %arg8[%c9_187, %c0_188, %c0_189] : memref<25x32x32xbf16, #tpu.memory_space<vmem>>, vector<1x32x32xbf16>
      %189 = vector.shape_cast %188 : vector<1x32x32xbf16> to vector<32x32xbf16>
      %cst_190 = arith.constant dense<0.000000e+00> : vector<13x32xf32>
      %190 = tpu.matmul %187, %189, %cst_190 {dimension_numbers = #tpu.dot_dimension_numbers<[1], [0], [0], [1], [0, 0, 1, 1], [], []>} : vector<13x32xbf16>, vector<32x32xbf16>, vector<13x32xf32> -> vector<13x32xf32>
      %191 = arith.addf %182, %190 : vector<13x32xf32>
      %c2_i32_191 = arith.constant 2 : i32
      %192 = arith.muli %c2_i32_191, %100 : i32
      %c2_i32_192 = arith.constant 2 : i32
      %193 = arith.addi %192, %c2_i32_192 : i32
      %194 = arith.index_cast %193 : i32 to index
      %c0_193 = arith.constant 0 : index
      %c0_194 = arith.constant 0 : index
      %195 = vector.load %arg15[%194, %c0_193, %c0_194] : memref<7x17x32xbf16, #tpu.memory_space<vmem>>, vector<1x13x32xbf16>
      %196 = vector.shape_cast %195 : vector<1x13x32xbf16> to vector<13x32xbf16>
      %c10_195 = arith.constant 10 : index
      %c0_196 = arith.constant 0 : index
      %c0_197 = arith.constant 0 : index
      %197 = vector.load %arg8[%c10_195, %c0_196, %c0_197] : memref<25x32x32xbf16, #tpu.memory_space<vmem>>, vector<1x32x32xbf16>
      %198 = vector.shape_cast %197 : vector<1x32x32xbf16> to vector<32x32xbf16>
      %cst_198 = arith.constant dense<0.000000e+00> : vector<13x32xf32>
      %199 = tpu.matmul %196, %198, %cst_198 {dimension_numbers = #tpu.dot_dimension_numbers<[1], [0], [0], [1], [0, 0, 1, 1], [], []>} : vector<13x32xbf16>, vector<32x32xbf16>, vector<13x32xf32> -> vector<13x32xf32>
      %200 = arith.addf %191, %199 : vector<13x32xf32>
      %c2_i32_199 = arith.constant 2 : i32
      %201 = arith.muli %c2_i32_199, %100 : i32
      %c2_i32_200 = arith.constant 2 : i32
      %202 = arith.addi %201, %c2_i32_200 : i32
      %203 = arith.index_cast %202 : i32 to index
      %c1_201 = arith.constant 1 : index
      %c0_202 = arith.constant 0 : index
      %204 = vector.load %arg15[%203, %c1_201, %c0_202] : memref<7x17x32xbf16, #tpu.memory_space<vmem>>, vector<1x13x32xbf16>
      %205 = vector.shape_cast %204 : vector<1x13x32xbf16> to vector<13x32xbf16>
      %c11_203 = arith.constant 11 : index
      %c0_204 = arith.constant 0 : index
      %c0_205 = arith.constant 0 : index
      %206 = vector.load %arg8[%c11_203, %c0_204, %c0_205] : memref<25x32x32xbf16, #tpu.memory_space<vmem>>, vector<1x32x32xbf16>
      %207 = vector.shape_cast %206 : vector<1x32x32xbf16> to vector<32x32xbf16>
      %cst_206 = arith.constant dense<0.000000e+00> : vector<13x32xf32>
      %208 = tpu.matmul %205, %207, %cst_206 {dimension_numbers = #tpu.dot_dimension_numbers<[1], [0], [0], [1], [0, 0, 1, 1], [], []>} : vector<13x32xbf16>, vector<32x32xbf16>, vector<13x32xf32> -> vector<13x32xf32>
      %209 = arith.addf %200, %208 : vector<13x32xf32>
      %c2_i32_207 = arith.constant 2 : i32
      %210 = arith.muli %c2_i32_207, %100 : i32
      %c2_i32_208 = arith.constant 2 : i32
      %211 = arith.addi %210, %c2_i32_208 : i32
      %212 = arith.index_cast %211 : i32 to index
      %c2_209 = arith.constant 2 : index
      %c0_210 = arith.constant 0 : index
      %213 = vector.load %arg15[%212, %c2_209, %c0_210] : memref<7x17x32xbf16, #tpu.memory_space<vmem>>, vector<1x13x32xbf16>
      %214 = vector.shape_cast %213 : vector<1x13x32xbf16> to vector<13x32xbf16>
      %c12_211 = arith.constant 12 : index
      %c0_212 = arith.constant 0 : index
      %c0_213 = arith.constant 0 : index
      %215 = vector.load %arg8[%c12_211, %c0_212, %c0_213] : memref<25x32x32xbf16, #tpu.memory_space<vmem>>, vector<1x32x32xbf16>
      %216 = vector.shape_cast %215 : vector<1x32x32xbf16> to vector<32x32xbf16>
      %cst_214 = arith.constant dense<0.000000e+00> : vector<13x32xf32>
      %217 = tpu.matmul %214, %216, %cst_214 {dimension_numbers = #tpu.dot_dimension_numbers<[1], [0], [0], [1], [0, 0, 1, 1], [], []>} : vector<13x32xbf16>, vector<32x32xbf16>, vector<13x32xf32> -> vector<13x32xf32>
      %218 = arith.addf %209, %217 : vector<13x32xf32>
      %c2_i32_215 = arith.constant 2 : i32
      %219 = arith.muli %c2_i32_215, %100 : i32
      %c2_i32_216 = arith.constant 2 : i32
      %220 = arith.addi %219, %c2_i32_216 : i32
      %221 = arith.index_cast %220 : i32 to index
      %c3_217 = arith.constant 3 : index
      %c0_218 = arith.constant 0 : index
      %222 = vector.load %arg15[%221, %c3_217, %c0_218] : memref<7x17x32xbf16, #tpu.memory_space<vmem>>, vector<1x13x32xbf16>
      %223 = vector.shape_cast %222 : vector<1x13x32xbf16> to vector<13x32xbf16>
      %c13_219 = arith.constant 13 : index
      %c0_220 = arith.constant 0 : index
      %c0_221 = arith.constant 0 : index
      %224 = vector.load %arg8[%c13_219, %c0_220, %c0_221] : memref<25x32x32xbf16, #tpu.memory_space<vmem>>, vector<1x32x32xbf16>
      %225 = vector.shape_cast %224 : vector<1x32x32xbf16> to vector<32x32xbf16>
      %cst_222 = arith.constant dense<0.000000e+00> : vector<13x32xf32>
      %226 = tpu.matmul %223, %225, %cst_222 {dimension_numbers = #tpu.dot_dimension_numbers<[1], [0], [0], [1], [0, 0, 1, 1], [], []>} : vector<13x32xbf16>, vector<32x32xbf16>, vector<13x32xf32> -> vector<13x32xf32>
      %227 = arith.addf %218, %226 : vector<13x32xf32>
      %c2_i32_223 = arith.constant 2 : i32
      %228 = arith.muli %c2_i32_223, %100 : i32
      %c2_i32_224 = arith.constant 2 : i32
      %229 = arith.addi %228, %c2_i32_224 : i32
      %230 = arith.index_cast %229 : i32 to index
      %c4_225 = arith.constant 4 : index
      %c0_226 = arith.constant 0 : index
      %231 = vector.load %arg15[%230, %c4_225, %c0_226] : memref<7x17x32xbf16, #tpu.memory_space<vmem>>, vector<1x13x32xbf16>
      %232 = vector.shape_cast %231 : vector<1x13x32xbf16> to vector<13x32xbf16>
      %c14 = arith.constant 14 : index
      %c0_227 = arith.constant 0 : index
      %c0_228 = arith.constant 0 : index
      %233 = vector.load %arg8[%c14, %c0_227, %c0_228] : memref<25x32x32xbf16, #tpu.memory_space<vmem>>, vector<1x32x32xbf16>
      %234 = vector.shape_cast %233 : vector<1x32x32xbf16> to vector<32x32xbf16>
      %cst_229 = arith.constant dense<0.000000e+00> : vector<13x32xf32>
      %235 = tpu.matmul %232, %234, %cst_229 {dimension_numbers = #tpu.dot_dimension_numbers<[1], [0], [0], [1], [0, 0, 1, 1], [], []>} : vector<13x32xbf16>, vector<32x32xbf16>, vector<13x32xf32> -> vector<13x32xf32>
      %236 = arith.addf %227, %235 : vector<13x32xf32>
      %c2_i32_230 = arith.constant 2 : i32
      %237 = arith.muli %c2_i32_230, %100 : i32
      %c3_i32 = arith.constant 3 : i32
      %238 = arith.addi %237, %c3_i32 : i32
      %239 = arith.index_cast %238 : i32 to index
      %c0_231 = arith.constant 0 : index
      %c0_232 = arith.constant 0 : index
      %240 = vector.load %arg15[%239, %c0_231, %c0_232] : memref<7x17x32xbf16, #tpu.memory_space<vmem>>, vector<1x13x32xbf16>
      %241 = vector.shape_cast %240 : vector<1x13x32xbf16> to vector<13x32xbf16>
      %c15 = arith.constant 15 : index
      %c0_233 = arith.constant 0 : index
      %c0_234 = arith.constant 0 : index
      %242 = vector.load %arg8[%c15, %c0_233, %c0_234] : memref<25x32x32xbf16, #tpu.memory_space<vmem>>, vector<1x32x32xbf16>
      %243 = vector.shape_cast %242 : vector<1x32x32xbf16> to vector<32x32xbf16>
      %cst_235 = arith.constant dense<0.000000e+00> : vector<13x32xf32>
      %244 = tpu.matmul %241, %243, %cst_235 {dimension_numbers = #tpu.dot_dimension_numbers<[1], [0], [0], [1], [0, 0, 1, 1], [], []>} : vector<13x32xbf16>, vector<32x32xbf16>, vector<13x32xf32> -> vector<13x32xf32>
      %245 = arith.addf %236, %244 : vector<13x32xf32>
      %c2_i32_236 = arith.constant 2 : i32
      %246 = arith.muli %c2_i32_236, %100 : i32
      %c3_i32_237 = arith.constant 3 : i32
      %247 = arith.addi %246, %c3_i32_237 : i32
      %248 = arith.index_cast %247 : i32 to index
      %c1_238 = arith.constant 1 : index
      %c0_239 = arith.constant 0 : index
      %249 = vector.load %arg15[%248, %c1_238, %c0_239] : memref<7x17x32xbf16, #tpu.memory_space<vmem>>, vector<1x13x32xbf16>
      %250 = vector.shape_cast %249 : vector<1x13x32xbf16> to vector<13x32xbf16>
      %c16 = arith.constant 16 : index
      %c0_240 = arith.constant 0 : index
      %c0_241 = arith.constant 0 : index
      %251 = vector.load %arg8[%c16, %c0_240, %c0_241] : memref<25x32x32xbf16, #tpu.memory_space<vmem>>, vector<1x32x32xbf16>
      %252 = vector.shape_cast %251 : vector<1x32x32xbf16> to vector<32x32xbf16>
      %cst_242 = arith.constant dense<0.000000e+00> : vector<13x32xf32>
      %253 = tpu.matmul %250, %252, %cst_242 {dimension_numbers = #tpu.dot_dimension_numbers<[1], [0], [0], [1], [0, 0, 1, 1], [], []>} : vector<13x32xbf16>, vector<32x32xbf16>, vector<13x32xf32> -> vector<13x32xf32>
      %254 = arith.addf %245, %253 : vector<13x32xf32>
      %c2_i32_243 = arith.constant 2 : i32
      %255 = arith.muli %c2_i32_243, %100 : i32
      %c3_i32_244 = arith.constant 3 : i32
      %256 = arith.addi %255, %c3_i32_244 : i32
      %257 = arith.index_cast %256 : i32 to index
      %c2_245 = arith.constant 2 : index
      %c0_246 = arith.constant 0 : index
      %258 = vector.load %arg15[%257, %c2_245, %c0_246] : memref<7x17x32xbf16, #tpu.memory_space<vmem>>, vector<1x13x32xbf16>
      %259 = vector.shape_cast %258 : vector<1x13x32xbf16> to vector<13x32xbf16>
      %c17 = arith.constant 17 : index
      %c0_247 = arith.constant 0 : index
      %c0_248 = arith.constant 0 : index
      %260 = vector.load %arg8[%c17, %c0_247, %c0_248] : memref<25x32x32xbf16, #tpu.memory_space<vmem>>, vector<1x32x32xbf16>
      %261 = vector.shape_cast %260 : vector<1x32x32xbf16> to vector<32x32xbf16>
      %cst_249 = arith.constant dense<0.000000e+00> : vector<13x32xf32>
      %262 = tpu.matmul %259, %261, %cst_249 {dimension_numbers = #tpu.dot_dimension_numbers<[1], [0], [0], [1], [0, 0, 1, 1], [], []>} : vector<13x32xbf16>, vector<32x32xbf16>, vector<13x32xf32> -> vector<13x32xf32>
      %263 = arith.addf %254, %262 : vector<13x32xf32>
      %c2_i32_250 = arith.constant 2 : i32
      %264 = arith.muli %c2_i32_250, %100 : i32
      %c3_i32_251 = arith.constant 3 : i32
      %265 = arith.addi %264, %c3_i32_251 : i32
      %266 = arith.index_cast %265 : i32 to index
      %c3_252 = arith.constant 3 : index
      %c0_253 = arith.constant 0 : index
      %267 = vector.load %arg15[%266, %c3_252, %c0_253] : memref<7x17x32xbf16, #tpu.memory_space<vmem>>, vector<1x13x32xbf16>
      %268 = vector.shape_cast %267 : vector<1x13x32xbf16> to vector<13x32xbf16>
      %c18 = arith.constant 18 : index
      %c0_254 = arith.constant 0 : index
      %c0_255 = arith.constant 0 : index
      %269 = vector.load %arg8[%c18, %c0_254, %c0_255] : memref<25x32x32xbf16, #tpu.memory_space<vmem>>, vector<1x32x32xbf16>
      %270 = vector.shape_cast %269 : vector<1x32x32xbf16> to vector<32x32xbf16>
      %cst_256 = arith.constant dense<0.000000e+00> : vector<13x32xf32>
      %271 = tpu.matmul %268, %270, %cst_256 {dimension_numbers = #tpu.dot_dimension_numbers<[1], [0], [0], [1], [0, 0, 1, 1], [], []>} : vector<13x32xbf16>, vector<32x32xbf16>, vector<13x32xf32> -> vector<13x32xf32>
      %272 = arith.addf %263, %271 : vector<13x32xf32>
      %c2_i32_257 = arith.constant 2 : i32
      %273 = arith.muli %c2_i32_257, %100 : i32
      %c3_i32_258 = arith.constant 3 : i32
      %274 = arith.addi %273, %c3_i32_258 : i32
      %275 = arith.index_cast %274 : i32 to index
      %c4_259 = arith.constant 4 : index
      %c0_260 = arith.constant 0 : index
      %276 = vector.load %arg15[%275, %c4_259, %c0_260] : memref<7x17x32xbf16, #tpu.memory_space<vmem>>, vector<1x13x32xbf16>
      %277 = vector.shape_cast %276 : vector<1x13x32xbf16> to vector<13x32xbf16>
      %c19 = arith.constant 19 : index
      %c0_261 = arith.constant 0 : index
      %c0_262 = arith.constant 0 : index
      %278 = vector.load %arg8[%c19, %c0_261, %c0_262] : memref<25x32x32xbf16, #tpu.memory_space<vmem>>, vector<1x32x32xbf16>
      %279 = vector.shape_cast %278 : vector<1x32x32xbf16> to vector<32x32xbf16>
      %cst_263 = arith.constant dense<0.000000e+00> : vector<13x32xf32>
      %280 = tpu.matmul %277, %279, %cst_263 {dimension_numbers = #tpu.dot_dimension_numbers<[1], [0], [0], [1], [0, 0, 1, 1], [], []>} : vector<13x32xbf16>, vector<32x32xbf16>, vector<13x32xf32> -> vector<13x32xf32>
      %281 = arith.addf %272, %280 : vector<13x32xf32>
      %c2_i32_264 = arith.constant 2 : i32
      %282 = arith.muli %c2_i32_264, %100 : i32
      %c4_i32 = arith.constant 4 : i32
      %283 = arith.addi %282, %c4_i32 : i32
      %284 = arith.index_cast %283 : i32 to index
      %c0_265 = arith.constant 0 : index
      %c0_266 = arith.constant 0 : index
      %285 = vector.load %arg15[%284, %c0_265, %c0_266] : memref<7x17x32xbf16, #tpu.memory_space<vmem>>, vector<1x13x32xbf16>
      %286 = vector.shape_cast %285 : vector<1x13x32xbf16> to vector<13x32xbf16>
      %c20 = arith.constant 20 : index
      %c0_267 = arith.constant 0 : index
      %c0_268 = arith.constant 0 : index
      %287 = vector.load %arg8[%c20, %c0_267, %c0_268] : memref<25x32x32xbf16, #tpu.memory_space<vmem>>, vector<1x32x32xbf16>
      %288 = vector.shape_cast %287 : vector<1x32x32xbf16> to vector<32x32xbf16>
      %cst_269 = arith.constant dense<0.000000e+00> : vector<13x32xf32>
      %289 = tpu.matmul %286, %288, %cst_269 {dimension_numbers = #tpu.dot_dimension_numbers<[1], [0], [0], [1], [0, 0, 1, 1], [], []>} : vector<13x32xbf16>, vector<32x32xbf16>, vector<13x32xf32> -> vector<13x32xf32>
      %290 = arith.addf %281, %289 : vector<13x32xf32>
      %c2_i32_270 = arith.constant 2 : i32
      %291 = arith.muli %c2_i32_270, %100 : i32
      %c4_i32_271 = arith.constant 4 : i32
      %292 = arith.addi %291, %c4_i32_271 : i32
      %293 = arith.index_cast %292 : i32 to index
      %c1_272 = arith.constant 1 : index
      %c0_273 = arith.constant 0 : index
      %294 = vector.load %arg15[%293, %c1_272, %c0_273] : memref<7x17x32xbf16, #tpu.memory_space<vmem>>, vector<1x13x32xbf16>
      %295 = vector.shape_cast %294 : vector<1x13x32xbf16> to vector<13x32xbf16>
      %c21 = arith.constant 21 : index
      %c0_274 = arith.constant 0 : index
      %c0_275 = arith.constant 0 : index
      %296 = vector.load %arg8[%c21, %c0_274, %c0_275] : memref<25x32x32xbf16, #tpu.memory_space<vmem>>, vector<1x32x32xbf16>
      %297 = vector.shape_cast %296 : vector<1x32x32xbf16> to vector<32x32xbf16>
      %cst_276 = arith.constant dense<0.000000e+00> : vector<13x32xf32>
      %298 = tpu.matmul %295, %297, %cst_276 {dimension_numbers = #tpu.dot_dimension_numbers<[1], [0], [0], [1], [0, 0, 1, 1], [], []>} : vector<13x32xbf16>, vector<32x32xbf16>, vector<13x32xf32> -> vector<13x32xf32>
      %299 = arith.addf %290, %298 : vector<13x32xf32>
      %c2_i32_277 = arith.constant 2 : i32
      %300 = arith.muli %c2_i32_277, %100 : i32
      %c4_i32_278 = arith.constant 4 : i32
      %301 = arith.addi %300, %c4_i32_278 : i32
      %302 = arith.index_cast %301 : i32 to index
      %c2_279 = arith.constant 2 : index
      %c0_280 = arith.constant 0 : index
      %303 = vector.load %arg15[%302, %c2_279, %c0_280] : memref<7x17x32xbf16, #tpu.memory_space<vmem>>, vector<1x13x32xbf16>
      %304 = vector.shape_cast %303 : vector<1x13x32xbf16> to vector<13x32xbf16>
      %c22 = arith.constant 22 : index
      %c0_281 = arith.constant 0 : index
      %c0_282 = arith.constant 0 : index
      %305 = vector.load %arg8[%c22, %c0_281, %c0_282] : memref<25x32x32xbf16, #tpu.memory_space<vmem>>, vector<1x32x32xbf16>
      %306 = vector.shape_cast %305 : vector<1x32x32xbf16> to vector<32x32xbf16>
      %cst_283 = arith.constant dense<0.000000e+00> : vector<13x32xf32>
      %307 = tpu.matmul %304, %306, %cst_283 {dimension_numbers = #tpu.dot_dimension_numbers<[1], [0], [0], [1], [0, 0, 1, 1], [], []>} : vector<13x32xbf16>, vector<32x32xbf16>, vector<13x32xf32> -> vector<13x32xf32>
      %308 = arith.addf %299, %307 : vector<13x32xf32>
      %c2_i32_284 = arith.constant 2 : i32
      %309 = arith.muli %c2_i32_284, %100 : i32
      %c4_i32_285 = arith.constant 4 : i32
      %310 = arith.addi %309, %c4_i32_285 : i32
      %311 = arith.index_cast %310 : i32 to index
      %c3_286 = arith.constant 3 : index
      %c0_287 = arith.constant 0 : index
      %312 = vector.load %arg15[%311, %c3_286, %c0_287] : memref<7x17x32xbf16, #tpu.memory_space<vmem>>, vector<1x13x32xbf16>
      %313 = vector.shape_cast %312 : vector<1x13x32xbf16> to vector<13x32xbf16>
      %c23 = arith.constant 23 : index
      %c0_288 = arith.constant 0 : index
      %c0_289 = arith.constant 0 : index
      %314 = vector.load %arg8[%c23, %c0_288, %c0_289] : memref<25x32x32xbf16, #tpu.memory_space<vmem>>, vector<1x32x32xbf16>
      %315 = vector.shape_cast %314 : vector<1x32x32xbf16> to vector<32x32xbf16>
      %cst_290 = arith.constant dense<0.000000e+00> : vector<13x32xf32>
      %316 = tpu.matmul %313, %315, %cst_290 {dimension_numbers = #tpu.dot_dimension_numbers<[1], [0], [0], [1], [0, 0, 1, 1], [], []>} : vector<13x32xbf16>, vector<32x32xbf16>, vector<13x32xf32> -> vector<13x32xf32>
      %317 = arith.addf %308, %316 : vector<13x32xf32>
      %c2_i32_291 = arith.constant 2 : i32
      %318 = arith.muli %c2_i32_291, %100 : i32
      %c4_i32_292 = arith.constant 4 : i32
      %319 = arith.addi %318, %c4_i32_292 : i32
      %320 = arith.index_cast %319 : i32 to index
      %c4_293 = arith.constant 4 : index
      %c0_294 = arith.constant 0 : index
      %321 = vector.load %arg15[%320, %c4_293, %c0_294] : memref<7x17x32xbf16, #tpu.memory_space<vmem>>, vector<1x13x32xbf16>
      %322 = vector.shape_cast %321 : vector<1x13x32xbf16> to vector<13x32xbf16>
      %c24 = arith.constant 24 : index
      %c0_295 = arith.constant 0 : index
      %c0_296 = arith.constant 0 : index
      %323 = vector.load %arg8[%c24, %c0_295, %c0_296] : memref<25x32x32xbf16, #tpu.memory_space<vmem>>, vector<1x32x32xbf16>
      %324 = vector.shape_cast %323 : vector<1x32x32xbf16> to vector<32x32xbf16>
      %cst_297 = arith.constant dense<0.000000e+00> : vector<13x32xf32>
      %325 = tpu.matmul %322, %324, %cst_297 {dimension_numbers = #tpu.dot_dimension_numbers<[1], [0], [0], [1], [0, 0, 1, 1], [], []>} : vector<13x32xbf16>, vector<32x32xbf16>, vector<13x32xf32> -> vector<13x32xf32>
      %326 = arith.addf %317, %325 : vector<13x32xf32>
      %cst_298 = arith.constant dense<0.000000e+00> : vector<7x32xf32>
      %327 = tpu.matmul %6, %326, %cst_298 {dimension_numbers = #tpu.dot_dimension_numbers<[1], [0], [0], [1], [0, 0, 1, 1], [], []>} : vector<7x13xf32>, vector<13x32xf32>, vector<7x32xf32> -> vector<7x32xf32>
      %328 = vector.broadcast %7 : vector<1x32xf32> to vector<7x32xf32>
      %329 = arith.addf %327, %328 : vector<7x32xf32>
      %cst_299 = arith.constant 0.000000e+00 : f32
      %330 = vector.broadcast %cst_299 : f32 to vector<7x32xf32>
      %331 = arith.maximumf %329, %330 : vector<7x32xf32>
      %332 = arith.truncf %331 : vector<7x32xf32> to vector<7x32xbf16>
      %333 = arith.index_cast %100 : i32 to index
      %c0_300 = arith.constant 0 : index
      %c0_301 = arith.constant 0 : index
      %334 = vector.load %arg16[%333, %c0_300, %c0_301] : memref<2x7x32xbf16, #tpu.memory_space<vmem>>, vector<1x7x32xbf16>
      %335 = vector.shape_cast %334 : vector<1x7x32xbf16> to vector<7x32xbf16>
      %336 = vector.shape_cast %332 : vector<7x32xbf16> to vector<1x7x32xbf16>
      tpu.vector_store %arg16[%333, %c0_300, %c0_301], %336 {strides = array<i32>} : memref<2x7x32xbf16, #tpu.memory_space<vmem>>, vector<1x7x32xbf16>,
    }
    %c2_i32_17 = arith.constant 2 : i32
    %cst = arith.constant 0.000000e+00 : f32
    %9 = vector.broadcast %cst : f32 to vector<1x2xf32>
    %c0_18 = arith.constant 0 : index
    %c0_19 = arith.constant 0 : index
    %c0_20 = arith.constant 0 : index
    %10 = vector.load %arg16[%c0_18, %c0_19, %c0_20] : memref<2x7x32xbf16, #tpu.memory_space<vmem>>, vector<1x1x32xbf16>
    %11 = vector.shape_cast %10 : vector<1x1x32xbf16> to vector<1x32xbf16>
    %c0_21 = arith.constant 0 : index
    %c0_22 = arith.constant 0 : index
    %c0_23 = arith.constant 0 : index
    %12 = vector.load %arg11[%c0_21, %c0_22, %c0_23] : memref<14x32x2xbf16, #tpu.memory_space<vmem>>, vector<1x32x2xbf16>
    %13 = vector.shape_cast %12 : vector<1x32x2xbf16> to vector<32x2xbf16>
    %cst_24 = arith.constant dense<0.000000e+00> : vector<1x2xf32>
    %14 = tpu.matmul %11, %13, %cst_24 {dimension_numbers = #tpu.dot_dimension_numbers<[1], [0], [0], [1], [0, 0, 1, 1], [], []>} : vector<1x32xbf16>, vector<32x2xbf16>, vector<1x2xf32> -> vector<1x2xf32>
    %15 = arith.addf %9, %14 : vector<1x2xf32>
    %c0_25 = arith.constant 0 : index
    %c1 = arith.constant 1 : index
    %c0_26 = arith.constant 0 : index
    %16 = vector.load %arg16[%c0_25, %c1, %c0_26] : memref<2x7x32xbf16, #tpu.memory_space<vmem>>, vector<1x1x32xbf16>
    %17 = vector.shape_cast %16 : vector<1x1x32xbf16> to vector<1x32xbf16>
    %c1_27 = arith.constant 1 : index
    %c0_28 = arith.constant 0 : index
    %c0_29 = arith.constant 0 : index
    %18 = vector.load %arg11[%c1_27, %c0_28, %c0_29] : memref<14x32x2xbf16, #tpu.memory_space<vmem>>, vector<1x32x2xbf16>
    %19 = vector.shape_cast %18 : vector<1x32x2xbf16> to vector<32x2xbf16>
    %cst_30 = arith.constant dense<0.000000e+00> : vector<1x2xf32>
    %20 = tpu.matmul %17, %19, %cst_30 {dimension_numbers = #tpu.dot_dimension_numbers<[1], [0], [0], [1], [0, 0, 1, 1], [], []>} : vector<1x32xbf16>, vector<32x2xbf16>, vector<1x2xf32> -> vector<1x2xf32>
    %21 = arith.addf %15, %20 : vector<1x2xf32>
    %c0_31 = arith.constant 0 : index
    %c2 = arith.constant 2 : index
    %c0_32 = arith.constant 0 : index
    %22 = vector.load %arg16[%c0_31, %c2, %c0_32] : memref<2x7x32xbf16, #tpu.memory_space<vmem>>, vector<1x1x32xbf16>
    %23 = vector.shape_cast %22 : vector<1x1x32xbf16> to vector<1x32xbf16>
    %c2_33 = arith.constant 2 : index
    %c0_34 = arith.constant 0 : index
    %c0_35 = arith.constant 0 : index
    %24 = vector.load %arg11[%c2_33, %c0_34, %c0_35] : memref<14x32x2xbf16, #tpu.memory_space<vmem>>, vector<1x32x2xbf16>
    %25 = vector.shape_cast %24 : vector<1x32x2xbf16> to vector<32x2xbf16>
    %cst_36 = arith.constant dense<0.000000e+00> : vector<1x2xf32>
    %26 = tpu.matmul %23, %25, %cst_36 {dimension_numbers = #tpu.dot_dimension_numbers<[1], [0], [0], [1], [0, 0, 1, 1], [], []>} : vector<1x32xbf16>, vector<32x2xbf16>, vector<1x2xf32> -> vector<1x2xf32>
    %27 = arith.addf %21, %26 : vector<1x2xf32>
    %c0_37 = arith.constant 0 : index
    %c3 = arith.constant 3 : index
    %c0_38 = arith.constant 0 : index
    %28 = vector.load %arg16[%c0_37, %c3, %c0_38] : memref<2x7x32xbf16, #tpu.memory_space<vmem>>, vector<1x1x32xbf16>
    %29 = vector.shape_cast %28 : vector<1x1x32xbf16> to vector<1x32xbf16>
    %c3_39 = arith.constant 3 : index
    %c0_40 = arith.constant 0 : index
    %c0_41 = arith.constant 0 : index
    %30 = vector.load %arg11[%c3_39, %c0_40, %c0_41] : memref<14x32x2xbf16, #tpu.memory_space<vmem>>, vector<1x32x2xbf16>
    %31 = vector.shape_cast %30 : vector<1x32x2xbf16> to vector<32x2xbf16>
    %cst_42 = arith.constant dense<0.000000e+00> : vector<1x2xf32>
    %32 = tpu.matmul %29, %31, %cst_42 {dimension_numbers = #tpu.dot_dimension_numbers<[1], [0], [0], [1], [0, 0, 1, 1], [], []>} : vector<1x32xbf16>, vector<32x2xbf16>, vector<1x2xf32> -> vector<1x2xf32>
    %33 = arith.addf %27, %32 : vector<1x2xf32>
    %c0_43 = arith.constant 0 : index
    %c4 = arith.constant 4 : index
    %c0_44 = arith.constant 0 : index
    %34 = vector.load %arg16[%c0_43, %c4, %c0_44] : memref<2x7x32xbf16, #tpu.memory_space<vmem>>, vector<1x1x32xbf16>
    %35 = vector.shape_cast %34 : vector<1x1x32xbf16> to vector<1x32xbf16>
    %c4_45 = arith.constant 4 : index
    %c0_46 = arith.constant 0 : index
    %c0_47 = arith.constant 0 : index
    %36 = vector.load %arg11[%c4_45, %c0_46, %c0_47] : memref<14x32x2xbf16, #tpu.memory_space<vmem>>, vector<1x32x2xbf16>
    %37 = vector.shape_cast %36 : vector<1x32x2xbf16> to vector<32x2xbf16>
    %cst_48 = arith.constant dense<0.000000e+00> : vector<1x2xf32>
    %38 = tpu.matmul %35, %37, %cst_48 {dimension_numbers = #tpu.dot_dimension_numbers<[1], [0], [0], [1], [0, 0, 1, 1], [], []>} : vector<1x32xbf16>, vector<32x2xbf16>, vector<1x2xf32> -> vector<1x2xf32>
    %39 = arith.addf %33, %38 : vector<1x2xf32>
    %c0_49 = arith.constant 0 : index
    %c5 = arith.constant 5 : index
    %c0_50 = arith.constant 0 : index
    %40 = vector.load %arg16[%c0_49, %c5, %c0_50] : memref<2x7x32xbf16, #tpu.memory_space<vmem>>, vector<1x1x32xbf16>
    %41 = vector.shape_cast %40 : vector<1x1x32xbf16> to vector<1x32xbf16>
    %c5_51 = arith.constant 5 : index
    %c0_52 = arith.constant 0 : index
    %c0_53 = arith.constant 0 : index
    %42 = vector.load %arg11[%c5_51, %c0_52, %c0_53] : memref<14x32x2xbf16, #tpu.memory_space<vmem>>, vector<1x32x2xbf16>
    %43 = vector.shape_cast %42 : vector<1x32x2xbf16> to vector<32x2xbf16>
    %cst_54 = arith.constant dense<0.000000e+00> : vector<1x2xf32>
    %44 = tpu.matmul %41, %43, %cst_54 {dimension_numbers = #tpu.dot_dimension_numbers<[1], [0], [0], [1], [0, 0, 1, 1], [], []>} : vector<1x32xbf16>, vector<32x2xbf16>, vector<1x2xf32> -> vector<1x2xf32>
    %45 = arith.addf %39, %44 : vector<1x2xf32>
    %c0_55 = arith.constant 0 : index
    %c6 = arith.constant 6 : index
    %c0_56 = arith.constant 0 : index
    %46 = vector.load %arg16[%c0_55, %c6, %c0_56] : memref<2x7x32xbf16, #tpu.memory_space<vmem>>, vector<1x1x32xbf16>
    %47 = vector.shape_cast %46 : vector<1x1x32xbf16> to vector<1x32xbf16>
    %c6_57 = arith.constant 6 : index
    %c0_58 = arith.constant 0 : index
    %c0_59 = arith.constant 0 : index
    %48 = vector.load %arg11[%c6_57, %c0_58, %c0_59] : memref<14x32x2xbf16, #tpu.memory_space<vmem>>, vector<1x32x2xbf16>
    %49 = vector.shape_cast %48 : vector<1x32x2xbf16> to vector<32x2xbf16>
    %cst_60 = arith.constant dense<0.000000e+00> : vector<1x2xf32>
    %50 = tpu.matmul %47, %49, %cst_60 {dimension_numbers = #tpu.dot_dimension_numbers<[1], [0], [0], [1], [0, 0, 1, 1], [], []>} : vector<1x32xbf16>, vector<32x2xbf16>, vector<1x2xf32> -> vector<1x2xf32>
    %51 = arith.addf %45, %50 : vector<1x2xf32>
    %c1_61 = arith.constant 1 : index
    %c0_62 = arith.constant 0 : index
    %c0_63 = arith.constant 0 : index
    %52 = vector.load %arg16[%c1_61, %c0_62, %c0_63] : memref<2x7x32xbf16, #tpu.memory_space<vmem>>, vector<1x1x32xbf16>
    %53 = vector.shape_cast %52 : vector<1x1x32xbf16> to vector<1x32xbf16>
    %c7 = arith.constant 7 : index
    %c0_64 = arith.constant 0 : index
    %c0_65 = arith.constant 0 : index
    %54 = vector.load %arg11[%c7, %c0_64, %c0_65] : memref<14x32x2xbf16, #tpu.memory_space<vmem>>, vector<1x32x2xbf16>
    %55 = vector.shape_cast %54 : vector<1x32x2xbf16> to vector<32x2xbf16>
    %cst_66 = arith.constant dense<0.000000e+00> : vector<1x2xf32>
    %56 = tpu.matmul %53, %55, %cst_66 {dimension_numbers = #tpu.dot_dimension_numbers<[1], [0], [0], [1], [0, 0, 1, 1], [], []>} : vector<1x32xbf16>, vector<32x2xbf16>, vector<1x2xf32> -> vector<1x2xf32>
    %57 = arith.addf %51, %56 : vector<1x2xf32>
    %c1_67 = arith.constant 1 : index
    %c1_68 = arith.constant 1 : index
    %c0_69 = arith.constant 0 : index
    %58 = vector.load %arg16[%c1_67, %c1_68, %c0_69] : memref<2x7x32xbf16, #tpu.memory_space<vmem>>, vector<1x1x32xbf16>
    %59 = vector.shape_cast %58 : vector<1x1x32xbf16> to vector<1x32xbf16>
    %c8 = arith.constant 8 : index
    %c0_70 = arith.constant 0 : index
    %c0_71 = arith.constant 0 : index
    %60 = vector.load %arg11[%c8, %c0_70, %c0_71] : memref<14x32x2xbf16, #tpu.memory_space<vmem>>, vector<1x32x2xbf16>
    %61 = vector.shape_cast %60 : vector<1x32x2xbf16> to vector<32x2xbf16>
    %cst_72 = arith.constant dense<0.000000e+00> : vector<1x2xf32>
    %62 = tpu.matmul %59, %61, %cst_72 {dimension_numbers = #tpu.dot_dimension_numbers<[1], [0], [0], [1], [0, 0, 1, 1], [], []>} : vector<1x32xbf16>, vector<32x2xbf16>, vector<1x2xf32> -> vector<1x2xf32>
    %63 = arith.addf %57, %62 : vector<1x2xf32>
    %c1_73 = arith.constant 1 : index
    %c2_74 = arith.constant 2 : index
    %c0_75 = arith.constant 0 : index
    %64 = vector.load %arg16[%c1_73, %c2_74, %c0_75] : memref<2x7x32xbf16, #tpu.memory_space<vmem>>, vector<1x1x32xbf16>
    %65 = vector.shape_cast %64 : vector<1x1x32xbf16> to vector<1x32xbf16>
    %c9 = arith.constant 9 : index
    %c0_76 = arith.constant 0 : index
    %c0_77 = arith.constant 0 : index
    %66 = vector.load %arg11[%c9, %c0_76, %c0_77] : memref<14x32x2xbf16, #tpu.memory_space<vmem>>, vector<1x32x2xbf16>
    %67 = vector.shape_cast %66 : vector<1x32x2xbf16> to vector<32x2xbf16>
    %cst_78 = arith.constant dense<0.000000e+00> : vector<1x2xf32>
    %68 = tpu.matmul %65, %67, %cst_78 {dimension_numbers = #tpu.dot_dimension_numbers<[1], [0], [0], [1], [0, 0, 1, 1], [], []>} : vector<1x32xbf16>, vector<32x2xbf16>, vector<1x2xf32> -> vector<1x2xf32>
    %69 = arith.addf %63, %68 : vector<1x2xf32>
    %c1_79 = arith.constant 1 : index
    %c3_80 = arith.constant 3 : index
    %c0_81 = arith.constant 0 : index
    %70 = vector.load %arg16[%c1_79, %c3_80, %c0_81] : memref<2x7x32xbf16, #tpu.memory_space<vmem>>, vector<1x1x32xbf16>
    %71 = vector.shape_cast %70 : vector<1x1x32xbf16> to vector<1x32xbf16>
    %c10 = arith.constant 10 : index
    %c0_82 = arith.constant 0 : index
    %c0_83 = arith.constant 0 : index
    %72 = vector.load %arg11[%c10, %c0_82, %c0_83] : memref<14x32x2xbf16, #tpu.memory_space<vmem>>, vector<1x32x2xbf16>
    %73 = vector.shape_cast %72 : vector<1x32x2xbf16> to vector<32x2xbf16>
    %cst_84 = arith.constant dense<0.000000e+00> : vector<1x2xf32>
    %74 = tpu.matmul %71, %73, %cst_84 {dimension_numbers = #tpu.dot_dimension_numbers<[1], [0], [0], [1], [0, 0, 1, 1], [], []>} : vector<1x32xbf16>, vector<32x2xbf16>, vector<1x2xf32> -> vector<1x2xf32>
    %75 = arith.addf %69, %74 : vector<1x2xf32>
    %c1_85 = arith.constant 1 : index
    %c4_86 = arith.constant 4 : index
    %c0_87 = arith.constant 0 : index
    %76 = vector.load %arg16[%c1_85, %c4_86, %c0_87] : memref<2x7x32xbf16, #tpu.memory_space<vmem>>, vector<1x1x32xbf16>
    %77 = vector.shape_cast %76 : vector<1x1x32xbf16> to vector<1x32xbf16>
    %c11 = arith.constant 11 : index
    %c0_88 = arith.constant 0 : index
    %c0_89 = arith.constant 0 : index
    %78 = vector.load %arg11[%c11, %c0_88, %c0_89] : memref<14x32x2xbf16, #tpu.memory_space<vmem>>, vector<1x32x2xbf16>
    %79 = vector.shape_cast %78 : vector<1x32x2xbf16> to vector<32x2xbf16>
    %cst_90 = arith.constant dense<0.000000e+00> : vector<1x2xf32>
    %80 = tpu.matmul %77, %79, %cst_90 {dimension_numbers = #tpu.dot_dimension_numbers<[1], [0], [0], [1], [0, 0, 1, 1], [], []>} : vector<1x32xbf16>, vector<32x2xbf16>, vector<1x2xf32> -> vector<1x2xf32>
    %81 = arith.addf %75, %80 : vector<1x2xf32>
    %c1_91 = arith.constant 1 : index
    %c5_92 = arith.constant 5 : index
    %c0_93 = arith.constant 0 : index
    %82 = vector.load %arg16[%c1_91, %c5_92, %c0_93] : memref<2x7x32xbf16, #tpu.memory_space<vmem>>, vector<1x1x32xbf16>
    %83 = vector.shape_cast %82 : vector<1x1x32xbf16> to vector<1x32xbf16>
    %c12 = arith.constant 12 : index
    %c0_94 = arith.constant 0 : index
    %c0_95 = arith.constant 0 : index
    %84 = vector.load %arg11[%c12, %c0_94, %c0_95] : memref<14x32x2xbf16, #tpu.memory_space<vmem>>, vector<1x32x2xbf16>
    %85 = vector.shape_cast %84 : vector<1x32x2xbf16> to vector<32x2xbf16>
    %cst_96 = arith.constant dense<0.000000e+00> : vector<1x2xf32>
    %86 = tpu.matmul %83, %85, %cst_96 {dimension_numbers = #tpu.dot_dimension_numbers<[1], [0], [0], [1], [0, 0, 1, 1], [], []>} : vector<1x32xbf16>, vector<32x2xbf16>, vector<1x2xf32> -> vector<1x2xf32>
    %87 = arith.addf %81, %86 : vector<1x2xf32>
    %c1_97 = arith.constant 1 : index
    %c6_98 = arith.constant 6 : index
    %c0_99 = arith.constant 0 : index
    %88 = vector.load %arg16[%c1_97, %c6_98, %c0_99] : memref<2x7x32xbf16, #tpu.memory_space<vmem>>, vector<1x1x32xbf16>
    %89 = vector.shape_cast %88 : vector<1x1x32xbf16> to vector<1x32xbf16>
    %c13 = arith.constant 13 : index
    %c0_100 = arith.constant 0 : index
    %c0_101 = arith.constant 0 : index
    %90 = vector.load %arg11[%c13, %c0_100, %c0_101] : memref<14x32x2xbf16, #tpu.memory_space<vmem>>, vector<1x32x2xbf16>
    %91 = vector.shape_cast %90 : vector<1x32x2xbf16> to vector<32x2xbf16>
    %cst_102 = arith.constant dense<0.000000e+00> : vector<1x2xf32>
    %92 = tpu.matmul %89, %91, %cst_102 {dimension_numbers = #tpu.dot_dimension_numbers<[1], [0], [0], [1], [0, 0, 1, 1], [], []>} : vector<1x32xbf16>, vector<32x2xbf16>, vector<1x2xf32> -> vector<1x2xf32>
    %93 = arith.addf %87, %92 : vector<1x2xf32>
    %c0_103 = arith.constant 0 : index
    %c0_104 = arith.constant 0 : index
    %94 = vector.load %arg12[%c0_103, %c0_104] : memref<1x2xf32, #tpu.memory_space<vmem>>, vector<1x2xf32>
    %95 = arith.addf %93, %94 : vector<1x2xf32>
    %c0_105 = arith.constant 0 : index
    %c0_106 = arith.constant 0 : index
    %c0_107 = arith.constant 0 : index
    %96 = vector.load %arg13[%c0_105, %c0_106, %c0_107] : memref<1x1x2xf32, #tpu.memory_space<vmem>>, vector<1x1x2xf32>
    %97 = vector.shape_cast %96 : vector<1x1x2xf32> to vector<1x2xf32>
    %98 = vector.shape_cast %95 : vector<1x2xf32> to vector<1x1x2xf32>
    tpu.vector_store %arg13[%c0_105, %c0_106, %c0_107], %98 {strides = array<i32>} : memref<1x1x2xf32, #tpu.memory_space<vmem>>, vector<1x1x2xf32>,
    return
  }
  func.func @transform_0(%arg0: i32) -> (i32, i32, i32, i32) {
    %c0_i32 = arith.constant 0 : i32
    %c0_i32_0 = arith.constant 0 : i32
    %c0_i32_1 = arith.constant 0 : i32
    %c0_i32_2 = arith.constant 0 : i32
    return %arg0, %c0_i32, %c0_i32_0, %c0_i32_1 : i32, i32, i32, i32
  }
  func.func @transform_1(%arg0: i32) -> (i32, i32, i32) {
    %c0_i32 = arith.constant 0 : i32
    %c0_i32_0 = arith.constant 0 : i32
    %c0_i32_1 = arith.constant 0 : i32
    %c0_i32_2 = arith.constant 0 : i32
    return %c0_i32, %c0_i32_0, %c0_i32_1 : i32, i32, i32
  }
  func.func @transform_2(%arg0: i32) -> (i32, i32) {
    %c0_i32 = arith.constant 0 : i32
    %c0_i32_0 = arith.constant 0 : i32
    %c0_i32_1 = arith.constant 0 : i32
    return %c0_i32, %c0_i32_0 : i32, i32
  }
  func.func @transform_3(%arg0: i32) -> (i32, i32) {
    %c0_i32 = arith.constant 0 : i32
    %c0_i32_0 = arith.constant 0 : i32
    %c0_i32_1 = arith.constant 0 : i32
    return %c0_i32, %c0_i32_0 : i32, i32
  }
  func.func @transform_4(%arg0: i32) -> (i32, i32, i32) {
    %c0_i32 = arith.constant 0 : i32
    %c0_i32_0 = arith.constant 0 : i32
    %c0_i32_1 = arith.constant 0 : i32
    %c0_i32_2 = arith.constant 0 : i32
    return %c0_i32, %c0_i32_0, %c0_i32_1 : i32, i32, i32
  }
  func.func @transform_5(%arg0: i32) -> (i32, i32) {
    %c0_i32 = arith.constant 0 : i32
    %c0_i32_0 = arith.constant 0 : i32
    %c0_i32_1 = arith.constant 0 : i32
    return %c0_i32, %c0_i32_0 : i32, i32
  }
  func.func @transform_6(%arg0: i32) -> (i32, i32) {
    %c0_i32 = arith.constant 0 : i32
    %c0_i32_0 = arith.constant 0 : i32
    %c0_i32_1 = arith.constant 0 : i32
    return %c0_i32, %c0_i32_0 : i32, i32
  }
  func.func @transform_7(%arg0: i32) -> (i32, i32, i32) {
    %c0_i32 = arith.constant 0 : i32
    %c0_i32_0 = arith.constant 0 : i32
    %c0_i32_1 = arith.constant 0 : i32
    %c0_i32_2 = arith.constant 0 : i32
    return %c0_i32, %c0_i32_0, %c0_i32_1 : i32, i32, i32
  }
  func.func @transform_8(%arg0: i32) -> (i32, i32) {
    %c0_i32 = arith.constant 0 : i32
    %c0_i32_0 = arith.constant 0 : i32
    %c0_i32_1 = arith.constant 0 : i32
    return %c0_i32, %c0_i32_0 : i32, i32
  }
  func.func @transform_9(%arg0: i32) -> (i32, i32) {
    %c0_i32 = arith.constant 0 : i32
    %c0_i32_0 = arith.constant 0 : i32
    %c0_i32_1 = arith.constant 0 : i32
    return %c0_i32, %c0_i32_0 : i32, i32
  }
  func.func @transform_10(%arg0: i32) -> (i32, i32, i32) {
    %c0_i32 = arith.constant 0 : i32
    %c0_i32_0 = arith.constant 0 : i32
    %c0_i32_1 = arith.constant 0 : i32
    %c0_i32_2 = arith.constant 0 : i32
    return %c0_i32, %c0_i32_0, %c0_i32_1 : i32, i32, i32
  }
  func.func @transform_11(%arg0: i32) -> (i32, i32) {
    %c0_i32 = arith.constant 0 : i32
    %c0_i32_0 = arith.constant 0 : i32
    %c0_i32_1 = arith.constant 0 : i32
    return %c0_i32, %c0_i32_0 : i32, i32
  }
  func.func @transform_12(%arg0: i32) -> (i32, i32, i32) {
    %c0_i32 = arith.constant 0 : i32
    %c0_i32_0 = arith.constant 0 : i32
    %c0_i32_1 = arith.constant 0 : i32
    return %arg0, %c0_i32, %c0_i32_0 : i32, i32, i32
  }
}

</mosaic_0001>

<llo_original>
// kernel: dqn_forward.1
$region0: #{dqn_forward.1}
  #allocation0 [shape = 'u32[]', space=smem, size = 0x4, offset = 0x4, fixed_abs, tag = 'smem constant byte address 0x4 - core index']
  #allocation1 [shape = 'u32[144,128]{1,0:T(1,128)}', space=vmem, size = 0x12000, scoped, tag = 'internal scratch']
  #allocation2 [shape = 'bf16[18,38,16]{2,1,0:T(8,128)(2,1)}', space=vmem, size = 0x2d000, scoped, tag = 'scratch operand']
  #allocation3 [shape = 'bf16[7,17,32]{2,1,0:T(8,128)(2,1)}', space=vmem, size = 0xa800, scoped, tag = 'scratch operand']
  #allocation4 [shape = 'bf16[2,7,32]{2,1,0:T(8,128)(2,1)}', space=vmem, size = 0x1000, scoped, tag = 'scratch operand']
  %s0 = inlined_call_operand.vmem [shape: bf16[2,40,80,3], index: 0, kind: input, shape index: {}]
  %s1 = inlined_call_operand.vmem [shape: bf16[25,3,16], index: 1, kind: input, shape index: {}]
  %s2 = inlined_call_operand.vmem [shape: f32[1,16], index: 2, kind: input, shape index: {}]
  %s3 = inlined_call_operand.vmem [shape: f32[38,75], index: 3, kind: input, shape index: {}]
  %s4 = inlined_call_operand.vmem [shape: bf16[25,16,32], index: 4, kind: input, shape index: {}]
  %s5 = inlined_call_operand.vmem [shape: f32[1,32], index: 5, kind: input, shape index: {}]
  %s6 = inlined_call_operand.vmem [shape: f32[17,33], index: 6, kind: input, shape index: {}]
  %s7 = inlined_call_operand.vmem [shape: bf16[25,32,32], index: 7, kind: input, shape index: {}]
  %s8 = inlined_call_operand.vmem [shape: f32[1,32], index: 8, kind: input, shape index: {}]
  %s9 = inlined_call_operand.vmem [shape: f32[7,13], index: 9, kind: input, shape index: {}]
  %s10 = inlined_call_operand.vmem [shape: bf16[14,32,2], index: 10, kind: input, shape index: {}]
  %s11 = inlined_call_operand.vmem [shape: f32[1,2], index: 11, kind: input, shape index: {}]
  %s12 = inlined_call_operand.hbm [shape: f32[2,1,2], index: 12, kind: output, shape index: {}]
  %s13 = sld [smem:[#allocation0]]
  $region102: #{dqn_forward.1} parent=0
    _
  %s15 = ssub.s32 1, %s13
  %s16 = scalar_select 0, %s15, %s13
  $region1: #{dqn_forward.1} parent=0
    #allocation5 [shape = 'u8[1024]{0}', space=vmem, size = 0x400, scoped, tag = 'output window, operand 0']
    #allocation6 [shape = 's32[2]{0}', space=sflag, size = 0x8, scoped, tag = 'scoped memory for dqn_forward.1']
    %17 = vsyncpa [#allocation6], 0
    %s18 = scalar_lea.sflag [#allocation6], 1
    %19 = vsyncpa %s18, 0
    loop: start=0, step=1, limit=4
    $region2: #{dqn_forward.1} parent=1 // loop_pre_header
      _
    $region3: #{dqn_forward.1} parent=1 // loop_header
      %s21 = sphi 0, %s25
      %p22 = scmp.ge.s32.totalorder %s21, 4
      %s31 = sphi 0, %s33
      %s34 = sphi 0, %s31
      %s35 = sphi 0, %s34
      %s51 = sphi 0, %s35
      %s55 = sphi 0, %s55
      %s57 = sphi 0, %s55
      %s58 = sphi 0, %s57
      %s72 = sphi 0, %s58
      %s76 = sphi 0, %s76
      %s78 = sphi 0, %s76
      %s79 = sphi 0, %s78
      %s93 = sphi 0, %s79
      %s97 = sphi 0, %s97
      %s99 = sphi 0, %s97
      %s100 = sphi 0, %s99
      %s114 = sphi 0, %s100
      %s118 = sphi 0, %s118
      %s120 = sphi 0, %s118
      %s121 = sphi 0, %s120
      %s135 = sphi 0, %s121
      %s139 = sphi 0, %s139
      %s141 = sphi 0, %s139
      %s142 = sphi 0, %s141
      %s156 = sphi 0, %s142
      %s160 = sphi 0, %s160
      %s162 = sphi 0, %s160
      %s163 = sphi 0, %s162
      %s177 = sphi 0, %s163
      %s181 = sphi 0, %s181
      %s183 = sphi 0, %s181
      %s184 = sphi 0, %s183
      %s198 = sphi 0, %s184
      %s202 = sphi 0, %s202
      %s204 = sphi 0, %s202
      %s205 = sphi 0, %s204
      %s219 = sphi 0, %s205
      %s223 = sphi 0, %s223
      %s225 = sphi 0, %s223
      %s226 = sphi 0, %s225
      %s240 = sphi 0, %s226
      %s244 = sphi 0, %s244
      %s246 = sphi 0, %s244
      %s247 = sphi 0, %s246
      %s261 = sphi 0, %s247
      %s265 = sphi 0, %s265
      %s267 = sphi 0, %s265
      %s268 = sphi 0, %s267
      %s282 = sphi 0, %s268
      %s288 = sphi 0, %s290
      %s291 = sphi 0, %s288
      %s292 = sphi 0, %s291
      %s308 = sphi 0, %s292
    $region4: #{dqn_forward.1} parent=1 // loop_header_branch
      %24 = sbr.rel (%p22) target = $region8
    $region5: #{dqn_forward.1} parent=1 // loop_body
      %s26 = ssub.s32 %s21, 1
      %s27 = ssub.s32 %s21, 2
      %s28 = sadd.s32 %s21, 1
      %s29 = ssub.s32 %s21, %s28
      %p30 = scmp.eq.s32.totalorder %s29, 0
      %s32 = sadd.s32 %s31, 1
      %s33 = scalar_select %p30, %s31, %s32
      %p36 = pneg %p30
      %p37 = scmp.eq.s32.totalorder %s21, 1
      %p38 = por %p36, %p37
      %p39 = scmp.ne.s32.totalorder %s31, %s34
      %p40 = scmp.eq.s32.totalorder %s21, 0
      %p41 = por %p39, %p40
      %p42 = scmp.ne.s32.totalorder %s31, %s34
      %p43 = scmp.eq.s32.totalorder %s26, 1
      %p44 = por %p42, %p43
      %p45 = scmp.ne.s32.totalorder %s34, %s35
      %p46 = scmp.eq.s32.totalorder %s26, 0
      %p47 = por %p45, %p46
      %p48 = scmp.ne.s32.totalorder %s34, %s35
      %p49 = scmp.eq.s32.totalorder %s27, 1
      %p50 = por %p48, %p49
      %p52 = scmp.ne.s32.totalorder %s35, %s51
      %p53 = scmp.eq.s32.totalorder %s27, 0
      %p54 = por %p52, %p53
      %s56 = sadd.s32 %s55, 1
      %p59 = scmp.eq.s32.totalorder %s21, 1
      %p60 = scmp.ne.s32.totalorder %s55, %s57
      %p61 = scmp.eq.s32.totalorder %s21, 0
      %p62 = por %p60, %p61
      %p63 = scmp.ne.s32.totalorder %s55, %s57
      %p64 = scmp.eq.s32.totalorder %s26, 1
      %p65 = por %p63, %p64
      %p66 = scmp.ne.s32.totalorder %s57, %s58
      %p67 = scmp.eq.s32.totalorder %s26, 0
      %p68 = por %p66, %p67
      %p69 = scmp.ne.s32.totalorder %s57, %s58
      %p70 = scmp.eq.s32.totalorder %s27, 1
      %p71 = por %p69, %p70
      %p73 = scmp.ne.s32.totalorder %s58, %s72
      %p74 = scmp.eq.s32.totalorder %s27, 0
      %p75 = por %p73, %p74
      %s77 = sadd.s32 %s76, 1
      %p80 = scmp.eq.s32.totalorder %s21, 1
      %p81 = scmp.ne.s32.totalorder %s76, %s78
      %p82 = scmp.eq.s32.totalorder %s21, 0
      %p83 = por %p81, %p82
      %p84 = scmp.ne.s32.totalorder %s76, %s78
      %p85 = scmp.eq.s32.totalorder %s26, 1
      %p86 = por %p84, %p85
      %p87 = scmp.ne.s32.totalorder %s78, %s79
      %p88 = scmp.eq.s32.totalorder %s26, 0
      %p89 = por %p87, %p88
      %p90 = scmp.ne.s32.totalorder %s78, %s79
      %p91 = scmp.eq.s32.totalorder %s27, 1
      %p92 = por %p90, %p91
      %p94 = scmp.ne.s32.totalorder %s79, %s93
      %p95 = scmp.eq.s32.totalorder %s27, 0
      %p96 = por %p94, %p95
      %s98 = sadd.s32 %s97, 1
      %p101 = scmp.eq.s32.totalorder %s21, 1
      %p102 = scmp.ne.s32.totalorder %s97, %s99
      %p103 = scmp.eq.s32.totalorder %s21, 0
      %p104 = por %p102, %p103
      %p105 = scmp.ne.s32.totalorder %s97, %s99
      %p106 = scmp.eq.s32.totalorder %s26, 1
      %p107 = por %p105, %p106
      %p108 = scmp.ne.s32.totalorder %s99, %s100
      %p109 = scmp.eq.s32.totalorder %s26, 0
      %p110 = por %p108, %p109
      %p111 = scmp.ne.s32.totalorder %s99, %s100
      %p112 = scmp.eq.s32.totalorder %s27, 1
      %p113 = por %p111, %p112
      %p115 = scmp.ne.s32.totalorder %s100, %s114
      %p116 = scmp.eq.s32.totalorder %s27, 0
      %p117 = por %p115, %p116
      %s119 = sadd.s32 %s118, 1
      %p122 = scmp.eq.s32.totalorder %s21, 1
      %p123 = scmp.ne.s32.totalorder %s118, %s120
      %p124 = scmp.eq.s32.totalorder %s21, 0
      %p125 = por %p123, %p124
      %p126 = scmp.ne.s32.totalorder %s118, %s120
      %p127 = scmp.eq.s32.totalorder %s26, 1
      %p128 = por %p126, %p127
      %p129 = scmp.ne.s32.totalorder %s120, %s121
      %p130 = scmp.eq.s32.totalorder %s26, 0
      %p131 = por %p129, %p130
      %p132 = scmp.ne.s32.totalorder %s120, %s121
      %p133 = scmp.eq.s32.totalorder %s27, 1
      %p134 = por %p132, %p133
      %p136 = scmp.ne.s32.totalorder %s121, %s135
      %p137 = scmp.eq.s32.totalorder %s27, 0
      %p138 = por %p136, %p137
      %s140 = sadd.s32 %s139, 1
      %p143 = scmp.eq.s32.totalorder %s21, 1
      %p144 = scmp.ne.s32.totalorder %s139, %s141
      %p145 = scmp.eq.s32.totalorder %s21, 0
      %p146 = por %p144, %p145
      %p147 = scmp.ne.s32.totalorder %s139, %s141
      %p148 = scmp.eq.s32.totalorder %s26, 1
      %p149 = por %p147, %p148
      %p150 = scmp.ne.s32.totalorder %s141, %s142
      %p151 = scmp.eq.s32.totalorder %s26, 0
      %p152 = por %p150, %p151
      %p153 = scmp.ne.s32.totalorder %s141, %s142
      %p154 = scmp.eq.s32.totalorder %s27, 1
      %p155 = por %p153, %p154
      %p157 = scmp.ne.s32.totalorder %s142, %s156
      %p158 = scmp.eq.s32.totalorder %s27, 0
      %p159 = por %p157, %p158
      %s161 = sadd.s32 %s160, 1
      %p164 = scmp.eq.s32.totalorder %s21, 1
      %p165 = scmp.ne.s32.totalorder %s160, %s162
      %p166 = scmp.eq.s32.totalorder %s21, 0
      %p167 = por %p165, %p166
      %p168 = scmp.ne.s32.totalorder %s160, %s162
      %p169 = scmp.eq.s32.totalorder %s26, 1
      %p170 = por %p168, %p169
      %p171 = scmp.ne.s32.totalorder %s162, %s163
      %p172 = scmp.eq.s32.totalorder %s26, 0
      %p173 = por %p171, %p172
      %p174 = scmp.ne.s32.totalorder %s162, %s163
      %p175 = scmp.eq.s32.totalorder %s27, 1
      %p176 = por %p174, %p175
      %p178 = scmp.ne.s32.totalorder %s163, %s177
      %p179 = scmp.eq.s32.totalorder %s27, 0
      %p180 = por %p178, %p179
      %s182 = sadd.s32 %s181, 1
      %p185 = scmp.eq.s32.totalorder %s21, 1
      %p186 = scmp.ne.s32.totalorder %s181, %s183
      %p187 = scmp.eq.s32.totalorder %s21, 0
      %p188 = por %p186, %p187
      %p189 = scmp.ne.s32.totalorder %s181, %s183
      %p190 = scmp.eq.s32.totalorder %s26, 1
      %p191 = por %p189, %p190
      %p192 = scmp.ne.s32.totalorder %s183, %s184
      %p193 = scmp.eq.s32.totalorder %s26, 0
      %p194 = por %p192, %p193
      %p195 = scmp.ne.s32.totalorder %s183, %s184
      %p196 = scmp.eq.s32.totalorder %s27, 1
      %p197 = por %p195, %p196
      %p199 = scmp.ne.s32.totalorder %s184, %s198
      %p200 = scmp.eq.s32.totalorder %s27, 0
      %p201 = por %p199, %p200
      %s203 = sadd.s32 %s202, 1
      %p206 = scmp.eq.s32.totalorder %s21, 1
      %p207 = scmp.ne.s32.totalorder %s202, %s204
      %p208 = scmp.eq.s32.totalorder %s21, 0
      %p209 = por %p207, %p208
      %p210 = scmp.ne.s32.totalorder %s202, %s204
      %p211 = scmp.eq.s32.totalorder %s26, 1
      %p212 = por %p210, %p211
      %p213 = scmp.ne.s32.totalorder %s204, %s205
      %p214 = scmp.eq.s32.totalorder %s26, 0
      %p215 = por %p213, %p214
      %p216 = scmp.ne.s32.totalorder %s204, %s205
      %p217 = scmp.eq.s32.totalorder %s27, 1
      %p218 = por %p216, %p217
      %p220 = scmp.ne.s32.totalorder %s205, %s219
      %p221 = scmp.eq.s32.totalorder %s27, 0
      %p222 = por %p220, %p221
      %s224 = sadd.s32 %s223, 1
      %p227 = scmp.eq.s32.totalorder %s21, 1
      %p228 = scmp.ne.s32.totalorder %s223, %s225
      %p229 = scmp.eq.s32.totalorder %s21, 0
      %p230 = por %p228, %p229
      %p231 = scmp.ne.s32.totalorder %s223, %s225
      %p232 = scmp.eq.s32.totalorder %s26, 1
      %p233 = por %p231, %p232
      %p234 = scmp.ne.s32.totalorder %s225, %s226
      %p235 = scmp.eq.s32.totalorder %s26, 0
      %p236 = por %p234, %p235
      %p237 = scmp.ne.s32.totalorder %s225, %s226
      %p238 = scmp.eq.s32.totalorder %s27, 1
      %p239 = por %p237, %p238
      %p241 = scmp.ne.s32.totalorder %s226, %s240
      %p242 = scmp.eq.s32.totalorder %s27, 0
      %p243 = por %p241, %p242
      %s245 = sadd.s32 %s244, 1
      %p248 = scmp.eq.s32.totalorder %s21, 1
      %p249 = scmp.ne.s32.totalorder %s244, %s246
      %p250 = scmp.eq.s32.totalorder %s21, 0
      %p251 = por %p249, %p250
      %p252 = scmp.ne.s32.totalorder %s244, %s246
      %p253 = scmp.eq.s32.totalorder %s26, 1
      %p254 = por %p252, %p253
      %p255 = scmp.ne.s32.totalorder %s246, %s247
      %p256 = scmp.eq.s32.totalorder %s26, 0
      %p257 = por %p255, %p256
      %p258 = scmp.ne.s32.totalorder %s246, %s247
      %p259 = scmp.eq.s32.totalorder %s27, 1
      %p260 = por %p258, %p259
      %p262 = scmp.ne.s32.totalorder %s247, %s261
      %p263 = scmp.eq.s32.totalorder %s27, 0
      %p264 = por %p262, %p263
      %s266 = sadd.s32 %s265, 1
      %p269 = scmp.eq.s32.totalorder %s21, 1
      %p270 = scmp.ne.s32.totalorder %s265, %s267
      %p271 = scmp.eq.s32.totalorder %s21, 0
      %p272 = por %p270, %p271
      %p273 = scmp.ne.s32.totalorder %s265, %s267
      %p274 = scmp.eq.s32.totalorder %s26, 1
      %p275 = por %p273, %p274
      %p276 = scmp.ne.s32.totalorder %s267, %s268
      %p277 = scmp.eq.s32.totalorder %s26, 0
      %p278 = por %p276, %p277
      %p279 = scmp.ne.s32.totalorder %s267, %s268
      %p280 = scmp.eq.s32.totalorder %s27, 1
      %p281 = por %p279, %p280
      %p283 = scmp.ne.s32.totalorder %s268, %s282
      %p284 = scmp.eq.s32.totalorder %s27, 0
      %p285 = por %p283, %p284
      %s286 = ssub.s32 %s21, %s28
      %p287 = scmp.eq.s32.totalorder %s286, 0
      %s289 = sadd.s32 %s288, 1
      %s290 = scalar_select %p287, %s288, %s289
      %p293 = pneg %p287
      %p294 = scmp.eq.s32.totalorder %s21, 1
      %p295 = por %p293, %p294
      %p296 = scmp.ne.s32.totalorder %s288, %s291
      %p297 = scmp.eq.s32.totalorder %s21, 0
      %p298 = por %p296, %p297
      %p299 = scmp.ne.s32.totalorder %s288, %s291
      %p300 = scmp.eq.s32.totalorder %s26, 1
      %p301 = por %p299, %p300
      %p302 = scmp.ne.s32.totalorder %s291, %s292
      %p303 = scmp.eq.s32.totalorder %s26, 0
      %p304 = por %p302, %p303
      %p305 = scmp.ne.s32.totalorder %s291, %s292
      %p306 = scmp.eq.s32.totalorder %s27, 1
      %p307 = por %p305, %p306
      %p309 = scmp.ne.s32.totalorder %s292, %s308
      %p310 = scmp.eq.s32.totalorder %s27, 0
      %p311 = por %p309, %p310
      %p312 = scmp.le.s32.totalorder 1, %s21
      %p313 = scmp.lt.s32.totalorder %s21, 3
      %p314 = pnand %p312, %p313
      %p315 = pneg %p314
      // Predicated region
      $region9: #{dqn_forward.1} parent=5 // pred_check
        _
      $region10: #{dqn_forward.1} parent=5 // pred_check_branch
        %317 = sbr.rel (%p314) target = $region12
      $region11: #{dqn_forward.1} parent=5 // pred_region
        %s318 = ssub.s32 %s21, 1
        // Predicated region
        $region13: #{dqn_forward.1} parent=11 // pred_check
          %p319 = pneg %p68
        $region14: #{dqn_forward.1} parent=11 // pred_check_branch
          %321 = sbr.rel (%p319) target = $region16
        $region15: #{dqn_forward.1} parent=11 // pred_region
          _
        $region16: #{dqn_forward.1} parent=11 // pred_fallthru
          _
        // Predicated region
        $region17: #{dqn_forward.1} parent=11 // pred_check
          %p322 = pneg %p89
        $region18: #{dqn_forward.1} parent=11 // pred_check_branch
          %324 = sbr.rel (%p322) target = $region20
        $region19: #{dqn_forward.1} parent=11 // pred_region
          _
        $region20: #{dqn_forward.1} parent=11 // pred_fallthru
          _
        // Predicated region
        $region21: #{dqn_forward.1} parent=11 // pred_check
          %p325 = pneg %p110
        $region22: #{dqn_forward.1} parent=11 // pred_check_branch
          %327 = sbr.rel (%p325) target = $region24
        $region23: #{dqn_forward.1} parent=11 // pred_region
          _
        $region24: #{dqn_forward.1} parent=11 // pred_fallthru
          _
        // Predicated region
        $region25: #{dqn_forward.1} parent=11 // pred_check
          %p328 = pneg %p131
        $region26: #{dqn_forward.1} parent=11 // pred_check_branch
          %330 = sbr.rel (%p328) target = $region28
        $region27: #{dqn_forward.1} parent=11 // pred_region
          _
        $region28: #{dqn_forward.1} parent=11 // pred_fallthru
          _
        // Predicated region
        $region29: #{dqn_forward.1} parent=11 // pred_check
          %p331 = pneg %p152
        $region30: #{dqn_forward.1} parent=11 // pred_check_branch
          %333 = sbr.rel (%p331) target = $region32
        $region31: #{dqn_forward.1} parent=11 // pred_region
          _
        $region32: #{dqn_forward.1} parent=11 // pred_fallthru
          _
        // Predicated region
        $region33: #{dqn_forward.1} parent=11 // pred_check
          %p334 = pneg %p173
        $region34: #{dqn_forward.1} parent=11 // pred_check_branch
          %336 = sbr.rel (%p334) target = $region36
        $region35: #{dqn_forward.1} parent=11 // pred_region
          _
        $region36: #{dqn_forward.1} parent=11 // pred_fallthru
          _
        // Predicated region
        $region37: #{dqn_forward.1} parent=11 // pred_check
          %p337 = pneg %p194
        $region38: #{dqn_forward.1} parent=11 // pred_check_branch
          %339 = sbr.rel (%p337) target = $region40
        $region39: #{dqn_forward.1} parent=11 // pred_region
          _
        $region40: #{dqn_forward.1} parent=11 // pred_fallthru
          _
        // Predicated region
        $region41: #{dqn_forward.1} parent=11 // pred_check
          %p340 = pneg %p215
        $region42: #{dqn_forward.1} parent=11 // pred_check_branch
          %342 = sbr.rel (%p340) target = $region44
        $region43: #{dqn_forward.1} parent=11 // pred_region
          _
        $region44: #{dqn_forward.1} parent=11 // pred_fallthru
          _
        // Predicated region
        $region45: #{dqn_forward.1} parent=11 // pred_check
          %p343 = pneg %p236
        $region46: #{dqn_forward.1} parent=11 // pred_check_branch
          %345 = sbr.rel (%p343) target = $region48
        $region47: #{dqn_forward.1} parent=11 // pred_region
          _
        $region48: #{dqn_forward.1} parent=11 // pred_fallthru
          _
        // Predicated region
        $region49: #{dqn_forward.1} parent=11 // pred_check
          %p346 = pneg %p257
        $region50: #{dqn_forward.1} parent=11 // pred_check_branch
          %348 = sbr.rel (%p346) target = $region52
        $region51: #{dqn_forward.1} parent=11 // pred_region
          _
        $region52: #{dqn_forward.1} parent=11 // pred_fallthru
          _
        // Predicated region
        $region53: #{dqn_forward.1} parent=11 // pred_check
          %p349 = pneg %p278
        $region54: #{dqn_forward.1} parent=11 // pred_check_branch
          %351 = sbr.rel (%p349) target = $region56
        $region55: #{dqn_forward.1} parent=11 // pred_region
          _
        $region56: #{dqn_forward.1} parent=11 // pred_fallthru
          _
      $region12: #{dqn_forward.1} parent=5 // pred_fallthru
        _
      %p352 = scmp.lt.s32.totalorder %s21, 2
      // Predicated region
      $region57: #{dqn_forward.1} parent=5 // pred_check
        %p353 = pneg %p352
      $region58: #{dqn_forward.1} parent=5 // pred_check_branch
        %355 = sbr.rel (%p353) target = $region60
      $region59: #{dqn_forward.1} parent=5 // pred_region
        // Predicated region
        $region61: #{dqn_forward.1} parent=59 // pred_check
          %p356 = pneg %p41
        $region62: #{dqn_forward.1} parent=59 // pred_check_branch
          %358 = sbr.rel (%p356) target = $region64
        $region63: #{dqn_forward.1} parent=59 // pred_region
          %p359 = scmp.lt.s32.totalorder %s21, 1
          %s360 = scalar_select %p359, %s21, 1
          %s361 = smul.addr %s360, 400
          %s362 = smul.addr %s361, 4
          %s363 = scalar_lea.vmem %s0, %s362
        $region64: #{dqn_forward.1} parent=59 // pred_fallthru
          _
      $region60: #{dqn_forward.1} parent=5 // pred_fallthru
        _
      %p364 = scmp.le.s32.totalorder 1, %s21
      %p365 = scmp.lt.s32.totalorder %s21, 3
      %p366 = pnand %p364, %p365
      %p367 = pneg %p366
      // Predicated region
      $region65: #{dqn_forward.1} parent=5 // pred_check
        _
      $region66: #{dqn_forward.1} parent=5 // pred_check_branch
        %369 = sbr.rel (%p366) target = $region68
      $region67: #{dqn_forward.1} parent=5 // pred_region
        %s370 = ssub.s32 %s21, 1
        %p371 = scmp.lt.s32.totalorder %s26, 1
        %s372 = scalar_select %p371, %s26, 1
        %s373 = smul.addr %s372, 400
        %s374 = smul.addr %s373, 4
        %s375 = scalar_lea.vmem %s0, %s374
        %p376 = pneg %p47
        %p377 = pneg %p44
        %p378 = pneg %p68
        %p379 = pneg %p65
        %p380 = pneg %p89
        %p381 = pneg %p86
        %p382 = pneg %p110
        %p383 = pneg %p107
        %p384 = pneg %p131
        %p385 = pneg %p128
        %p386 = pneg %p152
        %p387 = pneg %p149
        %p388 = pneg %p173
        %p389 = pneg %p170
        %p390 = pneg %p194
        %p391 = pneg %p191
        %p392 = pneg %p215
        %p393 = pneg %p212
        %p394 = pneg %p236
        %p395 = pneg %p233
        %p396 = pneg %p257
        %p397 = pneg %p254
        %p398 = pneg %p278
        %p399 = pneg %p275
        %p400 = pneg %p304
        %p401 = pneg %p301
        %s402 = sand.u32 %s291, 1
        %s403 = scalar_lea.sflag [#allocation6], %s402
        %s404 = sand.u32 %s291, 1
        %s405 = scalar_lea.vmem [#allocation5], %s404
        %p406 = scmp.lt.s32.totalorder %s26, 1
        %s407 = scalar_select %p406, %s26, 1
        %s408 = smul.addr %s407, 400
        %s409 = smul.addr %s408, 4
        %s410 = scalar_lea.vmem %s0, %s409
        %v412 = vld [vmem:[%s3] sm:$0xff]
        %v413 = vld [vmem:[%s3 + $0x8] sm:$0xff]
        %v414 = vld [vmem:[%s3 + $0x10] sm:$0xff]
        %v415 = vld [vmem:[%s3 + $0x18] sm:$0xff]
        %v416 = vld [vmem:[%s3 + $0x20] sm:$0x3f]
        %v417 = vld [vmem:[%s2] sm:$0x1]
        loop: start=0, step=1, limit=18
        $region69: #{dqn_forward.1} parent=67 // loop_pre_header
          _
        $region70: #{dqn_forward.1} parent=67 // loop_header
          %s419 = sphi 0, %s423
          %p420 = scmp.ge.s32.totalorder %s419, 18
        $region71: #{dqn_forward.1} parent=67 // loop_header_branch
          %422 = sbr.rel (%p420) target = $region75
        $region72: #{dqn_forward.1} parent=67 // loop_body
          %s424 = smul.u32 %s419, 2
          %s425 = smul.u32 %s424, 10
          %s426 = smul.addr %s425, 4
          %s427 = scalar_lea.vmem %s410, %s426
          %v428 = vld [vmem:[%s427] sm:$0xf]
          %v429 = vld [vmem:[%s427 + $0x4] sm:$0xf]
          %v430 = vld [vmem:[%s427 + $0x8] sm:$0xf]
          %v431 = vld [vmem:[%s427 + $0xc] sm:$0xf]
          %v432 = vld [vmem:[%s427 + $0x10] sm:$0xf]
          %v433 = vld [vmem:[%s427 + $0x14] sm:$0xf]
          %v434 = vld [vmem:[%s427 + $0x18] sm:$0xf]
          %v435 = vld [vmem:[%s427 + $0x1c] sm:$0xf]
          %v436 = vld [vmem:[%s427 + $0x20] sm:$0xf]
          %v437 = vld [vmem:[%s427 + $0x24] sm:$0x3]
          %v438 = vld [vmem:[%s1] sm:$0x3]
          %s439 = scalar_lea.vmem %s1, 2
          %v440 = vld [vmem:[%s439] sm:$0x3]
          %v451 = vunpack.c.l.b16 %v428
          %v452 = vunpack.c.l.b16 %v429
          %v453 = vunpack.c.l.b16 %v430
          %v454 = vunpack.c.l.b16 %v431
          %v455 = vunpack.c.l.b16 %v432
          %v456 = vunpack.c.l.b16 %v433
          %v457 = vunpack.c.l.b16 %v434
          %v458 = vunpack.c.l.b16 %v435
          %v459 = vunpack.c.l.b16 %v436
          %v460 = vunpack.c.l.b16 %v437
          %v461 = vpack.c.b16 %v452, %v451
          %v462 = vpack.c.b16 %v454, %v453
          %v463 = vpack.c.b16 %v456, %v455
          %v464 = vpack.c.b16 %v458, %v457
          %v465 = vpack.c.b16 %v460, %v459
          %vm466 = vsmask.f32 7424
          %v468 = vshrl.u32 %v461, 16
          %v470 = vshll.u32 %v461, 16
          %v472 = vrot.slane %v470, 1
          %v473 = vor.u32 %v468, %v472
          %v475 = vshll.u32 %v462, 16
          %v477 = vrot.slane %v475, 1
          %v478 = vsel %vm466, %v473, %v477
          %v479 = vshrl.u32 %v462, 16
          %v481 = vor.u32 %v479, %v477
          %v483 = vshll.u32 %v463, 16
          %v485 = vrot.slane %v483, 1
          %v486 = vsel %vm466, %v481, %v485
          %v487 = vshrl.u32 %v463, 16
          %v489 = vor.u32 %v487, %v485
          %v491 = vshll.u32 %v464, 16
          %v493 = vrot.slane %v491, 1
          %v494 = vsel %vm466, %v489, %v493
          %v495 = vshrl.u32 %v464, 16
          %v497 = vor.u32 %v495, %v493
          %v499 = vshll.u32 %v465, 16
          %v501 = vrot.slane %v499, 1
          %v502 = vsel %vm466, %v497, %v501
          %v503 = vshrl.u32 %v465, 16
          %v505 = vor.u32 %v503, %v501
          %vm506 = vcmask 23552
          %v508 = vsel %vm506, %v478, 0
          %v511 = vsel %vm506, %v486, 0
          %v514 = vsel %vm506, %v494, 0
          %v517 = vsel %vm506, %v502, 0
          %v520 = vsel %vm506, %v505, 0
          %vm522 = vcmask 1040384
          %vm523 = vcmask 1041408
          %v524 = vsel %vm522, 4294967295, 65535
          %v525 = vsel %vm523, %v524, 0
          %v527 = vand.u32 %v440, %v525
          %529 = vmatprep.subr.bf16.mxu0 0
          %530 = vmatpush1.bf16.msra.mxu0 %v527
          %531 = vmatprep.subr.bf16.mxu0 0
          %532 = vmatpush1.bf16.msra.mxu0 0
          %533 = vmatprep.subr.bf16.mxu0 0
          %534 = vmatpush1.bf16.msra.mxu0 0
          %535 = vmatprep.subr.bf16.mxu0 0
          %536 = vmatpush1.bf16.msra.mxu0 0
          %537 = vmatprep.subr.bf16.mxu0 0
          %538 = vmatpush1.bf16.msra.mxu0 0
          %539 = vmatprep.subr.bf16.mxu0 0
          %540 = vmatpush1.bf16.msra.mxu0 0
          %541 = vmatprep.subr.bf16.mxu0 0
          %542 = vmatpush1.bf16.msra.mxu0 0
          %543 = vmatprep.subr.bf16.mxu0 0
          %544 = vmatpush1.bf16.msra.mxu0 0
          %545 = vmatprep.subr.bf16.mxu0 0
          %546 = vmatpush1.bf16.msra.mxu0 0
          %547 = vmatprep.subr.bf16.mxu0 0
          %548 = vmatpush1.bf16.msra.mxu0 0
          %549 = vmatprep.subr.bf16.mxu0 0
          %550 = vmatpush1.bf16.msra.mxu0 0
          %551 = vmatprep.subr.bf16.mxu0 0
          %552 = vmatpush1.bf16.msra.mxu0 0
          %553 = vmatprep.subr.bf16.mxu0 0
          %554 = vmatpush1.bf16.msra.mxu0 0
          %555 = vmatprep.subr.bf16.mxu0 0
          %556 = vmatpush1.bf16.msra.mxu0 0
          %557 = vmatprep.subr.bf16.mxu0 0
          %558 = vmatpush1.bf16.msra.mxu0 0
          %559 = vmatprep.subr.bf16.mxu0 0
          %560 = vmatpush1.bf16.msra.mxu0 0
          %561 = vmatprep.mubr.bf16.mxu0 0
          %562 = vmatmul.mubr.bf16.gmra.mrb[0].mxu0 %v508
          %v563 = vpop.f32.mrb[0].mxu0
          %v564 = vadd.f32 0.0, %v563
          %v565 = vpop.f32.mrb[0].mxu0
          %v566 = vpop.f32.mrb[0].mxu0
          %v567 = vadd.f32 0.0, %v566
          %v568 = vpop.f32.mrb[0].mxu0
          %569 = vmatprep.mubr.bf16.mxu0 0
          %570 = vmatmul.mubr.bf16.gmra.mrb[0].mxu0 %v511
          %v571 = vpop.f32.mrb[0].mxu0
          %v572 = vadd.f32 0.0, %v571
          %v573 = vpop.f32.mrb[0].mxu0
          %v574 = vpop.f32.mrb[0].mxu0
          %v575 = vadd.f32 0.0, %v574
          %v576 = vpop.f32.mrb[0].mxu0
          %577 = vmatprep.mubr.bf16.mxu0 0
          %578 = vmatmul.mubr.bf16.gmra.mrb[0].mxu0 %v514
          %v579 = vpop.f32.mrb[0].mxu0
          %v580 = vadd.f32 0.0, %v579
          %v581 = vpop.f32.mrb[0].mxu0
          %v582 = vpop.f32.mrb[0].mxu0
          %v583 = vadd.f32 0.0, %v582
          %v584 = vpop.f32.mrb[0].mxu0
          %585 = vmatprep.mubr.bf16.mxu0 0
          %586 = vmatmul.mubr.bf16.gmra.mrb[0].mxu0 %v517
          %v587 = vpop.f32.mrb[0].mxu0
          %v588 = vadd.f32 0.0, %v587
          %v589 = vpop.f32.mrb[0].mxu0
          %v590 = vpop.f32.mrb[0].mxu0
          %v591 = vadd.f32 0.0, %v590
          %v592 = vpop.f32.mrb[0].mxu0
          %593 = vmatprep.mubr.bf16.mxu0 0
          %594 = vmatmul.mubr.bf16.gmra.mrb[0].mxu0 %v520
          %v595 = vpop.f32.mrb[0].mxu0
          %v596 = vadd.f32 0.0, %v595
          %v597 = vpop.f32.mrb[0].mxu0
          %v598 = vpop.f32.mrb[0].mxu0
          %v599 = vadd.f32 0.0, %v598
          %v600 = vpop.f32.mrb[0].mxu0
          %601 = vdwg.mxu0
          %v602 = vsel %vm506, %v461, 0
          %v604 = vsel %vm506, %v462, 0
          %v606 = vsel %vm506, %v463, 0
          %v608 = vsel %vm506, %v464, 0
          %v610 = vsel %vm506, %v465, 0
          %v613 = vand.u32 %v438, %v525
          %615 = vmatprep.subr.bf16.mxu0 0
          %616 = vmatpush1.bf16.msra.mxu0 %v613
          %617 = vmatprep.subr.bf16.mxu0 0
          %618 = vmatpush1.bf16.msra.mxu0 0
          %619 = vmatprep.subr.bf16.mxu0 0
          %620 = vmatpush1.bf16.msra.mxu0 0
          %621 = vmatprep.subr.bf16.mxu0 0
          %622 = vmatpush1.bf16.msra.mxu0 0
          %623 = vmatprep.subr.bf16.mxu0 0
          %624 = vmatpush1.bf16.msra.mxu0 0
          %625 = vmatprep.subr.bf16.mxu0 0
          %626 = vmatpush1.bf16.msra.mxu0 0
          %627 = vmatprep.subr.bf16.mxu0 0
          %628 = vmatpush1.bf16.msra.mxu0 0
          %629 = vmatprep.subr.bf16.mxu0 0
          %630 = vmatpush1.bf16.msra.mxu0 0
          %631 = vmatprep.subr.bf16.mxu0 0
          %632 = vmatpush1.bf16.msra.mxu0 0
          %633 = vmatprep.subr.bf16.mxu0 0
          %634 = vmatpush1.bf16.msra.mxu0 0
          %635 = vmatprep.subr.bf16.mxu0 0
          %636 = vmatpush1.bf16.msra.mxu0 0
          %637 = vmatprep.subr.bf16.mxu0 0
          %638 = vmatpush1.bf16.msra.mxu0 0
          %639 = vmatprep.subr.bf16.mxu0 0
          %640 = vmatpush1.bf16.msra.mxu0 0
          %641 = vmatprep.subr.bf16.mxu0 0
          %642 = vmatpush1.bf16.msra.mxu0 0
          %643 = vmatprep.subr.bf16.mxu0 0
          %644 = vmatpush1.bf16.msra.mxu0 0
          %645 = vmatprep.subr.bf16.mxu0 0
          %646 = vmatpush1.bf16.msra.mxu0 0
          %647 = vmatprep.mubr.bf16.mxu0 0
          %648 = vmatmul.mubr.bf16.gmra.mrb[0].mxu0 %v602
          %v649 = vpop.f32.mrb[0].mxu0
          %v650 = vadd.f32 %v564, %v649
          %v651 = vpop.f32.mrb[0].mxu0
          %v652 = vpop.f32.mrb[0].mxu0
          %v653 = vadd.f32 %v567, %v652
          %v654 = vpop.f32.mrb[0].mxu0
          %655 = vmatprep.mubr.bf16.mxu0 0
          %656 = vmatmul.mubr.bf16.gmra.mrb[0].mxu0 %v604
          %v657 = vpop.f32.mrb[0].mxu0
          %v658 = vadd.f32 %v572, %v657
          %v659 = vpop.f32.mrb[0].mxu0
          %v660 = vpop.f32.mrb[0].mxu0
          %v661 = vadd.f32 %v575, %v660
          %v662 = vpop.f32.mrb[0].mxu0
          %663 = vmatprep.mubr.bf16.mxu0 0
          %664 = vmatmul.mubr.bf16.gmra.mrb[0].mxu0 %v606
          %v665 = vpop.f32.mrb[0].mxu0
          %v666 = vadd.f32 %v580, %v665
          %v667 = vpop.f32.mrb[0].mxu0
          %v668 = vpop.f32.mrb[0].mxu0
          %v669 = vadd.f32 %v583, %v668
          %v670 = vpop.f32.mrb[0].mxu0
          %671 = vmatprep.mubr.bf16.mxu0 0
          %672 = vmatmul.mubr.bf16.gmra.mrb[0].mxu0 %v608
          %v673 = vpop.f32.mrb[0].mxu0
          %v674 = vadd.f32 %v588, %v673
          %v675 = vpop.f32.mrb[0].mxu0
          %v676 = vpop.f32.mrb[0].mxu0
          %v677 = vadd.f32 %v591, %v676
          %v678 = vpop.f32.mrb[0].mxu0
          %679 = vmatprep.mubr.bf16.mxu0 0
          %680 = vmatmul.mubr.bf16.gmra.mrb[0].mxu0 %v610
          %v681 = vpop.f32.mrb[0].mxu0
          %v682 = vadd.f32 %v596, %v681
          %v683 = vpop.f32.mrb[0].mxu0
          %v684 = vpop.f32.mrb[0].mxu0
          %v685 = vadd.f32 %v599, %v684
          %v686 = vpop.f32.mrb[0].mxu0
          %687 = vdwg.mxu0
          %v688 = vld [vmem:[%s427] sm:$0xe]
          %v689 = vld [vmem:[%s427 + $0x24] sm:$0x7]
          %s690 = scalar_lea.vmem %s1, 4
          %v691 = vld [vmem:[%s690] sm:$0x3]
          %v694 = vunpack.c.l.b16 %v688
          %v695 = vunpack.c.l.b16 %v689
          %v696 = vpack.c.b16 %v452, %v694
          %v697 = vpack.c.b16 %v695, %v459
          %vm698 = vcmask 1046528
          %v699 = vrot.slane %v696, 1
          %v700 = vrot.slane %v462, 1
          %v701 = vsel %vm698, %v699, %v700
          %v702 = vrot.slane %v463, 1
          %v703 = vsel %vm698, %v700, %v702
          %v704 = vrot.slane %v464, 1
          %v705 = vsel %vm698, %v702, %v704
          %v706 = vrot.slane %v697, 1
          %v707 = vsel %vm698, %v704, %v706
          %v709 = vsel %vm506, %v701, 0
          %v712 = vsel %vm506, %v703, 0
          %v715 = vsel %vm506, %v705, 0
          %v718 = vsel %vm506, %v707, 0
          %v721 = vsel %vm506, %v706, 0
          %v724 = vand.u32 %v691, %v525
          %726 = vmatprep.subr.bf16.mxu0 0
          %727 = vmatpush1.bf16.msra.mxu0 %v724
          %728 = vmatprep.subr.bf16.mxu0 0
          %729 = vmatpush1.bf16.msra.mxu0 0
          %730 = vmatprep.subr.bf16.mxu0 0
          %731 = vmatpush1.bf16.msra.mxu0 0
          %732 = vmatprep.subr.bf16.mxu0 0
          %733 = vmatpush1.bf16.msra.mxu0 0
          %734 = vmatprep.subr.bf16.mxu0 0
          %735 = vmatpush1.bf16.msra.mxu0 0
          %736 = vmatprep.subr.bf16.mxu0 0
          %737 = vmatpush1.bf16.msra.mxu0 0
          %738 = vmatprep.subr.bf16.mxu0 0
          %739 = vmatpush1.bf16.msra.mxu0 0
          %740 = vmatprep.subr.bf16.mxu0 0
          %741 = vmatpush1.bf16.msra.mxu0 0
          %742 = vmatprep.subr.bf16.mxu0 0
          %743 = vmatpush1.bf16.msra.mxu0 0
          %744 = vmatprep.subr.bf16.mxu0 0
          %745 = vmatpush1.bf16.msra.mxu0 0
          %746 = vmatprep.subr.bf16.mxu0 0
          %747 = vmatpush1.bf16.msra.mxu0 0
          %748 = vmatprep.subr.bf16.mxu0 0
          %749 = vmatpush1.bf16.msra.mxu0 0
          %750 = vmatprep.subr.bf16.mxu0 0
          %751 = vmatpush1.bf16.msra.mxu0 0
          %752 = vmatprep.subr.bf16.mxu0 0
          %753 = vmatpush1.bf16.msra.mxu0 0
          %754 = vmatprep.subr.bf16.mxu0 0
          %755 = vmatpush1.bf16.msra.mxu0 0
          %756 = vmatprep.subr.bf16.mxu0 0
          %757 = vmatpush1.bf16.msra.mxu0 0
          %758 = vmatprep.mubr.bf16.mxu0 0
          %759 = vmatmul.mubr.bf16.gmra.mrb[0].mxu0 %v709
          %v760 = vpop.f32.mrb[0].mxu0
          %v761 = vadd.f32 0.0, %v760
          %v762 = vpop.f32.mrb[0].mxu0
          %v763 = vpop.f32.mrb[0].mxu0
          %v764 = vadd.f32 0.0, %v763
          %v765 = vpop.f32.mrb[0].mxu0
          %766 = vmatprep.mubr.bf16.mxu0 0
          %767 = vmatmul.mubr.bf16.gmra.mrb[0].mxu0 %v712
          %v768 = vpop.f32.mrb[0].mxu0
          %v769 = vadd.f32 0.0, %v768
          %v770 = vpop.f32.mrb[0].mxu0
          %v771 = vpop.f32.mrb[0].mxu0
          %v772 = vadd.f32 0.0, %v771
          %v773 = vpop.f32.mrb[0].mxu0
          %774 = vmatprep.mubr.bf16.mxu0 0
          %775 = vmatmul.mubr.bf16.gmra.mrb[0].mxu0 %v715
          %v776 = vpop.f32.mrb[0].mxu0
          %v777 = vadd.f32 0.0, %v776
          %v778 = vpop.f32.mrb[0].mxu0
          %v779 = vpop.f32.mrb[0].mxu0
          %v780 = vadd.f32 0.0, %v779
          %v781 = vpop.f32.mrb[0].mxu0
          %782 = vmatprep.mubr.bf16.mxu0 0
          %783 = vmatmul.mubr.bf16.gmra.mrb[0].mxu0 %v718
          %v784 = vpop.f32.mrb[0].mxu0
          %v785 = vadd.f32 0.0, %v784
          %v786 = vpop.f32.mrb[0].mxu0
          %v787 = vpop.f32.mrb[0].mxu0
          %v788 = vadd.f32 0.0, %v787
          %v789 = vpop.f32.mrb[0].mxu0
          %790 = vmatprep.mubr.bf16.mxu0 0
          %791 = vmatmul.mubr.bf16.gmra.mrb[0].mxu0 %v721
          %v792 = vpop.f32.mrb[0].mxu0
          %v793 = vadd.f32 0.0, %v792
          %v794 = vpop.f32.mrb[0].mxu0
          %v795 = vpop.f32.mrb[0].mxu0
          %v796 = vadd.f32 0.0, %v795
          %v797 = vpop.f32.mrb[0].mxu0
          %798 = vdwg.mxu0
          %v799 = vadd.f32 %v650, %v761
          %v800 = vadd.f32 %v653, %v764
          %v801 = vadd.f32 %v658, %v769
          %v802 = vadd.f32 %v661, %v772
          %v803 = vadd.f32 %v666, %v777
          %v804 = vadd.f32 %v669, %v780
          %v805 = vadd.f32 %v674, %v785
          %v806 = vadd.f32 %v677, %v788
          %v807 = vadd.f32 %v682, %v793
          %v808 = vadd.f32 %v685, %v796
          %s809 = scalar_lea.vmem %s1, 6
          %v810 = vld [vmem:[%s809] sm:$0x3]
          %vm811 = vsmask.f32 6400
          %v813 = vshrl.u32 %v696, 16
          %v815 = vrot.slane %v813, 1
          %v816 = vshll.u32 %v696, 16
          %v818 = vrot.slane %v816, 2
          %v819 = vor.u32 %v815, %v818
          %v820 = vrot.slane %v479, 1
          %v821 = vrot.slane %v475, 2
          %v822 = vor.u32 %v820, %v821
          %v823 = vsel %vm811, %v819, %v822
          %v824 = vrot.slane %v487, 1
          %v825 = vrot.slane %v483, 2
          %v826 = vor.u32 %v824, %v825
          %v827 = vsel %vm811, %v822, %v826
          %v828 = vrot.slane %v495, 1
          %v829 = vrot.slane %v491, 2
          %v830 = vor.u32 %v828, %v829
          %v831 = vsel %vm811, %v826, %v830
          %v833 = vshrl.u32 %v697, 16
          %v835 = vrot.slane %v833, 1
          %v836 = vshll.u32 %v697, 16
          %v838 = vrot.slane %v836, 2
          %v839 = vor.u32 %v835, %v838
          %v840 = vsel %vm811, %v830, %v839
          %v842 = vsel %vm506, %v823, 0
          %v845 = vsel %vm506, %v827, 0
          %v848 = vsel %vm506, %v831, 0
          %v851 = vsel %vm506, %v840, 0
          %v854 = vsel %vm506, %v839, 0
          %v857 = vand.u32 %v810, %v525
          %859 = vmatprep.subr.bf16.mxu0 0
          %860 = vmatpush1.bf16.msra.mxu0 %v857
          %861 = vmatprep.subr.bf16.mxu0 0
          %862 = vmatpush1.bf16.msra.mxu0 0
          %863 = vmatprep.subr.bf16.mxu0 0
          %864 = vmatpush1.bf16.msra.mxu0 0
          %865 = vmatprep.subr.bf16.mxu0 0
          %866 = vmatpush1.bf16.msra.mxu0 0
          %867 = vmatprep.subr.bf16.mxu0 0
          %868 = vmatpush1.bf16.msra.mxu0 0
          %869 = vmatprep.subr.bf16.mxu0 0
          %870 = vmatpush1.bf16.msra.mxu0 0
          %871 = vmatprep.subr.bf16.mxu0 0
          %872 = vmatpush1.bf16.msra.mxu0 0
          %873 = vmatprep.subr.bf16.mxu0 0
          %874 = vmatpush1.bf16.msra.mxu0 0
          %875 = vmatprep.subr.bf16.mxu0 0
          %876 = vmatpush1.bf16.msra.mxu0 0
          %877 = vmatprep.subr.bf16.mxu0 0
          %878 = vmatpush1.bf16.msra.mxu0 0
          %879 = vmatprep.subr.bf16.mxu0 0
          %880 = vmatpush1.bf16.msra.mxu0 0
          %881 = vmatprep.subr.bf16.mxu0 0
          %882 = vmatpush1.bf16.msra.mxu0 0
          %883 = vmatprep.subr.bf16.mxu0 0
          %884 = vmatpush1.bf16.msra.mxu0 0
          %885 = vmatprep.subr.bf16.mxu0 0
          %886 = vmatpush1.bf16.msra.mxu0 0
          %887 = vmatprep.subr.bf16.mxu0 0
          %888 = vmatpush1.bf16.msra.mxu0 0
          %889 = vmatprep.subr.bf16.mxu0 0
          %890 = vmatpush1.bf16.msra.mxu0 0
          %891 = vmatprep.mubr.bf16.mxu0 0
          %892 = vmatmul.mubr.bf16.gmra.mrb[0].mxu0 %v842
          %v893 = vpop.f32.mrb[0].mxu0
          %v894 = vadd.f32 0.0, %v893
          %v895 = vpop.f32.mrb[0].mxu0
          %v896 = vpop.f32.mrb[0].mxu0
          %v897 = vadd.f32 0.0, %v896
          %v898 = vpop.f32.mrb[0].mxu0
          %899 = vmatprep.mubr.bf16.mxu0 0
          %900 = vmatmul.mubr.bf16.gmra.mrb[0].mxu0 %v845
          %v901 = vpop.f32.mrb[0].mxu0
          %v902 = vadd.f32 0.0, %v901
          %v903 = vpop.f32.mrb[0].mxu0
          %v904 = vpop.f32.mrb[0].mxu0
          %v905 = vadd.f32 0.0, %v904
          %v906 = vpop.f32.mrb[0].mxu0
          %907 = vmatprep.mubr.bf16.mxu0 0
          %908 = vmatmul.mubr.bf16.gmra.mrb[0].mxu0 %v848
          %v909 = vpop.f32.mrb[0].mxu0
          %v910 = vadd.f32 0.0, %v909
          %v911 = vpop.f32.mrb[0].mxu0
          %v912 = vpop.f32.mrb[0].mxu0
          %v913 = vadd.f32 0.0, %v912
          %v914 = vpop.f32.mrb[0].mxu0
          %915 = vmatprep.mubr.bf16.mxu0 0
          %916 = vmatmul.mubr.bf16.gmra.mrb[0].mxu0 %v851
          %v917 = vpop.f32.mrb[0].mxu0
          %v918 = vadd.f32 0.0, %v917
          %v919 = vpop.f32.mrb[0].mxu0
          %v920 = vpop.f32.mrb[0].mxu0
          %v921 = vadd.f32 0.0, %v920
          %v922 = vpop.f32.mrb[0].mxu0
          %923 = vmatprep.mubr.bf16.mxu0 0
          %924 = vmatmul.mubr.bf16.gmra.mrb[0].mxu0 %v854
          %v925 = vpop.f32.mrb[0].mxu0
          %v926 = vadd.f32 0.0, %v925
          %v927 = vpop.f32.mrb[0].mxu0
          %v928 = vpop.f32.mrb[0].mxu0
          %v929 = vadd.f32 0.0, %v928
          %v930 = vpop.f32.mrb[0].mxu0
          %931 = vdwg.mxu0
          %v932 = vadd.f32 %v799, %v894
          %v933 = vadd.f32 %v800, %v897
          %v934 = vadd.f32 %v801, %v902
          %v935 = vadd.f32 %v802, %v905
          %v936 = vadd.f32 %v803, %v910
          %v937 = vadd.f32 %v804, %v913
          %v938 = vadd.f32 %v805, %v918
          %v939 = vadd.f32 %v806, %v921
          %v940 = vadd.f32 %v807, %v926
          %v941 = vadd.f32 %v808, %v929
          %v942 = vld [vmem:[%s427] sm:$0xc]
          %v943 = vld [vmem:[%s427 + $0x24] sm:$0xf]
          %s944 = scalar_lea.vmem %s1, 8
          %v945 = vld [vmem:[%s944] sm:$0x3]
          %v948 = vunpack.c.l.b16 %v942
          %v949 = vunpack.c.l.b16 %v943
          %v950 = vpack.c.b16 %v452, %v948
          %v951 = vpack.c.b16 %v949, %v459
          %vm952 = vcmask 1045504
          %v953 = vrot.slane %v950, 2
          %v954 = vrot.slane %v462, 2
          %v955 = vsel %vm952, %v953, %v954
          %v956 = vrot.slane %v463, 2
          %v957 = vsel %vm952, %v954, %v956
          %v958 = vrot.slane %v464, 2
          %v959 = vsel %vm952, %v956, %v958
          %v960 = vrot.slane %v951, 2
          %v961 = vsel %vm952, %v958, %v960
          %v963 = vsel %vm506, %v955, 0
          %v966 = vsel %vm506, %v957, 0
          %v969 = vsel %vm506, %v959, 0
          %v972 = vsel %vm506, %v961, 0
          %v975 = vsel %vm506, %v960, 0
          %v978 = vand.u32 %v945, %v525
          %980 = vmatprep.subr.bf16.mxu0 0
          %981 = vmatpush1.bf16.msra.mxu0 %v978
          %982 = vmatprep.subr.bf16.mxu0 0
          %983 = vmatpush1.bf16.msra.mxu0 0
          %984 = vmatprep.subr.bf16.mxu0 0
          %985 = vmatpush1.bf16.msra.mxu0 0
          %986 = vmatprep.subr.bf16.mxu0 0
          %987 = vmatpush1.bf16.msra.mxu0 0
          %988 = vmatprep.subr.bf16.mxu0 0
          %989 = vmatpush1.bf16.msra.mxu0 0
          %990 = vmatprep.subr.bf16.mxu0 0
          %991 = vmatpush1.bf16.msra.mxu0 0
          %992 = vmatprep.subr.bf16.mxu0 0
          %993 = vmatpush1.bf16.msra.mxu0 0
          %994 = vmatprep.subr.bf16.mxu0 0
          %995 = vmatpush1.bf16.msra.mxu0 0
          %996 = vmatprep.subr.bf16.mxu0 0
          %997 = vmatpush1.bf16.msra.mxu0 0
          %998 = vmatprep.subr.bf16.mxu0 0
          %999 = vmatpush1.bf16.msra.mxu0 0
          %1000 = vmatprep.subr.bf16.mxu0 0
          %1001 = vmatpush1.bf16.msra.mxu0 0
          %1002 = vmatprep.subr.bf16.mxu0 0
          %1003 = vmatpush1.bf16.msra.mxu0 0
          %1004 = vmatprep.subr.bf16.mxu0 0
          %1005 = vmatpush1.bf16.msra.mxu0 0
          %1006 = vmatprep.subr.bf16.mxu0 0
          %1007 = vmatpush1.bf16.msra.mxu0 0
          %1008 = vmatprep.subr.bf16.mxu0 0
          %1009 = vmatpush1.bf16.msra.mxu0 0
          %1010 = vmatprep.subr.bf16.mxu0 0
          %1011 = vmatpush1.bf16.msra.mxu0 0
          %1012 = vmatprep.mubr.bf16.mxu0 0
          %1013 = vmatmul.mubr.bf16.gmra.mrb[0].mxu0 %v963
          %v1014 = vpop.f32.mrb[0].mxu0
          %v1015 = vadd.f32 0.0, %v1014
          %v1016 = vpop.f32.mrb[0].mxu0
          %v1017 = vpop.f32.mrb[0].mxu0
          %v1018 = vadd.f32 0.0, %v1017
          %v1019 = vpop.f32.mrb[0].mxu0
          %1020 = vmatprep.mubr.bf16.mxu0 0
          %1021 = vmatmul.mubr.bf16.gmra.mrb[0].mxu0 %v966
          %v1022 = vpop.f32.mrb[0].mxu0
          %v1023 = vadd.f32 0.0, %v1022
          %v1024 = vpop.f32.mrb[0].mxu0
          %v1025 = vpop.f32.mrb[0].mxu0
          %v1026 = vadd.f32 0.0, %v1025
          %v1027 = vpop.f32.mrb[0].mxu0
          %1028 = vmatprep.mubr.bf16.mxu0 0
          %1029 = vmatmul.mubr.bf16.gmra.mrb[0].mxu0 %v969
          %v1030 = vpop.f32.mrb[0].mxu0
          %v1031 = vadd.f32 0.0, %v1030
          %v1032 = vpop.f32.mrb[0].mxu0
          %v1033 = vpop.f32.mrb[0].mxu0
          %v1034 = vadd.f32 0.0, %v1033
          %v1035 = vpop.f32.mrb[0].mxu0
          %1036 = vmatprep.mubr.bf16.mxu0 0
          %1037 = vmatmul.mubr.bf16.gmra.mrb[0].mxu0 %v972
          %v1038 = vpop.f32.mrb[0].mxu0
          %v1039 = vadd.f32 0.0, %v1038
          %v1040 = vpop.f32.mrb[0].mxu0
          %v1041 = vpop.f32.mrb[0].mxu0
          %v1042 = vadd.f32 0.0, %v1041
          %v1043 = vpop.f32.mrb[0].mxu0
          %1044 = vmatprep.mubr.bf16.mxu0 0
          %1045 = vmatmul.mubr.bf16.gmra.mrb[0].mxu0 %v975
          %v1046 = vpop.f32.mrb[0].mxu0
          %v1047 = vadd.f32 0.0, %v1046
          %v1048 = vpop.f32.mrb[0].mxu0
          %v1049 = vpop.f32.mrb[0].mxu0
          %v1050 = vadd.f32 0.0, %v1049
          %v1051 = vpop.f32.mrb[0].mxu0
          %1052 = vdwg.mxu0
          %v1053 = vadd.f32 %v932, %v1015
          %v1054 = vadd.f32 %v933, %v1018
          %v1055 = vadd.f32 %v934, %v1023
          %v1056 = vadd.f32 %v935, %v1026
          %v1057 = vadd.f32 %v936, %v1031
          %v1058 = vadd.f32 %v937, %v1034
          %v1059 = vadd.f32 %v938, %v1039
          %v1060 = vadd.f32 %v939, %v1042
          %v1061 = vadd.f32 %v940, %v1047
          %v1062 = vadd.f32 %v941, %v1050
          %s1063 = sadd.s32 %s424, 1
          %s1064 = smul.u32 %s1063, 10
          %s1065 = smul.addr %s1064, 4
          %s1066 = scalar_lea.vmem %s410, %s1065
          %v1067 = vld [vmem:[%s1066] sm:$0xf]
          %v1068 = vld [vmem:[%s1066 + $0x4] sm:$0xf]
          %v1069 = vld [vmem:[%s1066 + $0x8] sm:$0xf]
          %v1070 = vld [vmem:[%s1066 + $0xc] sm:$0xf]
          %v1071 = vld [vmem:[%s1066 + $0x10] sm:$0xf]
          %v1072 = vld [vmem:[%s1066 + $0x14] sm:$0xf]
          %v1073 = vld [vmem:[%s1066 + $0x18] sm:$0xf]
          %v1074 = vld [vmem:[%s1066 + $0x1c] sm:$0xf]
          %v1075 = vld [vmem:[%s1066 + $0x20] sm:$0xf]
          %v1076 = vld [vmem:[%s1066 + $0x24] sm:$0x3]
          %s1077 = scalar_lea.vmem %s1, 10
          %v1078 = vld [vmem:[%s1077] sm:$0x3]
          %v1089 = vunpack.c.l.b16 %v1067
          %v1090 = vunpack.c.l.b16 %v1068
          %v1091 = vunpack.c.l.b16 %v1069
          %v1092 = vunpack.c.l.b16 %v1070
          %v1093 = vunpack.c.l.b16 %v1071
          %v1094 = vunpack.c.l.b16 %v1072
          %v1095 = vunpack.c.l.b16 %v1073
          %v1096 = vunpack.c.l.b16 %v1074
          %v1097 = vunpack.c.l.b16 %v1075
          %v1098 = vunpack.c.l.b16 %v1076
          %v1099 = vpack.c.b16 %v1090, %v1089
          %v1100 = vpack.c.b16 %v1092, %v1091
          %v1101 = vpack.c.b16 %v1094, %v1093
          %v1102 = vpack.c.b16 %v1096, %v1095
          %v1103 = vpack.c.b16 %v1098, %v1097
          %v1105 = vsel %vm506, %v1099, 0
          %v1108 = vsel %vm506, %v1100, 0
          %v1111 = vsel %vm506, %v1101, 0
          %v1114 = vsel %vm506, %v1102, 0
          %v1117 = vsel %vm506, %v1103, 0
          %v1120 = vand.u32 %v1078, %v525
          %1122 = vmatprep.subr.bf16.mxu0 0
          %1123 = vmatpush1.bf16.msra.mxu0 %v1120
          %1124 = vmatprep.subr.bf16.mxu0 0
          %1125 = vmatpush1.bf16.msra.mxu0 0
          %1126 = vmatprep.subr.bf16.mxu0 0
          %1127 = vmatpush1.bf16.msra.mxu0 0
          %1128 = vmatprep.subr.bf16.mxu0 0
          %1129 = vmatpush1.bf16.msra.mxu0 0
          %1130 = vmatprep.subr.bf16.mxu0 0
          %1131 = vmatpush1.bf16.msra.mxu0 0
          %1132 = vmatprep.subr.bf16.mxu0 0
          %1133 = vmatpush1.bf16.msra.mxu0 0
          %1134 = vmatprep.subr.bf16.mxu0 0
          %1135 = vmatpush1.bf16.msra.mxu0 0
          %1136 = vmatprep.subr.bf16.mxu0 0
          %1137 = vmatpush1.bf16.msra.mxu0 0
          %1138 = vmatprep.subr.bf16.mxu0 0
          %1139 = vmatpush1.bf16.msra.mxu0 0
          %1140 = vmatprep.subr.bf16.mxu0 0
          %1141 = vmatpush1.bf16.msra.mxu0 0
          %1142 = vmatprep.subr.bf16.mxu0 0
          %1143 = vmatpush1.bf16.msra.mxu0 0
          %1144 = vmatprep.subr.bf16.mxu0 0
          %1145 = vmatpush1.bf16.msra.mxu0 0
          %1146 = vmatprep.subr.bf16.mxu0 0
          %1147 = vmatpush1.bf16.msra.mxu0 0
          %1148 = vmatprep.subr.bf16.mxu0 0
          %1149 = vmatpush1.bf16.msra.mxu0 0
          %1150 = vmatprep.subr.bf16.mxu0 0
          %1151 = vmatpush1.bf16.msra.mxu0 0
          %1152 = vmatprep.subr.bf16.mxu0 0
          %1153 = vmatpush1.bf16.msra.mxu0 0
          %1154 = vmatprep.mubr.bf16.mxu0 0
          %1155 = vmatmul.mubr.bf16.gmra.mrb[0].mxu0 %v1105
          %v1156 = vpop.f32.mrb[0].mxu0
          %v1157 = vadd.f32 0.0, %v1156
          %v1158 = vpop.f32.mrb[0].mxu0
          %v1159 = vpop.f32.mrb[0].mxu0
          %v1160 = vadd.f32 0.0, %v1159
          %v1161 = vpop.f32.mrb[0].mxu0
          %1162 = vmatprep.mubr.bf16.mxu0 0
          %1163 = vmatmul.mubr.bf16.gmra.mrb[0].mxu0 %v1108
          %v1164 = vpop.f32.mrb[0].mxu0
          %v1165 = vadd.f32 0.0, %v1164
          %v1166 = vpop.f32.mrb[0].mxu0
          %v1167 = vpop.f32.mrb[0].mxu0
          %v1168 = vadd.f32 0.0, %v1167
          %v1169 = vpop.f32.mrb[0].mxu0
          %1170 = vmatprep.mubr.bf16.mxu0 0
          %1171 = vmatmul.mubr.bf16.gmra.mrb[0].mxu0 %v1111
          %v1172 = vpop.f32.mrb[0].mxu0
          %v1173 = vadd.f32 0.0, %v1172
          %v1174 = vpop.f32.mrb[0].mxu0
          %v1175 = vpop.f32.mrb[0].mxu0
          %v1176 = vadd.f32 0.0, %v1175
          %v1177 = vpop.f32.mrb[0].mxu0
          %1178 = vmatprep.mubr.bf16.mxu0 0
          %1179 = vmatmul.mubr.bf16.gmra.mrb[0].mxu0 %v1114
          %v1180 = vpop.f32.mrb[0].mxu0
          %v1181 = vadd.f32 0.0, %v1180
          %v1182 = vpop.f32.mrb[0].mxu0
          %v1183 = vpop.f32.mrb[0].mxu0
          %v1184 = vadd.f32 0.0, %v1183
          %v1185 = vpop.f32.mrb[0].mxu0
          %1186 = vmatprep.mubr.bf16.mxu0 0
          %1187 = vmatmul.mubr.bf16.gmra.mrb[0].mxu0 %v1117
          %v1188 = vpop.f32.mrb[0].mxu0
          %v1189 = vadd.f32 0.0, %v1188
          %v1190 = vpop.f32.mrb[0].mxu0
          %v1191 = vpop.f32.mrb[0].mxu0
          %v1192 = vadd.f32 0.0, %v1191
          %v1193 = vpop.f32.mrb[0].mxu0
          %1194 = vdwg.mxu0
          %v1195 = vadd.f32 %v1053, %v1157
          %v1196 = vadd.f32 %v1054, %v1160
          %v1197 = vadd.f32 %v1055, %v1165
          %v1198 = vadd.f32 %v1056, %v1168
          %v1199 = vadd.f32 %v1057, %v1173
          %v1200 = vadd.f32 %v1058, %v1176
          %v1201 = vadd.f32 %v1059, %v1181
          %v1202 = vadd.f32 %v1060, %v1184
          %v1203 = vadd.f32 %v1061, %v1189
          %v1204 = vadd.f32 %v1062, %v1192
          %s1205 = scalar_lea.vmem %s1, 12
          %v1206 = vld [vmem:[%s1205] sm:$0x3]
          %v1207 = vshrl.u32 %v1099, 16
          %v1209 = vshll.u32 %v1099, 16
          %v1211 = vrot.slane %v1209, 1
          %v1212 = vor.u32 %v1207, %v1211
          %v1213 = vshll.u32 %v1100, 16
          %v1215 = vrot.slane %v1213, 1
          %v1216 = vsel %vm466, %v1212, %v1215
          %v1217 = vshrl.u32 %v1100, 16
          %v1219 = vor.u32 %v1217, %v1215
          %v1220 = vshll.u32 %v1101, 16
          %v1222 = vrot.slane %v1220, 1
          %v1223 = vsel %vm466, %v1219, %v1222
          %v1224 = vshrl.u32 %v1101, 16
          %v1226 = vor.u32 %v1224, %v1222
          %v1227 = vshll.u32 %v1102, 16
          %v1229 = vrot.slane %v1227, 1
          %v1230 = vsel %vm466, %v1226, %v1229
          %v1231 = vshrl.u32 %v1102, 16
          %v1233 = vor.u32 %v1231, %v1229
          %v1234 = vshll.u32 %v1103, 16
          %v1236 = vrot.slane %v1234, 1
          %v1237 = vsel %vm466, %v1233, %v1236
          %v1238 = vshrl.u32 %v1103, 16
          %v1240 = vor.u32 %v1238, %v1236
          %v1242 = vsel %vm506, %v1216, 0
          %v1245 = vsel %vm506, %v1223, 0
          %v1248 = vsel %vm506, %v1230, 0
          %v1251 = vsel %vm506, %v1237, 0
          %v1254 = vsel %vm506, %v1240, 0
          %v1257 = vand.u32 %v1206, %v525
          %1259 = vmatprep.subr.bf16.mxu0 0
          %1260 = vmatpush1.bf16.msra.mxu0 %v1257
          %1261 = vmatprep.subr.bf16.mxu0 0
          %1262 = vmatpush1.bf16.msra.mxu0 0
          %1263 = vmatprep.subr.bf16.mxu0 0
          %1264 = vmatpush1.bf16.msra.mxu0 0
          %1265 = vmatprep.subr.bf16.mxu0 0
          %1266 = vmatpush1.bf16.msra.mxu0 0
          %1267 = vmatprep.subr.bf16.mxu0 0
          %1268 = vmatpush1.bf16.msra.mxu0 0
          %1269 = vmatprep.subr.bf16.mxu0 0
          %1270 = vmatpush1.bf16.msra.mxu0 0
          %1271 = vmatprep.subr.bf16.mxu0 0
          %1272 = vmatpush1.bf16.msra.mxu0 0
          %1273 = vmatprep.subr.bf16.mxu0 0
          %1274 = vmatpush1.bf16.msra.mxu0 0
          %1275 = vmatprep.subr.bf16.mxu0 0
          %1276 = vmatpush1.bf16.msra.mxu0 0
          %1277 = vmatprep.subr.bf16.mxu0 0
          %1278 = vmatpush1.bf16.msra.mxu0 0
          %1279 = vmatprep.subr.bf16.mxu0 0
          %1280 = vmatpush1.bf16.msra.mxu0 0
          %1281 = vmatprep.subr.bf16.mxu0 0
          %1282 = vmatpush1.bf16.msra.mxu0 0
          %1283 = vmatprep.subr.bf16.mxu0 0
          %1284 = vmatpush1.bf16.msra.mxu0 0
          %1285 = vmatprep.subr.bf16.mxu0 0
          %1286 = vmatpush1.bf16.msra.mxu0 0
          %1287 = vmatprep.subr.bf16.mxu0 0
          %1288 = vmatpush1.bf16.msra.mxu0 0
          %1289 = vmatprep.subr.bf16.mxu0 0
          %1290 = vmatpush1.bf16.msra.mxu0 0
          %1291 = vmatprep.mubr.bf16.mxu0 0
          %1292 = vmatmul.mubr.bf16.gmra.mrb[0].mxu0 %v1242
          %v1293 = vpop.f32.mrb[0].mxu0
          %v1294 = vadd.f32 0.0, %v1293
          %v1295 = vpop.f32.mrb[0].mxu0
          %v1296 = vpop.f32.mrb[0].mxu0
          %v1297 = vadd.f32 0.0, %v1296
          %v1298 = vpop.f32.mrb[0].mxu0
          %1299 = vmatprep.mubr.bf16.mxu0 0
          %1300 = vmatmul.mubr.bf16.gmra.mrb[0].mxu0 %v1245
          %v1301 = vpop.f32.mrb[0].mxu0
          %v1302 = vadd.f32 0.0, %v1301
          %v1303 = vpop.f32.mrb[0].mxu0
          %v1304 = vpop.f32.mrb[0].mxu0
          %v1305 = vadd.f32 0.0, %v1304
          %v1306 = vpop.f32.mrb[0].mxu0
          %1307 = vmatprep.mubr.bf16.mxu0 0
          %1308 = vmatmul.mubr.bf16.gmra.mrb[0].mxu0 %v1248
          %v1309 = vpop.f32.mrb[0].mxu0
          %v1310 = vadd.f32 0.0, %v1309
          %v1311 = vpop.f32.mrb[0].mxu0
          %v1312 = vpop.f32.mrb[0].mxu0
          %v1313 = vadd.f32 0.0, %v1312
          %v1314 = vpop.f32.mrb[0].mxu0
          %1315 = vmatprep.mubr.bf16.mxu0 0
          %1316 = vmatmul.mubr.bf16.gmra.mrb[0].mxu0 %v1251
          %v1317 = vpop.f32.mrb[0].mxu0
          %v1318 = vadd.f32 0.0, %v1317
          %v1319 = vpop.f32.mrb[0].mxu0
          %v1320 = vpop.f32.mrb[0].mxu0
          %v1321 = vadd.f32 0.0, %v1320
          %v1322 = vpop.f32.mrb[0].mxu0
          %1323 = vmatprep.mubr.bf16.mxu0 0
          %1324 = vmatmul.mubr.bf16.gmra.mrb[0].mxu0 %v1254
          %v1325 = vpop.f32.mrb[0].mxu0
          %v1326 = vadd.f32 0.0, %v1325
          %v1327 = vpop.f32.mrb[0].mxu0
          %v1328 = vpop.f32.mrb[0].mxu0
          %v1329 = vadd.f32 0.0, %v1328
          %v1330 = vpop.f32.mrb[0].mxu0
          %1331 = vdwg.mxu0
          %v1332 = vadd.f32 %v1195, %v1294
          %v1333 = vadd.f32 %v1196, %v1297
          %v1334 = vadd.f32 %v1197, %v1302
          %v1335 = vadd.f32 %v1198, %v1305
          %v1336 = vadd.f32 %v1199, %v1310
          %v1337 = vadd.f32 %v1200, %v1313
          %v1338 = vadd.f32 %v1201, %v1318
          %v1339 = vadd.f32 %v1202, %v1321
          %v1340 = vadd.f32 %v1203, %v1326
          %v1341 = vadd.f32 %v1204, %v1329
          %v1342 = vld [vmem:[%s1066] sm:$0xe]
          %v1343 = vld [vmem:[%s1066 + $0x24] sm:$0x7]
          %s1344 = scalar_lea.vmem %s1, 14
          %v1345 = vld [vmem:[%s1344] sm:$0x3]
          %v1348 = vunpack.c.l.b16 %v1342
          %v1349 = vunpack.c.l.b16 %v1343
          %v1350 = vpack.c.b16 %v1090, %v1348
          %v1351 = vpack.c.b16 %v1349, %v1097
          %v1352 = vrot.slane %v1350, 1
          %v1353 = vrot.slane %v1100, 1
          %v1354 = vsel %vm698, %v1352, %v1353
          %v1355 = vrot.slane %v1101, 1
          %v1356 = vsel %vm698, %v1353, %v1355
          %v1357 = vrot.slane %v1102, 1
          %v1358 = vsel %vm698, %v1355, %v1357
          %v1359 = vrot.slane %v1351, 1
          %v1360 = vsel %vm698, %v1357, %v1359
          %v1362 = vsel %vm506, %v1354, 0
          %v1365 = vsel %vm506, %v1356, 0
          %v1368 = vsel %vm506, %v1358, 0
          %v1371 = vsel %vm506, %v1360, 0
          %v1374 = vsel %vm506, %v1359, 0
          %v1377 = vand.u32 %v1345, %v525
          %1379 = vmatprep.subr.bf16.mxu0 0
          %1380 = vmatpush1.bf16.msra.mxu0 %v1377
          %1381 = vmatprep.subr.bf16.mxu0 0
          %1382 = vmatpush1.bf16.msra.mxu0 0
          %1383 = vmatprep.subr.bf16.mxu0 0
          %1384 = vmatpush1.bf16.msra.mxu0 0
          %1385 = vmatprep.subr.bf16.mxu0 0
          %1386 = vmatpush1.bf16.msra.mxu0 0
          %1387 = vmatprep.subr.bf16.mxu0 0
          %1388 = vmatpush1.bf16.msra.mxu0 0
          %1389 = vmatprep.subr.bf16.mxu0 0
          %1390 = vmatpush1.bf16.msra.mxu0 0
          %1391 = vmatprep.subr.bf16.mxu0 0
          %1392 = vmatpush1.bf16.msra.mxu0 0
          %1393 = vmatprep.subr.bf16.mxu0 0
          %1394 = vmatpush1.bf16.msra.mxu0 0
          %1395 = vmatprep.subr.bf16.mxu0 0
          %1396 = vmatpush1.bf16.msra.mxu0 0
          %1397 = vmatprep.subr.bf16.mxu0 0
          %1398 = vmatpush1.bf16.msra.mxu0 0
          %1399 = vmatprep.subr.bf16.mxu0 0
          %1400 = vmatpush1.bf16.msra.mxu0 0
          %1401 = vmatprep.subr.bf16.mxu0 0
          %1402 = vmatpush1.bf16.msra.mxu0 0
          %1403 = vmatprep.subr.bf16.mxu0 0
          %1404 = vmatpush1.bf16.msra.mxu0 0
          %1405 = vmatprep.subr.bf16.mxu0 0
          %1406 = vmatpush1.bf16.msra.mxu0 0
          %1407 = vmatprep.subr.bf16.mxu0 0
          %1408 = vmatpush1.bf16.msra.mxu0 0
          %1409 = vmatprep.subr.bf16.mxu0 0
          %1410 = vmatpush1.bf16.msra.mxu0 0
          %1411 = vmatprep.mubr.bf16.mxu0 0
          %1412 = vmatmul.mubr.bf16.gmra.mrb[0].mxu0 %v1362
          %v1413 = vpop.f32.mrb[0].mxu0
          %v1414 = vadd.f32 0.0, %v1413
          %v1415 = vpop.f32.mrb[0].mxu0
          %v1416 = vpop.f32.mrb[0].mxu0
          %v1417 = vadd.f32 0.0, %v1416
          %v1418 = vpop.f32.mrb[0].mxu0
          %1419 = vmatprep.mubr.bf16.mxu0 0
          %1420 = vmatmul.mubr.bf16.gmra.mrb[0].mxu0 %v1365
          %v1421 = vpop.f32.mrb[0].mxu0
          %v1422 = vadd.f32 0.0, %v1421
          %v1423 = vpop.f32.mrb[0].mxu0
          %v1424 = vpop.f32.mrb[0].mxu0
          %v1425 = vadd.f32 0.0, %v1424
          %v1426 = vpop.f32.mrb[0].mxu0
          %1427 = vmatprep.mubr.bf16.mxu0 0
          %1428 = vmatmul.mubr.bf16.gmra.mrb[0].mxu0 %v1368
          %v1429 = vpop.f32.mrb[0].mxu0
          %v1430 = vadd.f32 0.0, %v1429
          %v1431 = vpop.f32.mrb[0].mxu0
          %v1432 = vpop.f32.mrb[0].mxu0
          %v1433 = vadd.f32 0.0, %v1432
          %v1434 = vpop.f32.mrb[0].mxu0
          %1435 = vmatprep.mubr.bf16.mxu0 0
          %1436 = vmatmul.mubr.bf16.gmra.mrb[0].mxu0 %v1371
          %v1437 = vpop.f32.mrb[0].mxu0
          %v1438 = vadd.f32 0.0, %v1437
          %v1439 = vpop.f32.mrb[0].mxu0
          %v1440 = vpop.f32.mrb[0].mxu0
          %v1441 = vadd.f32 0.0, %v1440
          %v1442 = vpop.f32.mrb[0].mxu0
          %1443 = vmatprep.mubr.bf16.mxu0 0
          %1444 = vmatmul.mubr.bf16.gmra.mrb[0].mxu0 %v1374
          %v1445 = vpop.f32.mrb[0].mxu0
          %v1446 = vadd.f32 0.0, %v1445
          %v1447 = vpop.f32.mrb[0].mxu0
          %v1448 = vpop.f32.mrb[0].mxu0
          %v1449 = vadd.f32 0.0, %v1448
          %v1450 = vpop.f32.mrb[0].mxu0
          %1451 = vdwg.mxu0
          %v1452 = vadd.f32 %v1332, %v1414
          %v1453 = vadd.f32 %v1333, %v1417
          %v1454 = vadd.f32 %v1334, %v1422
          %v1455 = vadd.f32 %v1335, %v1425
          %v1456 = vadd.f32 %v1336, %v1430
          %v1457 = vadd.f32 %v1337, %v1433
          %v1458 = vadd.f32 %v1338, %v1438
          %v1459 = vadd.f32 %v1339, %v1441
          %v1460 = vadd.f32 %v1340, %v1446
          %v1461 = vadd.f32 %v1341, %v1449
          %s1462 = scalar_lea.vmem %s1, 16
          %v1463 = vld [vmem:[%s1462] sm:$0x3]
          %v1465 = vshrl.u32 %v1350, 16
          %v1467 = vrot.slane %v1465, 1
          %v1468 = vshll.u32 %v1350, 16
          %v1470 = vrot.slane %v1468, 2
          %v1471 = vor.u32 %v1467, %v1470
          %v1472 = vrot.slane %v1217, 1
          %v1473 = vrot.slane %v1213, 2
          %v1474 = vor.u32 %v1472, %v1473
          %v1475 = vsel %vm811, %v1471, %v1474
          %v1476 = vrot.slane %v1224, 1
          %v1477 = vrot.slane %v1220, 2
          %v1478 = vor.u32 %v1476, %v1477
          %v1479 = vsel %vm811, %v1474, %v1478
          %v1480 = vrot.slane %v1231, 1
          %v1481 = vrot.slane %v1227, 2
          %v1482 = vor.u32 %v1480, %v1481
          %v1483 = vsel %vm811, %v1478, %v1482
          %v1485 = vshrl.u32 %v1351, 16
          %v1487 = vrot.slane %v1485, 1
          %v1488 = vshll.u32 %v1351, 16
          %v1490 = vrot.slane %v1488, 2
          %v1491 = vor.u32 %v1487, %v1490
          %v1492 = vsel %vm811, %v1482, %v1491
          %v1494 = vsel %vm506, %v1475, 0
          %v1497 = vsel %vm506, %v1479, 0
          %v1500 = vsel %vm506, %v1483, 0
          %v1503 = vsel %vm506, %v1492, 0
          %v1506 = vsel %vm506, %v1491, 0
          %v1509 = vand.u32 %v1463, %v525
          %1511 = vmatprep.subr.bf16.mxu0 0
          %1512 = vmatpush1.bf16.msra.mxu0 %v1509
          %1513 = vmatprep.subr.bf16.mxu0 0
          %1514 = vmatpush1.bf16.msra.mxu0 0
          %1515 = vmatprep.subr.bf16.mxu0 0
          %1516 = vmatpush1.bf16.msra.mxu0 0
          %1517 = vmatprep.subr.bf16.mxu0 0
          %1518 = vmatpush1.bf16.msra.mxu0 0
          %1519 = vmatprep.subr.bf16.mxu0 0
          %1520 = vmatpush1.bf16.msra.mxu0 0
          %1521 = vmatprep.subr.bf16.mxu0 0
          %1522 = vmatpush1.bf16.msra.mxu0 0
          %1523 = vmatprep.subr.bf16.mxu0 0
          %1524 = vmatpush1.bf16.msra.mxu0 0
          %1525 = vmatprep.subr.bf16.mxu0 0
          %1526 = vmatpush1.bf16.msra.mxu0 0
          %1527 = vmatprep.subr.bf16.mxu0 0
          %1528 = vmatpush1.bf16.msra.mxu0 0
          %1529 = vmatprep.subr.bf16.mxu0 0
          %1530 = vmatpush1.bf16.msra.mxu0 0
          %1531 = vmatprep.subr.bf16.mxu0 0
          %1532 = vmatpush1.bf16.msra.mxu0 0
          %1533 = vmatprep.subr.bf16.mxu0 0
          %1534 = vmatpush1.bf16.msra.mxu0 0
          %1535 = vmatprep.subr.bf16.mxu0 0
          %1536 = vmatpush1.bf16.msra.mxu0 0
          %1537 = vmatprep.subr.bf16.mxu0 0
          %1538 = vmatpush1.bf16.msra.mxu0 0
          %1539 = vmatprep.subr.bf16.mxu0 0
          %1540 = vmatpush1.bf16.msra.mxu0 0
          %1541 = vmatprep.subr.bf16.mxu0 0
          %1542 = vmatpush1.bf16.msra.mxu0 0
          %1543 = vmatprep.mubr.bf16.mxu0 0
          %1544 = vmatmul.mubr.bf16.gmra.mrb[0].mxu0 %v1494
          %v1545 = vpop.f32.mrb[0].mxu0
          %v1546 = vadd.f32 0.0, %v1545
          %v1547 = vpop.f32.mrb[0].mxu0
          %v1548 = vpop.f32.mrb[0].mxu0
          %v1549 = vadd.f32 0.0, %v1548
          %v1550 = vpop.f32.mrb[0].mxu0
          %1551 = vmatprep.mubr.bf16.mxu0 0
          %1552 = vmatmul.mubr.bf16.gmra.mrb[0].mxu0 %v1497
          %v1553 = vpop.f32.mrb[0].mxu0
          %v1554 = vadd.f32 0.0, %v1553
          %v1555 = vpop.f32.mrb[0].mxu0
          %v1556 = vpop.f32.mrb[0].mxu0
          %v1557 = vadd.f32 0.0, %v1556
          %v1558 = vpop.f32.mrb[0].mxu0
          %1559 = vmatprep.mubr.bf16.mxu0 0
          %1560 = vmatmul.mubr.bf16.gmra.mrb[0].mxu0 %v1500
          %v1561 = vpop.f32.mrb[0].mxu0
          %v1562 = vadd.f32 0.0, %v1561
          %v1563 = vpop.f32.mrb[0].mxu0
          %v1564 = vpop.f32.mrb[0].mxu0
          %v1565 = vadd.f32 0.0, %v1564
          %v1566 = vpop.f32.mrb[0].mxu0
          %1567 = vmatprep.mubr.bf16.mxu0 0
          %1568 = vmatmul.mubr.bf16.gmra.mrb[0].mxu0 %v1503
          %v1569 = vpop.f32.mrb[0].mxu0
          %v1570 = vadd.f32 0.0, %v1569
          %v1571 = vpop.f32.mrb[0].mxu0
          %v1572 = vpop.f32.mrb[0].mxu0
          %v1573 = vadd.f32 0.0, %v1572
          %v1574 = vpop.f32.mrb[0].mxu0
          %1575 = vmatprep.mubr.bf16.mxu0 0
          %1576 = vmatmul.mubr.bf16.gmra.mrb[0].mxu0 %v1506
          %v1577 = vpop.f32.mrb[0].mxu0
          %v1578 = vadd.f32 0.0, %v1577
          %v1579 = vpop.f32.mrb[0].mxu0
          %v1580 = vpop.f32.mrb[0].mxu0
          %v1581 = vadd.f32 0.0, %v1580
          %v1582 = vpop.f32.mrb[0].mxu0
          %1583 = vdwg.mxu0
          %v1584 = vadd.f32 %v1452, %v1546
          %v1585 = vadd.f32 %v1453, %v1549
          %v1586 = vadd.f32 %v1454, %v1554
          %v1587 = vadd.f32 %v1455, %v1557
          %v1588 = vadd.f32 %v1456, %v1562
          %v1589 = vadd.f32 %v1457, %v1565
          %v1590 = vadd.f32 %v1458, %v1570
          %v1591 = vadd.f32 %v1459, %v1573
          %v1592 = vadd.f32 %v1460, %v1578
          %v1593 = vadd.f32 %v1461, %v1581
          %v1594 = vld [vmem:[%s1066] sm:$0xc]
          %v1595 = vld [vmem:[%s1066 + $0x24] sm:$0xf]
          %s1596 = scalar_lea.vmem %s1, 18
          %v1597 = vld [vmem:[%s1596] sm:$0x3]
          %v1600 = vunpack.c.l.b16 %v1594
          %v1601 = vunpack.c.l.b16 %v1595
          %v1602 = vpack.c.b16 %v1090, %v1600
          %v1603 = vpack.c.b16 %v1601, %v1097
          %v1604 = vrot.slane %v1602, 2
          %v1605 = vrot.slane %v1100, 2
          %v1606 = vsel %vm952, %v1604, %v1605
          %v1607 = vrot.slane %v1101, 2
          %v1608 = vsel %vm952, %v1605, %v1607
          %v1609 = vrot.slane %v1102, 2
          %v1610 = vsel %vm952, %v1607, %v1609
          %v1611 = vrot.slane %v1603, 2
          %v1612 = vsel %vm952, %v1609, %v1611
          %v1614 = vsel %vm506, %v1606, 0
          %v1617 = vsel %vm506, %v1608, 0
          %v1620 = vsel %vm506, %v1610, 0
          %v1623 = vsel %vm506, %v1612, 0
          %v1626 = vsel %vm506, %v1611, 0
          %v1629 = vand.u32 %v1597, %v525
          %1631 = vmatprep.subr.bf16.mxu0 0
          %1632 = vmatpush1.bf16.msra.mxu0 %v1629
          %1633 = vmatprep.subr.bf16.mxu0 0
          %1634 = vmatpush1.bf16.msra.mxu0 0
          %1635 = vmatprep.subr.bf16.mxu0 0
          %1636 = vmatpush1.bf16.msra.mxu0 0
          %1637 = vmatprep.subr.bf16.mxu0 0
          %1638 = vmatpush1.bf16.msra.mxu0 0
          %1639 = vmatprep.subr.bf16.mxu0 0
          %1640 = vmatpush1.bf16.msra.mxu0 0
          %1641 = vmatprep.subr.bf16.mxu0 0
          %1642 = vmatpush1.bf16.msra.mxu0 0
          %1643 = vmatprep.subr.bf16.mxu0 0
          %1644 = vmatpush1.bf16.msra.mxu0 0
          %1645 = vmatprep.subr.bf16.mxu0 0
          %1646 = vmatpush1.bf16.msra.mxu0 0
          %1647 = vmatprep.subr.bf16.mxu0 0
          %1648 = vmatpush1.bf16.msra.mxu0 0
          %1649 = vmatprep.subr.bf16.mxu0 0
          %1650 = vmatpush1.bf16.msra.mxu0 0
          %1651 = vmatprep.subr.bf16.mxu0 0
          %1652 = vmatpush1.bf16.msra.mxu0 0
          %1653 = vmatprep.subr.bf16.mxu0 0
          %1654 = vmatpush1.bf16.msra.mxu0 0
          %1655 = vmatprep.subr.bf16.mxu0 0
          %1656 = vmatpush1.bf16.msra.mxu0 0
          %1657 = vmatprep.subr.bf16.mxu0 0
          %1658 = vmatpush1.bf16.msra.mxu0 0
          %1659 = vmatprep.subr.bf16.mxu0 0
          %1660 = vmatpush1.bf16.msra.mxu0 0
          %1661 = vmatprep.subr.bf16.mxu0 0
          %1662 = vmatpush1.bf16.msra.mxu0 0
          %1663 = vmatprep.mubr.bf16.mxu0 0
          %1664 = vmatmul.mubr.bf16.gmra.mrb[0].mxu0 %v1614
          %v1665 = vpop.f32.mrb[0].mxu0
          %v1666 = vadd.f32 0.0, %v1665
          %v1667 = vpop.f32.mrb[0].mxu0
          %v1668 = vpop.f32.mrb[0].mxu0
          %v1669 = vadd.f32 0.0, %v1668
          %v1670 = vpop.f32.mrb[0].mxu0
          %1671 = vmatprep.mubr.bf16.mxu0 0
          %1672 = vmatmul.mubr.bf16.gmra.mrb[0].mxu0 %v1617
          %v1673 = vpop.f32.mrb[0].mxu0
          %v1674 = vadd.f32 0.0, %v1673
          %v1675 = vpop.f32.mrb[0].mxu0
          %v1676 = vpop.f32.mrb[0].mxu0
          %v1677 = vadd.f32 0.0, %v1676
          %v1678 = vpop.f32.mrb[0].mxu0
          %1679 = vmatprep.mubr.bf16.mxu0 0
          %1680 = vmatmul.mubr.bf16.gmra.mrb[0].mxu0 %v1620
          %v1681 = vpop.f32.mrb[0].mxu0
          %v1682 = vadd.f32 0.0, %v1681
          %v1683 = vpop.f32.mrb[0].mxu0
          %v1684 = vpop.f32.mrb[0].mxu0
          %v1685 = vadd.f32 0.0, %v1684
          %v1686 = vpop.f32.mrb[0].mxu0
          %1687 = vmatprep.mubr.bf16.mxu0 0
          %1688 = vmatmul.mubr.bf16.gmra.mrb[0].mxu0 %v1623
          %v1689 = vpop.f32.mrb[0].mxu0
          %v1690 = vadd.f32 0.0, %v1689
          %v1691 = vpop.f32.mrb[0].mxu0
          %v1692 = vpop.f32.mrb[0].mxu0
          %v1693 = vadd.f32 0.0, %v1692
          %v1694 = vpop.f32.mrb[0].mxu0
          %1695 = vmatprep.mubr.bf16.mxu0 0
          %1696 = vmatmul.mubr.bf16.gmra.mrb[0].mxu0 %v1626
          %v1697 = vpop.f32.mrb[0].mxu0
          %v1698 = vadd.f32 0.0, %v1697
          %v1699 = vpop.f32.mrb[0].mxu0
          %v1700 = vpop.f32.mrb[0].mxu0
          %v1701 = vadd.f32 0.0, %v1700
          %v1702 = vpop.f32.mrb[0].mxu0
          %1703 = vdwg.mxu0
          %v1704 = vadd.f32 %v1584, %v1666
          %v1705 = vadd.f32 %v1585, %v1669
          %v1706 = vadd.f32 %v1586, %v1674
          %v1707 = vadd.f32 %v1587, %v1677
          %v1708 = vadd.f32 %v1588, %v1682
          %v1709 = vadd.f32 %v1589, %v1685
          %v1710 = vadd.f32 %v1590, %v1690
          %v1711 = vadd.f32 %v1591, %v1693
          %v1712 = vadd.f32 %v1592, %v1698
          %v1713 = vadd.f32 %v1593, %v1701
          %s1714 = sadd.s32 %s424, 2
          %s1715 = smul.u32 %s1714, 10
          %s1716 = smul.addr %s1715, 4
          %s1717 = scalar_lea.vmem %s410, %s1716
          %v1718 = vld [vmem:[%s1717] sm:$0xf]
          %v1719 = vld [vmem:[%s1717 + $0x4] sm:$0xf]
          %v1720 = vld [vmem:[%s1717 + $0x8] sm:$0xf]
          %v1721 = vld [vmem:[%s1717 + $0xc] sm:$0xf]
          %v1722 = vld [vmem:[%s1717 + $0x10] sm:$0xf]
          %v1723 = vld [vmem:[%s1717 + $0x14] sm:$0xf]
          %v1724 = vld [vmem:[%s1717 + $0x18] sm:$0xf]
          %v1725 = vld [vmem:[%s1717 + $0x1c] sm:$0xf]
          %v1726 = vld [vmem:[%s1717 + $0x20] sm:$0xf]
          %v1727 = vld [vmem:[%s1717 + $0x24] sm:$0x3]
          %s1728 = scalar_lea.vmem %s1, 20
          %v1729 = vld [vmem:[%s1728] sm:$0x3]
          %v1740 = vunpack.c.l.b16 %v1718
          %v1741 = vunpack.c.l.b16 %v1719
          %v1742 = vunpack.c.l.b16 %v1720
          %v1743 = vunpack.c.l.b16 %v1721
          %v1744 = vunpack.c.l.b16 %v1722
          %v1745 = vunpack.c.l.b16 %v1723
          %v1746 = vunpack.c.l.b16 %v1724
          %v1747 = vunpack.c.l.b16 %v1725
          %v1748 = vunpack.c.l.b16 %v1726
          %v1749 = vunpack.c.l.b16 %v1727
          %v1750 = vpack.c.b16 %v1741, %v1740
          %v1751 = vpack.c.b16 %v1743, %v1742
          %v1752 = vpack.c.b16 %v1745, %v1744
          %v1753 = vpack.c.b16 %v1747, %v1746
          %v1754 = vpack.c.b16 %v1749, %v1748
          %v1756 = vsel %vm506, %v1750, 0
          %v1759 = vsel %vm506, %v1751, 0
          %v1762 = vsel %vm506, %v1752, 0
          %v1765 = vsel %vm506, %v1753, 0
          %v1768 = vsel %vm506, %v1754, 0
          %v1771 = vand.u32 %v1729, %v525
          %1773 = vmatprep.subr.bf16.mxu0 0
          %1774 = vmatpush1.bf16.msra.mxu0 %v1771
          %1775 = vmatprep.subr.bf16.mxu0 0
          %1776 = vmatpush1.bf16.msra.mxu0 0
          %1777 = vmatprep.subr.bf16.mxu0 0
          %1778 = vmatpush1.bf16.msra.mxu0 0
          %1779 = vmatprep.subr.bf16.mxu0 0
          %1780 = vmatpush1.bf16.msra.mxu0 0
          %1781 = vmatprep.subr.bf16.mxu0 0
          %1782 = vmatpush1.bf16.msra.mxu0 0
          %1783 = vmatprep.subr.bf16.mxu0 0
          %1784 = vmatpush1.bf16.msra.mxu0 0
          %1785 = vmatprep.subr.bf16.mxu0 0
          %1786 = vmatpush1.bf16.msra.mxu0 0
          %1787 = vmatprep.subr.bf16.mxu0 0
          %1788 = vmatpush1.bf16.msra.mxu0 0
          %1789 = vmatprep.subr.bf16.mxu0 0
          %1790 = vmatpush1.bf16.msra.mxu0 0
          %1791 = vmatprep.subr.bf16.mxu0 0
          %1792 = vmatpush1.bf16.msra.mxu0 0
          %1793 = vmatprep.subr.bf16.mxu0 0
          %1794 = vmatpush1.bf16.msra.mxu0 0
          %1795 = vmatprep.subr.bf16.mxu0 0
          %1796 = vmatpush1.bf16.msra.mxu0 0
          %1797 = vmatprep.subr.bf16.mxu0 0
          %1798 = vmatpush1.bf16.msra.mxu0 0
          %1799 = vmatprep.subr.bf16.mxu0 0
          %1800 = vmatpush1.bf16.msra.mxu0 0
          %1801 = vmatprep.subr.bf16.mxu0 0
          %1802 = vmatpush1.bf16.msra.mxu0 0
          %1803 = vmatprep.subr.bf16.mxu0 0
          %1804 = vmatpush1.bf16.msra.mxu0 0
          %1805 = vmatprep.mubr.bf16.mxu0 0
          %1806 = vmatmul.mubr.bf16.gmra.mrb[0].mxu0 %v1756
          %v1807 = vpop.f32.mrb[0].mxu0
          %v1808 = vadd.f32 0.0, %v1807
          %v1809 = vpop.f32.mrb[0].mxu0
          %v1810 = vpop.f32.mrb[0].mxu0
          %v1811 = vadd.f32 0.0, %v1810
          %v1812 = vpop.f32.mrb[0].mxu0
          %1813 = vmatprep.mubr.bf16.mxu0 0
          %1814 = vmatmul.mubr.bf16.gmra.mrb[0].mxu0 %v1759
          %v1815 = vpop.f32.mrb[0].mxu0
          %v1816 = vadd.f32 0.0, %v1815
          %v1817 = vpop.f32.mrb[0].mxu0
          %v1818 = vpop.f32.mrb[0].mxu0
          %v1819 = vadd.f32 0.0, %v1818
          %v1820 = vpop.f32.mrb[0].mxu0
          %1821 = vmatprep.mubr.bf16.mxu0 0
          %1822 = vmatmul.mubr.bf16.gmra.mrb[0].mxu0 %v1762
          %v1823 = vpop.f32.mrb[0].mxu0
          %v1824 = vadd.f32 0.0, %v1823
          %v1825 = vpop.f32.mrb[0].mxu0
          %v1826 = vpop.f32.mrb[0].mxu0
          %v1827 = vadd.f32 0.0, %v1826
          %v1828 = vpop.f32.mrb[0].mxu0
          %1829 = vmatprep.mubr.bf16.mxu0 0
          %1830 = vmatmul.mubr.bf16.gmra.mrb[0].mxu0 %v1765
          %v1831 = vpop.f32.mrb[0].mxu0
          %v1832 = vadd.f32 0.0, %v1831
          %v1833 = vpop.f32.mrb[0].mxu0
          %v1834 = vpop.f32.mrb[0].mxu0
          %v1835 = vadd.f32 0.0, %v1834
          %v1836 = vpop.f32.mrb[0].mxu0
          %1837 = vmatprep.mubr.bf16.mxu0 0
          %1838 = vmatmul.mubr.bf16.gmra.mrb[0].mxu0 %v1768
          %v1839 = vpop.f32.mrb[0].mxu0
          %v1840 = vadd.f32 0.0, %v1839
          %v1841 = vpop.f32.mrb[0].mxu0
          %v1842 = vpop.f32.mrb[0].mxu0
          %v1843 = vadd.f32 0.0, %v1842
          %v1844 = vpop.f32.mrb[0].mxu0
          %1845 = vdwg.mxu0
          %v1846 = vadd.f32 %v1704, %v1808
          %v1847 = vadd.f32 %v1705, %v1811
          %v1848 = vadd.f32 %v1706, %v1816
          %v1849 = vadd.f32 %v1707, %v1819
          %v1850 = vadd.f32 %v1708, %v1824
          %v1851 = vadd.f32 %v1709, %v1827
          %v1852 = vadd.f32 %v1710, %v1832
          %v1853 = vadd.f32 %v1711, %v1835
          %v1854 = vadd.f32 %v1712, %v1840
          %v1855 = vadd.f32 %v1713, %v1843
          %s1856 = scalar_lea.vmem %s1, 22
          %v1857 = vld [vmem:[%s1856] sm:$0x3]
          %v1858 = vshrl.u32 %v1750, 16
          %v1860 = vshll.u32 %v1750, 16
          %v1862 = vrot.slane %v1860, 1
          %v1863 = vor.u32 %v1858, %v1862
          %v1864 = vshll.u32 %v1751, 16
          %v1866 = vrot.slane %v1864, 1
          %v1867 = vsel %vm466, %v1863, %v1866
          %v1868 = vshrl.u32 %v1751, 16
          %v1870 = vor.u32 %v1868, %v1866
          %v1871 = vshll.u32 %v1752, 16
          %v1873 = vrot.slane %v1871, 1
          %v1874 = vsel %vm466, %v1870, %v1873
          %v1875 = vshrl.u32 %v1752, 16
          %v1877 = vor.u32 %v1875, %v1873
          %v1878 = vshll.u32 %v1753, 16
          %v1880 = vrot.slane %v1878, 1
          %v1881 = vsel %vm466, %v1877, %v1880
          %v1882 = vshrl.u32 %v1753, 16
          %v1884 = vor.u32 %v1882, %v1880
          %v1885 = vshll.u32 %v1754, 16
          %v1887 = vrot.slane %v1885, 1
          %v1888 = vsel %vm466, %v1884, %v1887
          %v1889 = vshrl.u32 %v1754, 16
          %v1891 = vor.u32 %v1889, %v1887
          %v1893 = vsel %vm506, %v1867, 0
          %v1896 = vsel %vm506, %v1874, 0
          %v1899 = vsel %vm506, %v1881, 0
          %v1902 = vsel %vm506, %v1888, 0
          %v1905 = vsel %vm506, %v1891, 0
          %v1908 = vand.u32 %v1857, %v525
          %1910 = vmatprep.subr.bf16.mxu0 0
          %1911 = vmatpush1.bf16.msra.mxu0 %v1908
          %1912 = vmatprep.subr.bf16.mxu0 0
          %1913 = vmatpush1.bf16.msra.mxu0 0
          %1914 = vmatprep.subr.bf16.mxu0 0
          %1915 = vmatpush1.bf16.msra.mxu0 0
          %1916 = vmatprep.subr.bf16.mxu0 0
          %1917 = vmatpush1.bf16.msra.mxu0 0
          %1918 = vmatprep.subr.bf16.mxu0 0
          %1919 = vmatpush1.bf16.msra.mxu0 0
          %1920 = vmatprep.subr.bf16.mxu0 0
          %1921 = vmatpush1.bf16.msra.mxu0 0
          %1922 = vmatprep.subr.bf16.mxu0 0
          %1923 = vmatpush1.bf16.msra.mxu0 0
          %1924 = vmatprep.subr.bf16.mxu0 0
          %1925 = vmatpush1.bf16.msra.mxu0 0
          %1926 = vmatprep.subr.bf16.mxu0 0
          %1927 = vmatpush1.bf16.msra.mxu0 0
          %1928 = vmatprep.subr.bf16.mxu0 0
          %1929 = vmatpush1.bf16.msra.mxu0 0
          %1930 = vmatprep.subr.bf16.mxu0 0
          %1931 = vmatpush1.bf16.msra.mxu0 0
          %1932 = vmatprep.subr.bf16.mxu0 0
          %1933 = vmatpush1.bf16.msra.mxu0 0
          %1934 = vmatprep.subr.bf16.mxu0 0
          %1935 = vmatpush1.bf16.msra.mxu0 0
          %1936 = vmatprep.subr.bf16.mxu0 0
          %1937 = vmatpush1.bf16.msra.mxu0 0
          %1938 = vmatprep.subr.bf16.mxu0 0
          %1939 = vmatpush1.bf16.msra.mxu0 0
          %1940 = vmatprep.subr.bf16.mxu0 0
          %1941 = vmatpush1.bf16.msra.mxu0 0
          %1942 = vmatprep.mubr.bf16.mxu0 0
          %1943 = vmatmul.mubr.bf16.gmra.mrb[0].mxu0 %v1893
          %v1944 = vpop.f32.mrb[0].mxu0
          %v1945 = vadd.f32 0.0, %v1944
          %v1946 = vpop.f32.mrb[0].mxu0
          %v1947 = vpop.f32.mrb[0].mxu0
          %v1948 = vadd.f32 0.0, %v1947
          %v1949 = vpop.f32.mrb[0].mxu0
          %1950 = vmatprep.mubr.bf16.mxu0 0
          %1951 = vmatmul.mubr.bf16.gmra.mrb[0].mxu0 %v1896
          %v1952 = vpop.f32.mrb[0].mxu0
          %v1953 = vadd.f32 0.0, %v1952
          %v1954 = vpop.f32.mrb[0].mxu0
          %v1955 = vpop.f32.mrb[0].mxu0
          %v1956 = vadd.f32 0.0, %v1955
          %v1957 = vpop.f32.mrb[0].mxu0
          %1958 = vmatprep.mubr.bf16.mxu0 0
          %1959 = vmatmul.mubr.bf16.gmra.mrb[0].mxu0 %v1899
          %v1960 = vpop.f32.mrb[0].mxu0
          %v1961 = vadd.f32 0.0, %v1960
          %v1962 = vpop.f32.mrb[0].mxu0
          %v1963 = vpop.f32.mrb[0].mxu0
          %v1964 = vadd.f32 0.0, %v1963
          %v1965 = vpop.f32.mrb[0].mxu0
          %1966 = vmatprep.mubr.bf16.mxu0 0
          %1967 = vmatmul.mubr.bf16.gmra.mrb[0].mxu0 %v1902
          %v1968 = vpop.f32.mrb[0].mxu0
          %v1969 = vadd.f32 0.0, %v1968
          %v1970 = vpop.f32.mrb[0].mxu0
          %v1971 = vpop.f32.mrb[0].mxu0
          %v1972 = vadd.f32 0.0, %v1971
          %v1973 = vpop.f32.mrb[0].mxu0
          %1974 = vmatprep.mubr.bf16.mxu0 0
          %1975 = vmatmul.mubr.bf16.gmra.mrb[0].mxu0 %v1905
          %v1976 = vpop.f32.mrb[0].mxu0
          %v1977 = vadd.f32 0.0, %v1976
          %v1978 = vpop.f32.mrb[0].mxu0
          %v1979 = vpop.f32.mrb[0].mxu0
          %v1980 = vadd.f32 0.0, %v1979
          %v1981 = vpop.f32.mrb[0].mxu0
          %1982 = vdwg.mxu0
          %v1983 = vadd.f32 %v1846, %v1945
          %v1984 = vadd.f32 %v1847, %v1948
          %v1985 = vadd.f32 %v1848, %v1953
          %v1986 = vadd.f32 %v1849, %v1956
          %v1987 = vadd.f32 %v1850, %v1961
          %v1988 = vadd.f32 %v1851, %v1964
          %v1989 = vadd.f32 %v1852, %v1969
          %v1990 = vadd.f32 %v1853, %v1972
          %v1991 = vadd.f32 %v1854, %v1977
          %v1992 = vadd.f32 %v1855, %v1980
          %v1993 = vld [vmem:[%s1717] sm:$0xe]
          %v1994 = vld [vmem:[%s1717 + $0x24] sm:$0x7]
          %s1995 = scalar_lea.vmem %s1, 24
          %v1996 = vld [vmem:[%s1995] sm:$0x3]
          %v1999 = vunpack.c.l.b16 %v1993
          %v2000 = vunpack.c.l.b16 %v1994
          %v2001 = vpack.c.b16 %v1741, %v1999
          %v2002 = vpack.c.b16 %v2000, %v1748
          %v2003 = vrot.slane %v2001, 1
          %v2004 = vrot.slane %v1751, 1
          %v2005 = vsel %vm698, %v2003, %v2004
          %v2006 = vrot.slane %v1752, 1
          %v2007 = vsel %vm698, %v2004, %v2006
          %v2008 = vrot.slane %v1753, 1
          %v2009 = vsel %vm698, %v2006, %v2008
          %v2010 = vrot.slane %v2002, 1
          %v2011 = vsel %vm698, %v2008, %v2010
          %v2013 = vsel %vm506, %v2005, 0
          %v2016 = vsel %vm506, %v2007, 0
          %v2019 = vsel %vm506, %v2009, 0
          %v2022 = vsel %vm506, %v2011, 0
          %v2025 = vsel %vm506, %v2010, 0
          %v2028 = vand.u32 %v1996, %v525
          %2030 = vmatprep.subr.bf16.mxu0 0
          %2031 = vmatpush1.bf16.msra.mxu0 %v2028
          %2032 = vmatprep.subr.bf16.mxu0 0
          %2033 = vmatpush1.bf16.msra.mxu0 0
          %2034 = vmatprep.subr.bf16.mxu0 0
          %2035 = vmatpush1.bf16.msra.mxu0 0
          %2036 = vmatprep.subr.bf16.mxu0 0
          %2037 = vmatpush1.bf16.msra.mxu0 0
          %2038 = vmatprep.subr.bf16.mxu0 0
          %2039 = vmatpush1.bf16.msra.mxu0 0
          %2040 = vmatprep.subr.bf16.mxu0 0
          %2041 = vmatpush1.bf16.msra.mxu0 0
          %2042 = vmatprep.subr.bf16.mxu0 0
          %2043 = vmatpush1.bf16.msra.mxu0 0
          %2044 = vmatprep.subr.bf16.mxu0 0
          %2045 = vmatpush1.bf16.msra.mxu0 0
          %2046 = vmatprep.subr.bf16.mxu0 0
          %2047 = vmatpush1.bf16.msra.mxu0 0
          %2048 = vmatprep.subr.bf16.mxu0 0
          %2049 = vmatpush1.bf16.msra.mxu0 0
          %2050 = vmatprep.subr.bf16.mxu0 0
          %2051 = vmatpush1.bf16.msra.mxu0 0
          %2052 = vmatprep.subr.bf16.mxu0 0
          %2053 = vmatpush1.bf16.msra.mxu0 0
          %2054 = vmatprep.subr.bf16.mxu0 0
          %2055 = vmatpush1.bf16.msra.mxu0 0
          %2056 = vmatprep.subr.bf16.mxu0 0
          %2057 = vmatpush1.bf16.msra.mxu0 0
          %2058 = vmatprep.subr.bf16.mxu0 0
          %2059 = vmatpush1.bf16.msra.mxu0 0
          %2060 = vmatprep.subr.bf16.mxu0 0
          %2061 = vmatpush1.bf16.msra.mxu0 0
          %2062 = vmatprep.mubr.bf16.mxu0 0
          %2063 = vmatmul.mubr.bf16.gmra.mrb[0].mxu0 %v2013
          %v2064 = vpop.f32.mrb[0].mxu0
          %v2065 = vadd.f32 0.0, %v2064
          %v2066 = vpop.f32.mrb[0].mxu0
          %v2067 = vpop.f32.mrb[0].mxu0
          %v2068 = vadd.f32 0.0, %v2067
          %v2069 = vpop.f32.mrb[0].mxu0
          %2070 = vmatprep.mubr.bf16.mxu0 0
          %2071 = vmatmul.mubr.bf16.gmra.mrb[0].mxu0 %v2016
          %v2072 = vpop.f32.mrb[0].mxu0
          %v2073 = vadd.f32 0.0, %v2072
          %v2074 = vpop.f32.mrb[0].mxu0
          %v2075 = vpop.f32.mrb[0].mxu0
          %v2076 = vadd.f32 0.0, %v2075
          %v2077 = vpop.f32.mrb[0].mxu0
          %2078 = vmatprep.mubr.bf16.mxu0 0
          %2079 = vmatmul.mubr.bf16.gmra.mrb[0].mxu0 %v2019
          %v2080 = vpop.f32.mrb[0].mxu0
          %v2081 = vadd.f32 0.0, %v2080
          %v2082 = vpop.f32.mrb[0].mxu0
          %v2083 = vpop.f32.mrb[0].mxu0
          %v2084 = vadd.f32 0.0, %v2083
          %v2085 = vpop.f32.mrb[0].mxu0
          %2086 = vmatprep.mubr.bf16.mxu0 0
          %2087 = vmatmul.mubr.bf16.gmra.mrb[0].mxu0 %v2022
          %v2088 = vpop.f32.mrb[0].mxu0
          %v2089 = vadd.f32 0.0, %v2088
          %v2090 = vpop.f32.mrb[0].mxu0
          %v2091 = vpop.f32.mrb[0].mxu0
          %v2092 = vadd.f32 0.0, %v2091
          %v2093 = vpop.f32.mrb[0].mxu0
          %2094 = vmatprep.mubr.bf16.mxu0 0
          %2095 = vmatmul.mubr.bf16.gmra.mrb[0].mxu0 %v2025
          %v2096 = vpop.f32.mrb[0].mxu0
          %v2097 = vadd.f32 0.0, %v2096
          %v2098 = vpop.f32.mrb[0].mxu0
          %v2099 = vpop.f32.mrb[0].mxu0
          %v2100 = vadd.f32 0.0, %v2099
          %v2101 = vpop.f32.mrb[0].mxu0
          %2102 = vdwg.mxu0
          %v2103 = vadd.f32 %v1983, %v2065
          %v2104 = vadd.f32 %v1984, %v2068
          %v2105 = vadd.f32 %v1985, %v2073
          %v2106 = vadd.f32 %v1986, %v2076
          %v2107 = vadd.f32 %v1987, %v2081
          %v2108 = vadd.f32 %v1988, %v2084
          %v2109 = vadd.f32 %v1989, %v2089
          %v2110 = vadd.f32 %v1990, %v2092
          %v2111 = vadd.f32 %v1991, %v2097
          %v2112 = vadd.f32 %v1992, %v2100
          %s2113 = scalar_lea.vmem %s1, 26
          %v2114 = vld [vmem:[%s2113] sm:$0x3]
          %v2116 = vshrl.u32 %v2001, 16
          %v2118 = vrot.slane %v2116, 1
          %v2119 = vshll.u32 %v2001, 16
          %v2121 = vrot.slane %v2119, 2
          %v2122 = vor.u32 %v2118, %v2121
          %v2123 = vrot.slane %v1868, 1
          %v2124 = vrot.slane %v1864, 2
          %v2125 = vor.u32 %v2123, %v2124
          %v2126 = vsel %vm811, %v2122, %v2125
          %v2127 = vrot.slane %v1875, 1
          %v2128 = vrot.slane %v1871, 2
          %v2129 = vor.u32 %v2127, %v2128
          %v2130 = vsel %vm811, %v2125, %v2129
          %v2131 = vrot.slane %v1882, 1
          %v2132 = vrot.slane %v1878, 2
          %v2133 = vor.u32 %v2131, %v2132
          %v2134 = vsel %vm811, %v2129, %v2133
          %v2136 = vshrl.u32 %v2002, 16
          %v2138 = vrot.slane %v2136, 1
          %v2139 = vshll.u32 %v2002, 16
          %v2141 = vrot.slane %v2139, 2
          %v2142 = vor.u32 %v2138, %v2141
          %v2143 = vsel %vm811, %v2133, %v2142
          %v2145 = vsel %vm506, %v2126, 0
          %v2148 = vsel %vm506, %v2130, 0
          %v2151 = vsel %vm506, %v2134, 0
          %v2154 = vsel %vm506, %v2143, 0
          %v2157 = vsel %vm506, %v2142, 0
          %v2160 = vand.u32 %v2114, %v525
          %2162 = vmatprep.subr.bf16.mxu0 0
          %2163 = vmatpush1.bf16.msra.mxu0 %v2160
          %2164 = vmatprep.subr.bf16.mxu0 0
          %2165 = vmatpush1.bf16.msra.mxu0 0
          %2166 = vmatprep.subr.bf16.mxu0 0
          %2167 = vmatpush1.bf16.msra.mxu0 0
          %2168 = vmatprep.subr.bf16.mxu0 0
          %2169 = vmatpush1.bf16.msra.mxu0 0
          %2170 = vmatprep.subr.bf16.mxu0 0
          %2171 = vmatpush1.bf16.msra.mxu0 0
          %2172 = vmatprep.subr.bf16.mxu0 0
          %2173 = vmatpush1.bf16.msra.mxu0 0
          %2174 = vmatprep.subr.bf16.mxu0 0
          %2175 = vmatpush1.bf16.msra.mxu0 0
          %2176 = vmatprep.subr.bf16.mxu0 0
          %2177 = vmatpush1.bf16.msra.mxu0 0
          %2178 = vmatprep.subr.bf16.mxu0 0
          %2179 = vmatpush1.bf16.msra.mxu0 0
          %2180 = vmatprep.subr.bf16.mxu0 0
          %2181 = vmatpush1.bf16.msra.mxu0 0
          %2182 = vmatprep.subr.bf16.mxu0 0
          %2183 = vmatpush1.bf16.msra.mxu0 0
          %2184 = vmatprep.subr.bf16.mxu0 0
          %2185 = vmatpush1.bf16.msra.mxu0 0
          %2186 = vmatprep.subr.bf16.mxu0 0
          %2187 = vmatpush1.bf16.msra.mxu0 0
          %2188 = vmatprep.subr.bf16.mxu0 0
          %2189 = vmatpush1.bf16.msra.mxu0 0
          %2190 = vmatprep.subr.bf16.mxu0 0
          %2191 = vmatpush1.bf16.msra.mxu0 0
          %2192 = vmatprep.subr.bf16.mxu0 0
          %2193 = vmatpush1.bf16.msra.mxu0 0
          %2194 = vmatprep.mubr.bf16.mxu0 0
          %2195 = vmatmul.mubr.bf16.gmra.mrb[0].mxu0 %v2145
          %v2196 = vpop.f32.mrb[0].mxu0
          %v2197 = vadd.f32 0.0, %v2196
          %v2198 = vpop.f32.mrb[0].mxu0
          %v2199 = vpop.f32.mrb[0].mxu0
          %v2200 = vadd.f32 0.0, %v2199
          %v2201 = vpop.f32.mrb[0].mxu0
          %2202 = vmatprep.mubr.bf16.mxu0 0
          %2203 = vmatmul.mubr.bf16.gmra.mrb[0].mxu0 %v2148
          %v2204 = vpop.f32.mrb[0].mxu0
          %v2205 = vadd.f32 0.0, %v2204
          %v2206 = vpop.f32.mrb[0].mxu0
          %v2207 = vpop.f32.mrb[0].mxu0
          %v2208 = vadd.f32 0.0, %v2207
          %v2209 = vpop.f32.mrb[0].mxu0
          %2210 = vmatprep.mubr.bf16.mxu0 0
          %2211 = vmatmul.mubr.bf16.gmra.mrb[0].mxu0 %v2151
          %v2212 = vpop.f32.mrb[0].mxu0
          %v2213 = vadd.f32 0.0, %v2212
          %v2214 = vpop.f32.mrb[0].mxu0
          %v2215 = vpop.f32.mrb[0].mxu0
          %v2216 = vadd.f32 0.0, %v2215
          %v2217 = vpop.f32.mrb[0].mxu0
          %2218 = vmatprep.mubr.bf16.mxu0 0
          %2219 = vmatmul.mubr.bf16.gmra.mrb[0].mxu0 %v2154
          %v2220 = vpop.f32.mrb[0].mxu0
          %v2221 = vadd.f32 0.0, %v2220
          %v2222 = vpop.f32.mrb[0].mxu0
          %v2223 = vpop.f32.mrb[0].mxu0
          %v2224 = vadd.f32 0.0, %v2223
          %v2225 = vpop.f32.mrb[0].mxu0
          %2226 = vmatprep.mubr.bf16.mxu0 0
          %2227 = vmatmul.mubr.bf16.gmra.mrb[0].mxu0 %v2157
          %v2228 = vpop.f32.mrb[0].mxu0
          %v2229 = vadd.f32 0.0, %v2228
          %v2230 = vpop.f32.mrb[0].mxu0
          %v2231 = vpop.f32.mrb[0].mxu0
          %v2232 = vadd.f32 0.0, %v2231
          %v2233 = vpop.f32.mrb[0].mxu0
          %2234 = vdwg.mxu0
          %v2235 = vadd.f32 %v2103, %v2197
          %v2236 = vadd.f32 %v2104, %v2200
          %v2237 = vadd.f32 %v2105, %v2205
          %v2238 = vadd.f32 %v2106, %v2208
          %v2239 = vadd.f32 %v2107, %v2213
          %v2240 = vadd.f32 %v2108, %v2216
          %v2241 = vadd.f32 %v2109, %v2221
          %v2242 = vadd.f32 %v2110, %v2224
          %v2243 = vadd.f32 %v2111, %v2229
          %v2244 = vadd.f32 %v2112, %v2232
          %v2245 = vld [vmem:[%s1717] sm:$0xc]
          %v2246 = vld [vmem:[%s1717 + $0x24] sm:$0xf]
          %s2247 = scalar_lea.vmem %s1, 28
          %v2248 = vld [vmem:[%s2247] sm:$0x3]
          %v2251 = vunpack.c.l.b16 %v2245
          %v2252 = vunpack.c.l.b16 %v2246
          %v2253 = vpack.c.b16 %v1741, %v2251
          %v2254 = vpack.c.b16 %v2252, %v1748
          %v2255 = vrot.slane %v2253, 2
          %v2256 = vrot.slane %v1751, 2
          %v2257 = vsel %vm952, %v2255, %v2256
          %v2258 = vrot.slane %v1752, 2
          %v2259 = vsel %vm952, %v2256, %v2258
          %v2260 = vrot.slane %v1753, 2
          %v2261 = vsel %vm952, %v2258, %v2260
          %v2262 = vrot.slane %v2254, 2
          %v2263 = vsel %vm952, %v2260, %v2262
          %v2265 = vsel %vm506, %v2257, 0
          %v2268 = vsel %vm506, %v2259, 0
          %v2271 = vsel %vm506, %v2261, 0
          %v2274 = vsel %vm506, %v2263, 0
          %v2277 = vsel %vm506, %v2262, 0
          %v2280 = vand.u32 %v2248, %v525
          %2282 = vmatprep.subr.bf16.mxu0 0
          %2283 = vmatpush1.bf16.msra.mxu0 %v2280
          %2284 = vmatprep.subr.bf16.mxu0 0
          %2285 = vmatpush1.bf16.msra.mxu0 0
          %2286 = vmatprep.subr.bf16.mxu0 0
          %2287 = vmatpush1.bf16.msra.mxu0 0
          %2288 = vmatprep.subr.bf16.mxu0 0
          %2289 = vmatpush1.bf16.msra.mxu0 0
          %2290 = vmatprep.subr.bf16.mxu0 0
          %2291 = vmatpush1.bf16.msra.mxu0 0
          %2292 = vmatprep.subr.bf16.mxu0 0
          %2293 = vmatpush1.bf16.msra.mxu0 0
          %2294 = vmatprep.subr.bf16.mxu0 0
          %2295 = vmatpush1.bf16.msra.mxu0 0
          %2296 = vmatprep.subr.bf16.mxu0 0
          %2297 = vmatpush1.bf16.msra.mxu0 0
          %2298 = vmatprep.subr.bf16.mxu0 0
          %2299 = vmatpush1.bf16.msra.mxu0 0
          %2300 = vmatprep.subr.bf16.mxu0 0
          %2301 = vmatpush1.bf16.msra.mxu0 0
          %2302 = vmatprep.subr.bf16.mxu0 0
          %2303 = vmatpush1.bf16.msra.mxu0 0
          %2304 = vmatprep.subr.bf16.mxu0 0
          %2305 = vmatpush1.bf16.msra.mxu0 0
          %2306 = vmatprep.subr.bf16.mxu0 0
          %2307 = vmatpush1.bf16.msra.mxu0 0
          %2308 = vmatprep.subr.bf16.mxu0 0
          %2309 = vmatpush1.bf16.msra.mxu0 0
          %2310 = vmatprep.subr.bf16.mxu0 0
          %2311 = vmatpush1.bf16.msra.mxu0 0
          %2312 = vmatprep.subr.bf16.mxu0 0
          %2313 = vmatpush1.bf16.msra.mxu0 0
          %2314 = vmatprep.mubr.bf16.mxu0 0
          %2315 = vmatmul.mubr.bf16.gmra.mrb[0].mxu0 %v2265
          %v2316 = vpop.f32.mrb[0].mxu0
          %v2317 = vadd.f32 0.0, %v2316
          %v2318 = vpop.f32.mrb[0].mxu0
          %v2319 = vpop.f32.mrb[0].mxu0
          %v2320 = vadd.f32 0.0, %v2319
          %v2321 = vpop.f32.mrb[0].mxu0
          %2322 = vmatprep.mubr.bf16.mxu0 0
          %2323 = vmatmul.mubr.bf16.gmra.mrb[0].mxu0 %v2268
          %v2324 = vpop.f32.mrb[0].mxu0
          %v2325 = vadd.f32 0.0, %v2324
          %v2326 = vpop.f32.mrb[0].mxu0
          %v2327 = vpop.f32.mrb[0].mxu0
          %v2328 = vadd.f32 0.0, %v2327
          %v2329 = vpop.f32.mrb[0].mxu0
          %2330 = vmatprep.mubr.bf16.mxu0 0
          %2331 = vmatmul.mubr.bf16.gmra.mrb[0].mxu0 %v2271
          %v2332 = vpop.f32.mrb[0].mxu0
          %v2333 = vadd.f32 0.0, %v2332
          %v2334 = vpop.f32.mrb[0].mxu0
          %v2335 = vpop.f32.mrb[0].mxu0
          %v2336 = vadd.f32 0.0, %v2335
          %v2337 = vpop.f32.mrb[0].mxu0
          %2338 = vmatprep.mubr.bf16.mxu0 0
          %2339 = vmatmul.mubr.bf16.gmra.mrb[0].mxu0 %v2274
          %v2340 = vpop.f32.mrb[0].mxu0
          %v2341 = vadd.f32 0.0, %v2340
          %v2342 = vpop.f32.mrb[0].mxu0
          %v2343 = vpop.f32.mrb[0].mxu0
          %v2344 = vadd.f32 0.0, %v2343
          %v2345 = vpop.f32.mrb[0].mxu0
          %2346 = vmatprep.mubr.bf16.mxu0 0
          %2347 = vmatmul.mubr.bf16.gmra.mrb[0].mxu0 %v2277
          %v2348 = vpop.f32.mrb[0].mxu0
          %v2349 = vadd.f32 0.0, %v2348
          %v2350 = vpop.f32.mrb[0].mxu0
          %v2351 = vpop.f32.mrb[0].mxu0
          %v2352 = vadd.f32 0.0, %v2351
          %v2353 = vpop.f32.mrb[0].mxu0
          %2354 = vdwg.mxu0
          %v2355 = vadd.f32 %v2235, %v2317
          %v2356 = vadd.f32 %v2236, %v2320
          %v2357 = vadd.f32 %v2237, %v2325
          %v2358 = vadd.f32 %v2238, %v2328
          %v2359 = vadd.f32 %v2239, %v2333
          %v2360 = vadd.f32 %v2240, %v2336
          %v2361 = vadd.f32 %v2241, %v2341
          %v2362 = vadd.f32 %v2242, %v2344
          %v2363 = vadd.f32 %v2243, %v2349
          %v2364 = vadd.f32 %v2244, %v2352
          %s2365 = sadd.s32 %s424, 3
          %s2366 = smul.u32 %s2365, 10
          %s2367 = smul.addr %s2366, 4
          %s2368 = scalar_lea.vmem %s410, %s2367
          %v2369 = vld [vmem:[%s2368] sm:$0xf]
          %v2370 = vld [vmem:[%s2368 + $0x4] sm:$0xf]
          %v2371 = vld [vmem:[%s2368 + $0x8] sm:$0xf]
          %v2372 = vld [vmem:[%s2368 + $0xc] sm:$0xf]
          %v2373 = vld [vmem:[%s2368 + $0x10] sm:$0xf]
          %v2374 = vld [vmem:[%s2368 + $0x14] sm:$0xf]
          %v2375 = vld [vmem:[%s2368 + $0x18] sm:$0xf]
          %v2376 = vld [vmem:[%s2368 + $0x1c] sm:$0xf]
          %v2377 = vld [vmem:[%s2368 + $0x20] sm:$0xf]
          %v2378 = vld [vmem:[%s2368 + $0x24] sm:$0x3]
          %s2379 = scalar_lea.vmem %s1, 30
          %v2380 = vld [vmem:[%s2379] sm:$0x3]
          %v2391 = vunpack.c.l.b16 %v2369
          %v2392 = vunpack.c.l.b16 %v2370
          %v2393 = vunpack.c.l.b16 %v2371
          %v2394 = vunpack.c.l.b16 %v2372
          %v2395 = vunpack.c.l.b16 %v2373
          %v2396 = vunpack.c.l.b16 %v2374
          %v2397 = vunpack.c.l.b16 %v2375
          %v2398 = vunpack.c.l.b16 %v2376
          %v2399 = vunpack.c.l.b16 %v2377
          %v2400 = vunpack.c.l.b16 %v2378
          %v2401 = vpack.c.b16 %v2392, %v2391
          %v2402 = vpack.c.b16 %v2394, %v2393
          %v2403 = vpack.c.b16 %v2396, %v2395
          %v2404 = vpack.c.b16 %v2398, %v2397
          %v2405 = vpack.c.b16 %v2400, %v2399
          %v2407 = vsel %vm506, %v2401, 0
          %v2410 = vsel %vm506, %v2402, 0
          %v2413 = vsel %vm506, %v2403, 0
          %v2416 = vsel %vm506, %v2404, 0
          %v2419 = vsel %vm506, %v2405, 0
          %v2422 = vand.u32 %v2380, %v525
          %2424 = vmatprep.subr.bf16.mxu0 0
          %2425 = vmatpush1.bf16.msra.mxu0 %v2422
          %2426 = vmatprep.subr.bf16.mxu0 0
          %2427 = vmatpush1.bf16.msra.mxu0 0
          %2428 = vmatprep.subr.bf16.mxu0 0
          %2429 = vmatpush1.bf16.msra.mxu0 0
          %2430 = vmatprep.subr.bf16.mxu0 0
          %2431 = vmatpush1.bf16.msra.mxu0 0
          %2432 = vmatprep.subr.bf16.mxu0 0
          %2433 = vmatpush1.bf16.msra.mxu0 0
          %2434 = vmatprep.subr.bf16.mxu0 0
          %2435 = vmatpush1.bf16.msra.mxu0 0
          %2436 = vmatprep.subr.bf16.mxu0 0
          %2437 = vmatpush1.bf16.msra.mxu0 0
          %2438 = vmatprep.subr.bf16.mxu0 0
          %2439 = vmatpush1.bf16.msra.mxu0 0
          %2440 = vmatprep.subr.bf16.mxu0 0
          %2441 = vmatpush1.bf16.msra.mxu0 0
          %2442 = vmatprep.subr.bf16.mxu0 0
          %2443 = vmatpush1.bf16.msra.mxu0 0
          %2444 = vmatprep.subr.bf16.mxu0 0
          %2445 = vmatpush1.bf16.msra.mxu0 0
          %2446 = vmatprep.subr.bf16.mxu0 0
          %2447 = vmatpush1.bf16.msra.mxu0 0
          %2448 = vmatprep.subr.bf16.mxu0 0
          %2449 = vmatpush1.bf16.msra.mxu0 0
          %2450 = vmatprep.subr.bf16.mxu0 0
          %2451 = vmatpush1.bf16.msra.mxu0 0
          %2452 = vmatprep.subr.bf16.mxu0 0
          %2453 = vmatpush1.bf16.msra.mxu0 0
          %2454 = vmatprep.subr.bf16.mxu0 0
          %2455 = vmatpush1.bf16.msra.mxu0 0
          %2456 = vmatprep.mubr.bf16.mxu0 0
          %2457 = vmatmul.mubr.bf16.gmra.mrb[0].mxu0 %v2407
          %v2458 = vpop.f32.mrb[0].mxu0
          %v2459 = vadd.f32 0.0, %v2458
          %v2460 = vpop.f32.mrb[0].mxu0
          %v2461 = vpop.f32.mrb[0].mxu0
          %v2462 = vadd.f32 0.0, %v2461
          %v2463 = vpop.f32.mrb[0].mxu0
          %2464 = vmatprep.mubr.bf16.mxu0 0
          %2465 = vmatmul.mubr.bf16.gmra.mrb[0].mxu0 %v2410
          %v2466 = vpop.f32.mrb[0].mxu0
          %v2467 = vadd.f32 0.0, %v2466
          %v2468 = vpop.f32.mrb[0].mxu0
          %v2469 = vpop.f32.mrb[0].mxu0
          %v2470 = vadd.f32 0.0, %v2469
          %v2471 = vpop.f32.mrb[0].mxu0
          %2472 = vmatprep.mubr.bf16.mxu0 0
          %2473 = vmatmul.mubr.bf16.gmra.mrb[0].mxu0 %v2413
          %v2474 = vpop.f32.mrb[0].mxu0
          %v2475 = vadd.f32 0.0, %v2474
          %v2476 = vpop.f32.mrb[0].mxu0
          %v2477 = vpop.f32.mrb[0].mxu0
          %v2478 = vadd.f32 0.0, %v2477
          %v2479 = vpop.f32.mrb[0].mxu0
          %2480 = vmatprep.mubr.bf16.mxu0 0
          %2481 = vmatmul.mubr.bf16.gmra.mrb[0].mxu0 %v2416
          %v2482 = vpop.f32.mrb[0].mxu0
          %v2483 = vadd.f32 0.0, %v2482
          %v2484 = vpop.f32.mrb[0].mxu0
          %v2485 = vpop.f32.mrb[0].mxu0
          %v2486 = vadd.f32 0.0, %v2485
          %v2487 = vpop.f32.mrb[0].mxu0
          %2488 = vmatprep.mubr.bf16.mxu0 0
          %2489 = vmatmul.mubr.bf16.gmra.mrb[0].mxu0 %v2419
          %v2490 = vpop.f32.mrb[0].mxu0
          %v2491 = vadd.f32 0.0, %v2490
          %v2492 = vpop.f32.mrb[0].mxu0
          %v2493 = vpop.f32.mrb[0].mxu0
          %v2494 = vadd.f32 0.0, %v2493
          %v2495 = vpop.f32.mrb[0].mxu0
          %2496 = vdwg.mxu0
          %v2497 = vadd.f32 %v2355, %v2459
          %v2498 = vadd.f32 %v2356, %v2462
          %v2499 = vadd.f32 %v2357, %v2467
          %v2500 = vadd.f32 %v2358, %v2470
          %v2501 = vadd.f32 %v2359, %v2475
          %v2502 = vadd.f32 %v2360, %v2478
          %v2503 = vadd.f32 %v2361, %v2483
          %v2504 = vadd.f32 %v2362, %v2486
          %v2505 = vadd.f32 %v2363, %v2491
          %v2506 = vadd.f32 %v2364, %v2494
          %s2507 = scalar_lea.vmem %s1, 32
          %v2508 = vld [vmem:[%s2507] sm:$0x3]
          %v2509 = vshrl.u32 %v2401, 16
          %v2511 = vshll.u32 %v2401, 16
          %v2513 = vrot.slane %v2511, 1
          %v2514 = vor.u32 %v2509, %v2513
          %v2515 = vshll.u32 %v2402, 16
          %v2517 = vrot.slane %v2515, 1
          %v2518 = vsel %vm466, %v2514, %v2517
          %v2519 = vshrl.u32 %v2402, 16
          %v2521 = vor.u32 %v2519, %v2517
          %v2522 = vshll.u32 %v2403, 16
          %v2524 = vrot.slane %v2522, 1
          %v2525 = vsel %vm466, %v2521, %v2524
          %v2526 = vshrl.u32 %v2403, 16
          %v2528 = vor.u32 %v2526, %v2524
          %v2529 = vshll.u32 %v2404, 16
          %v2531 = vrot.slane %v2529, 1
          %v2532 = vsel %vm466, %v2528, %v2531
          %v2533 = vshrl.u32 %v2404, 16
          %v2535 = vor.u32 %v2533, %v2531
          %v2536 = vshll.u32 %v2405, 16
          %v2538 = vrot.slane %v2536, 1
          %v2539 = vsel %vm466, %v2535, %v2538
          %v2540 = vshrl.u32 %v2405, 16
          %v2542 = vor.u32 %v2540, %v2538
          %v2544 = vsel %vm506, %v2518, 0
          %v2547 = vsel %vm506, %v2525, 0
          %v2550 = vsel %vm506, %v2532, 0
          %v2553 = vsel %vm506, %v2539, 0
          %v2556 = vsel %vm506, %v2542, 0
          %v2559 = vand.u32 %v2508, %v525
          %2561 = vmatprep.subr.bf16.mxu0 0
          %2562 = vmatpush1.bf16.msra.mxu0 %v2559
          %2563 = vmatprep.subr.bf16.mxu0 0
          %2564 = vmatpush1.bf16.msra.mxu0 0
          %2565 = vmatprep.subr.bf16.mxu0 0
          %2566 = vmatpush1.bf16.msra.mxu0 0
          %2567 = vmatprep.subr.bf16.mxu0 0
          %2568 = vmatpush1.bf16.msra.mxu0 0
          %2569 = vmatprep.subr.bf16.mxu0 0
          %2570 = vmatpush1.bf16.msra.mxu0 0
          %2571 = vmatprep.subr.bf16.mxu0 0
          %2572 = vmatpush1.bf16.msra.mxu0 0
          %2573 = vmatprep.subr.bf16.mxu0 0
          %2574 = vmatpush1.bf16.msra.mxu0 0
          %2575 = vmatprep.subr.bf16.mxu0 0
          %2576 = vmatpush1.bf16.msra.mxu0 0
          %2577 = vmatprep.subr.bf16.mxu0 0
          %2578 = vmatpush1.bf16.msra.mxu0 0
          %2579 = vmatprep.subr.bf16.mxu0 0
          %2580 = vmatpush1.bf16.msra.mxu0 0
          %2581 = vmatprep.subr.bf16.mxu0 0
          %2582 = vmatpush1.bf16.msra.mxu0 0
          %2583 = vmatprep.subr.bf16.mxu0 0
          %2584 = vmatpush1.bf16.msra.mxu0 0
          %2585 = vmatprep.subr.bf16.mxu0 0
          %2586 = vmatpush1.bf16.msra.mxu0 0
          %2587 = vmatprep.subr.bf16.mxu0 0
          %2588 = vmatpush1.bf16.msra.mxu0 0
          %2589 = vmatprep.subr.bf16.mxu0 0
          %2590 = vmatpush1.bf16.msra.mxu0 0
          %2591 = vmatprep.subr.bf16.mxu0 0
          %2592 = vmatpush1.bf16.msra.mxu0 0
          %2593 = vmatprep.mubr.bf16.mxu0 0
          %2594 = vmatmul.mubr.bf16.gmra.mrb[0].mxu0 %v2544
          %v2595 = vpop.f32.mrb[0].mxu0
          %v2596 = vadd.f32 0.0, %v2595
          %v2597 = vpop.f32.mrb[0].mxu0
          %v2598 = vpop.f32.mrb[0].mxu0
          %v2599 = vadd.f32 0.0, %v2598
          %v2600 = vpop.f32.mrb[0].mxu0
          %2601 = vmatprep.mubr.bf16.mxu0 0
          %2602 = vmatmul.mubr.bf16.gmra.mrb[0].mxu0 %v2547
          %v2603 = vpop.f32.mrb[0].mxu0
          %v2604 = vadd.f32 0.0, %v2603
          %v2605 = vpop.f32.mrb[0].mxu0
          %v2606 = vpop.f32.mrb[0].mxu0
          %v2607 = vadd.f32 0.0, %v2606
          %v2608 = vpop.f32.mrb[0].mxu0
          %2609 = vmatprep.mubr.bf16.mxu0 0
          %2610 = vmatmul.mubr.bf16.gmra.mrb[0].mxu0 %v2550
          %v2611 = vpop.f32.mrb[0].mxu0
          %v2612 = vadd.f32 0.0, %v2611
          %v2613 = vpop.f32.mrb[0].mxu0
          %v2614 = vpop.f32.mrb[0].mxu0
          %v2615 = vadd.f32 0.0, %v2614
          %v2616 = vpop.f32.mrb[0].mxu0
          %2617 = vmatprep.mubr.bf16.mxu0 0
          %2618 = vmatmul.mubr.bf16.gmra.mrb[0].mxu0 %v2553
          %v2619 = vpop.f32.mrb[0].mxu0
          %v2620 = vadd.f32 0.0, %v2619
          %v2621 = vpop.f32.mrb[0].mxu0
          %v2622 = vpop.f32.mrb[0].mxu0
          %v2623 = vadd.f32 0.0, %v2622
          %v2624 = vpop.f32.mrb[0].mxu0
          %2625 = vmatprep.mubr.bf16.mxu0 0
          %2626 = vmatmul.mubr.bf16.gmra.mrb[0].mxu0 %v2556
          %v2627 = vpop.f32.mrb[0].mxu0
          %v2628 = vadd.f32 0.0, %v2627
          %v2629 = vpop.f32.mrb[0].mxu0
          %v2630 = vpop.f32.mrb[0].mxu0
          %v2631 = vadd.f32 0.0, %v2630
          %v2632 = vpop.f32.mrb[0].mxu0
          %2633 = vdwg.mxu0
          %v2634 = vadd.f32 %v2497, %v2596
          %v2635 = vadd.f32 %v2498, %v2599
          %v2636 = vadd.f32 %v2499, %v2604
          %v2637 = vadd.f32 %v2500, %v2607
          %v2638 = vadd.f32 %v2501, %v2612
          %v2639 = vadd.f32 %v2502, %v2615
          %v2640 = vadd.f32 %v2503, %v2620
          %v2641 = vadd.f32 %v2504, %v2623
          %v2642 = vadd.f32 %v2505, %v2628
          %v2643 = vadd.f32 %v2506, %v2631
          %v2644 = vld [vmem:[%s2368] sm:$0xe]
          %v2645 = vld [vmem:[%s2368 + $0x24] sm:$0x7]
          %s2646 = scalar_lea.vmem %s1, 34
          %v2647 = vld [vmem:[%s2646] sm:$0x3]
          %v2650 = vunpack.c.l.b16 %v2644
          %v2651 = vunpack.c.l.b16 %v2645
          %v2652 = vpack.c.b16 %v2392, %v2650
          %v2653 = vpack.c.b16 %v2651, %v2399
          %v2654 = vrot.slane %v2652, 1
          %v2655 = vrot.slane %v2402, 1
          %v2656 = vsel %vm698, %v2654, %v2655
          %v2657 = vrot.slane %v2403, 1
          %v2658 = vsel %vm698, %v2655, %v2657
          %v2659 = vrot.slane %v2404, 1
          %v2660 = vsel %vm698, %v2657, %v2659
          %v2661 = vrot.slane %v2653, 1
          %v2662 = vsel %vm698, %v2659, %v2661
          %v2664 = vsel %vm506, %v2656, 0
          %v2667 = vsel %vm506, %v2658, 0
          %v2670 = vsel %vm506, %v2660, 0
          %v2673 = vsel %vm506, %v2662, 0
          %v2676 = vsel %vm506, %v2661, 0
          %v2679 = vand.u32 %v2647, %v525
          %2681 = vmatprep.subr.bf16.mxu0 0
          %2682 = vmatpush1.bf16.msra.mxu0 %v2679
          %2683 = vmatprep.subr.bf16.mxu0 0
          %2684 = vmatpush1.bf16.msra.mxu0 0
          %2685 = vmatprep.subr.bf16.mxu0 0
          %2686 = vmatpush1.bf16.msra.mxu0 0
          %2687 = vmatprep.subr.bf16.mxu0 0
          %2688 = vmatpush1.bf16.msra.mxu0 0
          %2689 = vmatprep.subr.bf16.mxu0 0
          %2690 = vmatpush1.bf16.msra.mxu0 0
          %2691 = vmatprep.subr.bf16.mxu0 0
          %2692 = vmatpush1.bf16.msra.mxu0 0
          %2693 = vmatprep.subr.bf16.mxu0 0
          %2694 = vmatpush1.bf16.msra.mxu0 0
          %2695 = vmatprep.subr.bf16.mxu0 0
          %2696 = vmatpush1.bf16.msra.mxu0 0
          %2697 = vmatprep.subr.bf16.mxu0 0
          %2698 = vmatpush1.bf16.msra.mxu0 0
          %2699 = vmatprep.subr.bf16.mxu0 0
          %2700 = vmatpush1.bf16.msra.mxu0 0
          %2701 = vmatprep.subr.bf16.mxu0 0
          %2702 = vmatpush1.bf16.msra.mxu0 0
          %2703 = vmatprep.subr.bf16.mxu0 0
          %2704 = vmatpush1.bf16.msra.mxu0 0
          %2705 = vmatprep.subr.bf16.mxu0 0
          %2706 = vmatpush1.bf16.msra.mxu0 0
          %2707 = vmatprep.subr.bf16.mxu0 0
          %2708 = vmatpush1.bf16.msra.mxu0 0
          %2709 = vmatprep.subr.bf16.mxu0 0
          %2710 = vmatpush1.bf16.msra.mxu0 0
          %2711 = vmatprep.subr.bf16.mxu0 0
          %2712 = vmatpush1.bf16.msra.mxu0 0
          %2713 = vmatprep.mubr.bf16.mxu0 0
          %2714 = vmatmul.mubr.bf16.gmra.mrb[0].mxu0 %v2664
          %v2715 = vpop.f32.mrb[0].mxu0
          %v2716 = vadd.f32 0.0, %v2715
          %v2717 = vpop.f32.mrb[0].mxu0
          %v2718 = vpop.f32.mrb[0].mxu0
          %v2719 = vadd.f32 0.0, %v2718
          %v2720 = vpop.f32.mrb[0].mxu0
          %2721 = vmatprep.mubr.bf16.mxu0 0
          %2722 = vmatmul.mubr.bf16.gmra.mrb[0].mxu0 %v2667
          %v2723 = vpop.f32.mrb[0].mxu0
          %v2724 = vadd.f32 0.0, %v2723
          %v2725 = vpop.f32.mrb[0].mxu0
          %v2726 = vpop.f32.mrb[0].mxu0
          %v2727 = vadd.f32 0.0, %v2726
          %v2728 = vpop.f32.mrb[0].mxu0
          %2729 = vmatprep.mubr.bf16.mxu0 0
          %2730 = vmatmul.mubr.bf16.gmra.mrb[0].mxu0 %v2670
          %v2731 = vpop.f32.mrb[0].mxu0
          %v2732 = vadd.f32 0.0, %v2731
          %v2733 = vpop.f32.mrb[0].mxu0
          %v2734 = vpop.f32.mrb[0].mxu0
          %v2735 = vadd.f32 0.0, %v2734
          %v2736 = vpop.f32.mrb[0].mxu0
          %2737 = vmatprep.mubr.bf16.mxu0 0
          %2738 = vmatmul.mubr.bf16.gmra.mrb[0].mxu0 %v2673
          %v2739 = vpop.f32.mrb[0].mxu0
          %v2740 = vadd.f32 0.0, %v2739
          %v2741 = vpop.f32.mrb[0].mxu0
          %v2742 = vpop.f32.mrb[0].mxu0
          %v2743 = vadd.f32 0.0, %v2742
          %v2744 = vpop.f32.mrb[0].mxu0
          %2745 = vmatprep.mubr.bf16.mxu0 0
          %2746 = vmatmul.mubr.bf16.gmra.mrb[0].mxu0 %v2676
          %v2747 = vpop.f32.mrb[0].mxu0
          %v2748 = vadd.f32 0.0, %v2747
          %v2749 = vpop.f32.mrb[0].mxu0
          %v2750 = vpop.f32.mrb[0].mxu0
          %v2751 = vadd.f32 0.0, %v2750
          %v2752 = vpop.f32.mrb[0].mxu0
          %2753 = vdwg.mxu0
          %v2754 = vadd.f32 %v2634, %v2716
          %v2755 = vadd.f32 %v2635, %v2719
          %v2756 = vadd.f32 %v2636, %v2724
          %v2757 = vadd.f32 %v2637, %v2727
          %v2758 = vadd.f32 %v2638, %v2732
          %v2759 = vadd.f32 %v2639, %v2735
          %v2760 = vadd.f32 %v2640, %v2740
          %v2761 = vadd.f32 %v2641, %v2743
          %v2762 = vadd.f32 %v2642, %v2748
          %v2763 = vadd.f32 %v2643, %v2751
          %s2764 = scalar_lea.vmem %s1, 36
          %v2765 = vld [vmem:[%s2764] sm:$0x3]
          %v2767 = vshrl.u32 %v2652, 16
          %v2769 = vrot.slane %v2767, 1
          %v2770 = vshll.u32 %v2652, 16
          %v2772 = vrot.slane %v2770, 2
          %v2773 = vor.u32 %v2769, %v2772
          %v2774 = vrot.slane %v2519, 1
          %v2775 = vrot.slane %v2515, 2
          %v2776 = vor.u32 %v2774, %v2775
          %v2777 = vsel %vm811, %v2773, %v2776
          %v2778 = vrot.slane %v2526, 1
          %v2779 = vrot.slane %v2522, 2
          %v2780 = vor.u32 %v2778, %v2779
          %v2781 = vsel %vm811, %v2776, %v2780
          %v2782 = vrot.slane %v2533, 1
          %v2783 = vrot.slane %v2529, 2
          %v2784 = vor.u32 %v2782, %v2783
          %v2785 = vsel %vm811, %v2780, %v2784
          %v2787 = vshrl.u32 %v2653, 16
          %v2789 = vrot.slane %v2787, 1
          %v2790 = vshll.u32 %v2653, 16
          %v2792 = vrot.slane %v2790, 2
          %v2793 = vor.u32 %v2789, %v2792
          %v2794 = vsel %vm811, %v2784, %v2793
          %v2796 = vsel %vm506, %v2777, 0
          %v2799 = vsel %vm506, %v2781, 0
          %v2802 = vsel %vm506, %v2785, 0
          %v2805 = vsel %vm506, %v2794, 0
          %v2808 = vsel %vm506, %v2793, 0
          %v2811 = vand.u32 %v2765, %v525
          %2813 = vmatprep.subr.bf16.mxu0 0
          %2814 = vmatpush1.bf16.msra.mxu0 %v2811
          %2815 = vmatprep.subr.bf16.mxu0 0
          %2816 = vmatpush1.bf16.msra.mxu0 0
          %2817 = vmatprep.subr.bf16.mxu0 0
          %2818 = vmatpush1.bf16.msra.mxu0 0
          %2819 = vmatprep.subr.bf16.mxu0 0
          %2820 = vmatpush1.bf16.msra.mxu0 0
          %2821 = vmatprep.subr.bf16.mxu0 0
          %2822 = vmatpush1.bf16.msra.mxu0 0
          %2823 = vmatprep.subr.bf16.mxu0 0
          %2824 = vmatpush1.bf16.msra.mxu0 0
          %2825 = vmatprep.subr.bf16.mxu0 0
          %2826 = vmatpush1.bf16.msra.mxu0 0
          %2827 = vmatprep.subr.bf16.mxu0 0
          %2828 = vmatpush1.bf16.msra.mxu0 0
          %2829 = vmatprep.subr.bf16.mxu0 0
          %2830 = vmatpush1.bf16.msra.mxu0 0
          %2831 = vmatprep.subr.bf16.mxu0 0
          %2832 = vmatpush1.bf16.msra.mxu0 0
          %2833 = vmatprep.subr.bf16.mxu0 0
          %2834 = vmatpush1.bf16.msra.mxu0 0
          %2835 = vmatprep.subr.bf16.mxu0 0
          %2836 = vmatpush1.bf16.msra.mxu0 0
          %2837 = vmatprep.subr.bf16.mxu0 0
          %2838 = vmatpush1.bf16.msra.mxu0 0
          %2839 = vmatprep.subr.bf16.mxu0 0
          %2840 = vmatpush1.bf16.msra.mxu0 0
          %2841 = vmatprep.subr.bf16.mxu0 0
          %2842 = vmatpush1.bf16.msra.mxu0 0
          %2843 = vmatprep.subr.bf16.mxu0 0
          %2844 = vmatpush1.bf16.msra.mxu0 0
          %2845 = vmatprep.mubr.bf16.mxu0 0
          %2846 = vmatmul.mubr.bf16.gmra.mrb[0].mxu0 %v2796
          %v2847 = vpop.f32.mrb[0].mxu0
          %v2848 = vadd.f32 0.0, %v2847
          %v2849 = vpop.f32.mrb[0].mxu0
          %v2850 = vpop.f32.mrb[0].mxu0
          %v2851 = vadd.f32 0.0, %v2850
          %v2852 = vpop.f32.mrb[0].mxu0
          %2853 = vmatprep.mubr.bf16.mxu0 0
          %2854 = vmatmul.mubr.bf16.gmra.mrb[0].mxu0 %v2799
          %v2855 = vpop.f32.mrb[0].mxu0
          %v2856 = vadd.f32 0.0, %v2855
          %v2857 = vpop.f32.mrb[0].mxu0
          %v2858 = vpop.f32.mrb[0].mxu0
          %v2859 = vadd.f32 0.0, %v2858
          %v2860 = vpop.f32.mrb[0].mxu0
          %2861 = vmatprep.mubr.bf16.mxu0 0
          %2862 = vmatmul.mubr.bf16.gmra.mrb[0].mxu0 %v2802
          %v2863 = vpop.f32.mrb[0].mxu0
          %v2864 = vadd.f32 0.0, %v2863
          %v2865 = vpop.f32.mrb[0].mxu0
          %v2866 = vpop.f32.mrb[0].mxu0
          %v2867 = vadd.f32 0.0, %v2866
          %v2868 = vpop.f32.mrb[0].mxu0
          %2869 = vmatprep.mubr.bf16.mxu0 0
          %2870 = vmatmul.mubr.bf16.gmra.mrb[0].mxu0 %v2805
          %v2871 = vpop.f32.mrb[0].mxu0
          %v2872 = vadd.f32 0.0, %v2871
          %v2873 = vpop.f32.mrb[0].mxu0
          %v2874 = vpop.f32.mrb[0].mxu0
          %v2875 = vadd.f32 0.0, %v2874
          %v2876 = vpop.f32.mrb[0].mxu0
          %2877 = vmatprep.mubr.bf16.mxu0 0
          %2878 = vmatmul.mubr.bf16.gmra.mrb[0].mxu0 %v2808
          %v2879 = vpop.f32.mrb[0].mxu0
          %v2880 = vadd.f32 0.0, %v2879
          %v2881 = vpop.f32.mrb[0].mxu0
          %v2882 = vpop.f32.mrb[0].mxu0
          %v2883 = vadd.f32 0.0, %v2882
          %v2884 = vpop.f32.mrb[0].mxu0
          %2885 = vdwg.mxu0
          %v2886 = vadd.f32 %v2754, %v2848
          %v2887 = vadd.f32 %v2755, %v2851
          %v2888 = vadd.f32 %v2756, %v2856
          %v2889 = vadd.f32 %v2757, %v2859
          %v2890 = vadd.f32 %v2758, %v2864
          %v2891 = vadd.f32 %v2759, %v2867
          %v2892 = vadd.f32 %v2760, %v2872
          %v2893 = vadd.f32 %v2761, %v2875
          %v2894 = vadd.f32 %v2762, %v2880
          %v2895 = vadd.f32 %v2763, %v2883
          %v2896 = vld [vmem:[%s2368] sm:$0xc]
          %v2897 = vld [vmem:[%s2368 + $0x24] sm:$0xf]
          %s2898 = scalar_lea.vmem %s1, 38
          %v2899 = vld [vmem:[%s2898] sm:$0x3]
          %v2902 = vunpack.c.l.b16 %v2896
          %v2903 = vunpack.c.l.b16 %v2897
          %v2904 = vpack.c.b16 %v2392, %v2902
          %v2905 = vpack.c.b16 %v2903, %v2399
          %v2906 = vrot.slane %v2904, 2
          %v2907 = vrot.slane %v2402, 2
          %v2908 = vsel %vm952, %v2906, %v2907
          %v2909 = vrot.slane %v2403, 2
          %v2910 = vsel %vm952, %v2907, %v2909
          %v2911 = vrot.slane %v2404, 2
          %v2912 = vsel %vm952, %v2909, %v2911
          %v2913 = vrot.slane %v2905, 2
          %v2914 = vsel %vm952, %v2911, %v2913
          %v2916 = vsel %vm506, %v2908, 0
          %v2919 = vsel %vm506, %v2910, 0
          %v2922 = vsel %vm506, %v2912, 0
          %v2925 = vsel %vm506, %v2914, 0
          %v2928 = vsel %vm506, %v2913, 0
          %v2931 = vand.u32 %v2899, %v525
          %2933 = vmatprep.subr.bf16.mxu0 0
          %2934 = vmatpush1.bf16.msra.mxu0 %v2931
          %2935 = vmatprep.subr.bf16.mxu0 0
          %2936 = vmatpush1.bf16.msra.mxu0 0
          %2937 = vmatprep.subr.bf16.mxu0 0
          %2938 = vmatpush1.bf16.msra.mxu0 0
          %2939 = vmatprep.subr.bf16.mxu0 0
          %2940 = vmatpush1.bf16.msra.mxu0 0
          %2941 = vmatprep.subr.bf16.mxu0 0
          %2942 = vmatpush1.bf16.msra.mxu0 0
          %2943 = vmatprep.subr.bf16.mxu0 0
          %2944 = vmatpush1.bf16.msra.mxu0 0
          %2945 = vmatprep.subr.bf16.mxu0 0
          %2946 = vmatpush1.bf16.msra.mxu0 0
          %2947 = vmatprep.subr.bf16.mxu0 0
          %2948 = vmatpush1.bf16.msra.mxu0 0
          %2949 = vmatprep.subr.bf16.mxu0 0
          %2950 = vmatpush1.bf16.msra.mxu0 0
          %2951 = vmatprep.subr.bf16.mxu0 0
          %2952 = vmatpush1.bf16.msra.mxu0 0
          %2953 = vmatprep.subr.bf16.mxu0 0
          %2954 = vmatpush1.bf16.msra.mxu0 0
          %2955 = vmatprep.subr.bf16.mxu0 0
          %2956 = vmatpush1.bf16.msra.mxu0 0
          %2957 = vmatprep.subr.bf16.mxu0 0
          %2958 = vmatpush1.bf16.msra.mxu0 0
          %2959 = vmatprep.subr.bf16.mxu0 0
          %2960 = vmatpush1.bf16.msra.mxu0 0
          %2961 = vmatprep.subr.bf16.mxu0 0
          %2962 = vmatpush1.bf16.msra.mxu0 0
          %2963 = vmatprep.subr.bf16.mxu0 0
          %2964 = vmatpush1.bf16.msra.mxu0 0
          %2965 = vmatprep.mubr.bf16.mxu0 0
          %2966 = vmatmul.mubr.bf16.gmra.mrb[0].mxu0 %v2916
          %v2967 = vpop.f32.mrb[0].mxu0
          %v2968 = vadd.f32 0.0, %v2967
          %v2969 = vpop.f32.mrb[0].mxu0
          %v2970 = vpop.f32.mrb[0].mxu0
          %v2971 = vadd.f32 0.0, %v2970
          %v2972 = vpop.f32.mrb[0].mxu0
          %2973 = vmatprep.mubr.bf16.mxu0 0
          %2974 = vmatmul.mubr.bf16.gmra.mrb[0].mxu0 %v2919
          %v2975 = vpop.f32.mrb[0].mxu0
          %v2976 = vadd.f32 0.0, %v2975
          %v2977 = vpop.f32.mrb[0].mxu0
          %v2978 = vpop.f32.mrb[0].mxu0
          %v2979 = vadd.f32 0.0, %v2978
          %v2980 = vpop.f32.mrb[0].mxu0
          %2981 = vmatprep.mubr.bf16.mxu0 0
          %2982 = vmatmul.mubr.bf16.gmra.mrb[0].mxu0 %v2922
          %v2983 = vpop.f32.mrb[0].mxu0
          %v2984 = vadd.f32 0.0, %v2983
          %v2985 = vpop.f32.mrb[0].mxu0
          %v2986 = vpop.f32.mrb[0].mxu0
          %v2987 = vadd.f32 0.0, %v2986
          %v2988 = vpop.f32.mrb[0].mxu0
          %2989 = vmatprep.mubr.bf16.mxu0 0
          %2990 = vmatmul.mubr.bf16.gmra.mrb[0].mxu0 %v2925
          %v2991 = vpop.f32.mrb[0].mxu0
          %v2992 = vadd.f32 0.0, %v2991
          %v2993 = vpop.f32.mrb[0].mxu0
          %v2994 = vpop.f32.mrb[0].mxu0
          %v2995 = vadd.f32 0.0, %v2994
          %v2996 = vpop.f32.mrb[0].mxu0
          %2997 = vmatprep.mubr.bf16.mxu0 0
          %2998 = vmatmul.mubr.bf16.gmra.mrb[0].mxu0 %v2928
          %v2999 = vpop.f32.mrb[0].mxu0
          %v3000 = vadd.f32 0.0, %v2999
          %v3001 = vpop.f32.mrb[0].mxu0
          %v3002 = vpop.f32.mrb[0].mxu0
          %v3003 = vadd.f32 0.0, %v3002
          %v3004 = vpop.f32.mrb[0].mxu0
          %3005 = vdwg.mxu0
          %v3006 = vadd.f32 %v2886, %v2968
          %v3007 = vadd.f32 %v2887, %v2971
          %v3008 = vadd.f32 %v2888, %v2976
          %v3009 = vadd.f32 %v2889, %v2979
          %v3010 = vadd.f32 %v2890, %v2984
          %v3011 = vadd.f32 %v2891, %v2987
          %v3012 = vadd.f32 %v2892, %v2992
          %v3013 = vadd.f32 %v2893, %v2995
          %v3014 = vadd.f32 %v2894, %v3000
          %v3015 = vadd.f32 %v2895, %v3003
          %s3016 = sadd.s32 %s424, 4
          %s3017 = smul.u32 %s3016, 10
          %s3018 = smul.addr %s3017, 4
          %s3019 = scalar_lea.vmem %s410, %s3018
          %v3020 = vld [vmem:[%s3019] sm:$0xf]
          %v3021 = vld [vmem:[%s3019 + $0x4] sm:$0xf]
          %v3022 = vld [vmem:[%s3019 + $0x8] sm:$0xf]
          %v3023 = vld [vmem:[%s3019 + $0xc] sm:$0xf]
          %v3024 = vld [vmem:[%s3019 + $0x10] sm:$0xf]
          %v3025 = vld [vmem:[%s3019 + $0x14] sm:$0xf]
          %v3026 = vld [vmem:[%s3019 + $0x18] sm:$0xf]
          %v3027 = vld [vmem:[%s3019 + $0x1c] sm:$0xf]
          %v3028 = vld [vmem:[%s3019 + $0x20] sm:$0xf]
          %v3029 = vld [vmem:[%s3019 + $0x24] sm:$0x3]
          %s3030 = scalar_lea.vmem %s1, 40
          %v3031 = vld [vmem:[%s3030] sm:$0x3]
          %v3042 = vunpack.c.l.b16 %v3020
          %v3043 = vunpack.c.l.b16 %v3021
          %v3044 = vunpack.c.l.b16 %v3022
          %v3045 = vunpack.c.l.b16 %v3023
          %v3046 = vunpack.c.l.b16 %v3024
          %v3047 = vunpack.c.l.b16 %v3025
          %v3048 = vunpack.c.l.b16 %v3026
          %v3049 = vunpack.c.l.b16 %v3027
          %v3050 = vunpack.c.l.b16 %v3028
          %v3051 = vunpack.c.l.b16 %v3029
          %v3052 = vpack.c.b16 %v3043, %v3042
          %v3053 = vpack.c.b16 %v3045, %v3044
          %v3054 = vpack.c.b16 %v3047, %v3046
          %v3055 = vpack.c.b16 %v3049, %v3048
          %v3056 = vpack.c.b16 %v3051, %v3050
          %v3058 = vsel %vm506, %v3052, 0
          %v3061 = vsel %vm506, %v3053, 0
          %v3064 = vsel %vm506, %v3054, 0
          %v3067 = vsel %vm506, %v3055, 0
          %v3070 = vsel %vm506, %v3056, 0
          %v3073 = vand.u32 %v3031, %v525
          %3075 = vmatprep.subr.bf16.mxu0 0
          %3076 = vmatpush1.bf16.msra.mxu0 %v3073
          %3077 = vmatprep.subr.bf16.mxu0 0
          %3078 = vmatpush1.bf16.msra.mxu0 0
          %3079 = vmatprep.subr.bf16.mxu0 0
          %3080 = vmatpush1.bf16.msra.mxu0 0
          %3081 = vmatprep.subr.bf16.mxu0 0
          %3082 = vmatpush1.bf16.msra.mxu0 0
          %3083 = vmatprep.subr.bf16.mxu0 0
          %3084 = vmatpush1.bf16.msra.mxu0 0
          %3085 = vmatprep.subr.bf16.mxu0 0
          %3086 = vmatpush1.bf16.msra.mxu0 0
          %3087 = vmatprep.subr.bf16.mxu0 0
          %3088 = vmatpush1.bf16.msra.mxu0 0
          %3089 = vmatprep.subr.bf16.mxu0 0
          %3090 = vmatpush1.bf16.msra.mxu0 0
          %3091 = vmatprep.subr.bf16.mxu0 0
          %3092 = vmatpush1.bf16.msra.mxu0 0
          %3093 = vmatprep.subr.bf16.mxu0 0
          %3094 = vmatpush1.bf16.msra.mxu0 0
          %3095 = vmatprep.subr.bf16.mxu0 0
          %3096 = vmatpush1.bf16.msra.mxu0 0
          %3097 = vmatprep.subr.bf16.mxu0 0
          %3098 = vmatpush1.bf16.msra.mxu0 0
          %3099 = vmatprep.subr.bf16.mxu0 0
          %3100 = vmatpush1.bf16.msra.mxu0 0
          %3101 = vmatprep.subr.bf16.mxu0 0
          %3102 = vmatpush1.bf16.msra.mxu0 0
          %3103 = vmatprep.subr.bf16.mxu0 0
          %3104 = vmatpush1.bf16.msra.mxu0 0
          %3105 = vmatprep.subr.bf16.mxu0 0
          %3106 = vmatpush1.bf16.msra.mxu0 0
          %3107 = vmatprep.mubr.bf16.mxu0 0
          %3108 = vmatmul.mubr.bf16.gmra.mrb[0].mxu0 %v3058
          %v3109 = vpop.f32.mrb[0].mxu0
          %v3110 = vadd.f32 0.0, %v3109
          %v3111 = vpop.f32.mrb[0].mxu0
          %v3112 = vpop.f32.mrb[0].mxu0
          %v3113 = vadd.f32 0.0, %v3112
          %v3114 = vpop.f32.mrb[0].mxu0
          %3115 = vmatprep.mubr.bf16.mxu0 0
          %3116 = vmatmul.mubr.bf16.gmra.mrb[0].mxu0 %v3061
          %v3117 = vpop.f32.mrb[0].mxu0
          %v3118 = vadd.f32 0.0, %v3117
          %v3119 = vpop.f32.mrb[0].mxu0
          %v3120 = vpop.f32.mrb[0].mxu0
          %v3121 = vadd.f32 0.0, %v3120
          %v3122 = vpop.f32.mrb[0].mxu0
          %3123 = vmatprep.mubr.bf16.mxu0 0
          %3124 = vmatmul.mubr.bf16.gmra.mrb[0].mxu0 %v3064
          %v3125 = vpop.f32.mrb[0].mxu0
          %v3126 = vadd.f32 0.0, %v3125
          %v3127 = vpop.f32.mrb[0].mxu0
          %v3128 = vpop.f32.mrb[0].mxu0
          %v3129 = vadd.f32 0.0, %v3128
          %v3130 = vpop.f32.mrb[0].mxu0
          %3131 = vmatprep.mubr.bf16.mxu0 0
          %3132 = vmatmul.mubr.bf16.gmra.mrb[0].mxu0 %v3067
          %v3133 = vpop.f32.mrb[0].mxu0
          %v3134 = vadd.f32 0.0, %v3133
          %v3135 = vpop.f32.mrb[0].mxu0
          %v3136 = vpop.f32.mrb[0].mxu0
          %v3137 = vadd.f32 0.0, %v3136
          %v3138 = vpop.f32.mrb[0].mxu0
          %3139 = vmatprep.mubr.bf16.mxu0 0
          %3140 = vmatmul.mubr.bf16.gmra.mrb[0].mxu0 %v3070
          %v3141 = vpop.f32.mrb[0].mxu0
          %v3142 = vadd.f32 0.0, %v3141
          %v3143 = vpop.f32.mrb[0].mxu0
          %v3144 = vpop.f32.mrb[0].mxu0
          %v3145 = vadd.f32 0.0, %v3144
          %v3146 = vpop.f32.mrb[0].mxu0
          %3147 = vdwg.mxu0
          %v3148 = vadd.f32 %v3006, %v3110
          %v3149 = vadd.f32 %v3007, %v3113
          %v3150 = vadd.f32 %v3008, %v3118
          %v3151 = vadd.f32 %v3009, %v3121
          %v3152 = vadd.f32 %v3010, %v3126
          %v3153 = vadd.f32 %v3011, %v3129
          %v3154 = vadd.f32 %v3012, %v3134
          %v3155 = vadd.f32 %v3013, %v3137
          %v3156 = vadd.f32 %v3014, %v3142
          %v3157 = vadd.f32 %v3015, %v3145
          %s3158 = scalar_lea.vmem %s1, 42
          %v3159 = vld [vmem:[%s3158] sm:$0x3]
          %v3160 = vshrl.u32 %v3052, 16
          %v3162 = vshll.u32 %v3052, 16
          %v3164 = vrot.slane %v3162, 1
          %v3165 = vor.u32 %v3160, %v3164
          %v3166 = vshll.u32 %v3053, 16
          %v3168 = vrot.slane %v3166, 1
          %v3169 = vsel %vm466, %v3165, %v3168
          %v3170 = vshrl.u32 %v3053, 16
          %v3172 = vor.u32 %v3170, %v3168
          %v3173 = vshll.u32 %v3054, 16
          %v3175 = vrot.slane %v3173, 1
          %v3176 = vsel %vm466, %v3172, %v3175
          %v3177 = vshrl.u32 %v3054, 16
          %v3179 = vor.u32 %v3177, %v3175
          %v3180 = vshll.u32 %v3055, 16
          %v3182 = vrot.slane %v3180, 1
          %v3183 = vsel %vm466, %v3179, %v3182
          %v3184 = vshrl.u32 %v3055, 16
          %v3186 = vor.u32 %v3184, %v3182
          %v3187 = vshll.u32 %v3056, 16
          %v3189 = vrot.slane %v3187, 1
          %v3190 = vsel %vm466, %v3186, %v3189
          %v3191 = vshrl.u32 %v3056, 16
          %v3193 = vor.u32 %v3191, %v3189
          %v3195 = vsel %vm506, %v3169, 0
          %v3198 = vsel %vm506, %v3176, 0
          %v3201 = vsel %vm506, %v3183, 0
          %v3204 = vsel %vm506, %v3190, 0
          %v3207 = vsel %vm506, %v3193, 0
          %v3210 = vand.u32 %v3159, %v525
          %3212 = vmatprep.subr.bf16.mxu0 0
          %3213 = vmatpush1.bf16.msra.mxu0 %v3210
          %3214 = vmatprep.subr.bf16.mxu0 0
          %3215 = vmatpush1.bf16.msra.mxu0 0
          %3216 = vmatprep.subr.bf16.mxu0 0
          %3217 = vmatpush1.bf16.msra.mxu0 0
          %3218 = vmatprep.subr.bf16.mxu0 0
          %3219 = vmatpush1.bf16.msra.mxu0 0
          %3220 = vmatprep.subr.bf16.mxu0 0
          %3221 = vmatpush1.bf16.msra.mxu0 0
          %3222 = vmatprep.subr.bf16.mxu0 0
          %3223 = vmatpush1.bf16.msra.mxu0 0
          %3224 = vmatprep.subr.bf16.mxu0 0
          %3225 = vmatpush1.bf16.msra.mxu0 0
          %3226 = vmatprep.subr.bf16.mxu0 0
          %3227 = vmatpush1.bf16.msra.mxu0 0
          %3228 = vmatprep.subr.bf16.mxu0 0
          %3229 = vmatpush1.bf16.msra.mxu0 0
          %3230 = vmatprep.subr.bf16.mxu0 0
          %3231 = vmatpush1.bf16.msra.mxu0 0
          %3232 = vmatprep.subr.bf16.mxu0 0
          %3233 = vmatpush1.bf16.msra.mxu0 0
          %3234 = vmatprep.subr.bf16.mxu0 0
          %3235 = vmatpush1.bf16.msra.mxu0 0
          %3236 = vmatprep.subr.bf16.mxu0 0
          %3237 = vmatpush1.bf16.msra.mxu0 0
          %3238 = vmatprep.subr.bf16.mxu0 0
          %3239 = vmatpush1.bf16.msra.mxu0 0
          %3240 = vmatprep.subr.bf16.mxu0 0
          %3241 = vmatpush1.bf16.msra.mxu0 0
          %3242 = vmatprep.subr.bf16.mxu0 0
          %3243 = vmatpush1.bf16.msra.mxu0 0
          %3244 = vmatprep.mubr.bf16.mxu0 0
          %3245 = vmatmul.mubr.bf16.gmra.mrb[0].mxu0 %v3195
          %v3246 = vpop.f32.mrb[0].mxu0
          %v3247 = vadd.f32 0.0, %v3246
          %v3248 = vpop.f32.mrb[0].mxu0
          %v3249 = vpop.f32.mrb[0].mxu0
          %v3250 = vadd.f32 0.0, %v3249
          %v3251 = vpop.f32.mrb[0].mxu0
          %3252 = vmatprep.mubr.bf16.mxu0 0
          %3253 = vmatmul.mubr.bf16.gmra.mrb[0].mxu0 %v3198
          %v3254 = vpop.f32.mrb[0].mxu0
          %v3255 = vadd.f32 0.0, %v3254
          %v3256 = vpop.f32.mrb[0].mxu0
          %v3257 = vpop.f32.mrb[0].mxu0
          %v3258 = vadd.f32 0.0, %v3257
          %v3259 = vpop.f32.mrb[0].mxu0
          %3260 = vmatprep.mubr.bf16.mxu0 0
          %3261 = vmatmul.mubr.bf16.gmra.mrb[0].mxu0 %v3201
          %v3262 = vpop.f32.mrb[0].mxu0
          %v3263 = vadd.f32 0.0, %v3262
          %v3264 = vpop.f32.mrb[0].mxu0
          %v3265 = vpop.f32.mrb[0].mxu0
          %v3266 = vadd.f32 0.0, %v3265
          %v3267 = vpop.f32.mrb[0].mxu0
          %3268 = vmatprep.mubr.bf16.mxu0 0
          %3269 = vmatmul.mubr.bf16.gmra.mrb[0].mxu0 %v3204
          %v3270 = vpop.f32.mrb[0].mxu0
          %v3271 = vadd.f32 0.0, %v3270
          %v3272 = vpop.f32.mrb[0].mxu0
          %v3273 = vpop.f32.mrb[0].mxu0
          %v3274 = vadd.f32 0.0, %v3273
          %v3275 = vpop.f32.mrb[0].mxu0
          %3276 = vmatprep.mubr.bf16.mxu0 0
          %3277 = vmatmul.mubr.bf16.gmra.mrb[0].mxu0 %v3207
          %v3278 = vpop.f32.mrb[0].mxu0
          %v3279 = vadd.f32 0.0, %v3278
          %v3280 = vpop.f32.mrb[0].mxu0
          %v3281 = vpop.f32.mrb[0].mxu0
          %v3282 = vadd.f32 0.0, %v3281
          %v3283 = vpop.f32.mrb[0].mxu0
          %3284 = vdwg.mxu0
          %v3285 = vadd.f32 %v3148, %v3247
          %v3286 = vadd.f32 %v3149, %v3250
          %v3287 = vadd.f32 %v3150, %v3255
          %v3288 = vadd.f32 %v3151, %v3258
          %v3289 = vadd.f32 %v3152, %v3263
          %v3290 = vadd.f32 %v3153, %v3266
          %v3291 = vadd.f32 %v3154, %v3271
          %v3292 = vadd.f32 %v3155, %v3274
          %v3293 = vadd.f32 %v3156, %v3279
          %v3294 = vadd.f32 %v3157, %v3282
          %v3295 = vld [vmem:[%s3019] sm:$0xe]
          %v3296 = vld [vmem:[%s3019 + $0x24] sm:$0x7]
          %s3297 = scalar_lea.vmem %s1, 44
          %v3298 = vld [vmem:[%s3297] sm:$0x3]
          %v3301 = vunpack.c.l.b16 %v3295
          %v3302 = vunpack.c.l.b16 %v3296
          %v3303 = vpack.c.b16 %v3043, %v3301
          %v3304 = vpack.c.b16 %v3302, %v3050
          %v3305 = vrot.slane %v3303, 1
          %v3306 = vrot.slane %v3053, 1
          %v3307 = vsel %vm698, %v3305, %v3306
          %v3308 = vrot.slane %v3054, 1
          %v3309 = vsel %vm698, %v3306, %v3308
          %v3310 = vrot.slane %v3055, 1
          %v3311 = vsel %vm698, %v3308, %v3310
          %v3312 = vrot.slane %v3304, 1
          %v3313 = vsel %vm698, %v3310, %v3312
          %v3315 = vsel %vm506, %v3307, 0
          %v3318 = vsel %vm506, %v3309, 0
          %v3321 = vsel %vm506, %v3311, 0
          %v3324 = vsel %vm506, %v3313, 0
          %v3327 = vsel %vm506, %v3312, 0
          %v3330 = vand.u32 %v3298, %v525
          %3332 = vmatprep.subr.bf16.mxu0 0
          %3333 = vmatpush1.bf16.msra.mxu0 %v3330
          %3334 = vmatprep.subr.bf16.mxu0 0
          %3335 = vmatpush1.bf16.msra.mxu0 0
          %3336 = vmatprep.subr.bf16.mxu0 0
          %3337 = vmatpush1.bf16.msra.mxu0 0
          %3338 = vmatprep.subr.bf16.mxu0 0
          %3339 = vmatpush1.bf16.msra.mxu0 0
          %3340 = vmatprep.subr.bf16.mxu0 0
          %3341 = vmatpush1.bf16.msra.mxu0 0
          %3342 = vmatprep.subr.bf16.mxu0 0
          %3343 = vmatpush1.bf16.msra.mxu0 0
          %3344 = vmatprep.subr.bf16.mxu0 0
          %3345 = vmatpush1.bf16.msra.mxu0 0
          %3346 = vmatprep.subr.bf16.mxu0 0
          %3347 = vmatpush1.bf16.msra.mxu0 0
          %3348 = vmatprep.subr.bf16.mxu0 0
          %3349 = vmatpush1.bf16.msra.mxu0 0
          %3350 = vmatprep.subr.bf16.mxu0 0
          %3351 = vmatpush1.bf16.msra.mxu0 0
          %3352 = vmatprep.subr.bf16.mxu0 0
          %3353 = vmatpush1.bf16.msra.mxu0 0
          %3354 = vmatprep.subr.bf16.mxu0 0
          %3355 = vmatpush1.bf16.msra.mxu0 0
          %3356 = vmatprep.subr.bf16.mxu0 0
          %3357 = vmatpush1.bf16.msra.mxu0 0
          %3358 = vmatprep.subr.bf16.mxu0 0
          %3359 = vmatpush1.bf16.msra.mxu0 0
          %3360 = vmatprep.subr.bf16.mxu0 0
          %3361 = vmatpush1.bf16.msra.mxu0 0
          %3362 = vmatprep.subr.bf16.mxu0 0
          %3363 = vmatpush1.bf16.msra.mxu0 0
          %3364 = vmatprep.mubr.bf16.mxu0 0
          %3365 = vmatmul.mubr.bf16.gmra.mrb[0].mxu0 %v3315
          %v3366 = vpop.f32.mrb[0].mxu0
          %v3367 = vadd.f32 0.0, %v3366
          %v3368 = vpop.f32.mrb[0].mxu0
          %v3369 = vpop.f32.mrb[0].mxu0
          %v3370 = vadd.f32 0.0, %v3369
          %v3371 = vpop.f32.mrb[0].mxu0
          %3372 = vmatprep.mubr.bf16.mxu0 0
          %3373 = vmatmul.mubr.bf16.gmra.mrb[0].mxu0 %v3318
          %v3374 = vpop.f32.mrb[0].mxu0
          %v3375 = vadd.f32 0.0, %v3374
          %v3376 = vpop.f32.mrb[0].mxu0
          %v3377 = vpop.f32.mrb[0].mxu0
          %v3378 = vadd.f32 0.0, %v3377
          %v3379 = vpop.f32.mrb[0].mxu0
          %3380 = vmatprep.mubr.bf16.mxu0 0
          %3381 = vmatmul.mubr.bf16.gmra.mrb[0].mxu0 %v3321
          %v3382 = vpop.f32.mrb[0].mxu0
          %v3383 = vadd.f32 0.0, %v3382
          %v3384 = vpop.f32.mrb[0].mxu0
          %v3385 = vpop.f32.mrb[0].mxu0
          %v3386 = vadd.f32 0.0, %v3385
          %v3387 = vpop.f32.mrb[0].mxu0
          %3388 = vmatprep.mubr.bf16.mxu0 0
          %3389 = vmatmul.mubr.bf16.gmra.mrb[0].mxu0 %v3324
          %v3390 = vpop.f32.mrb[0].mxu0
          %v3391 = vadd.f32 0.0, %v3390
          %v3392 = vpop.f32.mrb[0].mxu0
          %v3393 = vpop.f32.mrb[0].mxu0
          %v3394 = vadd.f32 0.0, %v3393
          %v3395 = vpop.f32.mrb[0].mxu0
          %3396 = vmatprep.mubr.bf16.mxu0 0
          %3397 = vmatmul.mubr.bf16.gmra.mrb[0].mxu0 %v3327
          %v3398 = vpop.f32.mrb[0].mxu0
          %v3399 = vadd.f32 0.0, %v3398
          %v3400 = vpop.f32.mrb[0].mxu0
          %v3401 = vpop.f32.mrb[0].mxu0
          %v3402 = vadd.f32 0.0, %v3401
          %v3403 = vpop.f32.mrb[0].mxu0
          %3404 = vdwg.mxu0
          %v3405 = vadd.f32 %v3285, %v3367
          %v3406 = vadd.f32 %v3286, %v3370
          %v3407 = vadd.f32 %v3287, %v3375
          %v3408 = vadd.f32 %v3288, %v3378
          %v3409 = vadd.f32 %v3289, %v3383
          %v3410 = vadd.f32 %v3290, %v3386
          %v3411 = vadd.f32 %v3291, %v3391
          %v3412 = vadd.f32 %v3292, %v3394
          %v3413 = vadd.f32 %v3293, %v3399
          %v3414 = vadd.f32 %v3294, %v3402
          %s3415 = scalar_lea.vmem %s1, 46
          %v3416 = vld [vmem:[%s3415] sm:$0x3]
          %v3418 = vshrl.u32 %v3303, 16
          %v3420 = vrot.slane %v3418, 1
          %v3421 = vshll.u32 %v3303, 16
          %v3423 = vrot.slane %v3421, 2
          %v3424 = vor.u32 %v3420, %v3423
          %v3425 = vrot.slane %v3170, 1
          %v3426 = vrot.slane %v3166, 2
          %v3427 = vor.u32 %v3425, %v3426
          %v3428 = vsel %vm811, %v3424, %v3427
          %v3429 = vrot.slane %v3177, 1
          %v3430 = vrot.slane %v3173, 2
          %v3431 = vor.u32 %v3429, %v3430
          %v3432 = vsel %vm811, %v3427, %v3431
          %v3433 = vrot.slane %v3184, 1
          %v3434 = vrot.slane %v3180, 2
          %v3435 = vor.u32 %v3433, %v3434
          %v3436 = vsel %vm811, %v3431, %v3435
          %v3438 = vshrl.u32 %v3304, 16
          %v3440 = vrot.slane %v3438, 1
          %v3441 = vshll.u32 %v3304, 16
          %v3443 = vrot.slane %v3441, 2
          %v3444 = vor.u32 %v3440, %v3443
          %v3445 = vsel %vm811, %v3435, %v3444
          %v3447 = vsel %vm506, %v3428, 0
          %v3450 = vsel %vm506, %v3432, 0
          %v3453 = vsel %vm506, %v3436, 0
          %v3456 = vsel %vm506, %v3445, 0
          %v3459 = vsel %vm506, %v3444, 0
          %v3462 = vand.u32 %v3416, %v525
          %3464 = vmatprep.subr.bf16.mxu0 0
          %3465 = vmatpush1.bf16.msra.mxu0 %v3462
          %3466 = vmatprep.subr.bf16.mxu0 0
          %3467 = vmatpush1.bf16.msra.mxu0 0
          %3468 = vmatprep.subr.bf16.mxu0 0
          %3469 = vmatpush1.bf16.msra.mxu0 0
          %3470 = vmatprep.subr.bf16.mxu0 0
          %3471 = vmatpush1.bf16.msra.mxu0 0
          %3472 = vmatprep.subr.bf16.mxu0 0
          %3473 = vmatpush1.bf16.msra.mxu0 0
          %3474 = vmatprep.subr.bf16.mxu0 0
          %3475 = vmatpush1.bf16.msra.mxu0 0
          %3476 = vmatprep.subr.bf16.mxu0 0
          %3477 = vmatpush1.bf16.msra.mxu0 0
          %3478 = vmatprep.subr.bf16.mxu0 0
          %3479 = vmatpush1.bf16.msra.mxu0 0
          %3480 = vmatprep.subr.bf16.mxu0 0
          %3481 = vmatpush1.bf16.msra.mxu0 0
          %3482 = vmatprep.subr.bf16.mxu0 0
          %3483 = vmatpush1.bf16.msra.mxu0 0
          %3484 = vmatprep.subr.bf16.mxu0 0
          %3485 = vmatpush1.bf16.msra.mxu0 0
          %3486 = vmatprep.subr.bf16.mxu0 0
          %3487 = vmatpush1.bf16.msra.mxu0 0
          %3488 = vmatprep.subr.bf16.mxu0 0
          %3489 = vmatpush1.bf16.msra.mxu0 0
          %3490 = vmatprep.subr.bf16.mxu0 0
          %3491 = vmatpush1.bf16.msra.mxu0 0
          %3492 = vmatprep.subr.bf16.mxu0 0
          %3493 = vmatpush1.bf16.msra.mxu0 0
          %3494 = vmatprep.subr.bf16.mxu0 0
          %3495 = vmatpush1.bf16.msra.mxu0 0
          %3496 = vmatprep.mubr.bf16.mxu0 0
          %3497 = vmatmul.mubr.bf16.gmra.mrb[0].mxu0 %v3447
          %v3498 = vpop.f32.mrb[0].mxu0
          %v3499 = vadd.f32 0.0, %v3498
          %v3500 = vpop.f32.mrb[0].mxu0
          %v3501 = vpop.f32.mrb[0].mxu0
          %v3502 = vadd.f32 0.0, %v3501
          %v3503 = vpop.f32.mrb[0].mxu0
          %3504 = vmatprep.mubr.bf16.mxu0 0
          %3505 = vmatmul.mubr.bf16.gmra.mrb[0].mxu0 %v3450
          %v3506 = vpop.f32.mrb[0].mxu0
          %v3507 = vadd.f32 0.0, %v3506
          %v3508 = vpop.f32.mrb[0].mxu0
          %v3509 = vpop.f32.mrb[0].mxu0
          %v3510 = vadd.f32 0.0, %v3509
          %v3511 = vpop.f32.mrb[0].mxu0
          %3512 = vmatprep.mubr.bf16.mxu0 0
          %3513 = vmatmul.mubr.bf16.gmra.mrb[0].mxu0 %v3453
          %v3514 = vpop.f32.mrb[0].mxu0
          %v3515 = vadd.f32 0.0, %v3514
          %v3516 = vpop.f32.mrb[0].mxu0
          %v3517 = vpop.f32.mrb[0].mxu0
          %v3518 = vadd.f32 0.0, %v3517
          %v3519 = vpop.f32.mrb[0].mxu0
          %3520 = vmatprep.mubr.bf16.mxu0 0
          %3521 = vmatmul.mubr.bf16.gmra.mrb[0].mxu0 %v3456
          %v3522 = vpop.f32.mrb[0].mxu0
          %v3523 = vadd.f32 0.0, %v3522
          %v3524 = vpop.f32.mrb[0].mxu0
          %v3525 = vpop.f32.mrb[0].mxu0
          %v3526 = vadd.f32 0.0, %v3525
          %v3527 = vpop.f32.mrb[0].mxu0
          %3528 = vmatprep.mubr.bf16.mxu0 0
          %3529 = vmatmul.mubr.bf16.gmra.mrb[0].mxu0 %v3459
          %v3530 = vpop.f32.mrb[0].mxu0
          %v3531 = vadd.f32 0.0, %v3530
          %v3532 = vpop.f32.mrb[0].mxu0
          %v3533 = vpop.f32.mrb[0].mxu0
          %v3534 = vadd.f32 0.0, %v3533
          %v3535 = vpop.f32.mrb[0].mxu0
          %3536 = vdwg.mxu0
          %v3537 = vadd.f32 %v3405, %v3499
          %v3538 = vadd.f32 %v3406, %v3502
          %v3539 = vadd.f32 %v3407, %v3507
          %v3540 = vadd.f32 %v3408, %v3510
          %v3541 = vadd.f32 %v3409, %v3515
          %v3542 = vadd.f32 %v3410, %v3518
          %v3543 = vadd.f32 %v3411, %v3523
          %v3544 = vadd.f32 %v3412, %v3526
          %v3545 = vadd.f32 %v3413, %v3531
          %v3546 = vadd.f32 %v3414, %v3534
          %v3547 = vld [vmem:[%s3019] sm:$0xc]
          %v3548 = vld [vmem:[%s3019 + $0x24] sm:$0xf]
          %s3549 = scalar_lea.vmem %s1, 48
          %v3550 = vld [vmem:[%s3549] sm:$0x3]
          %v3553 = vunpack.c.l.b16 %v3547
          %v3554 = vunpack.c.l.b16 %v3548
          %v3555 = vpack.c.b16 %v3043, %v3553
          %v3556 = vpack.c.b16 %v3554, %v3050
          %v3557 = vrot.slane %v3555, 2
          %v3558 = vrot.slane %v3053, 2
          %v3559 = vsel %vm952, %v3557, %v3558
          %v3560 = vrot.slane %v3054, 2
          %v3561 = vsel %vm952, %v3558, %v3560
          %v3562 = vrot.slane %v3055, 2
          %v3563 = vsel %vm952, %v3560, %v3562
          %v3564 = vrot.slane %v3556, 2
          %v3565 = vsel %vm952, %v3562, %v3564
          %v3567 = vsel %vm506, %v3559, 0
          %v3570 = vsel %vm506, %v3561, 0
          %v3573 = vsel %vm506, %v3563, 0
          %v3576 = vsel %vm506, %v3565, 0
          %v3579 = vsel %vm506, %v3564, 0
          %v3582 = vand.u32 %v3550, %v525
          %3584 = vmatprep.subr.bf16.mxu0 0
          %3585 = vmatpush1.bf16.msra.mxu0 %v3582
          %3586 = vmatprep.subr.bf16.mxu0 0
          %3587 = vmatpush1.bf16.msra.mxu0 0
          %3588 = vmatprep.subr.bf16.mxu0 0
          %3589 = vmatpush1.bf16.msra.mxu0 0
          %3590 = vmatprep.subr.bf16.mxu0 0
          %3591 = vmatpush1.bf16.msra.mxu0 0
          %3592 = vmatprep.subr.bf16.mxu0 0
          %3593 = vmatpush1.bf16.msra.mxu0 0
          %3594 = vmatprep.subr.bf16.mxu0 0
          %3595 = vmatpush1.bf16.msra.mxu0 0
          %3596 = vmatprep.subr.bf16.mxu0 0
          %3597 = vmatpush1.bf16.msra.mxu0 0
          %3598 = vmatprep.subr.bf16.mxu0 0
          %3599 = vmatpush1.bf16.msra.mxu0 0
          %3600 = vmatprep.subr.bf16.mxu0 0
          %3601 = vmatpush1.bf16.msra.mxu0 0
          %3602 = vmatprep.subr.bf16.mxu0 0
          %3603 = vmatpush1.bf16.msra.mxu0 0
          %3604 = vmatprep.subr.bf16.mxu0 0
          %3605 = vmatpush1.bf16.msra.mxu0 0
          %3606 = vmatprep.subr.bf16.mxu0 0
          %3607 = vmatpush1.bf16.msra.mxu0 0
          %3608 = vmatprep.subr.bf16.mxu0 0
          %3609 = vmatpush1.bf16.msra.mxu0 0
          %3610 = vmatprep.subr.bf16.mxu0 0
          %3611 = vmatpush1.bf16.msra.mxu0 0
          %3612 = vmatprep.subr.bf16.mxu0 0
          %3613 = vmatpush1.bf16.msra.mxu0 0
          %3614 = vmatprep.subr.bf16.mxu0 0
          %3615 = vmatpush1.bf16.msra.mxu0 0
          %3616 = vmatprep.mubr.bf16.mxu0 0
          %3617 = vmatmul.mubr.bf16.gmra.mrb[0].mxu0 %v3567
          %v3618 = vpop.f32.mrb[0].mxu0
          %v3619 = vadd.f32 0.0, %v3618
          %v3620 = vpop.f32.mrb[0].mxu0
          %v3621 = vpop.f32.mrb[0].mxu0
          %v3622 = vadd.f32 0.0, %v3621
          %v3623 = vpop.f32.mrb[0].mxu0
          %3624 = vmatprep.mubr.bf16.mxu0 0
          %3625 = vmatmul.mubr.bf16.gmra.mrb[0].mxu0 %v3570
          %v3626 = vpop.f32.mrb[0].mxu0
          %v3627 = vadd.f32 0.0, %v3626
          %v3628 = vpop.f32.mrb[0].mxu0
          %v3629 = vpop.f32.mrb[0].mxu0
          %v3630 = vadd.f32 0.0, %v3629
          %v3631 = vpop.f32.mrb[0].mxu0
          %3632 = vmatprep.mubr.bf16.mxu0 0
          %3633 = vmatmul.mubr.bf16.gmra.mrb[0].mxu0 %v3573
          %v3634 = vpop.f32.mrb[0].mxu0
          %v3635 = vadd.f32 0.0, %v3634
          %v3636 = vpop.f32.mrb[0].mxu0
          %v3637 = vpop.f32.mrb[0].mxu0
          %v3638 = vadd.f32 0.0, %v3637
          %v3639 = vpop.f32.mrb[0].mxu0
          %3640 = vmatprep.mubr.bf16.mxu0 0
          %3641 = vmatmul.mubr.bf16.gmra.mrb[0].mxu0 %v3576
          %v3642 = vpop.f32.mrb[0].mxu0
          %v3643 = vadd.f32 0.0, %v3642
          %v3644 = vpop.f32.mrb[0].mxu0
          %v3645 = vpop.f32.mrb[0].mxu0
          %v3646 = vadd.f32 0.0, %v3645
          %v3647 = vpop.f32.mrb[0].mxu0
          %3648 = vmatprep.mubr.bf16.mxu0 0
          %3649 = vmatmul.mubr.bf16.gmra.mrb[0].mxu0 %v3579
          %v3650 = vpop.f32.mrb[0].mxu0
          %v3651 = vadd.f32 0.0, %v3650
          %v3652 = vpop.f32.mrb[0].mxu0
          %v3653 = vpop.f32.mrb[0].mxu0
          %v3654 = vadd.f32 0.0, %v3653
          %v3655 = vpop.f32.mrb[0].mxu0
          %3656 = vdwg.mxu0
          %v3657 = vadd.f32 %v3537, %v3619
          %v3658 = vadd.f32 %v3538, %v3622
          %v3659 = vadd.f32 %v3539, %v3627
          %v3660 = vadd.f32 %v3540, %v3630
          %v3661 = vadd.f32 %v3541, %v3635
          %v3662 = vadd.f32 %v3542, %v3638
          %v3663 = vadd.f32 %v3543, %v3643
          %v3664 = vadd.f32 %v3544, %v3646
          %v3665 = vadd.f32 %v3545, %v3651
          %v3666 = vadd.f32 %v3546, %v3654
          %v3668 = vlaneseq
          %v3669 = vshrl.u32 %v3668, 7
          %v3670 = vsub.s32 0, %v3669
          %v3671 = vrot.slane %v417, %v3670
          %vm3673 = vcmask 613376
          %v3675 = vsel %vm3673, %v412, 0
          %v3678 = vsel %vm3673, %v413, 0
          %v3681 = vsel %vm3673, %v414, 0
          %v3684 = vsel %vm3673, %v415, 0
          %v3687 = vsel %vm3673, %v416, 0
          %vm3689 = vcmask 1042432
          %v3691 = vsel %vm3689, %v3666, 0
          %3693 = vmatprep.subr.mxu0 0.0
          %3694 = vmatpush1.msra.mxu0 %v3657
          %3695 = vmatprep.subr.mxu0 0.0
          %3696 = vmatpush1.msra.mxu0 %v3658
          %3697 = vmatprep.subr.mxu0 0.0
          %3698 = vmatpush1.msra.mxu0 %v3659
          %3699 = vmatprep.subr.mxu0 0.0
          %3700 = vmatpush1.msra.mxu0 %v3660
          %3701 = vmatprep.subr.mxu0 0.0
          %3702 = vmatpush1.msra.mxu0 %v3661
          %3703 = vmatprep.subr.mxu0 0.0
          %3704 = vmatpush1.msra.mxu0 %v3662
          %3705 = vmatprep.subr.mxu0 0.0
          %3706 = vmatpush1.msra.mxu0 %v3663
          %3707 = vmatprep.subr.mxu0 0.0
          %3708 = vmatpush1.msra.mxu0 %v3664
          %3709 = vmatprep.subr.mxu0 0.0
          %3710 = vmatpush1.msra.mxu0 %v3665
          %3711 = vmatprep.subr.mxu0 0.0
          %3712 = vmatpush1.msra.mxu0 %v3691
          %3713 = vmatprep.subr.mxu0 0.0
          %3714 = vmatpush1.msra.mxu0 0.0
          %3715 = vmatprep.subr.mxu0 0.0
          %3716 = vmatpush1.msra.mxu0 0.0
          %3717 = vmatprep.subr.mxu0 0.0
          %3718 = vmatpush1.msra.mxu0 0.0
          %3719 = vmatprep.subr.mxu0 0.0
          %3720 = vmatpush1.msra.mxu0 0.0
          %3721 = vmatprep.subr.mxu0 0.0
          %3722 = vmatpush1.msra.mxu0 0.0
          %3723 = vmatprep.subr.mxu0 0.0
          %3724 = vmatpush1.msra.mxu0 0.0
          %3725 = vmatprep.subr.mxu0 0.0
          %3726 = vmatpush1.msra.mxu0 0.0
          %3727 = vmatprep.subr.mxu0 0.0
          %3728 = vmatpush1.msra.mxu0 0.0
          %3729 = vmatprep.subr.mxu0 0.0
          %3730 = vmatpush1.msra.mxu0 0.0
          %3731 = vmatprep.subr.mxu0 0.0
          %3732 = vmatpush1.msra.mxu0 0.0
          %3733 = vmatprep.subr.mxu0 0.0
          %3734 = vmatpush1.msra.mxu0 0.0
          %3735 = vmatprep.subr.mxu0 0.0
          %3736 = vmatpush1.msra.mxu0 0.0
          %3737 = vmatprep.subr.mxu0 0.0
          %3738 = vmatpush1.msra.mxu0 0.0
          %3739 = vmatprep.subr.mxu0 0.0
          %3740 = vmatpush1.msra.mxu0 0.0
          %3741 = vmatprep.subr.mxu0 0.0
          %3742 = vmatpush1.msra.mxu0 0.0
          %3743 = vmatprep.subr.mxu0 0.0
          %3744 = vmatpush1.msra.mxu0 0.0
          %3745 = vmatprep.subr.mxu0 0.0
          %3746 = vmatpush1.msra.mxu0 0.0
          %3747 = vmatprep.subr.mxu0 0.0
          %3748 = vmatpush1.msra.mxu0 0.0
          %3749 = vmatprep.subr.mxu0 0.0
          %3750 = vmatpush1.msra.mxu0 0.0
          %3751 = vmatprep.subr.mxu0 0.0
          %3752 = vmatpush1.msra.mxu0 0.0
          %3753 = vmatprep.subr.mxu0 0.0
          %3754 = vmatpush1.msra.mxu0 0.0
          %3755 = vmatprep.subr.mxu0 0.0
          %3756 = vmatpush1.msra.mxu0 0.0
          %3757 = vmatprep.mubr.f32.mxu0 0.0
          %3758 = vmatmul.mubr.f32.gmra.mrb[0].mxu0 %v3675
          %v3759 = vpop.f32.mrb[0].mxu0
          %v3760 = vadd.f32 %v3671, %v3759
          %v3761 = vpop.f32.mrb[0].mxu0
          %3762 = vmatprep.mubr.f32.mxu0 0.0
          %3763 = vmatmul.mubr.f32.gmra.mrb[0].mxu0 %v3678
          %v3764 = vpop.f32.mrb[0].mxu0
          %v3765 = vadd.f32 %v3671, %v3764
          %v3766 = vpop.f32.mrb[0].mxu0
          %3767 = vmatprep.mubr.f32.mxu0 0.0
          %3768 = vmatmul.mubr.f32.gmra.mrb[0].mxu0 %v3681
          %v3769 = vpop.f32.mrb[0].mxu0
          %v3770 = vadd.f32 %v3671, %v3769
          %v3771 = vpop.f32.mrb[0].mxu0
          %3772 = vmatprep.mubr.f32.mxu0 0.0
          %3773 = vmatmul.mubr.f32.gmra.mrb[0].mxu0 %v3684
          %v3774 = vpop.f32.mrb[0].mxu0
          %v3775 = vadd.f32 %v3671, %v3774
          %v3776 = vpop.f32.mrb[0].mxu0
          %3777 = vmatprep.mubr.f32.mxu0 0.0
          %3778 = vmatmul.mubr.f32.gmra.mrb[0].mxu0 %v3687
          %v3779 = vpop.f32.mrb[0].mxu0
          %v3780 = vadd.f32 %v3671, %v3779
          %v3781 = vpop.f32.mrb[0].mxu0
          %3782 = vdwg.mxu0
          %v3783 = vmax.f32 %v3760, 0.0
          %v3784 = vmax.f32 %v3765, 0.0
          %v3785 = vmax.f32 %v3770, 0.0
          %v3786 = vmax.f32 %v3775, 0.0
          %v3787 = vmax.f32 %v3780, 0.0
          %v3788 = vpack.c.bf16 %v3784, %v3783
          %v3789 = vpack.c.bf16 %v3786, %v3785
          %v3790 = vpack.c.bf16 %v3787, %v3787
          %v3794 = vunpack.c.l.b16 %v3788
          %v3795 = vunpack.c.h.b16 %v3788
          %v3796 = vunpack.c.l.b16 %v3789
          %v3797 = vunpack.c.h.b16 %v3789
          %v3798 = vunpack.c.l.b16 %v3790
          %v3799 = vpack.c.b16 %v3794, %v3794
          %v3800 = vpack.c.b16 %v3795, %v3795
          %v3801 = vpack.c.b16 %v3796, %v3796
          %v3802 = vpack.c.b16 %v3797, %v3797
          %v3803 = vpack.c.b16 %v3798, %v3798
          %s3809 = smul.u32 %s419, 5
          %s3810 = smul.addr %s3809, 4
          %s3811 = scalar_lea.vmem [#allocation2], %s3810
          %vm3812 = vcmask 125952
          %3813 = vst.msk [vmem:[%s3811] sm:$0xf] %vm3812, %v3799
          %3814 = vst.msk [vmem:[%s3811 + $0x4] sm:$0xf] %vm3812, %v3800
          %3815 = vst.msk [vmem:[%s3811 + $0x8] sm:$0xf] %vm3812, %v3801
          %3816 = vst.msk [vmem:[%s3811 + $0xc] sm:$0xf] %vm3812, %v3802
          %vm3817 = vcmask 124928
          %3818 = vst.msk [vmem:[%s3811 + $0x10] sm:$0x7] %vm3817, %v3803
        $region73: #{dqn_forward.1} parent=67 // loop_footer
          %s423 = sadd.s32 1, %s419
        $region74: #{dqn_forward.1} parent=67 // loop_footer_branch
          %418 = sbr.rel target = $region70
        $region75: #{dqn_forward.1} parent=67 // loop_exit
          _
        %v3819 = vld [vmem:[%s6] sm:$0xff]
        %v3820 = vld [vmem:[%s6 + $0x8] sm:$0xff]
        %v3821 = vld [vmem:[%s6 + $0x10] sm:$0x1]
        %v3822 = vld [vmem:[%s5] sm:$0x1]
        loop: start=0, step=1, limit=7
        $region76: #{dqn_forward.1} parent=67 // loop_pre_header
          _
        $region77: #{dqn_forward.1} parent=67 // loop_header
          %s3824 = sphi 0, %s3828
          %p3825 = scmp.ge.s32.totalorder %s3824, 7
        $region78: #{dqn_forward.1} parent=67 // loop_header_branch
          %3827 = sbr.rel (%p3825) target = $region82
        $region79: #{dqn_forward.1} parent=67 // loop_body
          %s3829 = smul.u32 %s3824, 2
          %s3830 = smul.u32 %s3829, 5
          %s3831 = smul.addr %s3830, 4
          %s3832 = scalar_lea.vmem [#allocation2], %s3831
          %v3833 = vld [vmem:[%s3832] sm:$0xf]
          %v3834 = vld [vmem:[%s3832 + $0x4] sm:$0xf]
          %v3835 = vld [vmem:[%s3832 + $0x8] sm:$0xf]
          %v3836 = vld [vmem:[%s3832 + $0xc] sm:$0xf]
          %v3837 = vld [vmem:[%s3832 + $0x10] sm:$0x1]
          %v3838 = vld [vmem:[%s4] sm:$0xf]
          %v3839 = vld [vmem:[%s4 + $0x4] sm:$0xf]
          %s3840 = scalar_lea.vmem %s4, 8
          %v3841 = vld [vmem:[%s3840] sm:$0xf]
          %v3842 = vld [vmem:[%s3840 + $0x4] sm:$0xf]
          %v3848 = vunpack.c.l.b16 %v3833
          %v3849 = vunpack.c.l.b16 %v3834
          %v3850 = vunpack.c.l.b16 %v3835
          %v3851 = vunpack.c.l.b16 %v3836
          %v3852 = vunpack.c.l.b16 %v3837
          %v3853 = vpack.c.b16 %v3849, %v3848
          %v3854 = vpack.c.b16 %v3851, %v3850
          %v3855 = vpack.c.b16 %v3852, %v3852
          %vm3856 = vsmask.f32 7424
          %v3858 = vshrl.u32 %v3853, 16
          %v3860 = vshll.u32 %v3853, 16
          %v3862 = vrot.slane %v3860, 1
          %v3863 = vor.u32 %v3858, %v3862
          %v3865 = vshll.u32 %v3854, 16
          %v3867 = vrot.slane %v3865, 1
          %v3868 = vsel %vm3856, %v3863, %v3867
          %v3869 = vshrl.u32 %v3854, 16
          %v3871 = vor.u32 %v3869, %v3867
          %v3873 = vshll.u32 %v3855, 16
          %v3875 = vrot.slane %v3873, 1
          %v3876 = vsel %vm3856, %v3871, %v3875
          %v3877 = vshrl.u32 %v3855, 16
          %v3881 = vunpack.c.l.b16 %v3841
          %v3882 = vunpack.c.l.b16 %v3842
          %v3883 = vpack.c.b16 %v3882, %v3881
          %vm3885 = vcmask 130048
          %v3887 = vsel %vm3885, %v3868, 0
          %v3890 = vsel %vm3885, %v3876, 0
          %v3893 = vsel %vm3885, %v3877, 0
          %3895 = vmatprep.subr.bf16.mxu0 0
          %3896 = vmatpush1.bf16.msra.mxu0 %v3883
          %3897 = vmatprep.subr.bf16.mxu0 0
          %3898 = vmatpush1.bf16.msra.mxu0 0
          %3899 = vmatprep.subr.bf16.mxu0 0
          %3900 = vmatpush1.bf16.msra.mxu0 0
          %3901 = vmatprep.subr.bf16.mxu0 0
          %3902 = vmatpush1.bf16.msra.mxu0 0
          %3903 = vmatprep.subr.bf16.mxu0 0
          %3904 = vmatpush1.bf16.msra.mxu0 0
          %3905 = vmatprep.subr.bf16.mxu0 0
          %3906 = vmatpush1.bf16.msra.mxu0 0
          %3907 = vmatprep.subr.bf16.mxu0 0
          %3908 = vmatpush1.bf16.msra.mxu0 0
          %3909 = vmatprep.subr.bf16.mxu0 0
          %3910 = vmatpush1.bf16.msra.mxu0 0
          %3911 = vmatprep.subr.bf16.mxu0 0
          %3912 = vmatpush1.bf16.msra.mxu0 0
          %3913 = vmatprep.subr.bf16.mxu0 0
          %3914 = vmatpush1.bf16.msra.mxu0 0
          %3915 = vmatprep.subr.bf16.mxu0 0
          %3916 = vmatpush1.bf16.msra.mxu0 0
          %3917 = vmatprep.subr.bf16.mxu0 0
          %3918 = vmatpush1.bf16.msra.mxu0 0
          %3919 = vmatprep.subr.bf16.mxu0 0
          %3920 = vmatpush1.bf16.msra.mxu0 0
          %3921 = vmatprep.subr.bf16.mxu0 0
          %3922 = vmatpush1.bf16.msra.mxu0 0
          %3923 = vmatprep.subr.bf16.mxu0 0
          %3924 = vmatpush1.bf16.msra.mxu0 0
          %3925 = vmatprep.subr.bf16.mxu0 0
          %3926 = vmatpush1.bf16.msra.mxu0 0
          %3927 = vmatprep.mubr.bf16.mxu0 0
          %3928 = vmatmul.mubr.bf16.gmra.mrb[0].mxu0 %v3887
          %v3929 = vpop.f32.mrb[0].mxu0
          %v3930 = vadd.f32 0.0, %v3929
          %v3931 = vpop.f32.mrb[0].mxu0
          %v3932 = vpop.f32.mrb[0].mxu0
          %v3933 = vadd.f32 0.0, %v3932
          %v3934 = vpop.f32.mrb[0].mxu0
          %3935 = vmatprep.mubr.bf16.mxu0 0
          %3936 = vmatmul.mubr.bf16.gmra.mrb[0].mxu0 %v3890
          %v3937 = vpop.f32.mrb[0].mxu0
          %v3938 = vadd.f32 0.0, %v3937
          %v3939 = vpop.f32.mrb[0].mxu0
          %v3940 = vpop.f32.mrb[0].mxu0
          %v3941 = vadd.f32 0.0, %v3940
          %v3942 = vpop.f32.mrb[0].mxu0
          %3943 = vmatprep.mubr.bf16.mxu0 0
          %3944 = vmatmul.mubr.bf16.gmra.mrb[0].mxu0 %v3893
          %v3945 = vpop.f32.mrb[0].mxu0
          %v3946 = vadd.f32 0.0, %v3945
          %v3947 = vpop.f32.mrb[0].mxu0
          %v3948 = vpop.f32.mrb[0].mxu0
          %v3949 = vpop.f32.mrb[0].mxu0
          %3950 = vdwg.mxu0
          %v3953 = vunpack.c.l.b16 %v3838
          %v3954 = vunpack.c.l.b16 %v3839
          %v3955 = vpack.c.b16 %v3954, %v3953
          %v3957 = vsel %vm3885, %v3853, 0
          %v3959 = vsel %vm3885, %v3854, 0
          %v3961 = vsel %vm3885, %v3855, 0
          %3963 = vmatprep.subr.bf16.mxu0 0
          %3964 = vmatpush1.bf16.msra.mxu0 %v3955
          %3965 = vmatprep.subr.bf16.mxu0 0
          %3966 = vmatpush1.bf16.msra.mxu0 0
          %3967 = vmatprep.subr.bf16.mxu0 0
          %3968 = vmatpush1.bf16.msra.mxu0 0
          %3969 = vmatprep.subr.bf16.mxu0 0
          %3970 = vmatpush1.bf16.msra.mxu0 0
          %3971 = vmatprep.subr.bf16.mxu0 0
          %3972 = vmatpush1.bf16.msra.mxu0 0
          %3973 = vmatprep.subr.bf16.mxu0 0
          %3974 = vmatpush1.bf16.msra.mxu0 0
          %3975 = vmatprep.subr.bf16.mxu0 0
          %3976 = vmatpush1.bf16.msra.mxu0 0
          %3977 = vmatprep.subr.bf16.mxu0 0
          %3978 = vmatpush1.bf16.msra.mxu0 0
          %3979 = vmatprep.subr.bf16.mxu0 0
          %3980 = vmatpush1.bf16.msra.mxu0 0
          %3981 = vmatprep.subr.bf16.mxu0 0
          %3982 = vmatpush1.bf16.msra.mxu0 0
          %3983 = vmatprep.subr.bf16.mxu0 0
          %3984 = vmatpush1.bf16.msra.mxu0 0
          %3985 = vmatprep.subr.bf16.mxu0 0
          %3986 = vmatpush1.bf16.msra.mxu0 0
          %3987 = vmatprep.subr.bf16.mxu0 0
          %3988 = vmatpush1.bf16.msra.mxu0 0
          %3989 = vmatprep.subr.bf16.mxu0 0
          %3990 = vmatpush1.bf16.msra.mxu0 0
          %3991 = vmatprep.subr.bf16.mxu0 0
          %3992 = vmatpush1.bf16.msra.mxu0 0
          %3993 = vmatprep.subr.bf16.mxu0 0
          %3994 = vmatpush1.bf16.msra.mxu0 0
          %3995 = vmatprep.mubr.bf16.mxu0 0
          %3996 = vmatmul.mubr.bf16.gmra.mrb[0].mxu0 %v3957
          %v3997 = vpop.f32.mrb[0].mxu0
          %v3998 = vadd.f32 %v3930, %v3997
          %v3999 = vpop.f32.mrb[0].mxu0
          %v4000 = vpop.f32.mrb[0].mxu0
          %v4001 = vadd.f32 %v3933, %v4000
          %v4002 = vpop.f32.mrb[0].mxu0
          %4003 = vmatprep.mubr.bf16.mxu0 0
          %4004 = vmatmul.mubr.bf16.gmra.mrb[0].mxu0 %v3959
          %v4005 = vpop.f32.mrb[0].mxu0
          %v4006 = vadd.f32 %v3938, %v4005
          %v4007 = vpop.f32.mrb[0].mxu0
          %v4008 = vpop.f32.mrb[0].mxu0
          %v4009 = vadd.f32 %v3941, %v4008
          %v4010 = vpop.f32.mrb[0].mxu0
          %4011 = vmatprep.mubr.bf16.mxu0 0
          %4012 = vmatmul.mubr.bf16.gmra.mrb[0].mxu0 %v3961
          %v4013 = vpop.f32.mrb[0].mxu0
          %v4014 = vadd.f32 %v3946, %v4013
          %v4015 = vpop.f32.mrb[0].mxu0
          %v4016 = vpop.f32.mrb[0].mxu0
          %v4017 = vpop.f32.mrb[0].mxu0
          %4018 = vdwg.mxu0
          %v4019 = vld [vmem:[%s3832] sm:$0xe]
          %v4020 = vld [vmem:[%s3832 + $0x10] sm:$0x3]
          %s4021 = scalar_lea.vmem %s4, 16
          %v4022 = vld [vmem:[%s4021] sm:$0xf]
          %v4023 = vld [vmem:[%s4021 + $0x4] sm:$0xf]
          %v4026 = vunpack.c.l.b16 %v4019
          %v4027 = vunpack.c.l.b16 %v4020
          %v4028 = vpack.c.b16 %v3849, %v4026
          %v4029 = vpack.c.b16 %v4027, %v4027
          %vm4030 = vcmask 1046528
          %v4031 = vrot.slane %v4028, 1
          %v4032 = vrot.slane %v3854, 1
          %v4033 = vsel %vm4030, %v4031, %v4032
          %v4034 = vrot.slane %v4029, 1
          %v4035 = vsel %vm4030, %v4032, %v4034
          %v4038 = vunpack.c.l.b16 %v4022
          %v4039 = vunpack.c.l.b16 %v4023
          %v4040 = vpack.c.b16 %v4039, %v4038
          %v4043 = vsel %vm3885, %v4033, 0
          %v4046 = vsel %vm3885, %v4035, 0
          %v4049 = vsel %vm3885, %v4034, 0
          %4051 = vmatprep.subr.bf16.mxu0 0
          %4052 = vmatpush1.bf16.msra.mxu0 %v4040
          %4053 = vmatprep.subr.bf16.mxu0 0
          %4054 = vmatpush1.bf16.msra.mxu0 0
          %4055 = vmatprep.subr.bf16.mxu0 0
          %4056 = vmatpush1.bf16.msra.mxu0 0
          %4057 = vmatprep.subr.bf16.mxu0 0
          %4058 = vmatpush1.bf16.msra.mxu0 0
          %4059 = vmatprep.subr.bf16.mxu0 0
          %4060 = vmatpush1.bf16.msra.mxu0 0
          %4061 = vmatprep.subr.bf16.mxu0 0
          %4062 = vmatpush1.bf16.msra.mxu0 0
          %4063 = vmatprep.subr.bf16.mxu0 0
          %4064 = vmatpush1.bf16.msra.mxu0 0
          %4065 = vmatprep.subr.bf16.mxu0 0
          %4066 = vmatpush1.bf16.msra.mxu0 0
          %4067 = vmatprep.subr.bf16.mxu0 0
          %4068 = vmatpush1.bf16.msra.mxu0 0
          %4069 = vmatprep.subr.bf16.mxu0 0
          %4070 = vmatpush1.bf16.msra.mxu0 0
          %4071 = vmatprep.subr.bf16.mxu0 0
          %4072 = vmatpush1.bf16.msra.mxu0 0
          %4073 = vmatprep.subr.bf16.mxu0 0
          %4074 = vmatpush1.bf16.msra.mxu0 0
          %4075 = vmatprep.subr.bf16.mxu0 0
          %4076 = vmatpush1.bf16.msra.mxu0 0
          %4077 = vmatprep.subr.bf16.mxu0 0
          %4078 = vmatpush1.bf16.msra.mxu0 0
          %4079 = vmatprep.subr.bf16.mxu0 0
          %4080 = vmatpush1.bf16.msra.mxu0 0
          %4081 = vmatprep.subr.bf16.mxu0 0
          %4082 = vmatpush1.bf16.msra.mxu0 0
          %4083 = vmatprep.mubr.bf16.mxu0 0
          %4084 = vmatmul.mubr.bf16.gmra.mrb[0].mxu0 %v4043
          %v4085 = vpop.f32.mrb[0].mxu0
          %v4086 = vadd.f32 0.0, %v4085
          %v4087 = vpop.f32.mrb[0].mxu0
          %v4088 = vpop.f32.mrb[0].mxu0
          %v4089 = vadd.f32 0.0, %v4088
          %v4090 = vpop.f32.mrb[0].mxu0
          %4091 = vmatprep.mubr.bf16.mxu0 0
          %4092 = vmatmul.mubr.bf16.gmra.mrb[0].mxu0 %v4046
          %v4093 = vpop.f32.mrb[0].mxu0
          %v4094 = vadd.f32 0.0, %v4093
          %v4095 = vpop.f32.mrb[0].mxu0
          %v4096 = vpop.f32.mrb[0].mxu0
          %v4097 = vadd.f32 0.0, %v4096
          %v4098 = vpop.f32.mrb[0].mxu0
          %4099 = vmatprep.mubr.bf16.mxu0 0
          %4100 = vmatmul.mubr.bf16.gmra.mrb[0].mxu0 %v4049
          %v4101 = vpop.f32.mrb[0].mxu0
          %v4102 = vadd.f32 0.0, %v4101
          %v4103 = vpop.f32.mrb[0].mxu0
          %v4104 = vpop.f32.mrb[0].mxu0
          %v4105 = vpop.f32.mrb[0].mxu0
          %4106 = vdwg.mxu0
          %v4107 = vadd.f32 %v3998, %v4086
          %v4108 = vadd.f32 %v4001, %v4089
          %v4109 = vadd.f32 %v4006, %v4094
          %v4110 = vadd.f32 %v4009, %v4097
          %v4111 = vadd.f32 %v4014, %v4102
          %s4112 = scalar_lea.vmem %s4, 24
          %v4113 = vld [vmem:[%s4112] sm:$0xf]
          %v4114 = vld [vmem:[%s4112 + $0x4] sm:$0xf]
          %vm4115 = vsmask.f32 6400
          %v4117 = vshrl.u32 %v4028, 16
          %v4119 = vrot.slane %v4117, 1
          %v4120 = vshll.u32 %v4028, 16
          %v4122 = vrot.slane %v4120, 2
          %v4123 = vor.u32 %v4119, %v4122
          %v4124 = vrot.slane %v3869, 1
          %v4125 = vrot.slane %v3865, 2
          %v4126 = vor.u32 %v4124, %v4125
          %v4127 = vsel %vm4115, %v4123, %v4126
          %v4129 = vshrl.u32 %v4029, 16
          %v4131 = vrot.slane %v4129, 1
          %v4132 = vshll.u32 %v4029, 16
          %v4134 = vrot.slane %v4132, 2
          %v4135 = vor.u32 %v4131, %v4134
          %v4136 = vsel %vm4115, %v4126, %v4135
          %v4139 = vunpack.c.l.b16 %v4113
          %v4140 = vunpack.c.l.b16 %v4114
          %v4141 = vpack.c.b16 %v4140, %v4139
          %v4144 = vsel %vm3885, %v4127, 0
          %v4147 = vsel %vm3885, %v4136, 0
          %v4150 = vsel %vm3885, %v4131, 0
          %4152 = vmatprep.subr.bf16.mxu0 0
          %4153 = vmatpush1.bf16.msra.mxu0 %v4141
          %4154 = vmatprep.subr.bf16.mxu0 0
          %4155 = vmatpush1.bf16.msra.mxu0 0
          %4156 = vmatprep.subr.bf16.mxu0 0
          %4157 = vmatpush1.bf16.msra.mxu0 0
          %4158 = vmatprep.subr.bf16.mxu0 0
          %4159 = vmatpush1.bf16.msra.mxu0 0
          %4160 = vmatprep.subr.bf16.mxu0 0
          %4161 = vmatpush1.bf16.msra.mxu0 0
          %4162 = vmatprep.subr.bf16.mxu0 0
          %4163 = vmatpush1.bf16.msra.mxu0 0
          %4164 = vmatprep.subr.bf16.mxu0 0
          %4165 = vmatpush1.bf16.msra.mxu0 0
          %4166 = vmatprep.subr.bf16.mxu0 0
          %4167 = vmatpush1.bf16.msra.mxu0 0
          %4168 = vmatprep.subr.bf16.mxu0 0
          %4169 = vmatpush1.bf16.msra.mxu0 0
          %4170 = vmatprep.subr.bf16.mxu0 0
          %4171 = vmatpush1.bf16.msra.mxu0 0
          %4172 = vmatprep.subr.bf16.mxu0 0
          %4173 = vmatpush1.bf16.msra.mxu0 0
          %4174 = vmatprep.subr.bf16.mxu0 0
          %4175 = vmatpush1.bf16.msra.mxu0 0
          %4176 = vmatprep.subr.bf16.mxu0 0
          %4177 = vmatpush1.bf16.msra.mxu0 0
          %4178 = vmatprep.subr.bf16.mxu0 0
          %4179 = vmatpush1.bf16.msra.mxu0 0
          %4180 = vmatprep.subr.bf16.mxu0 0
          %4181 = vmatpush1.bf16.msra.mxu0 0
          %4182 = vmatprep.subr.bf16.mxu0 0
          %4183 = vmatpush1.bf16.msra.mxu0 0
          %4184 = vmatprep.mubr.bf16.mxu0 0
          %4185 = vmatmul.mubr.bf16.gmra.mrb[0].mxu0 %v4144
          %v4186 = vpop.f32.mrb[0].mxu0
          %v4187 = vadd.f32 0.0, %v4186
          %v4188 = vpop.f32.mrb[0].mxu0
          %v4189 = vpop.f32.mrb[0].mxu0
          %v4190 = vadd.f32 0.0, %v4189
          %v4191 = vpop.f32.mrb[0].mxu0
          %4192 = vmatprep.mubr.bf16.mxu0 0
          %4193 = vmatmul.mubr.bf16.gmra.mrb[0].mxu0 %v4147
          %v4194 = vpop.f32.mrb[0].mxu0
          %v4195 = vadd.f32 0.0, %v4194
          %v4196 = vpop.f32.mrb[0].mxu0
          %v4197 = vpop.f32.mrb[0].mxu0
          %v4198 = vadd.f32 0.0, %v4197
          %v4199 = vpop.f32.mrb[0].mxu0
          %4200 = vmatprep.mubr.bf16.mxu0 0
          %4201 = vmatmul.mubr.bf16.gmra.mrb[0].mxu0 %v4150
          %v4202 = vpop.f32.mrb[0].mxu0
          %v4203 = vadd.f32 0.0, %v4202
          %v4204 = vpop.f32.mrb[0].mxu0
          %v4205 = vpop.f32.mrb[0].mxu0
          %v4206 = vpop.f32.mrb[0].mxu0
          %4207 = vdwg.mxu0
          %v4208 = vadd.f32 %v4107, %v4187
          %v4209 = vadd.f32 %v4108, %v4190
          %v4210 = vadd.f32 %v4109, %v4195
          %v4211 = vadd.f32 %v4110, %v4198
          %v4212 = vadd.f32 %v4111, %v4203
          %v4213 = vld [vmem:[%s3832] sm:$0xc]
          %v4214 = vld [vmem:[%s3832 + $0x10] sm:$0x7]
          %s4215 = scalar_lea.vmem %s4, 32
          %v4216 = vld [vmem:[%s4215] sm:$0xf]
          %v4217 = vld [vmem:[%s4215 + $0x4] sm:$0xf]
          %v4220 = vunpack.c.l.b16 %v4213
          %v4221 = vunpack.c.l.b16 %v4214
          %v4222 = vpack.c.b16 %v3849, %v4220
          %v4223 = vpack.c.b16 %v4221, %v4221
          %vm4224 = vcmask 1045504
          %v4225 = vrot.slane %v4222, 2
          %v4226 = vrot.slane %v3854, 2
          %v4227 = vsel %vm4224, %v4225, %v4226
          %v4228 = vrot.slane %v4223, 2
          %v4229 = vsel %vm4224, %v4226, %v4228
          %v4232 = vunpack.c.l.b16 %v4216
          %v4233 = vunpack.c.l.b16 %v4217
          %v4234 = vpack.c.b16 %v4233, %v4232
          %v4237 = vsel %vm3885, %v4227, 0
          %v4240 = vsel %vm3885, %v4229, 0
          %v4243 = vsel %vm3885, %v4228, 0
          %4245 = vmatprep.subr.bf16.mxu0 0
          %4246 = vmatpush1.bf16.msra.mxu0 %v4234
          %4247 = vmatprep.subr.bf16.mxu0 0
          %4248 = vmatpush1.bf16.msra.mxu0 0
          %4249 = vmatprep.subr.bf16.mxu0 0
          %4250 = vmatpush1.bf16.msra.mxu0 0
          %4251 = vmatprep.subr.bf16.mxu0 0
          %4252 = vmatpush1.bf16.msra.mxu0 0
          %4253 = vmatprep.subr.bf16.mxu0 0
          %4254 = vmatpush1.bf16.msra.mxu0 0
          %4255 = vmatprep.subr.bf16.mxu0 0
          %4256 = vmatpush1.bf16.msra.mxu0 0
          %4257 = vmatprep.subr.bf16.mxu0 0
          %4258 = vmatpush1.bf16.msra.mxu0 0
          %4259 = vmatprep.subr.bf16.mxu0 0
          %4260 = vmatpush1.bf16.msra.mxu0 0
          %4261 = vmatprep.subr.bf16.mxu0 0
          %4262 = vmatpush1.bf16.msra.mxu0 0
          %4263 = vmatprep.subr.bf16.mxu0 0
          %4264 = vmatpush1.bf16.msra.mxu0 0
          %4265 = vmatprep.subr.bf16.mxu0 0
          %4266 = vmatpush1.bf16.msra.mxu0 0
          %4267 = vmatprep.subr.bf16.mxu0 0
          %4268 = vmatpush1.bf16.msra.mxu0 0
          %4269 = vmatprep.subr.bf16.mxu0 0
          %4270 = vmatpush1.bf16.msra.mxu0 0
          %4271 = vmatprep.subr.bf16.mxu0 0
          %4272 = vmatpush1.bf16.msra.mxu0 0
          %4273 = vmatprep.subr.bf16.mxu0 0
          %4274 = vmatpush1.bf16.msra.mxu0 0
          %4275 = vmatprep.subr.bf16.mxu0 0
          %4276 = vmatpush1.bf16.msra.mxu0 0
          %4277 = vmatprep.mubr.bf16.mxu0 0
          %4278 = vmatmul.mubr.bf16.gmra.mrb[0].mxu0 %v4237
          %v4279 = vpop.f32.mrb[0].mxu0
          %v4280 = vadd.f32 0.0, %v4279
          %v4281 = vpop.f32.mrb[0].mxu0
          %v4282 = vpop.f32.mrb[0].mxu0
          %v4283 = vadd.f32 0.0, %v4282
          %v4284 = vpop.f32.mrb[0].mxu0
          %4285 = vmatprep.mubr.bf16.mxu0 0
          %4286 = vmatmul.mubr.bf16.gmra.mrb[0].mxu0 %v4240
          %v4287 = vpop.f32.mrb[0].mxu0
          %v4288 = vadd.f32 0.0, %v4287
          %v4289 = vpop.f32.mrb[0].mxu0
          %v4290 = vpop.f32.mrb[0].mxu0
          %v4291 = vadd.f32 0.0, %v4290
          %v4292 = vpop.f32.mrb[0].mxu0
          %4293 = vmatprep.mubr.bf16.mxu0 0
          %4294 = vmatmul.mubr.bf16.gmra.mrb[0].mxu0 %v4243
          %v4295 = vpop.f32.mrb[0].mxu0
          %v4296 = vadd.f32 0.0, %v4295
          %v4297 = vpop.f32.mrb[0].mxu0
          %v4298 = vpop.f32.mrb[0].mxu0
          %v4299 = vpop.f32.mrb[0].mxu0
          %4300 = vdwg.mxu0
          %v4301 = vadd.f32 %v4208, %v4280
          %v4302 = vadd.f32 %v4209, %v4283
          %v4303 = vadd.f32 %v4210, %v4288
          %v4304 = vadd.f32 %v4211, %v4291
          %v4305 = vadd.f32 %v4212, %v4296
          %s4306 = sadd.s32 %s3829, 1
          %s4307 = smul.u32 %s4306, 5
          %s4308 = smul.addr %s4307, 4
          %s4309 = scalar_lea.vmem [#allocation2], %s4308
          %v4310 = vld [vmem:[%s4309] sm:$0xf]
          %v4311 = vld [vmem:[%s4309 + $0x4] sm:$0xf]
          %v4312 = vld [vmem:[%s4309 + $0x8] sm:$0xf]
          %v4313 = vld [vmem:[%s4309 + $0xc] sm:$0xf]
          %v4314 = vld [vmem:[%s4309 + $0x10] sm:$0x1]
          %s4315 = scalar_lea.vmem %s4, 40
          %v4316 = vld [vmem:[%s4315] sm:$0xf]
          %v4317 = vld [vmem:[%s4315 + $0x4] sm:$0xf]
          %v4323 = vunpack.c.l.b16 %v4310
          %v4324 = vunpack.c.l.b16 %v4311
          %v4325 = vunpack.c.l.b16 %v4312
          %v4326 = vunpack.c.l.b16 %v4313
          %v4327 = vunpack.c.l.b16 %v4314
          %v4328 = vpack.c.b16 %v4324, %v4323
          %v4329 = vpack.c.b16 %v4326, %v4325
          %v4330 = vpack.c.b16 %v4327, %v4327
          %v4333 = vunpack.c.l.b16 %v4316
          %v4334 = vunpack.c.l.b16 %v4317
          %v4335 = vpack.c.b16 %v4334, %v4333
          %v4338 = vsel %vm3885, %v4328, 0
          %v4341 = vsel %vm3885, %v4329, 0
          %v4344 = vsel %vm3885, %v4330, 0
          %4346 = vmatprep.subr.bf16.mxu0 0
          %4347 = vmatpush1.bf16.msra.mxu0 %v4335
          %4348 = vmatprep.subr.bf16.mxu0 0
          %4349 = vmatpush1.bf16.msra.mxu0 0
          %4350 = vmatprep.subr.bf16.mxu0 0
          %4351 = vmatpush1.bf16.msra.mxu0 0
          %4352 = vmatprep.subr.bf16.mxu0 0
          %4353 = vmatpush1.bf16.msra.mxu0 0
          %4354 = vmatprep.subr.bf16.mxu0 0
          %4355 = vmatpush1.bf16.msra.mxu0 0
          %4356 = vmatprep.subr.bf16.mxu0 0
          %4357 = vmatpush1.bf16.msra.mxu0 0
          %4358 = vmatprep.subr.bf16.mxu0 0
          %4359 = vmatpush1.bf16.msra.mxu0 0
          %4360 = vmatprep.subr.bf16.mxu0 0
          %4361 = vmatpush1.bf16.msra.mxu0 0
          %4362 = vmatprep.subr.bf16.mxu0 0
          %4363 = vmatpush1.bf16.msra.mxu0 0
          %4364 = vmatprep.subr.bf16.mxu0 0
          %4365 = vmatpush1.bf16.msra.mxu0 0
          %4366 = vmatprep.subr.bf16.mxu0 0
          %4367 = vmatpush1.bf16.msra.mxu0 0
          %4368 = vmatprep.subr.bf16.mxu0 0
          %4369 = vmatpush1.bf16.msra.mxu0 0
          %4370 = vmatprep.subr.bf16.mxu0 0
          %4371 = vmatpush1.bf16.msra.mxu0 0
          %4372 = vmatprep.subr.bf16.mxu0 0
          %4373 = vmatpush1.bf16.msra.mxu0 0
          %4374 = vmatprep.subr.bf16.mxu0 0
          %4375 = vmatpush1.bf16.msra.mxu0 0
          %4376 = vmatprep.subr.bf16.mxu0 0
          %4377 = vmatpush1.bf16.msra.mxu0 0
          %4378 = vmatprep.mubr.bf16.mxu0 0
          %4379 = vmatmul.mubr.bf16.gmra.mrb[0].mxu0 %v4338
          %v4380 = vpop.f32.mrb[0].mxu0
          %v4381 = vadd.f32 0.0, %v4380
          %v4382 = vpop.f32.mrb[0].mxu0
          %v4383 = vpop.f32.mrb[0].mxu0
          %v4384 = vadd.f32 0.0, %v4383
          %v4385 = vpop.f32.mrb[0].mxu0
          %4386 = vmatprep.mubr.bf16.mxu0 0
          %4387 = vmatmul.mubr.bf16.gmra.mrb[0].mxu0 %v4341
          %v4388 = vpop.f32.mrb[0].mxu0
          %v4389 = vadd.f32 0.0, %v4388
          %v4390 = vpop.f32.mrb[0].mxu0
          %v4391 = vpop.f32.mrb[0].mxu0
          %v4392 = vadd.f32 0.0, %v4391
          %v4393 = vpop.f32.mrb[0].mxu0
          %4394 = vmatprep.mubr.bf16.mxu0 0
          %4395 = vmatmul.mubr.bf16.gmra.mrb[0].mxu0 %v4344
          %v4396 = vpop.f32.mrb[0].mxu0
          %v4397 = vadd.f32 0.0, %v4396
          %v4398 = vpop.f32.mrb[0].mxu0
          %v4399 = vpop.f32.mrb[0].mxu0
          %v4400 = vpop.f32.mrb[0].mxu0
          %4401 = vdwg.mxu0
          %v4402 = vadd.f32 %v4301, %v4381
          %v4403 = vadd.f32 %v4302, %v4384
          %v4404 = vadd.f32 %v4303, %v4389
          %v4405 = vadd.f32 %v4304, %v4392
          %v4406 = vadd.f32 %v4305, %v4397
          %s4407 = scalar_lea.vmem %s4, 48
          %v4408 = vld [vmem:[%s4407] sm:$0xf]
          %v4409 = vld [vmem:[%s4407 + $0x4] sm:$0xf]
          %v4410 = vshrl.u32 %v4328, 16
          %v4412 = vshll.u32 %v4328, 16
          %v4414 = vrot.slane %v4412, 1
          %v4415 = vor.u32 %v4410, %v4414
          %v4416 = vshll.u32 %v4329, 16
          %v4418 = vrot.slane %v4416, 1
          %v4419 = vsel %vm3856, %v4415, %v4418
          %v4420 = vshrl.u32 %v4329, 16
          %v4422 = vor.u32 %v4420, %v4418
          %v4423 = vshll.u32 %v4330, 16
          %v4425 = vrot.slane %v4423, 1
          %v4426 = vsel %vm3856, %v4422, %v4425
          %v4427 = vshrl.u32 %v4330, 16
          %v4431 = vunpack.c.l.b16 %v4408
          %v4432 = vunpack.c.l.b16 %v4409
          %v4433 = vpack.c.b16 %v4432, %v4431
          %v4436 = vsel %vm3885, %v4419, 0
          %v4439 = vsel %vm3885, %v4426, 0
          %v4442 = vsel %vm3885, %v4427, 0
          %4444 = vmatprep.subr.bf16.mxu0 0
          %4445 = vmatpush1.bf16.msra.mxu0 %v4433
          %4446 = vmatprep.subr.bf16.mxu0 0
          %4447 = vmatpush1.bf16.msra.mxu0 0
          %4448 = vmatprep.subr.bf16.mxu0 0
          %4449 = vmatpush1.bf16.msra.mxu0 0
          %4450 = vmatprep.subr.bf16.mxu0 0
          %4451 = vmatpush1.bf16.msra.mxu0 0
          %4452 = vmatprep.subr.bf16.mxu0 0
          %4453 = vmatpush1.bf16.msra.mxu0 0
          %4454 = vmatprep.subr.bf16.mxu0 0
          %4455 = vmatpush1.bf16.msra.mxu0 0
          %4456 = vmatprep.subr.bf16.mxu0 0
          %4457 = vmatpush1.bf16.msra.mxu0 0
          %4458 = vmatprep.subr.bf16.mxu0 0
          %4459 = vmatpush1.bf16.msra.mxu0 0
          %4460 = vmatprep.subr.bf16.mxu0 0
          %4461 = vmatpush1.bf16.msra.mxu0 0
          %4462 = vmatprep.subr.bf16.mxu0 0
          %4463 = vmatpush1.bf16.msra.mxu0 0
          %4464 = vmatprep.subr.bf16.mxu0 0
          %4465 = vmatpush1.bf16.msra.mxu0 0
          %4466 = vmatprep.subr.bf16.mxu0 0
          %4467 = vmatpush1.bf16.msra.mxu0 0
          %4468 = vmatprep.subr.bf16.mxu0 0
          %4469 = vmatpush1.bf16.msra.mxu0 0
          %4470 = vmatprep.subr.bf16.mxu0 0
          %4471 = vmatpush1.bf16.msra.mxu0 0
          %4472 = vmatprep.subr.bf16.mxu0 0
          %4473 = vmatpush1.bf16.msra.mxu0 0
          %4474 = vmatprep.subr.bf16.mxu0 0
          %4475 = vmatpush1.bf16.msra.mxu0 0
          %4476 = vmatprep.mubr.bf16.mxu0 0
          %4477 = vmatmul.mubr.bf16.gmra.mrb[0].mxu0 %v4436
          %v4478 = vpop.f32.mrb[0].mxu0
          %v4479 = vadd.f32 0.0, %v4478
          %v4480 = vpop.f32.mrb[0].mxu0
          %v4481 = vpop.f32.mrb[0].mxu0
          %v4482 = vadd.f32 0.0, %v4481
          %v4483 = vpop.f32.mrb[0].mxu0
          %4484 = vmatprep.mubr.bf16.mxu0 0
          %4485 = vmatmul.mubr.bf16.gmra.mrb[0].mxu0 %v4439
          %v4486 = vpop.f32.mrb[0].mxu0
          %v4487 = vadd.f32 0.0, %v4486
          %v4488 = vpop.f32.mrb[0].mxu0
          %v4489 = vpop.f32.mrb[0].mxu0
          %v4490 = vadd.f32 0.0, %v4489
          %v4491 = vpop.f32.mrb[0].mxu0
          %4492 = vmatprep.mubr.bf16.mxu0 0
          %4493 = vmatmul.mubr.bf16.gmra.mrb[0].mxu0 %v4442
          %v4494 = vpop.f32.mrb[0].mxu0
          %v4495 = vadd.f32 0.0, %v4494
          %v4496 = vpop.f32.mrb[0].mxu0
          %v4497 = vpop.f32.mrb[0].mxu0
          %v4498 = vpop.f32.mrb[0].mxu0
          %4499 = vdwg.mxu0
          %v4500 = vadd.f32 %v4402, %v4479
          %v4501 = vadd.f32 %v4403, %v4482
          %v4502 = vadd.f32 %v4404, %v4487
          %v4503 = vadd.f32 %v4405, %v4490
          %v4504 = vadd.f32 %v4406, %v4495
          %v4505 = vld [vmem:[%s4309] sm:$0xe]
          %v4506 = vld [vmem:[%s4309 + $0x10] sm:$0x3]
          %s4507 = scalar_lea.vmem %s4, 56
          %v4508 = vld [vmem:[%s4507] sm:$0xf]
          %v4509 = vld [vmem:[%s4507 + $0x4] sm:$0xf]
          %v4512 = vunpack.c.l.b16 %v4505
          %v4513 = vunpack.c.l.b16 %v4506
          %v4514 = vpack.c.b16 %v4324, %v4512
          %v4515 = vpack.c.b16 %v4513, %v4513
          %v4516 = vrot.slane %v4514, 1
          %v4517 = vrot.slane %v4329, 1
          %v4518 = vsel %vm4030, %v4516, %v4517
          %v4519 = vrot.slane %v4515, 1
          %v4520 = vsel %vm4030, %v4517, %v4519
          %v4523 = vunpack.c.l.b16 %v4508
          %v4524 = vunpack.c.l.b16 %v4509
          %v4525 = vpack.c.b16 %v4524, %v4523
          %v4528 = vsel %vm3885, %v4518, 0
          %v4531 = vsel %vm3885, %v4520, 0
          %v4534 = vsel %vm3885, %v4519, 0
          %4536 = vmatprep.subr.bf16.mxu0 0
          %4537 = vmatpush1.bf16.msra.mxu0 %v4525
          %4538 = vmatprep.subr.bf16.mxu0 0
          %4539 = vmatpush1.bf16.msra.mxu0 0
          %4540 = vmatprep.subr.bf16.mxu0 0
          %4541 = vmatpush1.bf16.msra.mxu0 0
          %4542 = vmatprep.subr.bf16.mxu0 0
          %4543 = vmatpush1.bf16.msra.mxu0 0
          %4544 = vmatprep.subr.bf16.mxu0 0
          %4545 = vmatpush1.bf16.msra.mxu0 0
          %4546 = vmatprep.subr.bf16.mxu0 0
          %4547 = vmatpush1.bf16.msra.mxu0 0
          %4548 = vmatprep.subr.bf16.mxu0 0
          %4549 = vmatpush1.bf16.msra.mxu0 0
          %4550 = vmatprep.subr.bf16.mxu0 0
          %4551 = vmatpush1.bf16.msra.mxu0 0
          %4552 = vmatprep.subr.bf16.mxu0 0
          %4553 = vmatpush1.bf16.msra.mxu0 0
          %4554 = vmatprep.subr.bf16.mxu0 0
          %4555 = vmatpush1.bf16.msra.mxu0 0
          %4556 = vmatprep.subr.bf16.mxu0 0
          %4557 = vmatpush1.bf16.msra.mxu0 0
          %4558 = vmatprep.subr.bf16.mxu0 0
          %4559 = vmatpush1.bf16.msra.mxu0 0
          %4560 = vmatprep.subr.bf16.mxu0 0
          %4561 = vmatpush1.bf16.msra.mxu0 0
          %4562 = vmatprep.subr.bf16.mxu0 0
          %4563 = vmatpush1.bf16.msra.mxu0 0
          %4564 = vmatprep.subr.bf16.mxu0 0
          %4565 = vmatpush1.bf16.msra.mxu0 0
          %4566 = vmatprep.subr.bf16.mxu0 0
          %4567 = vmatpush1.bf16.msra.mxu0 0
          %4568 = vmatprep.mubr.bf16.mxu0 0
          %4569 = vmatmul.mubr.bf16.gmra.mrb[0].mxu0 %v4528
          %v4570 = vpop.f32.mrb[0].mxu0
          %v4571 = vadd.f32 0.0, %v4570
          %v4572 = vpop.f32.mrb[0].mxu0
          %v4573 = vpop.f32.mrb[0].mxu0
          %v4574 = vadd.f32 0.0, %v4573
          %v4575 = vpop.f32.mrb[0].mxu0
          %4576 = vmatprep.mubr.bf16.mxu0 0
          %4577 = vmatmul.mubr.bf16.gmra.mrb[0].mxu0 %v4531
          %v4578 = vpop.f32.mrb[0].mxu0
          %v4579 = vadd.f32 0.0, %v4578
          %v4580 = vpop.f32.mrb[0].mxu0
          %v4581 = vpop.f32.mrb[0].mxu0
          %v4582 = vadd.f32 0.0, %v4581
          %v4583 = vpop.f32.mrb[0].mxu0
          %4584 = vmatprep.mubr.bf16.mxu0 0
          %4585 = vmatmul.mubr.bf16.gmra.mrb[0].mxu0 %v4534
          %v4586 = vpop.f32.mrb[0].mxu0
          %v4587 = vadd.f32 0.0, %v4586
          %v4588 = vpop.f32.mrb[0].mxu0
          %v4589 = vpop.f32.mrb[0].mxu0
          %v4590 = vpop.f32.mrb[0].mxu0
          %4591 = vdwg.mxu0
          %v4592 = vadd.f32 %v4500, %v4571
          %v4593 = vadd.f32 %v4501, %v4574
          %v4594 = vadd.f32 %v4502, %v4579
          %v4595 = vadd.f32 %v4503, %v4582
          %v4596 = vadd.f32 %v4504, %v4587
          %s4597 = scalar_lea.vmem %s4, 64
          %v4598 = vld [vmem:[%s4597] sm:$0xf]
          %v4599 = vld [vmem:[%s4597 + $0x4] sm:$0xf]
          %v4601 = vshrl.u32 %v4514, 16
          %v4603 = vrot.slane %v4601, 1
          %v4604 = vshll.u32 %v4514, 16
          %v4606 = vrot.slane %v4604, 2
          %v4607 = vor.u32 %v4603, %v4606
          %v4608 = vrot.slane %v4420, 1
          %v4609 = vrot.slane %v4416, 2
          %v4610 = vor.u32 %v4608, %v4609
          %v4611 = vsel %vm4115, %v4607, %v4610
          %v4613 = vshrl.u32 %v4515, 16
          %v4615 = vrot.slane %v4613, 1
          %v4616 = vshll.u32 %v4515, 16
          %v4618 = vrot.slane %v4616, 2
          %v4619 = vor.u32 %v4615, %v4618
          %v4620 = vsel %vm4115, %v4610, %v4619
          %v4623 = vunpack.c.l.b16 %v4598
          %v4624 = vunpack.c.l.b16 %v4599
          %v4625 = vpack.c.b16 %v4624, %v4623
          %v4628 = vsel %vm3885, %v4611, 0
          %v4631 = vsel %vm3885, %v4620, 0
          %v4634 = vsel %vm3885, %v4615, 0
          %4636 = vmatprep.subr.bf16.mxu0 0
          %4637 = vmatpush1.bf16.msra.mxu0 %v4625
          %4638 = vmatprep.subr.bf16.mxu0 0
          %4639 = vmatpush1.bf16.msra.mxu0 0
          %4640 = vmatprep.subr.bf16.mxu0 0
          %4641 = vmatpush1.bf16.msra.mxu0 0
          %4642 = vmatprep.subr.bf16.mxu0 0
          %4643 = vmatpush1.bf16.msra.mxu0 0
          %4644 = vmatprep.subr.bf16.mxu0 0
          %4645 = vmatpush1.bf16.msra.mxu0 0
          %4646 = vmatprep.subr.bf16.mxu0 0
          %4647 = vmatpush1.bf16.msra.mxu0 0
          %4648 = vmatprep.subr.bf16.mxu0 0
          %4649 = vmatpush1.bf16.msra.mxu0 0
          %4650 = vmatprep.subr.bf16.mxu0 0
          %4651 = vmatpush1.bf16.msra.mxu0 0
          %4652 = vmatprep.subr.bf16.mxu0 0
          %4653 = vmatpush1.bf16.msra.mxu0 0
          %4654 = vmatprep.subr.bf16.mxu0 0
          %4655 = vmatpush1.bf16.msra.mxu0 0
          %4656 = vmatprep.subr.bf16.mxu0 0
          %4657 = vmatpush1.bf16.msra.mxu0 0
          %4658 = vmatprep.subr.bf16.mxu0 0
          %4659 = vmatpush1.bf16.msra.mxu0 0
          %4660 = vmatprep.subr.bf16.mxu0 0
          %4661 = vmatpush1.bf16.msra.mxu0 0
          %4662 = vmatprep.subr.bf16.mxu0 0
          %4663 = vmatpush1.bf16.msra.mxu0 0
          %4664 = vmatprep.subr.bf16.mxu0 0
          %4665 = vmatpush1.bf16.msra.mxu0 0
          %4666 = vmatprep.subr.bf16.mxu0 0
          %4667 = vmatpush1.bf16.msra.mxu0 0
          %4668 = vmatprep.mubr.bf16.mxu0 0
          %4669 = vmatmul.mubr.bf16.gmra.mrb[0].mxu0 %v4628
          %v4670 = vpop.f32.mrb[0].mxu0
          %v4671 = vadd.f32 0.0, %v4670
          %v4672 = vpop.f32.mrb[0].mxu0
          %v4673 = vpop.f32.mrb[0].mxu0
          %v4674 = vadd.f32 0.0, %v4673
          %v4675 = vpop.f32.mrb[0].mxu0
          %4676 = vmatprep.mubr.bf16.mxu0 0
          %4677 = vmatmul.mubr.bf16.gmra.mrb[0].mxu0 %v4631
          %v4678 = vpop.f32.mrb[0].mxu0
          %v4679 = vadd.f32 0.0, %v4678
          %v4680 = vpop.f32.mrb[0].mxu0
          %v4681 = vpop.f32.mrb[0].mxu0
          %v4682 = vadd.f32 0.0, %v4681
          %v4683 = vpop.f32.mrb[0].mxu0
          %4684 = vmatprep.mubr.bf16.mxu0 0
          %4685 = vmatmul.mubr.bf16.gmra.mrb[0].mxu0 %v4634
          %v4686 = vpop.f32.mrb[0].mxu0
          %v4687 = vadd.f32 0.0, %v4686
          %v4688 = vpop.f32.mrb[0].mxu0
          %v4689 = vpop.f32.mrb[0].mxu0
          %v4690 = vpop.f32.mrb[0].mxu0
          %4691 = vdwg.mxu0
          %v4692 = vadd.f32 %v4592, %v4671
          %v4693 = vadd.f32 %v4593, %v4674
          %v4694 = vadd.f32 %v4594, %v4679
          %v4695 = vadd.f32 %v4595, %v4682
          %v4696 = vadd.f32 %v4596, %v4687
          %v4697 = vld [vmem:[%s4309] sm:$0xc]
          %v4698 = vld [vmem:[%s4309 + $0x10] sm:$0x7]
          %s4699 = scalar_lea.vmem %s4, 72
          %v4700 = vld [vmem:[%s4699] sm:$0xf]
          %v4701 = vld [vmem:[%s4699 + $0x4] sm:$0xf]
          %v4704 = vunpack.c.l.b16 %v4697
          %v4705 = vunpack.c.l.b16 %v4698
          %v4706 = vpack.c.b16 %v4324, %v4704
          %v4707 = vpack.c.b16 %v4705, %v4705
          %v4708 = vrot.slane %v4706, 2
          %v4709 = vrot.slane %v4329, 2
          %v4710 = vsel %vm4224, %v4708, %v4709
          %v4711 = vrot.slane %v4707, 2
          %v4712 = vsel %vm4224, %v4709, %v4711
          %v4715 = vunpack.c.l.b16 %v4700
          %v4716 = vunpack.c.l.b16 %v4701
          %v4717 = vpack.c.b16 %v4716, %v4715
          %v4720 = vsel %vm3885, %v4710, 0
          %v4723 = vsel %vm3885, %v4712, 0
          %v4726 = vsel %vm3885, %v4711, 0
          %4728 = vmatprep.subr.bf16.mxu0 0
          %4729 = vmatpush1.bf16.msra.mxu0 %v4717
          %4730 = vmatprep.subr.bf16.mxu0 0
          %4731 = vmatpush1.bf16.msra.mxu0 0
          %4732 = vmatprep.subr.bf16.mxu0 0
          %4733 = vmatpush1.bf16.msra.mxu0 0
          %4734 = vmatprep.subr.bf16.mxu0 0
          %4735 = vmatpush1.bf16.msra.mxu0 0
          %4736 = vmatprep.subr.bf16.mxu0 0
          %4737 = vmatpush1.bf16.msra.mxu0 0
          %4738 = vmatprep.subr.bf16.mxu0 0
          %4739 = vmatpush1.bf16.msra.mxu0 0
          %4740 = vmatprep.subr.bf16.mxu0 0
          %4741 = vmatpush1.bf16.msra.mxu0 0
          %4742 = vmatprep.subr.bf16.mxu0 0
          %4743 = vmatpush1.bf16.msra.mxu0 0
          %4744 = vmatprep.subr.bf16.mxu0 0
          %4745 = vmatpush1.bf16.msra.mxu0 0
          %4746 = vmatprep.subr.bf16.mxu0 0
          %4747 = vmatpush1.bf16.msra.mxu0 0
          %4748 = vmatprep.subr.bf16.mxu0 0
          %4749 = vmatpush1.bf16.msra.mxu0 0
          %4750 = vmatprep.subr.bf16.mxu0 0
          %4751 = vmatpush1.bf16.msra.mxu0 0
          %4752 = vmatprep.subr.bf16.mxu0 0
          %4753 = vmatpush1.bf16.msra.mxu0 0
          %4754 = vmatprep.subr.bf16.mxu0 0
          %4755 = vmatpush1.bf16.msra.mxu0 0
          %4756 = vmatprep.subr.bf16.mxu0 0
          %4757 = vmatpush1.bf16.msra.mxu0 0
          %4758 = vmatprep.subr.bf16.mxu0 0
          %4759 = vmatpush1.bf16.msra.mxu0 0
          %4760 = vmatprep.mubr.bf16.mxu0 0
          %4761 = vmatmul.mubr.bf16.gmra.mrb[0].mxu0 %v4720
          %v4762 = vpop.f32.mrb[0].mxu0
          %v4763 = vadd.f32 0.0, %v4762
          %v4764 = vpop.f32.mrb[0].mxu0
          %v4765 = vpop.f32.mrb[0].mxu0
          %v4766 = vadd.f32 0.0, %v4765
          %v4767 = vpop.f32.mrb[0].mxu0
          %4768 = vmatprep.mubr.bf16.mxu0 0
          %4769 = vmatmul.mubr.bf16.gmra.mrb[0].mxu0 %v4723
          %v4770 = vpop.f32.mrb[0].mxu0
          %v4771 = vadd.f32 0.0, %v4770
          %v4772 = vpop.f32.mrb[0].mxu0
          %v4773 = vpop.f32.mrb[0].mxu0
          %v4774 = vadd.f32 0.0, %v4773
          %v4775 = vpop.f32.mrb[0].mxu0
          %4776 = vmatprep.mubr.bf16.mxu0 0
          %4777 = vmatmul.mubr.bf16.gmra.mrb[0].mxu0 %v4726
          %v4778 = vpop.f32.mrb[0].mxu0
          %v4779 = vadd.f32 0.0, %v4778
          %v4780 = vpop.f32.mrb[0].mxu0
          %v4781 = vpop.f32.mrb[0].mxu0
          %v4782 = vpop.f32.mrb[0].mxu0
          %4783 = vdwg.mxu0
          %v4784 = vadd.f32 %v4692, %v4763
          %v4785 = vadd.f32 %v4693, %v4766
          %v4786 = vadd.f32 %v4694, %v4771
          %v4787 = vadd.f32 %v4695, %v4774
          %v4788 = vadd.f32 %v4696, %v4779
          %s4789 = sadd.s32 %s3829, 2
          %s4790 = smul.u32 %s4789, 5
          %s4791 = smul.addr %s4790, 4
          %s4792 = scalar_lea.vmem [#allocation2], %s4791
          %v4793 = vld [vmem:[%s4792] sm:$0xf]
          %v4794 = vld [vmem:[%s4792 + $0x4] sm:$0xf]
          %v4795 = vld [vmem:[%s4792 + $0x8] sm:$0xf]
          %v4796 = vld [vmem:[%s4792 + $0xc] sm:$0xf]
          %v4797 = vld [vmem:[%s4792 + $0x10] sm:$0x1]
          %s4798 = scalar_lea.vmem %s4, 80
          %v4799 = vld [vmem:[%s4798] sm:$0xf]
          %v4800 = vld [vmem:[%s4798 + $0x4] sm:$0xf]
          %v4806 = vunpack.c.l.b16 %v4793
          %v4807 = vunpack.c.l.b16 %v4794
          %v4808 = vunpack.c.l.b16 %v4795
          %v4809 = vunpack.c.l.b16 %v4796
          %v4810 = vunpack.c.l.b16 %v4797
          %v4811 = vpack.c.b16 %v4807, %v4806
          %v4812 = vpack.c.b16 %v4809, %v4808
          %v4813 = vpack.c.b16 %v4810, %v4810
          %v4816 = vunpack.c.l.b16 %v4799
          %v4817 = vunpack.c.l.b16 %v4800
          %v4818 = vpack.c.b16 %v4817, %v4816
          %v4821 = vsel %vm3885, %v4811, 0
          %v4824 = vsel %vm3885, %v4812, 0
          %v4827 = vsel %vm3885, %v4813, 0
          %4829 = vmatprep.subr.bf16.mxu0 0
          %4830 = vmatpush1.bf16.msra.mxu0 %v4818
          %4831 = vmatprep.subr.bf16.mxu0 0
          %4832 = vmatpush1.bf16.msra.mxu0 0
          %4833 = vmatprep.subr.bf16.mxu0 0
          %4834 = vmatpush1.bf16.msra.mxu0 0
          %4835 = vmatprep.subr.bf16.mxu0 0
          %4836 = vmatpush1.bf16.msra.mxu0 0
          %4837 = vmatprep.subr.bf16.mxu0 0
          %4838 = vmatpush1.bf16.msra.mxu0 0
          %4839 = vmatprep.subr.bf16.mxu0 0
          %4840 = vmatpush1.bf16.msra.mxu0 0
          %4841 = vmatprep.subr.bf16.mxu0 0
          %4842 = vmatpush1.bf16.msra.mxu0 0
          %4843 = vmatprep.subr.bf16.mxu0 0
          %4844 = vmatpush1.bf16.msra.mxu0 0
          %4845 = vmatprep.subr.bf16.mxu0 0
          %4846 = vmatpush1.bf16.msra.mxu0 0
          %4847 = vmatprep.subr.bf16.mxu0 0
          %4848 = vmatpush1.bf16.msra.mxu0 0
          %4849 = vmatprep.subr.bf16.mxu0 0
          %4850 = vmatpush1.bf16.msra.mxu0 0
          %4851 = vmatprep.subr.bf16.mxu0 0
          %4852 = vmatpush1.bf16.msra.mxu0 0
          %4853 = vmatprep.subr.bf16.mxu0 0
          %4854 = vmatpush1.bf16.msra.mxu0 0
          %4855 = vmatprep.subr.bf16.mxu0 0
          %4856 = vmatpush1.bf16.msra.mxu0 0
          %4857 = vmatprep.subr.bf16.mxu0 0
          %4858 = vmatpush1.bf16.msra.mxu0 0
          %4859 = vmatprep.subr.bf16.mxu0 0
          %4860 = vmatpush1.bf16.msra.mxu0 0
          %4861 = vmatprep.mubr.bf16.mxu0 0
          %4862 = vmatmul.mubr.bf16.gmra.mrb[0].mxu0 %v4821
          %v4863 = vpop.f32.mrb[0].mxu0
          %v4864 = vadd.f32 0.0, %v4863
          %v4865 = vpop.f32.mrb[0].mxu0
          %v4866 = vpop.f32.mrb[0].mxu0
          %v4867 = vadd.f32 0.0, %v4866
          %v4868 = vpop.f32.mrb[0].mxu0
          %4869 = vmatprep.mubr.bf16.mxu0 0
          %4870 = vmatmul.mubr.bf16.gmra.mrb[0].mxu0 %v4824
          %v4871 = vpop.f32.mrb[0].mxu0
          %v4872 = vadd.f32 0.0, %v4871
          %v4873 = vpop.f32.mrb[0].mxu0
          %v4874 = vpop.f32.mrb[0].mxu0
          %v4875 = vadd.f32 0.0, %v4874
          %v4876 = vpop.f32.mrb[0].mxu0
          %4877 = vmatprep.mubr.bf16.mxu0 0
          %4878 = vmatmul.mubr.bf16.gmra.mrb[0].mxu0 %v4827
          %v4879 = vpop.f32.mrb[0].mxu0
          %v4880 = vadd.f32 0.0, %v4879
          %v4881 = vpop.f32.mrb[0].mxu0
          %v4882 = vpop.f32.mrb[0].mxu0
          %v4883 = vpop.f32.mrb[0].mxu0
          %4884 = vdwg.mxu0
          %v4885 = vadd.f32 %v4784, %v4864
          %v4886 = vadd.f32 %v4785, %v4867
          %v4887 = vadd.f32 %v4786, %v4872
          %v4888 = vadd.f32 %v4787, %v4875
          %v4889 = vadd.f32 %v4788, %v4880
          %s4890 = scalar_lea.vmem %s4, 88
          %v4891 = vld [vmem:[%s4890] sm:$0xf]
          %v4892 = vld [vmem:[%s4890 + $0x4] sm:$0xf]
          %v4893 = vshrl.u32 %v4811, 16
          %v4895 = vshll.u32 %v4811, 16
          %v4897 = vrot.slane %v4895, 1
          %v4898 = vor.u32 %v4893, %v4897
          %v4899 = vshll.u32 %v4812, 16
          %v4901 = vrot.slane %v4899, 1
          %v4902 = vsel %vm3856, %v4898, %v4901
          %v4903 = vshrl.u32 %v4812, 16
          %v4905 = vor.u32 %v4903, %v4901
          %v4906 = vshll.u32 %v4813, 16
          %v4908 = vrot.slane %v4906, 1
          %v4909 = vsel %vm3856, %v4905, %v4908
          %v4910 = vshrl.u32 %v4813, 16
          %v4914 = vunpack.c.l.b16 %v4891
          %v4915 = vunpack.c.l.b16 %v4892
          %v4916 = vpack.c.b16 %v4915, %v4914
          %v4919 = vsel %vm3885, %v4902, 0
          %v4922 = vsel %vm3885, %v4909, 0
          %v4925 = vsel %vm3885, %v4910, 0
          %4927 = vmatprep.subr.bf16.mxu0 0
          %4928 = vmatpush1.bf16.msra.mxu0 %v4916
          %4929 = vmatprep.subr.bf16.mxu0 0
          %4930 = vmatpush1.bf16.msra.mxu0 0
          %4931 = vmatprep.subr.bf16.mxu0 0
          %4932 = vmatpush1.bf16.msra.mxu0 0
          %4933 = vmatprep.subr.bf16.mxu0 0
          %4934 = vmatpush1.bf16.msra.mxu0 0
          %4935 = vmatprep.subr.bf16.mxu0 0
          %4936 = vmatpush1.bf16.msra.mxu0 0
          %4937 = vmatprep.subr.bf16.mxu0 0
          %4938 = vmatpush1.bf16.msra.mxu0 0
          %4939 = vmatprep.subr.bf16.mxu0 0
          %4940 = vmatpush1.bf16.msra.mxu0 0
          %4941 = vmatprep.subr.bf16.mxu0 0
          %4942 = vmatpush1.bf16.msra.mxu0 0
          %4943 = vmatprep.subr.bf16.mxu0 0
          %4944 = vmatpush1.bf16.msra.mxu0 0
          %4945 = vmatprep.subr.bf16.mxu0 0
          %4946 = vmatpush1.bf16.msra.mxu0 0
          %4947 = vmatprep.subr.bf16.mxu0 0
          %4948 = vmatpush1.bf16.msra.mxu0 0
          %4949 = vmatprep.subr.bf16.mxu0 0
          %4950 = vmatpush1.bf16.msra.mxu0 0
          %4951 = vmatprep.subr.bf16.mxu0 0
          %4952 = vmatpush1.bf16.msra.mxu0 0
          %4953 = vmatprep.subr.bf16.mxu0 0
          %4954 = vmatpush1.bf16.msra.mxu0 0
          %4955 = vmatprep.subr.bf16.mxu0 0
          %4956 = vmatpush1.bf16.msra.mxu0 0
          %4957 = vmatprep.subr.bf16.mxu0 0
          %4958 = vmatpush1.bf16.msra.mxu0 0
          %4959 = vmatprep.mubr.bf16.mxu0 0
          %4960 = vmatmul.mubr.bf16.gmra.mrb[0].mxu0 %v4919
          %v4961 = vpop.f32.mrb[0].mxu0
          %v4962 = vadd.f32 0.0, %v4961
          %v4963 = vpop.f32.mrb[0].mxu0
          %v4964 = vpop.f32.mrb[0].mxu0
          %v4965 = vadd.f32 0.0, %v4964
          %v4966 = vpop.f32.mrb[0].mxu0
          %4967 = vmatprep.mubr.bf16.mxu0 0
          %4968 = vmatmul.mubr.bf16.gmra.mrb[0].mxu0 %v4922
          %v4969 = vpop.f32.mrb[0].mxu0
          %v4970 = vadd.f32 0.0, %v4969
          %v4971 = vpop.f32.mrb[0].mxu0
          %v4972 = vpop.f32.mrb[0].mxu0
          %v4973 = vadd.f32 0.0, %v4972
          %v4974 = vpop.f32.mrb[0].mxu0
          %4975 = vmatprep.mubr.bf16.mxu0 0
          %4976 = vmatmul.mubr.bf16.gmra.mrb[0].mxu0 %v4925
          %v4977 = vpop.f32.mrb[0].mxu0
          %v4978 = vadd.f32 0.0, %v4977
          %v4979 = vpop.f32.mrb[0].mxu0
          %v4980 = vpop.f32.mrb[0].mxu0
          %v4981 = vpop.f32.mrb[0].mxu0
          %4982 = vdwg.mxu0
          %v4983 = vadd.f32 %v4885, %v4962
          %v4984 = vadd.f32 %v4886, %v4965
          %v4985 = vadd.f32 %v4887, %v4970
          %v4986 = vadd.f32 %v4888, %v4973
          %v4987 = vadd.f32 %v4889, %v4978
          %v4988 = vld [vmem:[%s4792] sm:$0xe]
          %v4989 = vld [vmem:[%s4792 + $0x10] sm:$0x3]
          %s4990 = scalar_lea.vmem %s4, 96
          %v4991 = vld [vmem:[%s4990] sm:$0xf]
          %v4992 = vld [vmem:[%s4990 + $0x4] sm:$0xf]
          %v4995 = vunpack.c.l.b16 %v4988
          %v4996 = vunpack.c.l.b16 %v4989
          %v4997 = vpack.c.b16 %v4807, %v4995
          %v4998 = vpack.c.b16 %v4996, %v4996
          %v4999 = vrot.slane %v4997, 1
          %v5000 = vrot.slane %v4812, 1
          %v5001 = vsel %vm4030, %v4999, %v5000
          %v5002 = vrot.slane %v4998, 1
          %v5003 = vsel %vm4030, %v5000, %v5002
          %v5006 = vunpack.c.l.b16 %v4991
          %v5007 = vunpack.c.l.b16 %v4992
          %v5008 = vpack.c.b16 %v5007, %v5006
          %v5011 = vsel %vm3885, %v5001, 0
          %v5014 = vsel %vm3885, %v5003, 0
          %v5017 = vsel %vm3885, %v5002, 0
          %5019 = vmatprep.subr.bf16.mxu0 0
          %5020 = vmatpush1.bf16.msra.mxu0 %v5008
          %5021 = vmatprep.subr.bf16.mxu0 0
          %5022 = vmatpush1.bf16.msra.mxu0 0
          %5023 = vmatprep.subr.bf16.mxu0 0
          %5024 = vmatpush1.bf16.msra.mxu0 0
          %5025 = vmatprep.subr.bf16.mxu0 0
          %5026 = vmatpush1.bf16.msra.mxu0 0
          %5027 = vmatprep.subr.bf16.mxu0 0
          %5028 = vmatpush1.bf16.msra.mxu0 0
          %5029 = vmatprep.subr.bf16.mxu0 0
          %5030 = vmatpush1.bf16.msra.mxu0 0
          %5031 = vmatprep.subr.bf16.mxu0 0
          %5032 = vmatpush1.bf16.msra.mxu0 0
          %5033 = vmatprep.subr.bf16.mxu0 0
          %5034 = vmatpush1.bf16.msra.mxu0 0
          %5035 = vmatprep.subr.bf16.mxu0 0
          %5036 = vmatpush1.bf16.msra.mxu0 0
          %5037 = vmatprep.subr.bf16.mxu0 0
          %5038 = vmatpush1.bf16.msra.mxu0 0
          %5039 = vmatprep.subr.bf16.mxu0 0
          %5040 = vmatpush1.bf16.msra.mxu0 0
          %5041 = vmatprep.subr.bf16.mxu0 0
          %5042 = vmatpush1.bf16.msra.mxu0 0
          %5043 = vmatprep.subr.bf16.mxu0 0
          %5044 = vmatpush1.bf16.msra.mxu0 0
          %5045 = vmatprep.subr.bf16.mxu0 0
          %5046 = vmatpush1.bf16.msra.mxu0 0
          %5047 = vmatprep.subr.bf16.mxu0 0
          %5048 = vmatpush1.bf16.msra.mxu0 0
          %5049 = vmatprep.subr.bf16.mxu0 0
          %5050 = vmatpush1.bf16.msra.mxu0 0
          %5051 = vmatprep.mubr.bf16.mxu0 0
          %5052 = vmatmul.mubr.bf16.gmra.mrb[0].mxu0 %v5011
          %v5053 = vpop.f32.mrb[0].mxu0
          %v5054 = vadd.f32 0.0, %v5053
          %v5055 = vpop.f32.mrb[0].mxu0
          %v5056 = vpop.f32.mrb[0].mxu0
          %v5057 = vadd.f32 0.0, %v5056
          %v5058 = vpop.f32.mrb[0].mxu0
          %5059 = vmatprep.mubr.bf16.mxu0 0
          %5060 = vmatmul.mubr.bf16.gmra.mrb[0].mxu0 %v5014
          %v5061 = vpop.f32.mrb[0].mxu0
          %v5062 = vadd.f32 0.0, %v5061
          %v5063 = vpop.f32.mrb[0].mxu0
          %v5064 = vpop.f32.mrb[0].mxu0
          %v5065 = vadd.f32 0.0, %v5064
          %v5066 = vpop.f32.mrb[0].mxu0
          %5067 = vmatprep.mubr.bf16.mxu0 0
          %5068 = vmatmul.mubr.bf16.gmra.mrb[0].mxu0 %v5017
          %v5069 = vpop.f32.mrb[0].mxu0
          %v5070 = vadd.f32 0.0, %v5069
          %v5071 = vpop.f32.mrb[0].mxu0
          %v5072 = vpop.f32.mrb[0].mxu0
          %v5073 = vpop.f32.mrb[0].mxu0
          %5074 = vdwg.mxu0
          %v5075 = vadd.f32 %v4983, %v5054
          %v5076 = vadd.f32 %v4984, %v5057
          %v5077 = vadd.f32 %v4985, %v5062
          %v5078 = vadd.f32 %v4986, %v5065
          %v5079 = vadd.f32 %v4987, %v5070
          %s5080 = scalar_lea.vmem %s4, 104
          %v5081 = vld [vmem:[%s5080] sm:$0xf]
          %v5082 = vld [vmem:[%s5080 + $0x4] sm:$0xf]
          %v5084 = vshrl.u32 %v4997, 16
          %v5086 = vrot.slane %v5084, 1
          %v5087 = vshll.u32 %v4997, 16
          %v5089 = vrot.slane %v5087, 2
          %v5090 = vor.u32 %v5086, %v5089
          %v5091 = vrot.slane %v4903, 1
          %v5092 = vrot.slane %v4899, 2
          %v5093 = vor.u32 %v5091, %v5092
          %v5094 = vsel %vm4115, %v5090, %v5093
          %v5096 = vshrl.u32 %v4998, 16
          %v5098 = vrot.slane %v5096, 1
          %v5099 = vshll.u32 %v4998, 16
          %v5101 = vrot.slane %v5099, 2
          %v5102 = vor.u32 %v5098, %v5101
          %v5103 = vsel %vm4115, %v5093, %v5102
          %v5106 = vunpack.c.l.b16 %v5081
          %v5107 = vunpack.c.l.b16 %v5082
          %v5108 = vpack.c.b16 %v5107, %v5106
          %v5111 = vsel %vm3885, %v5094, 0
          %v5114 = vsel %vm3885, %v5103, 0
          %v5117 = vsel %vm3885, %v5098, 0
          %5119 = vmatprep.subr.bf16.mxu0 0
          %5120 = vmatpush1.bf16.msra.mxu0 %v5108
          %5121 = vmatprep.subr.bf16.mxu0 0
          %5122 = vmatpush1.bf16.msra.mxu0 0
          %5123 = vmatprep.subr.bf16.mxu0 0
          %5124 = vmatpush1.bf16.msra.mxu0 0
          %5125 = vmatprep.subr.bf16.mxu0 0
          %5126 = vmatpush1.bf16.msra.mxu0 0
          %5127 = vmatprep.subr.bf16.mxu0 0
          %5128 = vmatpush1.bf16.msra.mxu0 0
          %5129 = vmatprep.subr.bf16.mxu0 0
          %5130 = vmatpush1.bf16.msra.mxu0 0
          %5131 = vmatprep.subr.bf16.mxu0 0
          %5132 = vmatpush1.bf16.msra.mxu0 0
          %5133 = vmatprep.subr.bf16.mxu0 0
          %5134 = vmatpush1.bf16.msra.mxu0 0
          %5135 = vmatprep.subr.bf16.mxu0 0
          %5136 = vmatpush1.bf16.msra.mxu0 0
          %5137 = vmatprep.subr.bf16.mxu0 0
          %5138 = vmatpush1.bf16.msra.mxu0 0
          %5139 = vmatprep.subr.bf16.mxu0 0
          %5140 = vmatpush1.bf16.msra.mxu0 0
          %5141 = vmatprep.subr.bf16.mxu0 0
          %5142 = vmatpush1.bf16.msra.mxu0 0
          %5143 = vmatprep.subr.bf16.mxu0 0
          %5144 = vmatpush1.bf16.msra.mxu0 0
          %5145 = vmatprep.subr.bf16.mxu0 0
          %5146 = vmatpush1.bf16.msra.mxu0 0
          %5147 = vmatprep.subr.bf16.mxu0 0
          %5148 = vmatpush1.bf16.msra.mxu0 0
          %5149 = vmatprep.subr.bf16.mxu0 0
          %5150 = vmatpush1.bf16.msra.mxu0 0
          %5151 = vmatprep.mubr.bf16.mxu0 0
          %5152 = vmatmul.mubr.bf16.gmra.mrb[0].mxu0 %v5111
          %v5153 = vpop.f32.mrb[0].mxu0
          %v5154 = vadd.f32 0.0, %v5153
          %v5155 = vpop.f32.mrb[0].mxu0
          %v5156 = vpop.f32.mrb[0].mxu0
          %v5157 = vadd.f32 0.0, %v5156
          %v5158 = vpop.f32.mrb[0].mxu0
          %5159 = vmatprep.mubr.bf16.mxu0 0
          %5160 = vmatmul.mubr.bf16.gmra.mrb[0].mxu0 %v5114
          %v5161 = vpop.f32.mrb[0].mxu0
          %v5162 = vadd.f32 0.0, %v5161
          %v5163 = vpop.f32.mrb[0].mxu0
          %v5164 = vpop.f32.mrb[0].mxu0
          %v5165 = vadd.f32 0.0, %v5164
          %v5166 = vpop.f32.mrb[0].mxu0
          %5167 = vmatprep.mubr.bf16.mxu0 0
          %5168 = vmatmul.mubr.bf16.gmra.mrb[0].mxu0 %v5117
          %v5169 = vpop.f32.mrb[0].mxu0
          %v5170 = vadd.f32 0.0, %v5169
          %v5171 = vpop.f32.mrb[0].mxu0
          %v5172 = vpop.f32.mrb[0].mxu0
          %v5173 = vpop.f32.mrb[0].mxu0
          %5174 = vdwg.mxu0
          %v5175 = vadd.f32 %v5075, %v5154
          %v5176 = vadd.f32 %v5076, %v5157
          %v5177 = vadd.f32 %v5077, %v5162
          %v5178 = vadd.f32 %v5078, %v5165
          %v5179 = vadd.f32 %v5079, %v5170
          %v5180 = vld [vmem:[%s4792] sm:$0xc]
          %v5181 = vld [vmem:[%s4792 + $0x10] sm:$0x7]
          %s5182 = scalar_lea.vmem %s4, 112
          %v5183 = vld [vmem:[%s5182] sm:$0xf]
          %v5184 = vld [vmem:[%s5182 + $0x4] sm:$0xf]
          %v5187 = vunpack.c.l.b16 %v5180
          %v5188 = vunpack.c.l.b16 %v5181
          %v5189 = vpack.c.b16 %v4807, %v5187
          %v5190 = vpack.c.b16 %v5188, %v5188
          %v5191 = vrot.slane %v5189, 2
          %v5192 = vrot.slane %v4812, 2
          %v5193 = vsel %vm4224, %v5191, %v5192
          %v5194 = vrot.slane %v5190, 2
          %v5195 = vsel %vm4224, %v5192, %v5194
          %v5198 = vunpack.c.l.b16 %v5183
          %v5199 = vunpack.c.l.b16 %v5184
          %v5200 = vpack.c.b16 %v5199, %v5198
          %v5203 = vsel %vm3885, %v5193, 0
          %v5206 = vsel %vm3885, %v5195, 0
          %v5209 = vsel %vm3885, %v5194, 0
          %5211 = vmatprep.subr.bf16.mxu0 0
          %5212 = vmatpush1.bf16.msra.mxu0 %v5200
          %5213 = vmatprep.subr.bf16.mxu0 0
          %5214 = vmatpush1.bf16.msra.mxu0 0
          %5215 = vmatprep.subr.bf16.mxu0 0
          %5216 = vmatpush1.bf16.msra.mxu0 0
          %5217 = vmatprep.subr.bf16.mxu0 0
          %5218 = vmatpush1.bf16.msra.mxu0 0
          %5219 = vmatprep.subr.bf16.mxu0 0
          %5220 = vmatpush1.bf16.msra.mxu0 0
          %5221 = vmatprep.subr.bf16.mxu0 0
          %5222 = vmatpush1.bf16.msra.mxu0 0
          %5223 = vmatprep.subr.bf16.mxu0 0
          %5224 = vmatpush1.bf16.msra.mxu0 0
          %5225 = vmatprep.subr.bf16.mxu0 0
          %5226 = vmatpush1.bf16.msra.mxu0 0
          %5227 = vmatprep.subr.bf16.mxu0 0
          %5228 = vmatpush1.bf16.msra.mxu0 0
          %5229 = vmatprep.subr.bf16.mxu0 0
          %5230 = vmatpush1.bf16.msra.mxu0 0
          %5231 = vmatprep.subr.bf16.mxu0 0
          %5232 = vmatpush1.bf16.msra.mxu0 0
          %5233 = vmatprep.subr.bf16.mxu0 0
          %5234 = vmatpush1.bf16.msra.mxu0 0
          %5235 = vmatprep.subr.bf16.mxu0 0
          %5236 = vmatpush1.bf16.msra.mxu0 0
          %5237 = vmatprep.subr.bf16.mxu0 0
          %5238 = vmatpush1.bf16.msra.mxu0 0
          %5239 = vmatprep.subr.bf16.mxu0 0
          %5240 = vmatpush1.bf16.msra.mxu0 0
          %5241 = vmatprep.subr.bf16.mxu0 0
          %5242 = vmatpush1.bf16.msra.mxu0 0
          %5243 = vmatprep.mubr.bf16.mxu0 0
          %5244 = vmatmul.mubr.bf16.gmra.mrb[0].mxu0 %v5203
          %v5245 = vpop.f32.mrb[0].mxu0
          %v5246 = vadd.f32 0.0, %v5245
          %v5247 = vpop.f32.mrb[0].mxu0
          %v5248 = vpop.f32.mrb[0].mxu0
          %v5249 = vadd.f32 0.0, %v5248
          %v5250 = vpop.f32.mrb[0].mxu0
          %5251 = vmatprep.mubr.bf16.mxu0 0
          %5252 = vmatmul.mubr.bf16.gmra.mrb[0].mxu0 %v5206
          %v5253 = vpop.f32.mrb[0].mxu0
          %v5254 = vadd.f32 0.0, %v5253
          %v5255 = vpop.f32.mrb[0].mxu0
          %v5256 = vpop.f32.mrb[0].mxu0
          %v5257 = vadd.f32 0.0, %v5256
          %v5258 = vpop.f32.mrb[0].mxu0
          %5259 = vmatprep.mubr.bf16.mxu0 0
          %5260 = vmatmul.mubr.bf16.gmra.mrb[0].mxu0 %v5209
          %v5261 = vpop.f32.mrb[0].mxu0
          %v5262 = vadd.f32 0.0, %v5261
          %v5263 = vpop.f32.mrb[0].mxu0
          %v5264 = vpop.f32.mrb[0].mxu0
          %v5265 = vpop.f32.mrb[0].mxu0
          %5266 = vdwg.mxu0
          %v5267 = vadd.f32 %v5175, %v5246
          %v5268 = vadd.f32 %v5176, %v5249
          %v5269 = vadd.f32 %v5177, %v5254
          %v5270 = vadd.f32 %v5178, %v5257
          %v5271 = vadd.f32 %v5179, %v5262
          %s5272 = sadd.s32 %s3829, 3
          %s5273 = smul.u32 %s5272, 5
          %s5274 = smul.addr %s5273, 4
          %s5275 = scalar_lea.vmem [#allocation2], %s5274
          %v5276 = vld [vmem:[%s5275] sm:$0xf]
          %v5277 = vld [vmem:[%s5275 + $0x4] sm:$0xf]
          %v5278 = vld [vmem:[%s5275 + $0x8] sm:$0xf]
          %v5279 = vld [vmem:[%s5275 + $0xc] sm:$0xf]
          %v5280 = vld [vmem:[%s5275 + $0x10] sm:$0x1]
          %s5281 = scalar_lea.vmem %s4, 120
          %v5282 = vld [vmem:[%s5281] sm:$0xf]
          %v5283 = vld [vmem:[%s5281 + $0x4] sm:$0xf]
          %v5289 = vunpack.c.l.b16 %v5276
          %v5290 = vunpack.c.l.b16 %v5277
          %v5291 = vunpack.c.l.b16 %v5278
          %v5292 = vunpack.c.l.b16 %v5279
          %v5293 = vunpack.c.l.b16 %v5280
          %v5294 = vpack.c.b16 %v5290, %v5289
          %v5295 = vpack.c.b16 %v5292, %v5291
          %v5296 = vpack.c.b16 %v5293, %v5293
          %v5299 = vunpack.c.l.b16 %v5282
          %v5300 = vunpack.c.l.b16 %v5283
          %v5301 = vpack.c.b16 %v5300, %v5299
          %v5304 = vsel %vm3885, %v5294, 0
          %v5307 = vsel %vm3885, %v5295, 0
          %v5310 = vsel %vm3885, %v5296, 0
          %5312 = vmatprep.subr.bf16.mxu0 0
          %5313 = vmatpush1.bf16.msra.mxu0 %v5301
          %5314 = vmatprep.subr.bf16.mxu0 0
          %5315 = vmatpush1.bf16.msra.mxu0 0
          %5316 = vmatprep.subr.bf16.mxu0 0
          %5317 = vmatpush1.bf16.msra.mxu0 0
          %5318 = vmatprep.subr.bf16.mxu0 0
          %5319 = vmatpush1.bf16.msra.mxu0 0
          %5320 = vmatprep.subr.bf16.mxu0 0
          %5321 = vmatpush1.bf16.msra.mxu0 0
          %5322 = vmatprep.subr.bf16.mxu0 0
          %5323 = vmatpush1.bf16.msra.mxu0 0
          %5324 = vmatprep.subr.bf16.mxu0 0
          %5325 = vmatpush1.bf16.msra.mxu0 0
          %5326 = vmatprep.subr.bf16.mxu0 0
          %5327 = vmatpush1.bf16.msra.mxu0 0
          %5328 = vmatprep.subr.bf16.mxu0 0
          %5329 = vmatpush1.bf16.msra.mxu0 0
          %5330 = vmatprep.subr.bf16.mxu0 0
          %5331 = vmatpush1.bf16.msra.mxu0 0
          %5332 = vmatprep.subr.bf16.mxu0 0
          %5333 = vmatpush1.bf16.msra.mxu0 0
          %5334 = vmatprep.subr.bf16.mxu0 0
          %5335 = vmatpush1.bf16.msra.mxu0 0
          %5336 = vmatprep.subr.bf16.mxu0 0
          %5337 = vmatpush1.bf16.msra.mxu0 0
          %5338 = vmatprep.subr.bf16.mxu0 0
          %5339 = vmatpush1.bf16.msra.mxu0 0
          %5340 = vmatprep.subr.bf16.mxu0 0
          %5341 = vmatpush1.bf16.msra.mxu0 0
          %5342 = vmatprep.subr.bf16.mxu0 0
          %5343 = vmatpush1.bf16.msra.mxu0 0
          %5344 = vmatprep.mubr.bf16.mxu0 0
          %5345 = vmatmul.mubr.bf16.gmra.mrb[0].mxu0 %v5304
          %v5346 = vpop.f32.mrb[0].mxu0
          %v5347 = vadd.f32 0.0, %v5346
          %v5348 = vpop.f32.mrb[0].mxu0
          %v5349 = vpop.f32.mrb[0].mxu0
          %v5350 = vadd.f32 0.0, %v5349
          %v5351 = vpop.f32.mrb[0].mxu0
          %5352 = vmatprep.mubr.bf16.mxu0 0
          %5353 = vmatmul.mubr.bf16.gmra.mrb[0].mxu0 %v5307
          %v5354 = vpop.f32.mrb[0].mxu0
          %v5355 = vadd.f32 0.0, %v5354
          %v5356 = vpop.f32.mrb[0].mxu0
          %v5357 = vpop.f32.mrb[0].mxu0
          %v5358 = vadd.f32 0.0, %v5357
          %v5359 = vpop.f32.mrb[0].mxu0
          %5360 = vmatprep.mubr.bf16.mxu0 0
          %5361 = vmatmul.mubr.bf16.gmra.mrb[0].mxu0 %v5310
          %v5362 = vpop.f32.mrb[0].mxu0
          %v5363 = vadd.f32 0.0, %v5362
          %v5364 = vpop.f32.mrb[0].mxu0
          %v5365 = vpop.f32.mrb[0].mxu0
          %v5366 = vpop.f32.mrb[0].mxu0
          %5367 = vdwg.mxu0
          %v5368 = vadd.f32 %v5267, %v5347
          %v5369 = vadd.f32 %v5268, %v5350
          %v5370 = vadd.f32 %v5269, %v5355
          %v5371 = vadd.f32 %v5270, %v5358
          %v5372 = vadd.f32 %v5271, %v5363
          %s5373 = scalar_lea.vmem %s4, 128
          %v5374 = vld [vmem:[%s5373] sm:$0xf]
          %v5375 = vld [vmem:[%s5373 + $0x4] sm:$0xf]
          %v5376 = vshrl.u32 %v5294, 16
          %v5378 = vshll.u32 %v5294, 16
          %v5380 = vrot.slane %v5378, 1
          %v5381 = vor.u32 %v5376, %v5380
          %v5382 = vshll.u32 %v5295, 16
          %v5384 = vrot.slane %v5382, 1
          %v5385 = vsel %vm3856, %v5381, %v5384
          %v5386 = vshrl.u32 %v5295, 16
          %v5388 = vor.u32 %v5386, %v5384
          %v5389 = vshll.u32 %v5296, 16
          %v5391 = vrot.slane %v5389, 1
          %v5392 = vsel %vm3856, %v5388, %v5391
          %v5393 = vshrl.u32 %v5296, 16
          %v5397 = vunpack.c.l.b16 %v5374
          %v5398 = vunpack.c.l.b16 %v5375
          %v5399 = vpack.c.b16 %v5398, %v5397
          %v5402 = vsel %vm3885, %v5385, 0
          %v5405 = vsel %vm3885, %v5392, 0
          %v5408 = vsel %vm3885, %v5393, 0
          %5410 = vmatprep.subr.bf16.mxu0 0
          %5411 = vmatpush1.bf16.msra.mxu0 %v5399
          %5412 = vmatprep.subr.bf16.mxu0 0
          %5413 = vmatpush1.bf16.msra.mxu0 0
          %5414 = vmatprep.subr.bf16.mxu0 0
          %5415 = vmatpush1.bf16.msra.mxu0 0
          %5416 = vmatprep.subr.bf16.mxu0 0
          %5417 = vmatpush1.bf16.msra.mxu0 0
          %5418 = vmatprep.subr.bf16.mxu0 0
          %5419 = vmatpush1.bf16.msra.mxu0 0
          %5420 = vmatprep.subr.bf16.mxu0 0
          %5421 = vmatpush1.bf16.msra.mxu0 0
          %5422 = vmatprep.subr.bf16.mxu0 0
          %5423 = vmatpush1.bf16.msra.mxu0 0
          %5424 = vmatprep.subr.bf16.mxu0 0
          %5425 = vmatpush1.bf16.msra.mxu0 0
          %5426 = vmatprep.subr.bf16.mxu0 0
          %5427 = vmatpush1.bf16.msra.mxu0 0
          %5428 = vmatprep.subr.bf16.mxu0 0
          %5429 = vmatpush1.bf16.msra.mxu0 0
          %5430 = vmatprep.subr.bf16.mxu0 0
          %5431 = vmatpush1.bf16.msra.mxu0 0
          %5432 = vmatprep.subr.bf16.mxu0 0
          %5433 = vmatpush1.bf16.msra.mxu0 0
          %5434 = vmatprep.subr.bf16.mxu0 0
          %5435 = vmatpush1.bf16.msra.mxu0 0
          %5436 = vmatprep.subr.bf16.mxu0 0
          %5437 = vmatpush1.bf16.msra.mxu0 0
          %5438 = vmatprep.subr.bf16.mxu0 0
          %5439 = vmatpush1.bf16.msra.mxu0 0
          %5440 = vmatprep.subr.bf16.mxu0 0
          %5441 = vmatpush1.bf16.msra.mxu0 0
          %5442 = vmatprep.mubr.bf16.mxu0 0
          %5443 = vmatmul.mubr.bf16.gmra.mrb[0].mxu0 %v5402
          %v5444 = vpop.f32.mrb[0].mxu0
          %v5445 = vadd.f32 0.0, %v5444
          %v5446 = vpop.f32.mrb[0].mxu0
          %v5447 = vpop.f32.mrb[0].mxu0
          %v5448 = vadd.f32 0.0, %v5447
          %v5449 = vpop.f32.mrb[0].mxu0
          %5450 = vmatprep.mubr.bf16.mxu0 0
          %5451 = vmatmul.mubr.bf16.gmra.mrb[0].mxu0 %v5405
          %v5452 = vpop.f32.mrb[0].mxu0
          %v5453 = vadd.f32 0.0, %v5452
          %v5454 = vpop.f32.mrb[0].mxu0
          %v5455 = vpop.f32.mrb[0].mxu0
          %v5456 = vadd.f32 0.0, %v5455
          %v5457 = vpop.f32.mrb[0].mxu0
          %5458 = vmatprep.mubr.bf16.mxu0 0
          %5459 = vmatmul.mubr.bf16.gmra.mrb[0].mxu0 %v5408
          %v5460 = vpop.f32.mrb[0].mxu0
          %v5461 = vadd.f32 0.0, %v5460
          %v5462 = vpop.f32.mrb[0].mxu0
          %v5463 = vpop.f32.mrb[0].mxu0
          %v5464 = vpop.f32.mrb[0].mxu0
          %5465 = vdwg.mxu0
          %v5466 = vadd.f32 %v5368, %v5445
          %v5467 = vadd.f32 %v5369, %v5448
          %v5468 = vadd.f32 %v5370, %v5453
          %v5469 = vadd.f32 %v5371, %v5456
          %v5470 = vadd.f32 %v5372, %v5461
          %v5471 = vld [vmem:[%s5275] sm:$0xe]
          %v5472 = vld [vmem:[%s5275 + $0x10] sm:$0x3]
          %s5473 = scalar_lea.vmem %s4, 136
          %v5474 = vld [vmem:[%s5473] sm:$0xf]
          %v5475 = vld [vmem:[%s5473 + $0x4] sm:$0xf]
          %v5478 = vunpack.c.l.b16 %v5471
          %v5479 = vunpack.c.l.b16 %v5472
          %v5480 = vpack.c.b16 %v5290, %v5478
          %v5481 = vpack.c.b16 %v5479, %v5479
          %v5482 = vrot.slane %v5480, 1
          %v5483 = vrot.slane %v5295, 1
          %v5484 = vsel %vm4030, %v5482, %v5483
          %v5485 = vrot.slane %v5481, 1
          %v5486 = vsel %vm4030, %v5483, %v5485
          %v5489 = vunpack.c.l.b16 %v5474
          %v5490 = vunpack.c.l.b16 %v5475
          %v5491 = vpack.c.b16 %v5490, %v5489
          %v5494 = vsel %vm3885, %v5484, 0
          %v5497 = vsel %vm3885, %v5486, 0
          %v5500 = vsel %vm3885, %v5485, 0
          %5502 = vmatprep.subr.bf16.mxu0 0
          %5503 = vmatpush1.bf16.msra.mxu0 %v5491
          %5504 = vmatprep.subr.bf16.mxu0 0
          %5505 = vmatpush1.bf16.msra.mxu0 0
          %5506 = vmatprep.subr.bf16.mxu0 0
          %5507 = vmatpush1.bf16.msra.mxu0 0
          %5508 = vmatprep.subr.bf16.mxu0 0
          %5509 = vmatpush1.bf16.msra.mxu0 0
          %5510 = vmatprep.subr.bf16.mxu0 0
          %5511 = vmatpush1.bf16.msra.mxu0 0
          %5512 = vmatprep.subr.bf16.mxu0 0
          %5513 = vmatpush1.bf16.msra.mxu0 0
          %5514 = vmatprep.subr.bf16.mxu0 0
          %5515 = vmatpush1.bf16.msra.mxu0 0
          %5516 = vmatprep.subr.bf16.mxu0 0
          %5517 = vmatpush1.bf16.msra.mxu0 0
          %5518 = vmatprep.subr.bf16.mxu0 0
          %5519 = vmatpush1.bf16.msra.mxu0 0
          %5520 = vmatprep.subr.bf16.mxu0 0
          %5521 = vmatpush1.bf16.msra.mxu0 0
          %5522 = vmatprep.subr.bf16.mxu0 0
          %5523 = vmatpush1.bf16.msra.mxu0 0
          %5524 = vmatprep.subr.bf16.mxu0 0
          %5525 = vmatpush1.bf16.msra.mxu0 0
          %5526 = vmatprep.subr.bf16.mxu0 0
          %5527 = vmatpush1.bf16.msra.mxu0 0
          %5528 = vmatprep.subr.bf16.mxu0 0
          %5529 = vmatpush1.bf16.msra.mxu0 0
          %5530 = vmatprep.subr.bf16.mxu0 0
          %5531 = vmatpush1.bf16.msra.mxu0 0
          %5532 = vmatprep.subr.bf16.mxu0 0
          %5533 = vmatpush1.bf16.msra.mxu0 0
          %5534 = vmatprep.mubr.bf16.mxu0 0
          %5535 = vmatmul.mubr.bf16.gmra.mrb[0].mxu0 %v5494
          %v5536 = vpop.f32.mrb[0].mxu0
          %v5537 = vadd.f32 0.0, %v5536
          %v5538 = vpop.f32.mrb[0].mxu0
          %v5539 = vpop.f32.mrb[0].mxu0
          %v5540 = vadd.f32 0.0, %v5539
          %v5541 = vpop.f32.mrb[0].mxu0
          %5542 = vmatprep.mubr.bf16.mxu0 0
          %5543 = vmatmul.mubr.bf16.gmra.mrb[0].mxu0 %v5497
          %v5544 = vpop.f32.mrb[0].mxu0
          %v5545 = vadd.f32 0.0, %v5544
          %v5546 = vpop.f32.mrb[0].mxu0
          %v5547 = vpop.f32.mrb[0].mxu0
          %v5548 = vadd.f32 0.0, %v5547
          %v5549 = vpop.f32.mrb[0].mxu0
          %5550 = vmatprep.mubr.bf16.mxu0 0
          %5551 = vmatmul.mubr.bf16.gmra.mrb[0].mxu0 %v5500
          %v5552 = vpop.f32.mrb[0].mxu0
          %v5553 = vadd.f32 0.0, %v5552
          %v5554 = vpop.f32.mrb[0].mxu0
          %v5555 = vpop.f32.mrb[0].mxu0
          %v5556 = vpop.f32.mrb[0].mxu0
          %5557 = vdwg.mxu0
          %v5558 = vadd.f32 %v5466, %v5537
          %v5559 = vadd.f32 %v5467, %v5540
          %v5560 = vadd.f32 %v5468, %v5545
          %v5561 = vadd.f32 %v5469, %v5548
          %v5562 = vadd.f32 %v5470, %v5553
          %s5563 = scalar_lea.vmem %s4, 144
          %v5564 = vld [vmem:[%s5563] sm:$0xf]
          %v5565 = vld [vmem:[%s5563 + $0x4] sm:$0xf]
          %v5567 = vshrl.u32 %v5480, 16
          %v5569 = vrot.slane %v5567, 1
          %v5570 = vshll.u32 %v5480, 16
          %v5572 = vrot.slane %v5570, 2
          %v5573 = vor.u32 %v5569, %v5572
          %v5574 = vrot.slane %v5386, 1
          %v5575 = vrot.slane %v5382, 2
          %v5576 = vor.u32 %v5574, %v5575
          %v5577 = vsel %vm4115, %v5573, %v5576
          %v5579 = vshrl.u32 %v5481, 16
          %v5581 = vrot.slane %v5579, 1
          %v5582 = vshll.u32 %v5481, 16
          %v5584 = vrot.slane %v5582, 2
          %v5585 = vor.u32 %v5581, %v5584
          %v5586 = vsel %vm4115, %v5576, %v5585
          %v5589 = vunpack.c.l.b16 %v5564
          %v5590 = vunpack.c.l.b16 %v5565
          %v5591 = vpack.c.b16 %v5590, %v5589
          %v5594 = vsel %vm3885, %v5577, 0
          %v5597 = vsel %vm3885, %v5586, 0
          %v5600 = vsel %vm3885, %v5581, 0
          %5602 = vmatprep.subr.bf16.mxu0 0
          %5603 = vmatpush1.bf16.msra.mxu0 %v5591
          %5604 = vmatprep.subr.bf16.mxu0 0
          %5605 = vmatpush1.bf16.msra.mxu0 0
          %5606 = vmatprep.subr.bf16.mxu0 0
          %5607 = vmatpush1.bf16.msra.mxu0 0
          %5608 = vmatprep.subr.bf16.mxu0 0
          %5609 = vmatpush1.bf16.msra.mxu0 0
          %5610 = vmatprep.subr.bf16.mxu0 0
          %5611 = vmatpush1.bf16.msra.mxu0 0
          %5612 = vmatprep.subr.bf16.mxu0 0
          %5613 = vmatpush1.bf16.msra.mxu0 0
          %5614 = vmatprep.subr.bf16.mxu0 0
          %5615 = vmatpush1.bf16.msra.mxu0 0
          %5616 = vmatprep.subr.bf16.mxu0 0
          %5617 = vmatpush1.bf16.msra.mxu0 0
          %5618 = vmatprep.subr.bf16.mxu0 0
          %5619 = vmatpush1.bf16.msra.mxu0 0
          %5620 = vmatprep.subr.bf16.mxu0 0
          %5621 = vmatpush1.bf16.msra.mxu0 0
          %5622 = vmatprep.subr.bf16.mxu0 0
          %5623 = vmatpush1.bf16.msra.mxu0 0
          %5624 = vmatprep.subr.bf16.mxu0 0
          %5625 = vmatpush1.bf16.msra.mxu0 0
          %5626 = vmatprep.subr.bf16.mxu0 0
          %5627 = vmatpush1.bf16.msra.mxu0 0
          %5628 = vmatprep.subr.bf16.mxu0 0
          %5629 = vmatpush1.bf16.msra.mxu0 0
          %5630 = vmatprep.subr.bf16.mxu0 0
          %5631 = vmatpush1.bf16.msra.mxu0 0
          %5632 = vmatprep.subr.bf16.mxu0 0
          %5633 = vmatpush1.bf16.msra.mxu0 0
          %5634 = vmatprep.mubr.bf16.mxu0 0
          %5635 = vmatmul.mubr.bf16.gmra.mrb[0].mxu0 %v5594
          %v5636 = vpop.f32.mrb[0].mxu0
          %v5637 = vadd.f32 0.0, %v5636
          %v5638 = vpop.f32.mrb[0].mxu0
          %v5639 = vpop.f32.mrb[0].mxu0
          %v5640 = vadd.f32 0.0, %v5639
          %v5641 = vpop.f32.mrb[0].mxu0
          %5642 = vmatprep.mubr.bf16.mxu0 0
          %5643 = vmatmul.mubr.bf16.gmra.mrb[0].mxu0 %v5597
          %v5644 = vpop.f32.mrb[0].mxu0
          %v5645 = vadd.f32 0.0, %v5644
          %v5646 = vpop.f32.mrb[0].mxu0
          %v5647 = vpop.f32.mrb[0].mxu0
          %v5648 = vadd.f32 0.0, %v5647
          %v5649 = vpop.f32.mrb[0].mxu0
          %5650 = vmatprep.mubr.bf16.mxu0 0
          %5651 = vmatmul.mubr.bf16.gmra.mrb[0].mxu0 %v5600
          %v5652 = vpop.f32.mrb[0].mxu0
          %v5653 = vadd.f32 0.0, %v5652
          %v5654 = vpop.f32.mrb[0].mxu0
          %v5655 = vpop.f32.mrb[0].mxu0
          %v5656 = vpop.f32.mrb[0].mxu0
          %5657 = vdwg.mxu0
          %v5658 = vadd.f32 %v5558, %v5637
          %v5659 = vadd.f32 %v5559, %v5640
          %v5660 = vadd.f32 %v5560, %v5645
          %v5661 = vadd.f32 %v5561, %v5648
          %v5662 = vadd.f32 %v5562, %v5653
          %v5663 = vld [vmem:[%s5275] sm:$0xc]
          %v5664 = vld [vmem:[%s5275 + $0x10] sm:$0x7]
          %s5665 = scalar_lea.vmem %s4, 152
          %v5666 = vld [vmem:[%s5665] sm:$0xf]
          %v5667 = vld [vmem:[%s5665 + $0x4] sm:$0xf]
          %v5670 = vunpack.c.l.b16 %v5663
          %v5671 = vunpack.c.l.b16 %v5664
          %v5672 = vpack.c.b16 %v5290, %v5670
          %v5673 = vpack.c.b16 %v5671, %v5671
          %v5674 = vrot.slane %v5672, 2
          %v5675 = vrot.slane %v5295, 2
          %v5676 = vsel %vm4224, %v5674, %v5675
          %v5677 = vrot.slane %v5673, 2
          %v5678 = vsel %vm4224, %v5675, %v5677
          %v5681 = vunpack.c.l.b16 %v5666
          %v5682 = vunpack.c.l.b16 %v5667
          %v5683 = vpack.c.b16 %v5682, %v5681
          %v5686 = vsel %vm3885, %v5676, 0
          %v5689 = vsel %vm3885, %v5678, 0
          %v5692 = vsel %vm3885, %v5677, 0
          %5694 = vmatprep.subr.bf16.mxu0 0
          %5695 = vmatpush1.bf16.msra.mxu0 %v5683
          %5696 = vmatprep.subr.bf16.mxu0 0
          %5697 = vmatpush1.bf16.msra.mxu0 0
          %5698 = vmatprep.subr.bf16.mxu0 0
          %5699 = vmatpush1.bf16.msra.mxu0 0
          %5700 = vmatprep.subr.bf16.mxu0 0
          %5701 = vmatpush1.bf16.msra.mxu0 0
          %5702 = vmatprep.subr.bf16.mxu0 0
          %5703 = vmatpush1.bf16.msra.mxu0 0
          %5704 = vmatprep.subr.bf16.mxu0 0
          %5705 = vmatpush1.bf16.msra.mxu0 0
          %5706 = vmatprep.subr.bf16.mxu0 0
          %5707 = vmatpush1.bf16.msra.mxu0 0
          %5708 = vmatprep.subr.bf16.mxu0 0
          %5709 = vmatpush1.bf16.msra.mxu0 0
          %5710 = vmatprep.subr.bf16.mxu0 0
          %5711 = vmatpush1.bf16.msra.mxu0 0
          %5712 = vmatprep.subr.bf16.mxu0 0
          %5713 = vmatpush1.bf16.msra.mxu0 0
          %5714 = vmatprep.subr.bf16.mxu0 0
          %5715 = vmatpush1.bf16.msra.mxu0 0
          %5716 = vmatprep.subr.bf16.mxu0 0
          %5717 = vmatpush1.bf16.msra.mxu0 0
          %5718 = vmatprep.subr.bf16.mxu0 0
          %5719 = vmatpush1.bf16.msra.mxu0 0
          %5720 = vmatprep.subr.bf16.mxu0 0
          %5721 = vmatpush1.bf16.msra.mxu0 0
          %5722 = vmatprep.subr.bf16.mxu0 0
          %5723 = vmatpush1.bf16.msra.mxu0 0
          %5724 = vmatprep.subr.bf16.mxu0 0
          %5725 = vmatpush1.bf16.msra.mxu0 0
          %5726 = vmatprep.mubr.bf16.mxu0 0
          %5727 = vmatmul.mubr.bf16.gmra.mrb[0].mxu0 %v5686
          %v5728 = vpop.f32.mrb[0].mxu0
          %v5729 = vadd.f32 0.0, %v5728
          %v5730 = vpop.f32.mrb[0].mxu0
          %v5731 = vpop.f32.mrb[0].mxu0
          %v5732 = vadd.f32 0.0, %v5731
          %v5733 = vpop.f32.mrb[0].mxu0
          %5734 = vmatprep.mubr.bf16.mxu0 0
          %5735 = vmatmul.mubr.bf16.gmra.mrb[0].mxu0 %v5689
          %v5736 = vpop.f32.mrb[0].mxu0
          %v5737 = vadd.f32 0.0, %v5736
          %v5738 = vpop.f32.mrb[0].mxu0
          %v5739 = vpop.f32.mrb[0].mxu0
          %v5740 = vadd.f32 0.0, %v5739
          %v5741 = vpop.f32.mrb[0].mxu0
          %5742 = vmatprep.mubr.bf16.mxu0 0
          %5743 = vmatmul.mubr.bf16.gmra.mrb[0].mxu0 %v5692
          %v5744 = vpop.f32.mrb[0].mxu0
          %v5745 = vadd.f32 0.0, %v5744
          %v5746 = vpop.f32.mrb[0].mxu0
          %v5747 = vpop.f32.mrb[0].mxu0
          %v5748 = vpop.f32.mrb[0].mxu0
          %5749 = vdwg.mxu0
          %v5750 = vadd.f32 %v5658, %v5729
          %v5751 = vadd.f32 %v5659, %v5732
          %v5752 = vadd.f32 %v5660, %v5737
          %v5753 = vadd.f32 %v5661, %v5740
          %v5754 = vadd.f32 %v5662, %v5745
          %s5755 = sadd.s32 %s3829, 4
          %s5756 = smul.u32 %s5755, 5
          %s5757 = smul.addr %s5756, 4
          %s5758 = scalar_lea.vmem [#allocation2], %s5757
          %v5759 = vld [vmem:[%s5758] sm:$0xf]
          %v5760 = vld [vmem:[%s5758 + $0x4] sm:$0xf]
          %v5761 = vld [vmem:[%s5758 + $0x8] sm:$0xf]
          %v5762 = vld [vmem:[%s5758 + $0xc] sm:$0xf]
          %v5763 = vld [vmem:[%s5758 + $0x10] sm:$0x1]
          %s5764 = scalar_lea.vmem %s4, 160
          %v5765 = vld [vmem:[%s5764] sm:$0xf]
          %v5766 = vld [vmem:[%s5764 + $0x4] sm:$0xf]
          %v5772 = vunpack.c.l.b16 %v5759
          %v5773 = vunpack.c.l.b16 %v5760
          %v5774 = vunpack.c.l.b16 %v5761
          %v5775 = vunpack.c.l.b16 %v5762
          %v5776 = vunpack.c.l.b16 %v5763
          %v5777 = vpack.c.b16 %v5773, %v5772
          %v5778 = vpack.c.b16 %v5775, %v5774
          %v5779 = vpack.c.b16 %v5776, %v5776
          %v5782 = vunpack.c.l.b16 %v5765
          %v5783 = vunpack.c.l.b16 %v5766
          %v5784 = vpack.c.b16 %v5783, %v5782
          %v5787 = vsel %vm3885, %v5777, 0
          %v5790 = vsel %vm3885, %v5778, 0
          %v5793 = vsel %vm3885, %v5779, 0
          %5795 = vmatprep.subr.bf16.mxu0 0
          %5796 = vmatpush1.bf16.msra.mxu0 %v5784
          %5797 = vmatprep.subr.bf16.mxu0 0
          %5798 = vmatpush1.bf16.msra.mxu0 0
          %5799 = vmatprep.subr.bf16.mxu0 0
          %5800 = vmatpush1.bf16.msra.mxu0 0
          %5801 = vmatprep.subr.bf16.mxu0 0
          %5802 = vmatpush1.bf16.msra.mxu0 0
          %5803 = vmatprep.subr.bf16.mxu0 0
          %5804 = vmatpush1.bf16.msra.mxu0 0
          %5805 = vmatprep.subr.bf16.mxu0 0
          %5806 = vmatpush1.bf16.msra.mxu0 0
          %5807 = vmatprep.subr.bf16.mxu0 0
          %5808 = vmatpush1.bf16.msra.mxu0 0
          %5809 = vmatprep.subr.bf16.mxu0 0
          %5810 = vmatpush1.bf16.msra.mxu0 0
          %5811 = vmatprep.subr.bf16.mxu0 0
          %5812 = vmatpush1.bf16.msra.mxu0 0
          %5813 = vmatprep.subr.bf16.mxu0 0
          %5814 = vmatpush1.bf16.msra.mxu0 0
          %5815 = vmatprep.subr.bf16.mxu0 0
          %5816 = vmatpush1.bf16.msra.mxu0 0
          %5817 = vmatprep.subr.bf16.mxu0 0
          %5818 = vmatpush1.bf16.msra.mxu0 0
          %5819 = vmatprep.subr.bf16.mxu0 0
          %5820 = vmatpush1.bf16.msra.mxu0 0
          %5821 = vmatprep.subr.bf16.mxu0 0
          %5822 = vmatpush1.bf16.msra.mxu0 0
          %5823 = vmatprep.subr.bf16.mxu0 0
          %5824 = vmatpush1.bf16.msra.mxu0 0
          %5825 = vmatprep.subr.bf16.mxu0 0
          %5826 = vmatpush1.bf16.msra.mxu0 0
          %5827 = vmatprep.mubr.bf16.mxu0 0
          %5828 = vmatmul.mubr.bf16.gmra.mrb[0].mxu0 %v5787
          %v5829 = vpop.f32.mrb[0].mxu0
          %v5830 = vadd.f32 0.0, %v5829
          %v5831 = vpop.f32.mrb[0].mxu0
          %v5832 = vpop.f32.mrb[0].mxu0
          %v5833 = vadd.f32 0.0, %v5832
          %v5834 = vpop.f32.mrb[0].mxu0
          %5835 = vmatprep.mubr.bf16.mxu0 0
          %5836 = vmatmul.mubr.bf16.gmra.mrb[0].mxu0 %v5790
          %v5837 = vpop.f32.mrb[0].mxu0
          %v5838 = vadd.f32 0.0, %v5837
          %v5839 = vpop.f32.mrb[0].mxu0
          %v5840 = vpop.f32.mrb[0].mxu0
          %v5841 = vadd.f32 0.0, %v5840
          %v5842 = vpop.f32.mrb[0].mxu0
          %5843 = vmatprep.mubr.bf16.mxu0 0
          %5844 = vmatmul.mubr.bf16.gmra.mrb[0].mxu0 %v5793
          %v5845 = vpop.f32.mrb[0].mxu0
          %v5846 = vadd.f32 0.0, %v5845
          %v5847 = vpop.f32.mrb[0].mxu0
          %v5848 = vpop.f32.mrb[0].mxu0
          %v5849 = vpop.f32.mrb[0].mxu0
          %5850 = vdwg.mxu0
          %v5851 = vadd.f32 %v5750, %v5830
          %v5852 = vadd.f32 %v5751, %v5833
          %v5853 = vadd.f32 %v5752, %v5838
          %v5854 = vadd.f32 %v5753, %v5841
          %v5855 = vadd.f32 %v5754, %v5846
          %s5856 = scalar_lea.vmem %s4, 168
          %v5857 = vld [vmem:[%s5856] sm:$0xf]
          %v5858 = vld [vmem:[%s5856 + $0x4] sm:$0xf]
          %v5859 = vshrl.u32 %v5777, 16
          %v5861 = vshll.u32 %v5777, 16
          %v5863 = vrot.slane %v5861, 1
          %v5864 = vor.u32 %v5859, %v5863
          %v5865 = vshll.u32 %v5778, 16
          %v5867 = vrot.slane %v5865, 1
          %v5868 = vsel %vm3856, %v5864, %v5867
          %v5869 = vshrl.u32 %v5778, 16
          %v5871 = vor.u32 %v5869, %v5867
          %v5872 = vshll.u32 %v5779, 16
          %v5874 = vrot.slane %v5872, 1
          %v5875 = vsel %vm3856, %v5871, %v5874
          %v5876 = vshrl.u32 %v5779, 16
          %v5880 = vunpack.c.l.b16 %v5857
          %v5881 = vunpack.c.l.b16 %v5858
          %v5882 = vpack.c.b16 %v5881, %v5880
          %v5885 = vsel %vm3885, %v5868, 0
          %v5888 = vsel %vm3885, %v5875, 0
          %v5891 = vsel %vm3885, %v5876, 0
          %5893 = vmatprep.subr.bf16.mxu0 0
          %5894 = vmatpush1.bf16.msra.mxu0 %v5882
          %5895 = vmatprep.subr.bf16.mxu0 0
          %5896 = vmatpush1.bf16.msra.mxu0 0
          %5897 = vmatprep.subr.bf16.mxu0 0
          %5898 = vmatpush1.bf16.msra.mxu0 0
          %5899 = vmatprep.subr.bf16.mxu0 0
          %5900 = vmatpush1.bf16.msra.mxu0 0
          %5901 = vmatprep.subr.bf16.mxu0 0
          %5902 = vmatpush1.bf16.msra.mxu0 0
          %5903 = vmatprep.subr.bf16.mxu0 0
          %5904 = vmatpush1.bf16.msra.mxu0 0
          %5905 = vmatprep.subr.bf16.mxu0 0
          %5906 = vmatpush1.bf16.msra.mxu0 0
          %5907 = vmatprep.subr.bf16.mxu0 0
          %5908 = vmatpush1.bf16.msra.mxu0 0
          %5909 = vmatprep.subr.bf16.mxu0 0
          %5910 = vmatpush1.bf16.msra.mxu0 0
          %5911 = vmatprep.subr.bf16.mxu0 0
          %5912 = vmatpush1.bf16.msra.mxu0 0
          %5913 = vmatprep.subr.bf16.mxu0 0
          %5914 = vmatpush1.bf16.msra.mxu0 0
          %5915 = vmatprep.subr.bf16.mxu0 0
          %5916 = vmatpush1.bf16.msra.mxu0 0
          %5917 = vmatprep.subr.bf16.mxu0 0
          %5918 = vmatpush1.bf16.msra.mxu0 0
          %5919 = vmatprep.subr.bf16.mxu0 0
          %5920 = vmatpush1.bf16.msra.mxu0 0
          %5921 = vmatprep.subr.bf16.mxu0 0
          %5922 = vmatpush1.bf16.msra.mxu0 0
          %5923 = vmatprep.subr.bf16.mxu0 0
          %5924 = vmatpush1.bf16.msra.mxu0 0
          %5925 = vmatprep.mubr.bf16.mxu0 0
          %5926 = vmatmul.mubr.bf16.gmra.mrb[0].mxu0 %v5885
          %v5927 = vpop.f32.mrb[0].mxu0
          %v5928 = vadd.f32 0.0, %v5927
          %v5929 = vpop.f32.mrb[0].mxu0
          %v5930 = vpop.f32.mrb[0].mxu0
          %v5931 = vadd.f32 0.0, %v5930
          %v5932 = vpop.f32.mrb[0].mxu0
          %5933 = vmatprep.mubr.bf16.mxu0 0
          %5934 = vmatmul.mubr.bf16.gmra.mrb[0].mxu0 %v5888
          %v5935 = vpop.f32.mrb[0].mxu0
          %v5936 = vadd.f32 0.0, %v5935
          %v5937 = vpop.f32.mrb[0].mxu0
          %v5938 = vpop.f32.mrb[0].mxu0
          %v5939 = vadd.f32 0.0, %v5938
          %v5940 = vpop.f32.mrb[0].mxu0
          %5941 = vmatprep.mubr.bf16.mxu0 0
          %5942 = vmatmul.mubr.bf16.gmra.mrb[0].mxu0 %v5891
          %v5943 = vpop.f32.mrb[0].mxu0
          %v5944 = vadd.f32 0.0, %v5943
          %v5945 = vpop.f32.mrb[0].mxu0
          %v5946 = vpop.f32.mrb[0].mxu0
          %v5947 = vpop.f32.mrb[0].mxu0
          %5948 = vdwg.mxu0
          %v5949 = vadd.f32 %v5851, %v5928
          %v5950 = vadd.f32 %v5852, %v5931
          %v5951 = vadd.f32 %v5853, %v5936
          %v5952 = vadd.f32 %v5854, %v5939
          %v5953 = vadd.f32 %v5855, %v5944
          %v5954 = vld [vmem:[%s5758] sm:$0xe]
          %v5955 = vld [vmem:[%s5758 + $0x10] sm:$0x3]
          %s5956 = scalar_lea.vmem %s4, 176
          %v5957 = vld [vmem:[%s5956] sm:$0xf]
          %v5958 = vld [vmem:[%s5956 + $0x4] sm:$0xf]
          %v5961 = vunpack.c.l.b16 %v5954
          %v5962 = vunpack.c.l.b16 %v5955
          %v5963 = vpack.c.b16 %v5773, %v5961
          %v5964 = vpack.c.b16 %v5962, %v5962
          %v5965 = vrot.slane %v5963, 1
          %v5966 = vrot.slane %v5778, 1
          %v5967 = vsel %vm4030, %v5965, %v5966
          %v5968 = vrot.slane %v5964, 1
          %v5969 = vsel %vm4030, %v5966, %v5968
          %v5972 = vunpack.c.l.b16 %v5957
          %v5973 = vunpack.c.l.b16 %v5958
          %v5974 = vpack.c.b16 %v5973, %v5972
          %v5977 = vsel %vm3885, %v5967, 0
          %v5980 = vsel %vm3885, %v5969, 0
          %v5983 = vsel %vm3885, %v5968, 0
          %5985 = vmatprep.subr.bf16.mxu0 0
          %5986 = vmatpush1.bf16.msra.mxu0 %v5974
          %5987 = vmatprep.subr.bf16.mxu0 0
          %5988 = vmatpush1.bf16.msra.mxu0 0
          %5989 = vmatprep.subr.bf16.mxu0 0
          %5990 = vmatpush1.bf16.msra.mxu0 0
          %5991 = vmatprep.subr.bf16.mxu0 0
          %5992 = vmatpush1.bf16.msra.mxu0 0
          %5993 = vmatprep.subr.bf16.mxu0 0
          %5994 = vmatpush1.bf16.msra.mxu0 0
          %5995 = vmatprep.subr.bf16.mxu0 0
          %5996 = vmatpush1.bf16.msra.mxu0 0
          %5997 = vmatprep.subr.bf16.mxu0 0
          %5998 = vmatpush1.bf16.msra.mxu0 0
          %5999 = vmatprep.subr.bf16.mxu0 0
          %6000 = vmatpush1.bf16.msra.mxu0 0
          %6001 = vmatprep.subr.bf16.mxu0 0
          %6002 = vmatpush1.bf16.msra.mxu0 0
          %6003 = vmatprep.subr.bf16.mxu0 0
          %6004 = vmatpush1.bf16.msra.mxu0 0
          %6005 = vmatprep.subr.bf16.mxu0 0
          %6006 = vmatpush1.bf16.msra.mxu0 0
          %6007 = vmatprep.subr.bf16.mxu0 0
          %6008 = vmatpush1.bf16.msra.mxu0 0
          %6009 = vmatprep.subr.bf16.mxu0 0
          %6010 = vmatpush1.bf16.msra.mxu0 0
          %6011 = vmatprep.subr.bf16.mxu0 0
          %6012 = vmatpush1.bf16.msra.mxu0 0
          %6013 = vmatprep.subr.bf16.mxu0 0
          %6014 = vmatpush1.bf16.msra.mxu0 0
          %6015 = vmatprep.subr.bf16.mxu0 0
          %6016 = vmatpush1.bf16.msra.mxu0 0
          %6017 = vmatprep.mubr.bf16.mxu0 0
          %6018 = vmatmul.mubr.bf16.gmra.mrb[0].mxu0 %v5977
          %v6019 = vpop.f32.mrb[0].mxu0
          %v6020 = vadd.f32 0.0, %v6019
          %v6021 = vpop.f32.mrb[0].mxu0
          %v6022 = vpop.f32.mrb[0].mxu0
          %v6023 = vadd.f32 0.0, %v6022
          %v6024 = vpop.f32.mrb[0].mxu0
          %6025 = vmatprep.mubr.bf16.mxu0 0
          %6026 = vmatmul.mubr.bf16.gmra.mrb[0].mxu0 %v5980
          %v6027 = vpop.f32.mrb[0].mxu0
          %v6028 = vadd.f32 0.0, %v6027
          %v6029 = vpop.f32.mrb[0].mxu0
          %v6030 = vpop.f32.mrb[0].mxu0
          %v6031 = vadd.f32 0.0, %v6030
          %v6032 = vpop.f32.mrb[0].mxu0
          %6033 = vmatprep.mubr.bf16.mxu0 0
          %6034 = vmatmul.mubr.bf16.gmra.mrb[0].mxu0 %v5983
          %v6035 = vpop.f32.mrb[0].mxu0
          %v6036 = vadd.f32 0.0, %v6035
          %v6037 = vpop.f32.mrb[0].mxu0
          %v6038 = vpop.f32.mrb[0].mxu0
          %v6039 = vpop.f32.mrb[0].mxu0
          %6040 = vdwg.mxu0
          %v6041 = vadd.f32 %v5949, %v6020
          %v6042 = vadd.f32 %v5950, %v6023
          %v6043 = vadd.f32 %v5951, %v6028
          %v6044 = vadd.f32 %v5952, %v6031
          %v6045 = vadd.f32 %v5953, %v6036
          %s6046 = scalar_lea.vmem %s4, 184
          %v6047 = vld [vmem:[%s6046] sm:$0xf]
          %v6048 = vld [vmem:[%s6046 + $0x4] sm:$0xf]
          %v6050 = vshrl.u32 %v5963, 16
          %v6052 = vrot.slane %v6050, 1
          %v6053 = vshll.u32 %v5963, 16
          %v6055 = vrot.slane %v6053, 2
          %v6056 = vor.u32 %v6052, %v6055
          %v6057 = vrot.slane %v5869, 1
          %v6058 = vrot.slane %v5865, 2
          %v6059 = vor.u32 %v6057, %v6058
          %v6060 = vsel %vm4115, %v6056, %v6059
          %v6062 = vshrl.u32 %v5964, 16
          %v6064 = vrot.slane %v6062, 1
          %v6065 = vshll.u32 %v5964, 16
          %v6067 = vrot.slane %v6065, 2
          %v6068 = vor.u32 %v6064, %v6067
          %v6069 = vsel %vm4115, %v6059, %v6068
          %v6072 = vunpack.c.l.b16 %v6047
          %v6073 = vunpack.c.l.b16 %v6048
          %v6074 = vpack.c.b16 %v6073, %v6072
          %v6077 = vsel %vm3885, %v6060, 0
          %v6080 = vsel %vm3885, %v6069, 0
          %v6083 = vsel %vm3885, %v6064, 0
          %6085 = vmatprep.subr.bf16.mxu0 0
          %6086 = vmatpush1.bf16.msra.mxu0 %v6074
          %6087 = vmatprep.subr.bf16.mxu0 0
          %6088 = vmatpush1.bf16.msra.mxu0 0
          %6089 = vmatprep.subr.bf16.mxu0 0
          %6090 = vmatpush1.bf16.msra.mxu0 0
          %6091 = vmatprep.subr.bf16.mxu0 0
          %6092 = vmatpush1.bf16.msra.mxu0 0
          %6093 = vmatprep.subr.bf16.mxu0 0
          %6094 = vmatpush1.bf16.msra.mxu0 0
          %6095 = vmatprep.subr.bf16.mxu0 0
          %6096 = vmatpush1.bf16.msra.mxu0 0
          %6097 = vmatprep.subr.bf16.mxu0 0
          %6098 = vmatpush1.bf16.msra.mxu0 0
          %6099 = vmatprep.subr.bf16.mxu0 0
          %6100 = vmatpush1.bf16.msra.mxu0 0
          %6101 = vmatprep.subr.bf16.mxu0 0
          %6102 = vmatpush1.bf16.msra.mxu0 0
          %6103 = vmatprep.subr.bf16.mxu0 0
          %6104 = vmatpush1.bf16.msra.mxu0 0
          %6105 = vmatprep.subr.bf16.mxu0 0
          %6106 = vmatpush1.bf16.msra.mxu0 0
          %6107 = vmatprep.subr.bf16.mxu0 0
          %6108 = vmatpush1.bf16.msra.mxu0 0
          %6109 = vmatprep.subr.bf16.mxu0 0
          %6110 = vmatpush1.bf16.msra.mxu0 0
          %6111 = vmatprep.subr.bf16.mxu0 0
          %6112 = vmatpush1.bf16.msra.mxu0 0
          %6113 = vmatprep.subr.bf16.mxu0 0
          %6114 = vmatpush1.bf16.msra.mxu0 0
          %6115 = vmatprep.subr.bf16.mxu0 0
          %6116 = vmatpush1.bf16.msra.mxu0 0
          %6117 = vmatprep.mubr.bf16.mxu0 0
          %6118 = vmatmul.mubr.bf16.gmra.mrb[0].mxu0 %v6077
          %v6119 = vpop.f32.mrb[0].mxu0
          %v6120 = vadd.f32 0.0, %v6119
          %v6121 = vpop.f32.mrb[0].mxu0
          %v6122 = vpop.f32.mrb[0].mxu0
          %v6123 = vadd.f32 0.0, %v6122
          %v6124 = vpop.f32.mrb[0].mxu0
          %6125 = vmatprep.mubr.bf16.mxu0 0
          %6126 = vmatmul.mubr.bf16.gmra.mrb[0].mxu0 %v6080
          %v6127 = vpop.f32.mrb[0].mxu0
          %v6128 = vadd.f32 0.0, %v6127
          %v6129 = vpop.f32.mrb[0].mxu0
          %v6130 = vpop.f32.mrb[0].mxu0
          %v6131 = vadd.f32 0.0, %v6130
          %v6132 = vpop.f32.mrb[0].mxu0
          %6133 = vmatprep.mubr.bf16.mxu0 0
          %6134 = vmatmul.mubr.bf16.gmra.mrb[0].mxu0 %v6083
          %v6135 = vpop.f32.mrb[0].mxu0
          %v6136 = vadd.f32 0.0, %v6135
          %v6137 = vpop.f32.mrb[0].mxu0
          %v6138 = vpop.f32.mrb[0].mxu0
          %v6139 = vpop.f32.mrb[0].mxu0
          %6140 = vdwg.mxu0
          %v6141 = vadd.f32 %v6041, %v6120
          %v6142 = vadd.f32 %v6042, %v6123
          %v6143 = vadd.f32 %v6043, %v6128
          %v6144 = vadd.f32 %v6044, %v6131
          %v6145 = vadd.f32 %v6045, %v6136
          %v6146 = vld [vmem:[%s5758] sm:$0xc]
          %v6147 = vld [vmem:[%s5758 + $0x10] sm:$0x7]
          %s6148 = scalar_lea.vmem %s4, 192
          %v6149 = vld [vmem:[%s6148] sm:$0xf]
          %v6150 = vld [vmem:[%s6148 + $0x4] sm:$0xf]
          %v6153 = vunpack.c.l.b16 %v6146
          %v6154 = vunpack.c.l.b16 %v6147
          %v6155 = vpack.c.b16 %v5773, %v6153
          %v6156 = vpack.c.b16 %v6154, %v6154
          %v6157 = vrot.slane %v6155, 2
          %v6158 = vrot.slane %v5778, 2
          %v6159 = vsel %vm4224, %v6157, %v6158
          %v6160 = vrot.slane %v6156, 2
          %v6161 = vsel %vm4224, %v6158, %v6160
          %v6164 = vunpack.c.l.b16 %v6149
          %v6165 = vunpack.c.l.b16 %v6150
          %v6166 = vpack.c.b16 %v6165, %v6164
          %v6169 = vsel %vm3885, %v6159, 0
          %v6172 = vsel %vm3885, %v6161, 0
          %v6175 = vsel %vm3885, %v6160, 0
          %6177 = vmatprep.subr.bf16.mxu0 0
          %6178 = vmatpush1.bf16.msra.mxu0 %v6166
          %6179 = vmatprep.subr.bf16.mxu0 0
          %6180 = vmatpush1.bf16.msra.mxu0 0
          %6181 = vmatprep.subr.bf16.mxu0 0
          %6182 = vmatpush1.bf16.msra.mxu0 0
          %6183 = vmatprep.subr.bf16.mxu0 0
          %6184 = vmatpush1.bf16.msra.mxu0 0
          %6185 = vmatprep.subr.bf16.mxu0 0
          %6186 = vmatpush1.bf16.msra.mxu0 0
          %6187 = vmatprep.subr.bf16.mxu0 0
          %6188 = vmatpush1.bf16.msra.mxu0 0
          %6189 = vmatprep.subr.bf16.mxu0 0
          %6190 = vmatpush1.bf16.msra.mxu0 0
          %6191 = vmatprep.subr.bf16.mxu0 0
          %6192 = vmatpush1.bf16.msra.mxu0 0
          %6193 = vmatprep.subr.bf16.mxu0 0
          %6194 = vmatpush1.bf16.msra.mxu0 0
          %6195 = vmatprep.subr.bf16.mxu0 0
          %6196 = vmatpush1.bf16.msra.mxu0 0
          %6197 = vmatprep.subr.bf16.mxu0 0
          %6198 = vmatpush1.bf16.msra.mxu0 0
          %6199 = vmatprep.subr.bf16.mxu0 0
          %6200 = vmatpush1.bf16.msra.mxu0 0
          %6201 = vmatprep.subr.bf16.mxu0 0
          %6202 = vmatpush1.bf16.msra.mxu0 0
          %6203 = vmatprep.subr.bf16.mxu0 0
          %6204 = vmatpush1.bf16.msra.mxu0 0
          %6205 = vmatprep.subr.bf16.mxu0 0
          %6206 = vmatpush1.bf16.msra.mxu0 0
          %6207 = vmatprep.subr.bf16.mxu0 0
          %6208 = vmatpush1.bf16.msra.mxu0 0
          %6209 = vmatprep.mubr.bf16.mxu0 0
          %6210 = vmatmul.mubr.bf16.gmra.mrb[0].mxu0 %v6169
          %v6211 = vpop.f32.mrb[0].mxu0
          %v6212 = vadd.f32 0.0, %v6211
          %v6213 = vpop.f32.mrb[0].mxu0
          %v6214 = vpop.f32.mrb[0].mxu0
          %v6215 = vadd.f32 0.0, %v6214
          %v6216 = vpop.f32.mrb[0].mxu0
          %6217 = vmatprep.mubr.bf16.mxu0 0
          %6218 = vmatmul.mubr.bf16.gmra.mrb[0].mxu0 %v6172
          %v6219 = vpop.f32.mrb[0].mxu0
          %v6220 = vadd.f32 0.0, %v6219
          %v6221 = vpop.f32.mrb[0].mxu0
          %v6222 = vpop.f32.mrb[0].mxu0
          %v6223 = vadd.f32 0.0, %v6222
          %v6224 = vpop.f32.mrb[0].mxu0
          %6225 = vmatprep.mubr.bf16.mxu0 0
          %6226 = vmatmul.mubr.bf16.gmra.mrb[0].mxu0 %v6175
          %v6227 = vpop.f32.mrb[0].mxu0
          %v6228 = vadd.f32 0.0, %v6227
          %v6229 = vpop.f32.mrb[0].mxu0
          %v6230 = vpop.f32.mrb[0].mxu0
          %v6231 = vpop.f32.mrb[0].mxu0
          %6232 = vdwg.mxu0
          %v6233 = vadd.f32 %v6141, %v6212
          %v6234 = vadd.f32 %v6142, %v6215
          %v6235 = vadd.f32 %v6143, %v6220
          %v6236 = vadd.f32 %v6144, %v6223
          %v6237 = vadd.f32 %v6145, %v6228
          %v6239 = vlaneseq
          %v6240 = vshrl.u32 %v6239, 7
          %v6241 = vsub.s32 0, %v6240
          %v6242 = vrot.slane %v3822, %v6241
          %vm6244 = vcmask 269312
          %v6246 = vsel %vm6244, %v3819, 0
          %v6249 = vsel %vm6244, %v3820, 0
          %v6252 = vsel %vm6244, %v3821, 0
          %vm6254 = vcmask 1040384
          %v6256 = vsel %vm6254, %v6237, 0
          %6258 = vmatprep.subr.mxu0 0.0
          %6259 = vmatpush1.msra.mxu0 %v6233
          %6260 = vmatprep.subr.mxu0 0.0
          %6261 = vmatpush1.msra.mxu0 %v6234
          %6262 = vmatprep.subr.mxu0 0.0
          %6263 = vmatpush1.msra.mxu0 %v6235
          %6264 = vmatprep.subr.mxu0 0.0
          %6265 = vmatpush1.msra.mxu0 %v6236
          %6266 = vmatprep.subr.mxu0 0.0
          %6267 = vmatpush1.msra.mxu0 %v6256
          %6268 = vmatprep.subr.mxu0 0.0
          %6269 = vmatpush1.msra.mxu0 0.0
          %6270 = vmatprep.subr.mxu0 0.0
          %6271 = vmatpush1.msra.mxu0 0.0
          %6272 = vmatprep.subr.mxu0 0.0
          %6273 = vmatpush1.msra.mxu0 0.0
          %6274 = vmatprep.subr.mxu0 0.0
          %6275 = vmatpush1.msra.mxu0 0.0
          %6276 = vmatprep.subr.mxu0 0.0
          %6277 = vmatpush1.msra.mxu0 0.0
          %6278 = vmatprep.subr.mxu0 0.0
          %6279 = vmatpush1.msra.mxu0 0.0
          %6280 = vmatprep.subr.mxu0 0.0
          %6281 = vmatpush1.msra.mxu0 0.0
          %6282 = vmatprep.subr.mxu0 0.0
          %6283 = vmatpush1.msra.mxu0 0.0
          %6284 = vmatprep.subr.mxu0 0.0
          %6285 = vmatpush1.msra.mxu0 0.0
          %6286 = vmatprep.subr.mxu0 0.0
          %6287 = vmatpush1.msra.mxu0 0.0
          %6288 = vmatprep.subr.mxu0 0.0
          %6289 = vmatpush1.msra.mxu0 0.0
          %6290 = vmatprep.subr.mxu0 0.0
          %6291 = vmatpush1.msra.mxu0 0.0
          %6292 = vmatprep.subr.mxu0 0.0
          %6293 = vmatpush1.msra.mxu0 0.0
          %6294 = vmatprep.subr.mxu0 0.0
          %6295 = vmatpush1.msra.mxu0 0.0
          %6296 = vmatprep.subr.mxu0 0.0
          %6297 = vmatpush1.msra.mxu0 0.0
          %6298 = vmatprep.subr.mxu0 0.0
          %6299 = vmatpush1.msra.mxu0 0.0
          %6300 = vmatprep.subr.mxu0 0.0
          %6301 = vmatpush1.msra.mxu0 0.0
          %6302 = vmatprep.subr.mxu0 0.0
          %6303 = vmatpush1.msra.mxu0 0.0
          %6304 = vmatprep.subr.mxu0 0.0
          %6305 = vmatpush1.msra.mxu0 0.0
          %6306 = vmatprep.subr.mxu0 0.0
          %6307 = vmatpush1.msra.mxu0 0.0
          %6308 = vmatprep.subr.mxu0 0.0
          %6309 = vmatpush1.msra.mxu0 0.0
          %6310 = vmatprep.subr.mxu0 0.0
          %6311 = vmatpush1.msra.mxu0 0.0
          %6312 = vmatprep.subr.mxu0 0.0
          %6313 = vmatpush1.msra.mxu0 0.0
          %6314 = vmatprep.subr.mxu0 0.0
          %6315 = vmatpush1.msra.mxu0 0.0
          %6316 = vmatprep.subr.mxu0 0.0
          %6317 = vmatpush1.msra.mxu0 0.0
          %6318 = vmatprep.subr.mxu0 0.0
          %6319 = vmatpush1.msra.mxu0 0.0
          %6320 = vmatprep.subr.mxu0 0.0
          %6321 = vmatpush1.msra.mxu0 0.0
          %6322 = vmatprep.mubr.f32.mxu0 0.0
          %6323 = vmatmul.mubr.f32.gmra.mrb[0].mxu0 %v6246
          %v6324 = vpop.f32.mrb[0].mxu0
          %v6325 = vadd.f32 %v6242, %v6324
          %v6326 = vpop.f32.mrb[0].mxu0
          %6327 = vmatprep.mubr.f32.mxu0 0.0
          %6328 = vmatmul.mubr.f32.gmra.mrb[0].mxu0 %v6249
          %v6329 = vpop.f32.mrb[0].mxu0
          %v6330 = vadd.f32 %v6242, %v6329
          %v6331 = vpop.f32.mrb[0].mxu0
          %6332 = vmatprep.mubr.f32.mxu0 0.0
          %6333 = vmatmul.mubr.f32.gmra.mrb[0].mxu0 %v6252
          %v6334 = vpop.f32.mrb[0].mxu0
          %v6335 = vadd.f32 %v6242, %v6334
          %v6336 = vpop.f32.mrb[0].mxu0
          %6337 = vdwg.mxu0
          %v6338 = vmax.f32 %v6325, 0.0
          %v6339 = vmax.f32 %v6330, 0.0
          %v6340 = vmax.f32 %v6335, 0.0
          %v6341 = vpack.c.bf16 %v6339, %v6338
          %v6342 = vpack.c.bf16 %v6340, %v6340
          %v6345 = vunpack.c.l.b16 %v6341
          %v6346 = vunpack.c.h.b16 %v6341
          %v6347 = vunpack.c.l.b16 %v6342
          %v6348 = vpack.c.b16 %v6345, %v6345
          %v6349 = vpack.c.b16 %v6346, %v6346
          %v6350 = vpack.c.b16 %v6347, %v6347
          %s6354 = smul.u32 %s3824, 3
          %s6355 = smul.addr %s6354, 4
          %s6356 = scalar_lea.vmem [#allocation3], %s6355
          %vm6357 = vcmask 257024
          %6358 = vst.msk [vmem:[%s6356] sm:$0xf] %vm6357, %v6348
          %6359 = vst.msk [vmem:[%s6356 + $0x4] sm:$0xf] %vm6357, %v6349
          %vm6360 = vcmask 253952
          %vm6361 = vsmask.f32 256
          %vm6362 = vmand %vm6360, %vm6361
          %v6363 = vld [vmem:[%s6356 + $0x8] sm:$0x1]
          %v6364 = vsel %vm6362, %v6350, %v6363
          %6365 = vst [vmem:[%s6356 + $0x8] sm:$0x1] %v6364
        $region80: #{dqn_forward.1} parent=67 // loop_footer
          %s3828 = sadd.s32 1, %s3824
        $region81: #{dqn_forward.1} parent=67 // loop_footer_branch
          %3823 = sbr.rel target = $region77
        $region82: #{dqn_forward.1} parent=67 // loop_exit
          _
        %v6366 = vld [vmem:[%s9] sm:$0x7f]
        %v6367 = vld [vmem:[%s8] sm:$0x1]
        loop: start=0, step=1, limit=2
        $region83: #{dqn_forward.1} parent=67 // loop_pre_header
          _
        $region84: #{dqn_forward.1} parent=67 // loop_header
          %s6369 = sphi 0, %s6373
          %p6370 = scmp.ge.s32.totalorder %s6369, 2
        $region85: #{dqn_forward.1} parent=67 // loop_header_branch
          %6372 = sbr.rel (%p6370) target = $region89
        $region86: #{dqn_forward.1} parent=67 // loop_body
          %s6374 = smul.u32 %s6369, 2
          %s6375 = smul.u32 %s6374, 3
          %s6376 = smul.addr %s6375, 4
          %s6377 = scalar_lea.vmem [#allocation3], %s6376
          %v6378 = vld [vmem:[%s6377] sm:$0xf]
          %v6379 = vld [vmem:[%s6377 + $0x4] sm:$0x7]
          %v6380 = vld [vmem:[%s7] sm:$0xf]
          %v6381 = vld [vmem:[%s7 + $0x4] sm:$0xf]
          %v6382 = vld [vmem:[%s7 + $0x8] sm:$0xf]
          %v6383 = vld [vmem:[%s7 + $0xc] sm:$0xf]
          %s6384 = scalar_lea.vmem %s7, 16
          %v6385 = vld [vmem:[%s6384] sm:$0xf]
          %v6386 = vld [vmem:[%s6384 + $0x4] sm:$0xf]
          %v6387 = vld [vmem:[%s6384 + $0x8] sm:$0xf]
          %v6388 = vld [vmem:[%s6384 + $0xc] sm:$0xf]
          %v6391 = vunpack.c.l.b16 %v6378
          %v6392 = vunpack.c.l.b16 %v6379
          %v6393 = vpack.c.b16 %v6392, %v6391
          %v6395 = vshrl.u32 %v6393, 16
          %v6397 = vshll.u32 %v6393, 16
          %v6399 = vrot.slane %v6397, 1
          %v6400 = vor.u32 %v6395, %v6399
          %v6405 = vunpack.c.l.b16 %v6385
          %v6406 = vunpack.c.l.b16 %v6386
          %v6407 = vunpack.c.l.b16 %v6387
          %v6408 = vunpack.c.l.b16 %v6388
          %v6409 = vpack.c.b16 %v6406, %v6405
          %v6410 = vpack.c.b16 %v6408, %v6407
          %vm6413 = vcmask 261120
          %v6415 = vsel %vm6413, %v6400, 0
          %6417 = vmatprep.subr.bf16.mxu0 0
          %6418 = vmatpush1.bf16.msra.mxu0 %v6409
          %6419 = vmatprep.subr.bf16.mxu0 0
          %6420 = vmatpush1.bf16.msra.mxu0 %v6410
          %6421 = vmatprep.subr.bf16.mxu0 0
          %6422 = vmatpush1.bf16.msra.mxu0 0
          %6423 = vmatprep.subr.bf16.mxu0 0
          %6424 = vmatpush1.bf16.msra.mxu0 0
          %6425 = vmatprep.subr.bf16.mxu0 0
          %6426 = vmatpush1.bf16.msra.mxu0 0
          %6427 = vmatprep.subr.bf16.mxu0 0
          %6428 = vmatpush1.bf16.msra.mxu0 0
          %6429 = vmatprep.subr.bf16.mxu0 0
          %6430 = vmatpush1.bf16.msra.mxu0 0
          %6431 = vmatprep.subr.bf16.mxu0 0
          %6432 = vmatpush1.bf16.msra.mxu0 0
          %6433 = vmatprep.subr.bf16.mxu0 0
          %6434 = vmatpush1.bf16.msra.mxu0 0
          %6435 = vmatprep.subr.bf16.mxu0 0
          %6436 = vmatpush1.bf16.msra.mxu0 0
          %6437 = vmatprep.subr.bf16.mxu0 0
          %6438 = vmatpush1.bf16.msra.mxu0 0
          %6439 = vmatprep.subr.bf16.mxu0 0
          %6440 = vmatpush1.bf16.msra.mxu0 0
          %6441 = vmatprep.subr.bf16.mxu0 0
          %6442 = vmatpush1.bf16.msra.mxu0 0
          %6443 = vmatprep.subr.bf16.mxu0 0
          %6444 = vmatpush1.bf16.msra.mxu0 0
          %6445 = vmatprep.subr.bf16.mxu0 0
          %6446 = vmatpush1.bf16.msra.mxu0 0
          %6447 = vmatprep.subr.bf16.mxu0 0
          %6448 = vmatpush1.bf16.msra.mxu0 0
          %6449 = vmatprep.mubr.bf16.mxu0 0
          %6450 = vmatmul.mubr.bf16.gmra.mrb[0].mxu0 %v6415
          %v6451 = vpop.f32.mrb[0].mxu0
          %v6452 = vadd.f32 0.0, %v6451
          %v6453 = vpop.f32.mrb[0].mxu0
          %v6454 = vpop.f32.mrb[0].mxu0
          %v6455 = vadd.f32 0.0, %v6454
          %v6456 = vpop.f32.mrb[0].mxu0
          %6457 = vdwg.mxu0
          %v6462 = vunpack.c.l.b16 %v6380
          %v6463 = vunpack.c.l.b16 %v6381
          %v6464 = vunpack.c.l.b16 %v6382
          %v6465 = vunpack.c.l.b16 %v6383
          %v6466 = vpack.c.b16 %v6463, %v6462
          %v6467 = vpack.c.b16 %v6465, %v6464
          %v6470 = vsel %vm6413, %v6393, 0
          %6472 = vmatprep.subr.bf16.mxu0 0
          %6473 = vmatpush1.bf16.msra.mxu0 %v6466
          %6474 = vmatprep.subr.bf16.mxu0 0
          %6475 = vmatpush1.bf16.msra.mxu0 %v6467
          %6476 = vmatprep.subr.bf16.mxu0 0
          %6477 = vmatpush1.bf16.msra.mxu0 0
          %6478 = vmatprep.subr.bf16.mxu0 0
          %6479 = vmatpush1.bf16.msra.mxu0 0
          %6480 = vmatprep.subr.bf16.mxu0 0
          %6481 = vmatpush1.bf16.msra.mxu0 0
          %6482 = vmatprep.subr.bf16.mxu0 0
          %6483 = vmatpush1.bf16.msra.mxu0 0
          %6484 = vmatprep.subr.bf16.mxu0 0
          %6485 = vmatpush1.bf16.msra.mxu0 0
          %6486 = vmatprep.subr.bf16.mxu0 0
          %6487 = vmatpush1.bf16.msra.mxu0 0
          %6488 = vmatprep.subr.bf16.mxu0 0
          %6489 = vmatpush1.bf16.msra.mxu0 0
          %6490 = vmatprep.subr.bf16.mxu0 0
          %6491 = vmatpush1.bf16.msra.mxu0 0
          %6492 = vmatprep.subr.bf16.mxu0 0
          %6493 = vmatpush1.bf16.msra.mxu0 0
          %6494 = vmatprep.subr.bf16.mxu0 0
          %6495 = vmatpush1.bf16.msra.mxu0 0
          %6496 = vmatprep.subr.bf16.mxu0 0
          %6497 = vmatpush1.bf16.msra.mxu0 0
          %6498 = vmatprep.subr.bf16.mxu0 0
          %6499 = vmatpush1.bf16.msra.mxu0 0
          %6500 = vmatprep.subr.bf16.mxu0 0
          %6501 = vmatpush1.bf16.msra.mxu0 0
          %6502 = vmatprep.subr.bf16.mxu0 0
          %6503 = vmatpush1.bf16.msra.mxu0 0
          %6504 = vmatprep.mubr.bf16.mxu0 0
          %6505 = vmatmul.mubr.bf16.gmra.mrb[0].mxu0 %v6470
          %v6506 = vpop.f32.mrb[0].mxu0
          %v6507 = vadd.f32 %v6452, %v6506
          %v6508 = vpop.f32.mrb[0].mxu0
          %v6509 = vpop.f32.mrb[0].mxu0
          %v6510 = vadd.f32 %v6455, %v6509
          %v6511 = vpop.f32.mrb[0].mxu0
          %6512 = vdwg.mxu0
          %v6513 = vld [vmem:[%s6377] sm:$0xe]
          %v6514 = vld [vmem:[%s6377 + $0x4] sm:$0xf]
          %s6515 = scalar_lea.vmem %s7, 32
          %v6516 = vld [vmem:[%s6515] sm:$0xf]
          %v6517 = vld [vmem:[%s6515 + $0x4] sm:$0xf]
          %v6518 = vld [vmem:[%s6515 + $0x8] sm:$0xf]
          %v6519 = vld [vmem:[%s6515 + $0xc] sm:$0xf]
          %v6522 = vunpack.c.l.b16 %v6513
          %v6523 = vunpack.c.l.b16 %v6514
          %v6524 = vpack.c.b16 %v6523, %v6522
          %v6525 = vrot.slane %v6524, 1
          %v6530 = vunpack.c.l.b16 %v6516
          %v6531 = vunpack.c.l.b16 %v6517
          %v6532 = vunpack.c.l.b16 %v6518
          %v6533 = vunpack.c.l.b16 %v6519
          %v6534 = vpack.c.b16 %v6531, %v6530
          %v6535 = vpack.c.b16 %v6533, %v6532
          %v6539 = vsel %vm6413, %v6525, 0
          %6541 = vmatprep.subr.bf16.mxu0 0
          %6542 = vmatpush1.bf16.msra.mxu0 %v6534
          %6543 = vmatprep.subr.bf16.mxu0 0
          %6544 = vmatpush1.bf16.msra.mxu0 %v6535
          %6545 = vmatprep.subr.bf16.mxu0 0
          %6546 = vmatpush1.bf16.msra.mxu0 0
          %6547 = vmatprep.subr.bf16.mxu0 0
          %6548 = vmatpush1.bf16.msra.mxu0 0
          %6549 = vmatprep.subr.bf16.mxu0 0
          %6550 = vmatpush1.bf16.msra.mxu0 0
          %6551 = vmatprep.subr.bf16.mxu0 0
          %6552 = vmatpush1.bf16.msra.mxu0 0
          %6553 = vmatprep.subr.bf16.mxu0 0
          %6554 = vmatpush1.bf16.msra.mxu0 0
          %6555 = vmatprep.subr.bf16.mxu0 0
          %6556 = vmatpush1.bf16.msra.mxu0 0
          %6557 = vmatprep.subr.bf16.mxu0 0
          %6558 = vmatpush1.bf16.msra.mxu0 0
          %6559 = vmatprep.subr.bf16.mxu0 0
          %6560 = vmatpush1.bf16.msra.mxu0 0
          %6561 = vmatprep.subr.bf16.mxu0 0
          %6562 = vmatpush1.bf16.msra.mxu0 0
          %6563 = vmatprep.subr.bf16.mxu0 0
          %6564 = vmatpush1.bf16.msra.mxu0 0
          %6565 = vmatprep.subr.bf16.mxu0 0
          %6566 = vmatpush1.bf16.msra.mxu0 0
          %6567 = vmatprep.subr.bf16.mxu0 0
          %6568 = vmatpush1.bf16.msra.mxu0 0
          %6569 = vmatprep.subr.bf16.mxu0 0
          %6570 = vmatpush1.bf16.msra.mxu0 0
          %6571 = vmatprep.subr.bf16.mxu0 0
          %6572 = vmatpush1.bf16.msra.mxu0 0
          %6573 = vmatprep.mubr.bf16.mxu0 0
          %6574 = vmatmul.mubr.bf16.gmra.mrb[0].mxu0 %v6539
          %v6575 = vpop.f32.mrb[0].mxu0
          %v6576 = vadd.f32 0.0, %v6575
          %v6577 = vpop.f32.mrb[0].mxu0
          %v6578 = vpop.f32.mrb[0].mxu0
          %v6579 = vadd.f32 0.0, %v6578
          %v6580 = vpop.f32.mrb[0].mxu0
          %6581 = vdwg.mxu0
          %v6582 = vadd.f32 %v6507, %v6576
          %v6583 = vadd.f32 %v6510, %v6579
          %s6584 = scalar_lea.vmem %s7, 48
          %v6585 = vld [vmem:[%s6584] sm:$0xf]
          %v6586 = vld [vmem:[%s6584 + $0x4] sm:$0xf]
          %v6587 = vld [vmem:[%s6584 + $0x8] sm:$0xf]
          %v6588 = vld [vmem:[%s6584 + $0xc] sm:$0xf]
          %v6590 = vshrl.u32 %v6524, 16
          %v6592 = vrot.slane %v6590, 1
          %v6593 = vshll.u32 %v6524, 16
          %v6595 = vrot.slane %v6593, 2
          %v6596 = vor.u32 %v6592, %v6595
          %v6601 = vunpack.c.l.b16 %v6585
          %v6602 = vunpack.c.l.b16 %v6586
          %v6603 = vunpack.c.l.b16 %v6587
          %v6604 = vunpack.c.l.b16 %v6588
          %v6605 = vpack.c.b16 %v6602, %v6601
          %v6606 = vpack.c.b16 %v6604, %v6603
          %v6610 = vsel %vm6413, %v6596, 0
          %6612 = vmatprep.subr.bf16.mxu0 0
          %6613 = vmatpush1.bf16.msra.mxu0 %v6605
          %6614 = vmatprep.subr.bf16.mxu0 0
          %6615 = vmatpush1.bf16.msra.mxu0 %v6606
          %6616 = vmatprep.subr.bf16.mxu0 0
          %6617 = vmatpush1.bf16.msra.mxu0 0
          %6618 = vmatprep.subr.bf16.mxu0 0
          %6619 = vmatpush1.bf16.msra.mxu0 0
          %6620 = vmatprep.subr.bf16.mxu0 0
          %6621 = vmatpush1.bf16.msra.mxu0 0
          %6622 = vmatprep.subr.bf16.mxu0 0
          %6623 = vmatpush1.bf16.msra.mxu0 0
          %6624 = vmatprep.subr.bf16.mxu0 0
          %6625 = vmatpush1.bf16.msra.mxu0 0
          %6626 = vmatprep.subr.bf16.mxu0 0
          %6627 = vmatpush1.bf16.msra.mxu0 0
          %6628 = vmatprep.subr.bf16.mxu0 0
          %6629 = vmatpush1.bf16.msra.mxu0 0
          %6630 = vmatprep.subr.bf16.mxu0 0
          %6631 = vmatpush1.bf16.msra.mxu0 0
          %6632 = vmatprep.subr.bf16.mxu0 0
          %6633 = vmatpush1.bf16.msra.mxu0 0
          %6634 = vmatprep.subr.bf16.mxu0 0
          %6635 = vmatpush1.bf16.msra.mxu0 0
          %6636 = vmatprep.subr.bf16.mxu0 0
          %6637 = vmatpush1.bf16.msra.mxu0 0
          %6638 = vmatprep.subr.bf16.mxu0 0
          %6639 = vmatpush1.bf16.msra.mxu0 0
          %6640 = vmatprep.subr.bf16.mxu0 0
          %6641 = vmatpush1.bf16.msra.mxu0 0
          %6642 = vmatprep.subr.bf16.mxu0 0
          %6643 = vmatpush1.bf16.msra.mxu0 0
          %6644 = vmatprep.mubr.bf16.mxu0 0
          %6645 = vmatmul.mubr.bf16.gmra.mrb[0].mxu0 %v6610
          %v6646 = vpop.f32.mrb[0].mxu0
          %v6647 = vadd.f32 0.0, %v6646
          %v6648 = vpop.f32.mrb[0].mxu0
          %v6649 = vpop.f32.mrb[0].mxu0
          %v6650 = vadd.f32 0.0, %v6649
          %v6651 = vpop.f32.mrb[0].mxu0
          %6652 = vdwg.mxu0
          %v6653 = vadd.f32 %v6582, %v6647
          %v6654 = vadd.f32 %v6583, %v6650
          %v6655 = vld [vmem:[%s6377] sm:$0xc]
          %v6656 = vld [vmem:[%s6377 + $0x4] sm:$0xf]
          %v6657 = vld [vmem:[%s6377 + $0x8] sm:$0x1]
          %s6658 = scalar_lea.vmem %s7, 64
          %v6659 = vld [vmem:[%s6658] sm:$0xf]
          %v6660 = vld [vmem:[%s6658 + $0x4] sm:$0xf]
          %v6661 = vld [vmem:[%s6658 + $0x8] sm:$0xf]
          %v6662 = vld [vmem:[%s6658 + $0xc] sm:$0xf]
          %v6666 = vunpack.c.l.b16 %v6655
          %v6667 = vunpack.c.l.b16 %v6656
          %v6668 = vunpack.c.l.b16 %v6657
          %v6669 = vpack.c.b16 %v6667, %v6666
          %v6670 = vpack.c.b16 %v6668, %v6668
          %vm6671 = vcmask 1045504
          %v6672 = vrot.slane %v6669, 2
          %v6673 = vrot.slane %v6670, 2
          %v6674 = vsel %vm6671, %v6672, %v6673
          %v6679 = vunpack.c.l.b16 %v6659
          %v6680 = vunpack.c.l.b16 %v6660
          %v6681 = vunpack.c.l.b16 %v6661
          %v6682 = vunpack.c.l.b16 %v6662
          %v6683 = vpack.c.b16 %v6680, %v6679
          %v6684 = vpack.c.b16 %v6682, %v6681
          %v6688 = vsel %vm6413, %v6674, 0
          %6690 = vmatprep.subr.bf16.mxu0 0
          %6691 = vmatpush1.bf16.msra.mxu0 %v6683
          %6692 = vmatprep.subr.bf16.mxu0 0
          %6693 = vmatpush1.bf16.msra.mxu0 %v6684
          %6694 = vmatprep.subr.bf16.mxu0 0
          %6695 = vmatpush1.bf16.msra.mxu0 0
          %6696 = vmatprep.subr.bf16.mxu0 0
          %6697 = vmatpush1.bf16.msra.mxu0 0
          %6698 = vmatprep.subr.bf16.mxu0 0
          %6699 = vmatpush1.bf16.msra.mxu0 0
          %6700 = vmatprep.subr.bf16.mxu0 0
          %6701 = vmatpush1.bf16.msra.mxu0 0
          %6702 = vmatprep.subr.bf16.mxu0 0
          %6703 = vmatpush1.bf16.msra.mxu0 0
          %6704 = vmatprep.subr.bf16.mxu0 0
          %6705 = vmatpush1.bf16.msra.mxu0 0
          %6706 = vmatprep.subr.bf16.mxu0 0
          %6707 = vmatpush1.bf16.msra.mxu0 0
          %6708 = vmatprep.subr.bf16.mxu0 0
          %6709 = vmatpush1.bf16.msra.mxu0 0
          %6710 = vmatprep.subr.bf16.mxu0 0
          %6711 = vmatpush1.bf16.msra.mxu0 0
          %6712 = vmatprep.subr.bf16.mxu0 0
          %6713 = vmatpush1.bf16.msra.mxu0 0
          %6714 = vmatprep.subr.bf16.mxu0 0
          %6715 = vmatpush1.bf16.msra.mxu0 0
          %6716 = vmatprep.subr.bf16.mxu0 0
          %6717 = vmatpush1.bf16.msra.mxu0 0
          %6718 = vmatprep.subr.bf16.mxu0 0
          %6719 = vmatpush1.bf16.msra.mxu0 0
          %6720 = vmatprep.subr.bf16.mxu0 0
          %6721 = vmatpush1.bf16.msra.mxu0 0
          %6722 = vmatprep.mubr.bf16.mxu0 0
          %6723 = vmatmul.mubr.bf16.gmra.mrb[0].mxu0 %v6688
          %v6724 = vpop.f32.mrb[0].mxu0
          %v6725 = vadd.f32 0.0, %v6724
          %v6726 = vpop.f32.mrb[0].mxu0
          %v6727 = vpop.f32.mrb[0].mxu0
          %v6728 = vadd.f32 0.0, %v6727
          %v6729 = vpop.f32.mrb[0].mxu0
          %6730 = vdwg.mxu0
          %v6731 = vadd.f32 %v6653, %v6725
          %v6732 = vadd.f32 %v6654, %v6728
          %s6733 = sadd.s32 %s6374, 1
          %s6734 = smul.u32 %s6733, 3
          %s6735 = smul.addr %s6734, 4
          %s6736 = scalar_lea.vmem [#allocation3], %s6735
          %v6737 = vld [vmem:[%s6736] sm:$0xf]
          %v6738 = vld [vmem:[%s6736 + $0x4] sm:$0x7]
          %s6739 = scalar_lea.vmem %s7, 80
          %v6740 = vld [vmem:[%s6739] sm:$0xf]
          %v6741 = vld [vmem:[%s6739 + $0x4] sm:$0xf]
          %v6742 = vld [vmem:[%s6739 + $0x8] sm:$0xf]
          %v6743 = vld [vmem:[%s6739 + $0xc] sm:$0xf]
          %v6746 = vunpack.c.l.b16 %v6737
          %v6747 = vunpack.c.l.b16 %v6738
          %v6748 = vpack.c.b16 %v6747, %v6746
          %v6753 = vunpack.c.l.b16 %v6740
          %v6754 = vunpack.c.l.b16 %v6741
          %v6755 = vunpack.c.l.b16 %v6742
          %v6756 = vunpack.c.l.b16 %v6743
          %v6757 = vpack.c.b16 %v6754, %v6753
          %v6758 = vpack.c.b16 %v6756, %v6755
          %v6762 = vsel %vm6413, %v6748, 0
          %6764 = vmatprep.subr.bf16.mxu0 0
          %6765 = vmatpush1.bf16.msra.mxu0 %v6757
          %6766 = vmatprep.subr.bf16.mxu0 0
          %6767 = vmatpush1.bf16.msra.mxu0 %v6758
          %6768 = vmatprep.subr.bf16.mxu0 0
          %6769 = vmatpush1.bf16.msra.mxu0 0
          %6770 = vmatprep.subr.bf16.mxu0 0
          %6771 = vmatpush1.bf16.msra.mxu0 0
          %6772 = vmatprep.subr.bf16.mxu0 0
          %6773 = vmatpush1.bf16.msra.mxu0 0
          %6774 = vmatprep.subr.bf16.mxu0 0
          %6775 = vmatpush1.bf16.msra.mxu0 0
          %6776 = vmatprep.subr.bf16.mxu0 0
          %6777 = vmatpush1.bf16.msra.mxu0 0
          %6778 = vmatprep.subr.bf16.mxu0 0
          %6779 = vmatpush1.bf16.msra.mxu0 0
          %6780 = vmatprep.subr.bf16.mxu0 0
          %6781 = vmatpush1.bf16.msra.mxu0 0
          %6782 = vmatprep.subr.bf16.mxu0 0
          %6783 = vmatpush1.bf16.msra.mxu0 0
          %6784 = vmatprep.subr.bf16.mxu0 0
          %6785 = vmatpush1.bf16.msra.mxu0 0
          %6786 = vmatprep.subr.bf16.mxu0 0
          %6787 = vmatpush1.bf16.msra.mxu0 0
          %6788 = vmatprep.subr.bf16.mxu0 0
          %6789 = vmatpush1.bf16.msra.mxu0 0
          %6790 = vmatprep.subr.bf16.mxu0 0
          %6791 = vmatpush1.bf16.msra.mxu0 0
          %6792 = vmatprep.subr.bf16.mxu0 0
          %6793 = vmatpush1.bf16.msra.mxu0 0
          %6794 = vmatprep.subr.bf16.mxu0 0
          %6795 = vmatpush1.bf16.msra.mxu0 0
          %6796 = vmatprep.mubr.bf16.mxu0 0
          %6797 = vmatmul.mubr.bf16.gmra.mrb[0].mxu0 %v6762
          %v6798 = vpop.f32.mrb[0].mxu0
          %v6799 = vadd.f32 0.0, %v6798
          %v6800 = vpop.f32.mrb[0].mxu0
          %v6801 = vpop.f32.mrb[0].mxu0
          %v6802 = vadd.f32 0.0, %v6801
          %v6803 = vpop.f32.mrb[0].mxu0
          %6804 = vdwg.mxu0
          %v6805 = vadd.f32 %v6731, %v6799
          %v6806 = vadd.f32 %v6732, %v6802
          %s6807 = scalar_lea.vmem %s7, 96
          %v6808 = vld [vmem:[%s6807] sm:$0xf]
          %v6809 = vld [vmem:[%s6807 + $0x4] sm:$0xf]
          %v6810 = vld [vmem:[%s6807 + $0x8] sm:$0xf]
          %v6811 = vld [vmem:[%s6807 + $0xc] sm:$0xf]
          %v6812 = vshrl.u32 %v6748, 16
          %v6814 = vshll.u32 %v6748, 16
          %v6816 = vrot.slane %v6814, 1
          %v6817 = vor.u32 %v6812, %v6816
          %v6822 = vunpack.c.l.b16 %v6808
          %v6823 = vunpack.c.l.b16 %v6809
          %v6824 = vunpack.c.l.b16 %v6810
          %v6825 = vunpack.c.l.b16 %v6811
          %v6826 = vpack.c.b16 %v6823, %v6822
          %v6827 = vpack.c.b16 %v6825, %v6824
          %v6831 = vsel %vm6413, %v6817, 0
          %6833 = vmatprep.subr.bf16.mxu0 0
          %6834 = vmatpush1.bf16.msra.mxu0 %v6826
          %6835 = vmatprep.subr.bf16.mxu0 0
          %6836 = vmatpush1.bf16.msra.mxu0 %v6827
          %6837 = vmatprep.subr.bf16.mxu0 0
          %6838 = vmatpush1.bf16.msra.mxu0 0
          %6839 = vmatprep.subr.bf16.mxu0 0
          %6840 = vmatpush1.bf16.msra.mxu0 0
          %6841 = vmatprep.subr.bf16.mxu0 0
          %6842 = vmatpush1.bf16.msra.mxu0 0
          %6843 = vmatprep.subr.bf16.mxu0 0
          %6844 = vmatpush1.bf16.msra.mxu0 0
          %6845 = vmatprep.subr.bf16.mxu0 0
          %6846 = vmatpush1.bf16.msra.mxu0 0
          %6847 = vmatprep.subr.bf16.mxu0 0
          %6848 = vmatpush1.bf16.msra.mxu0 0
          %6849 = vmatprep.subr.bf16.mxu0 0
          %6850 = vmatpush1.bf16.msra.mxu0 0
          %6851 = vmatprep.subr.bf16.mxu0 0
          %6852 = vmatpush1.bf16.msra.mxu0 0
          %6853 = vmatprep.subr.bf16.mxu0 0
          %6854 = vmatpush1.bf16.msra.mxu0 0
          %6855 = vmatprep.subr.bf16.mxu0 0
          %6856 = vmatpush1.bf16.msra.mxu0 0
          %6857 = vmatprep.subr.bf16.mxu0 0
          %6858 = vmatpush1.bf16.msra.mxu0 0
          %6859 = vmatprep.subr.bf16.mxu0 0
          %6860 = vmatpush1.bf16.msra.mxu0 0
          %6861 = vmatprep.subr.bf16.mxu0 0
          %6862 = vmatpush1.bf16.msra.mxu0 0
          %6863 = vmatprep.subr.bf16.mxu0 0
          %6864 = vmatpush1.bf16.msra.mxu0 0
          %6865 = vmatprep.mubr.bf16.mxu0 0
          %6866 = vmatmul.mubr.bf16.gmra.mrb[0].mxu0 %v6831
          %v6867 = vpop.f32.mrb[0].mxu0
          %v6868 = vadd.f32 0.0, %v6867
          %v6869 = vpop.f32.mrb[0].mxu0
          %v6870 = vpop.f32.mrb[0].mxu0
          %v6871 = vadd.f32 0.0, %v6870
          %v6872 = vpop.f32.mrb[0].mxu0
          %6873 = vdwg.mxu0
          %v6874 = vadd.f32 %v6805, %v6868
          %v6875 = vadd.f32 %v6806, %v6871
          %v6876 = vld [vmem:[%s6736] sm:$0xe]
          %v6877 = vld [vmem:[%s6736 + $0x4] sm:$0xf]
          %s6878 = scalar_lea.vmem %s7, 112
          %v6879 = vld [vmem:[%s6878] sm:$0xf]
          %v6880 = vld [vmem:[%s6878 + $0x4] sm:$0xf]
          %v6881 = vld [vmem:[%s6878 + $0x8] sm:$0xf]
          %v6882 = vld [vmem:[%s6878 + $0xc] sm:$0xf]
          %v6885 = vunpack.c.l.b16 %v6876
          %v6886 = vunpack.c.l.b16 %v6877
          %v6887 = vpack.c.b16 %v6886, %v6885
          %v6888 = vrot.slane %v6887, 1
          %v6893 = vunpack.c.l.b16 %v6879
          %v6894 = vunpack.c.l.b16 %v6880
          %v6895 = vunpack.c.l.b16 %v6881
          %v6896 = vunpack.c.l.b16 %v6882
          %v6897 = vpack.c.b16 %v6894, %v6893
          %v6898 = vpack.c.b16 %v6896, %v6895
          %v6902 = vsel %vm6413, %v6888, 0
          %6904 = vmatprep.subr.bf16.mxu0 0
          %6905 = vmatpush1.bf16.msra.mxu0 %v6897
          %6906 = vmatprep.subr.bf16.mxu0 0
          %6907 = vmatpush1.bf16.msra.mxu0 %v6898
          %6908 = vmatprep.subr.bf16.mxu0 0
          %6909 = vmatpush1.bf16.msra.mxu0 0
          %6910 = vmatprep.subr.bf16.mxu0 0
          %6911 = vmatpush1.bf16.msra.mxu0 0
          %6912 = vmatprep.subr.bf16.mxu0 0
          %6913 = vmatpush1.bf16.msra.mxu0 0
          %6914 = vmatprep.subr.bf16.mxu0 0
          %6915 = vmatpush1.bf16.msra.mxu0 0
          %6916 = vmatprep.subr.bf16.mxu0 0
          %6917 = vmatpush1.bf16.msra.mxu0 0
          %6918 = vmatprep.subr.bf16.mxu0 0
          %6919 = vmatpush1.bf16.msra.mxu0 0
          %6920 = vmatprep.subr.bf16.mxu0 0
          %6921 = vmatpush1.bf16.msra.mxu0 0
          %6922 = vmatprep.subr.bf16.mxu0 0
          %6923 = vmatpush1.bf16.msra.mxu0 0
          %6924 = vmatprep.subr.bf16.mxu0 0
          %6925 = vmatpush1.bf16.msra.mxu0 0
          %6926 = vmatprep.subr.bf16.mxu0 0
          %6927 = vmatpush1.bf16.msra.mxu0 0
          %6928 = vmatprep.subr.bf16.mxu0 0
          %6929 = vmatpush1.bf16.msra.mxu0 0
          %6930 = vmatprep.subr.bf16.mxu0 0
          %6931 = vmatpush1.bf16.msra.mxu0 0
          %6932 = vmatprep.subr.bf16.mxu0 0
          %6933 = vmatpush1.bf16.msra.mxu0 0
          %6934 = vmatprep.subr.bf16.mxu0 0
          %6935 = vmatpush1.bf16.msra.mxu0 0
          %6936 = vmatprep.mubr.bf16.mxu0 0
          %6937 = vmatmul.mubr.bf16.gmra.mrb[0].mxu0 %v6902
          %v6938 = vpop.f32.mrb[0].mxu0
          %v6939 = vadd.f32 0.0, %v6938
          %v6940 = vpop.f32.mrb[0].mxu0
          %v6941 = vpop.f32.mrb[0].mxu0
          %v6942 = vadd.f32 0.0, %v6941
          %v6943 = vpop.f32.mrb[0].mxu0
          %6944 = vdwg.mxu0
          %v6945 = vadd.f32 %v6874, %v6939
          %v6946 = vadd.f32 %v6875, %v6942
          %s6947 = scalar_lea.vmem %s7, 128
          %v6948 = vld [vmem:[%s6947] sm:$0xf]
          %v6949 = vld [vmem:[%s6947 + $0x4] sm:$0xf]
          %v6950 = vld [vmem:[%s6947 + $0x8] sm:$0xf]
          %v6951 = vld [vmem:[%s6947 + $0xc] sm:$0xf]
          %v6953 = vshrl.u32 %v6887, 16
          %v6955 = vrot.slane %v6953, 1
          %v6956 = vshll.u32 %v6887, 16
          %v6958 = vrot.slane %v6956, 2
          %v6959 = vor.u32 %v6955, %v6958
          %v6964 = vunpack.c.l.b16 %v6948
          %v6965 = vunpack.c.l.b16 %v6949
          %v6966 = vunpack.c.l.b16 %v6950
          %v6967 = vunpack.c.l.b16 %v6951
          %v6968 = vpack.c.b16 %v6965, %v6964
          %v6969 = vpack.c.b16 %v6967, %v6966
          %v6973 = vsel %vm6413, %v6959, 0
          %6975 = vmatprep.subr.bf16.mxu0 0
          %6976 = vmatpush1.bf16.msra.mxu0 %v6968
          %6977 = vmatprep.subr.bf16.mxu0 0
          %6978 = vmatpush1.bf16.msra.mxu0 %v6969
          %6979 = vmatprep.subr.bf16.mxu0 0
          %6980 = vmatpush1.bf16.msra.mxu0 0
          %6981 = vmatprep.subr.bf16.mxu0 0
          %6982 = vmatpush1.bf16.msra.mxu0 0
          %6983 = vmatprep.subr.bf16.mxu0 0
          %6984 = vmatpush1.bf16.msra.mxu0 0
          %6985 = vmatprep.subr.bf16.mxu0 0
          %6986 = vmatpush1.bf16.msra.mxu0 0
          %6987 = vmatprep.subr.bf16.mxu0 0
          %6988 = vmatpush1.bf16.msra.mxu0 0
          %6989 = vmatprep.subr.bf16.mxu0 0
          %6990 = vmatpush1.bf16.msra.mxu0 0
          %6991 = vmatprep.subr.bf16.mxu0 0
          %6992 = vmatpush1.bf16.msra.mxu0 0
          %6993 = vmatprep.subr.bf16.mxu0 0
          %6994 = vmatpush1.bf16.msra.mxu0 0
          %6995 = vmatprep.subr.bf16.mxu0 0
          %6996 = vmatpush1.bf16.msra.mxu0 0
          %6997 = vmatprep.subr.bf16.mxu0 0
          %6998 = vmatpush1.bf16.msra.mxu0 0
          %6999 = vmatprep.subr.bf16.mxu0 0
          %7000 = vmatpush1.bf16.msra.mxu0 0
          %7001 = vmatprep.subr.bf16.mxu0 0
          %7002 = vmatpush1.bf16.msra.mxu0 0
          %7003 = vmatprep.subr.bf16.mxu0 0
          %7004 = vmatpush1.bf16.msra.mxu0 0
          %7005 = vmatprep.subr.bf16.mxu0 0
          %7006 = vmatpush1.bf16.msra.mxu0 0
          %7007 = vmatprep.mubr.bf16.mxu0 0
          %7008 = vmatmul.mubr.bf16.gmra.mrb[0].mxu0 %v6973
          %v7009 = vpop.f32.mrb[0].mxu0
          %v7010 = vadd.f32 0.0, %v7009
          %v7011 = vpop.f32.mrb[0].mxu0
          %v7012 = vpop.f32.mrb[0].mxu0
          %v7013 = vadd.f32 0.0, %v7012
          %v7014 = vpop.f32.mrb[0].mxu0
          %7015 = vdwg.mxu0
          %v7016 = vadd.f32 %v6945, %v7010
          %v7017 = vadd.f32 %v6946, %v7013
          %v7018 = vld [vmem:[%s6736] sm:$0xc]
          %v7019 = vld [vmem:[%s6736 + $0x4] sm:$0xf]
          %v7020 = vld [vmem:[%s6736 + $0x8] sm:$0x1]
          %s7021 = scalar_lea.vmem %s7, 144
          %v7022 = vld [vmem:[%s7021] sm:$0xf]
          %v7023 = vld [vmem:[%s7021 + $0x4] sm:$0xf]
          %v7024 = vld [vmem:[%s7021 + $0x8] sm:$0xf]
          %v7025 = vld [vmem:[%s7021 + $0xc] sm:$0xf]
          %v7029 = vunpack.c.l.b16 %v7018
          %v7030 = vunpack.c.l.b16 %v7019
          %v7031 = vunpack.c.l.b16 %v7020
          %v7032 = vpack.c.b16 %v7030, %v7029
          %v7033 = vpack.c.b16 %v7031, %v7031
          %v7034 = vrot.slane %v7032, 2
          %v7035 = vrot.slane %v7033, 2
          %v7036 = vsel %vm6671, %v7034, %v7035
          %v7041 = vunpack.c.l.b16 %v7022
          %v7042 = vunpack.c.l.b16 %v7023
          %v7043 = vunpack.c.l.b16 %v7024
          %v7044 = vunpack.c.l.b16 %v7025
          %v7045 = vpack.c.b16 %v7042, %v7041
          %v7046 = vpack.c.b16 %v7044, %v7043
          %v7050 = vsel %vm6413, %v7036, 0
          %7052 = vmatprep.subr.bf16.mxu0 0
          %7053 = vmatpush1.bf16.msra.mxu0 %v7045
          %7054 = vmatprep.subr.bf16.mxu0 0
          %7055 = vmatpush1.bf16.msra.mxu0 %v7046
          %7056 = vmatprep.subr.bf16.mxu0 0
          %7057 = vmatpush1.bf16.msra.mxu0 0
          %7058 = vmatprep.subr.bf16.mxu0 0
          %7059 = vmatpush1.bf16.msra.mxu0 0
          %7060 = vmatprep.subr.bf16.mxu0 0
          %7061 = vmatpush1.bf16.msra.mxu0 0
          %7062 = vmatprep.subr.bf16.mxu0 0
          %7063 = vmatpush1.bf16.msra.mxu0 0
          %7064 = vmatprep.subr.bf16.mxu0 0
          %7065 = vmatpush1.bf16.msra.mxu0 0
          %7066 = vmatprep.subr.bf16.mxu0 0
          %7067 = vmatpush1.bf16.msra.mxu0 0
          %7068 = vmatprep.subr.bf16.mxu0 0
          %7069 = vmatpush1.bf16.msra.mxu0 0
          %7070 = vmatprep.subr.bf16.mxu0 0
          %7071 = vmatpush1.bf16.msra.mxu0 0
          %7072 = vmatprep.subr.bf16.mxu0 0
          %7073 = vmatpush1.bf16.msra.mxu0 0
          %7074 = vmatprep.subr.bf16.mxu0 0
          %7075 = vmatpush1.bf16.msra.mxu0 0
          %7076 = vmatprep.subr.bf16.mxu0 0
          %7077 = vmatpush1.bf16.msra.mxu0 0
          %7078 = vmatprep.subr.bf16.mxu0 0
          %7079 = vmatpush1.bf16.msra.mxu0 0
          %7080 = vmatprep.subr.bf16.mxu0 0
          %7081 = vmatpush1.bf16.msra.mxu0 0
          %7082 = vmatprep.subr.bf16.mxu0 0
          %7083 = vmatpush1.bf16.msra.mxu0 0
          %7084 = vmatprep.mubr.bf16.mxu0 0
          %7085 = vmatmul.mubr.bf16.gmra.mrb[0].mxu0 %v7050
          %v7086 = vpop.f32.mrb[0].mxu0
          %v7087 = vadd.f32 0.0, %v7086
          %v7088 = vpop.f32.mrb[0].mxu0
          %v7089 = vpop.f32.mrb[0].mxu0
          %v7090 = vadd.f32 0.0, %v7089
          %v7091 = vpop.f32.mrb[0].mxu0
          %7092 = vdwg.mxu0
          %v7093 = vadd.f32 %v7016, %v7087
          %v7094 = vadd.f32 %v7017, %v7090
          %s7095 = sadd.s32 %s6374, 2
          %s7096 = smul.u32 %s7095, 3
          %s7097 = smul.addr %s7096, 4
          %s7098 = scalar_lea.vmem [#allocation3], %s7097
          %v7099 = vld [vmem:[%s7098] sm:$0xf]
          %v7100 = vld [vmem:[%s7098 + $0x4] sm:$0x7]
          %s7101 = scalar_lea.vmem %s7, 160
          %v7102 = vld [vmem:[%s7101] sm:$0xf]
          %v7103 = vld [vmem:[%s7101 + $0x4] sm:$0xf]
          %v7104 = vld [vmem:[%s7101 + $0x8] sm:$0xf]
          %v7105 = vld [vmem:[%s7101 + $0xc] sm:$0xf]
          %v7108 = vunpack.c.l.b16 %v7099
          %v7109 = vunpack.c.l.b16 %v7100
          %v7110 = vpack.c.b16 %v7109, %v7108
          %v7115 = vunpack.c.l.b16 %v7102
          %v7116 = vunpack.c.l.b16 %v7103
          %v7117 = vunpack.c.l.b16 %v7104
          %v7118 = vunpack.c.l.b16 %v7105
          %v7119 = vpack.c.b16 %v7116, %v7115
          %v7120 = vpack.c.b16 %v7118, %v7117
          %v7124 = vsel %vm6413, %v7110, 0
          %7126 = vmatprep.subr.bf16.mxu0 0
          %7127 = vmatpush1.bf16.msra.mxu0 %v7119
          %7128 = vmatprep.subr.bf16.mxu0 0
          %7129 = vmatpush1.bf16.msra.mxu0 %v7120
          %7130 = vmatprep.subr.bf16.mxu0 0
          %7131 = vmatpush1.bf16.msra.mxu0 0
          %7132 = vmatprep.subr.bf16.mxu0 0
          %7133 = vmatpush1.bf16.msra.mxu0 0
          %7134 = vmatprep.subr.bf16.mxu0 0
          %7135 = vmatpush1.bf16.msra.mxu0 0
          %7136 = vmatprep.subr.bf16.mxu0 0
          %7137 = vmatpush1.bf16.msra.mxu0 0
          %7138 = vmatprep.subr.bf16.mxu0 0
          %7139 = vmatpush1.bf16.msra.mxu0 0
          %7140 = vmatprep.subr.bf16.mxu0 0
          %7141 = vmatpush1.bf16.msra.mxu0 0
          %7142 = vmatprep.subr.bf16.mxu0 0
          %7143 = vmatpush1.bf16.msra.mxu0 0
          %7144 = vmatprep.subr.bf16.mxu0 0
          %7145 = vmatpush1.bf16.msra.mxu0 0
          %7146 = vmatprep.subr.bf16.mxu0 0
          %7147 = vmatpush1.bf16.msra.mxu0 0
          %7148 = vmatprep.subr.bf16.mxu0 0
          %7149 = vmatpush1.bf16.msra.mxu0 0
          %7150 = vmatprep.subr.bf16.mxu0 0
          %7151 = vmatpush1.bf16.msra.mxu0 0
          %7152 = vmatprep.subr.bf16.mxu0 0
          %7153 = vmatpush1.bf16.msra.mxu0 0
          %7154 = vmatprep.subr.bf16.mxu0 0
          %7155 = vmatpush1.bf16.msra.mxu0 0
          %7156 = vmatprep.subr.bf16.mxu0 0
          %7157 = vmatpush1.bf16.msra.mxu0 0
          %7158 = vmatprep.mubr.bf16.mxu0 0
          %7159 = vmatmul.mubr.bf16.gmra.mrb[0].mxu0 %v7124
          %v7160 = vpop.f32.mrb[0].mxu0
          %v7161 = vadd.f32 0.0, %v7160
          %v7162 = vpop.f32.mrb[0].mxu0
          %v7163 = vpop.f32.mrb[0].mxu0
          %v7164 = vadd.f32 0.0, %v7163
          %v7165 = vpop.f32.mrb[0].mxu0
          %7166 = vdwg.mxu0
          %v7167 = vadd.f32 %v7093, %v7161
          %v7168 = vadd.f32 %v7094, %v7164
          %s7169 = scalar_lea.vmem %s7, 176
          %v7170 = vld [vmem:[%s7169] sm:$0xf]
          %v7171 = vld [vmem:[%s7169 + $0x4] sm:$0xf]
          %v7172 = vld [vmem:[%s7169 + $0x8] sm:$0xf]
          %v7173 = vld [vmem:[%s7169 + $0xc] sm:$0xf]
          %v7174 = vshrl.u32 %v7110, 16
          %v7176 = vshll.u32 %v7110, 16
          %v7178 = vrot.slane %v7176, 1
          %v7179 = vor.u32 %v7174, %v7178
          %v7184 = vunpack.c.l.b16 %v7170
          %v7185 = vunpack.c.l.b16 %v7171
          %v7186 = vunpack.c.l.b16 %v7172
          %v7187 = vunpack.c.l.b16 %v7173
          %v7188 = vpack.c.b16 %v7185, %v7184
          %v7189 = vpack.c.b16 %v7187, %v7186
          %v7193 = vsel %vm6413, %v7179, 0
          %7195 = vmatprep.subr.bf16.mxu0 0
          %7196 = vmatpush1.bf16.msra.mxu0 %v7188
          %7197 = vmatprep.subr.bf16.mxu0 0
          %7198 = vmatpush1.bf16.msra.mxu0 %v7189
          %7199 = vmatprep.subr.bf16.mxu0 0
          %7200 = vmatpush1.bf16.msra.mxu0 0
          %7201 = vmatprep.subr.bf16.mxu0 0
          %7202 = vmatpush1.bf16.msra.mxu0 0
          %7203 = vmatprep.subr.bf16.mxu0 0
          %7204 = vmatpush1.bf16.msra.mxu0 0
          %7205 = vmatprep.subr.bf16.mxu0 0
          %7206 = vmatpush1.bf16.msra.mxu0 0
          %7207 = vmatprep.subr.bf16.mxu0 0
          %7208 = vmatpush1.bf16.msra.mxu0 0
          %7209 = vmatprep.subr.bf16.mxu0 0
          %7210 = vmatpush1.bf16.msra.mxu0 0
          %7211 = vmatprep.subr.bf16.mxu0 0
          %7212 = vmatpush1.bf16.msra.mxu0 0
          %7213 = vmatprep.subr.bf16.mxu0 0
          %7214 = vmatpush1.bf16.msra.mxu0 0
          %7215 = vmatprep.subr.bf16.mxu0 0
          %7216 = vmatpush1.bf16.msra.mxu0 0
          %7217 = vmatprep.subr.bf16.mxu0 0
          %7218 = vmatpush1.bf16.msra.mxu0 0
          %7219 = vmatprep.subr.bf16.mxu0 0
          %7220 = vmatpush1.bf16.msra.mxu0 0
          %7221 = vmatprep.subr.bf16.mxu0 0
          %7222 = vmatpush1.bf16.msra.mxu0 0
          %7223 = vmatprep.subr.bf16.mxu0 0
          %7224 = vmatpush1.bf16.msra.mxu0 0
          %7225 = vmatprep.subr.bf16.mxu0 0
          %7226 = vmatpush1.bf16.msra.mxu0 0
          %7227 = vmatprep.mubr.bf16.mxu0 0
          %7228 = vmatmul.mubr.bf16.gmra.mrb[0].mxu0 %v7193
          %v7229 = vpop.f32.mrb[0].mxu0
          %v7230 = vadd.f32 0.0, %v7229
          %v7231 = vpop.f32.mrb[0].mxu0
          %v7232 = vpop.f32.mrb[0].mxu0
          %v7233 = vadd.f32 0.0, %v7232
          %v7234 = vpop.f32.mrb[0].mxu0
          %7235 = vdwg.mxu0
          %v7236 = vadd.f32 %v7167, %v7230
          %v7237 = vadd.f32 %v7168, %v7233
          %v7238 = vld [vmem:[%s7098] sm:$0xe]
          %v7239 = vld [vmem:[%s7098 + $0x4] sm:$0xf]
          %s7240 = scalar_lea.vmem %s7, 192
          %v7241 = vld [vmem:[%s7240] sm:$0xf]
          %v7242 = vld [vmem:[%s7240 + $0x4] sm:$0xf]
          %v7243 = vld [vmem:[%s7240 + $0x8] sm:$0xf]
          %v7244 = vld [vmem:[%s7240 + $0xc] sm:$0xf]
          %v7247 = vunpack.c.l.b16 %v7238
          %v7248 = vunpack.c.l.b16 %v7239
          %v7249 = vpack.c.b16 %v7248, %v7247
          %v7250 = vrot.slane %v7249, 1
          %v7255 = vunpack.c.l.b16 %v7241
          %v7256 = vunpack.c.l.b16 %v7242
          %v7257 = vunpack.c.l.b16 %v7243
          %v7258 = vunpack.c.l.b16 %v7244
          %v7259 = vpack.c.b16 %v7256, %v7255
          %v7260 = vpack.c.b16 %v7258, %v7257
          %v7264 = vsel %vm6413, %v7250, 0
          %7266 = vmatprep.subr.bf16.mxu0 0
          %7267 = vmatpush1.bf16.msra.mxu0 %v7259
          %7268 = vmatprep.subr.bf16.mxu0 0
          %7269 = vmatpush1.bf16.msra.mxu0 %v7260
          %7270 = vmatprep.subr.bf16.mxu0 0
          %7271 = vmatpush1.bf16.msra.mxu0 0
          %7272 = vmatprep.subr.bf16.mxu0 0
          %7273 = vmatpush1.bf16.msra.mxu0 0
          %7274 = vmatprep.subr.bf16.mxu0 0
          %7275 = vmatpush1.bf16.msra.mxu0 0
          %7276 = vmatprep.subr.bf16.mxu0 0
          %7277 = vmatpush1.bf16.msra.mxu0 0
          %7278 = vmatprep.subr.bf16.mxu0 0
          %7279 = vmatpush1.bf16.msra.mxu0 0
          %7280 = vmatprep.subr.bf16.mxu0 0
          %7281 = vmatpush1.bf16.msra.mxu0 0
          %7282 = vmatprep.subr.bf16.mxu0 0
          %7283 = vmatpush1.bf16.msra.mxu0 0
          %7284 = vmatprep.subr.bf16.mxu0 0
          %7285 = vmatpush1.bf16.msra.mxu0 0
          %7286 = vmatprep.subr.bf16.mxu0 0
          %7287 = vmatpush1.bf16.msra.mxu0 0
          %7288 = vmatprep.subr.bf16.mxu0 0
          %7289 = vmatpush1.bf16.msra.mxu0 0
          %7290 = vmatprep.subr.bf16.mxu0 0
          %7291 = vmatpush1.bf16.msra.mxu0 0
          %7292 = vmatprep.subr.bf16.mxu0 0
          %7293 = vmatpush1.bf16.msra.mxu0 0
          %7294 = vmatprep.subr.bf16.mxu0 0
          %7295 = vmatpush1.bf16.msra.mxu0 0
          %7296 = vmatprep.subr.bf16.mxu0 0
          %7297 = vmatpush1.bf16.msra.mxu0 0
          %7298 = vmatprep.mubr.bf16.mxu0 0
          %7299 = vmatmul.mubr.bf16.gmra.mrb[0].mxu0 %v7264
          %v7300 = vpop.f32.mrb[0].mxu0
          %v7301 = vadd.f32 0.0, %v7300
          %v7302 = vpop.f32.mrb[0].mxu0
          %v7303 = vpop.f32.mrb[0].mxu0
          %v7304 = vadd.f32 0.0, %v7303
          %v7305 = vpop.f32.mrb[0].mxu0
          %7306 = vdwg.mxu0
          %v7307 = vadd.f32 %v7236, %v7301
          %v7308 = vadd.f32 %v7237, %v7304
          %s7309 = scalar_lea.vmem %s7, 208
          %v7310 = vld [vmem:[%s7309] sm:$0xf]
          %v7311 = vld [vmem:[%s7309 + $0x4] sm:$0xf]
          %v7312 = vld [vmem:[%s7309 + $0x8] sm:$0xf]
          %v7313 = vld [vmem:[%s7309 + $0xc] sm:$0xf]
          %v7315 = vshrl.u32 %v7249, 16
          %v7317 = vrot.slane %v7315, 1
          %v7318 = vshll.u32 %v7249, 16
          %v7320 = vrot.slane %v7318, 2
          %v7321 = vor.u32 %v7317, %v7320
          %v7326 = vunpack.c.l.b16 %v7310
          %v7327 = vunpack.c.l.b16 %v7311
          %v7328 = vunpack.c.l.b16 %v7312
          %v7329 = vunpack.c.l.b16 %v7313
          %v7330 = vpack.c.b16 %v7327, %v7326
          %v7331 = vpack.c.b16 %v7329, %v7328
          %v7335 = vsel %vm6413, %v7321, 0
          %7337 = vmatprep.subr.bf16.mxu0 0
          %7338 = vmatpush1.bf16.msra.mxu0 %v7330
          %7339 = vmatprep.subr.bf16.mxu0 0
          %7340 = vmatpush1.bf16.msra.mxu0 %v7331
          %7341 = vmatprep.subr.bf16.mxu0 0
          %7342 = vmatpush1.bf16.msra.mxu0 0
          %7343 = vmatprep.subr.bf16.mxu0 0
          %7344 = vmatpush1.bf16.msra.mxu0 0
          %7345 = vmatprep.subr.bf16.mxu0 0
          %7346 = vmatpush1.bf16.msra.mxu0 0
          %7347 = vmatprep.subr.bf16.mxu0 0
          %7348 = vmatpush1.bf16.msra.mxu0 0
          %7349 = vmatprep.subr.bf16.mxu0 0
          %7350 = vmatpush1.bf16.msra.mxu0 0
          %7351 = vmatprep.subr.bf16.mxu0 0
          %7352 = vmatpush1.bf16.msra.mxu0 0
          %7353 = vmatprep.subr.bf16.mxu0 0
          %7354 = vmatpush1.bf16.msra.mxu0 0
          %7355 = vmatprep.subr.bf16.mxu0 0
          %7356 = vmatpush1.bf16.msra.mxu0 0
          %7357 = vmatprep.subr.bf16.mxu0 0
          %7358 = vmatpush1.bf16.msra.mxu0 0
          %7359 = vmatprep.subr.bf16.mxu0 0
          %7360 = vmatpush1.bf16.msra.mxu0 0
          %7361 = vmatprep.subr.bf16.mxu0 0
          %7362 = vmatpush1.bf16.msra.mxu0 0
          %7363 = vmatprep.subr.bf16.mxu0 0
          %7364 = vmatpush1.bf16.msra.mxu0 0
          %7365 = vmatprep.subr.bf16.mxu0 0
          %7366 = vmatpush1.bf16.msra.mxu0 0
          %7367 = vmatprep.subr.bf16.mxu0 0
          %7368 = vmatpush1.bf16.msra.mxu0 0
          %7369 = vmatprep.mubr.bf16.mxu0 0
          %7370 = vmatmul.mubr.bf16.gmra.mrb[0].mxu0 %v7335
          %v7371 = vpop.f32.mrb[0].mxu0
          %v7372 = vadd.f32 0.0, %v7371
          %v7373 = vpop.f32.mrb[0].mxu0
          %v7374 = vpop.f32.mrb[0].mxu0
          %v7375 = vadd.f32 0.0, %v7374
          %v7376 = vpop.f32.mrb[0].mxu0
          %7377 = vdwg.mxu0
          %v7378 = vadd.f32 %v7307, %v7372
          %v7379 = vadd.f32 %v7308, %v7375
          %v7380 = vld [vmem:[%s7098] sm:$0xc]
          %v7381 = vld [vmem:[%s7098 + $0x4] sm:$0xf]
          %v7382 = vld [vmem:[%s7098 + $0x8] sm:$0x1]
          %s7383 = scalar_lea.vmem %s7, 224
          %v7384 = vld [vmem:[%s7383] sm:$0xf]
          %v7385 = vld [vmem:[%s7383 + $0x4] sm:$0xf]
          %v7386 = vld [vmem:[%s7383 + $0x8] sm:$0xf]
          %v7387 = vld [vmem:[%s7383 + $0xc] sm:$0xf]
          %v7391 = vunpack.c.l.b16 %v7380
          %v7392 = vunpack.c.l.b16 %v7381
          %v7393 = vunpack.c.l.b16 %v7382
          %v7394 = vpack.c.b16 %v7392, %v7391
          %v7395 = vpack.c.b16 %v7393, %v7393
          %v7396 = vrot.slane %v7394, 2
          %v7397 = vrot.slane %v7395, 2
          %v7398 = vsel %vm6671, %v7396, %v7397
          %v7403 = vunpack.c.l.b16 %v7384
          %v7404 = vunpack.c.l.b16 %v7385
          %v7405 = vunpack.c.l.b16 %v7386
          %v7406 = vunpack.c.l.b16 %v7387
          %v7407 = vpack.c.b16 %v7404, %v7403
          %v7408 = vpack.c.b16 %v7406, %v7405
          %v7412 = vsel %vm6413, %v7398, 0
          %7414 = vmatprep.subr.bf16.mxu0 0
          %7415 = vmatpush1.bf16.msra.mxu0 %v7407
          %7416 = vmatprep.subr.bf16.mxu0 0
          %7417 = vmatpush1.bf16.msra.mxu0 %v7408
          %7418 = vmatprep.subr.bf16.mxu0 0
          %7419 = vmatpush1.bf16.msra.mxu0 0
          %7420 = vmatprep.subr.bf16.mxu0 0
          %7421 = vmatpush1.bf16.msra.mxu0 0
          %7422 = vmatprep.subr.bf16.mxu0 0
          %7423 = vmatpush1.bf16.msra.mxu0 0
          %7424 = vmatprep.subr.bf16.mxu0 0
          %7425 = vmatpush1.bf16.msra.mxu0 0
          %7426 = vmatprep.subr.bf16.mxu0 0
          %7427 = vmatpush1.bf16.msra.mxu0 0
          %7428 = vmatprep.subr.bf16.mxu0 0
          %7429 = vmatpush1.bf16.msra.mxu0 0
          %7430 = vmatprep.subr.bf16.mxu0 0
          %7431 = vmatpush1.bf16.msra.mxu0 0
          %7432 = vmatprep.subr.bf16.mxu0 0
          %7433 = vmatpush1.bf16.msra.mxu0 0
          %7434 = vmatprep.subr.bf16.mxu0 0
          %7435 = vmatpush1.bf16.msra.mxu0 0
          %7436 = vmatprep.subr.bf16.mxu0 0
          %7437 = vmatpush1.bf16.msra.mxu0 0
          %7438 = vmatprep.subr.bf16.mxu0 0
          %7439 = vmatpush1.bf16.msra.mxu0 0
          %7440 = vmatprep.subr.bf16.mxu0 0
          %7441 = vmatpush1.bf16.msra.mxu0 0
          %7442 = vmatprep.subr.bf16.mxu0 0
          %7443 = vmatpush1.bf16.msra.mxu0 0
          %7444 = vmatprep.subr.bf16.mxu0 0
          %7445 = vmatpush1.bf16.msra.mxu0 0
          %7446 = vmatprep.mubr.bf16.mxu0 0
          %7447 = vmatmul.mubr.bf16.gmra.mrb[0].mxu0 %v7412
          %v7448 = vpop.f32.mrb[0].mxu0
          %v7449 = vadd.f32 0.0, %v7448
          %v7450 = vpop.f32.mrb[0].mxu0
          %v7451 = vpop.f32.mrb[0].mxu0
          %v7452 = vadd.f32 0.0, %v7451
          %v7453 = vpop.f32.mrb[0].mxu0
          %7454 = vdwg.mxu0
          %v7455 = vadd.f32 %v7378, %v7449
          %v7456 = vadd.f32 %v7379, %v7452
          %s7457 = sadd.s32 %s6374, 3
          %s7458 = smul.u32 %s7457, 3
          %s7459 = smul.addr %s7458, 4
          %s7460 = scalar_lea.vmem [#allocation3], %s7459
          %v7461 = vld [vmem:[%s7460] sm:$0xf]
          %v7462 = vld [vmem:[%s7460 + $0x4] sm:$0x7]
          %s7463 = scalar_lea.vmem %s7, 240
          %v7464 = vld [vmem:[%s7463] sm:$0xf]
          %v7465 = vld [vmem:[%s7463 + $0x4] sm:$0xf]
          %v7466 = vld [vmem:[%s7463 + $0x8] sm:$0xf]
          %v7467 = vld [vmem:[%s7463 + $0xc] sm:$0xf]
          %v7470 = vunpack.c.l.b16 %v7461
          %v7471 = vunpack.c.l.b16 %v7462
          %v7472 = vpack.c.b16 %v7471, %v7470
          %v7477 = vunpack.c.l.b16 %v7464
          %v7478 = vunpack.c.l.b16 %v7465
          %v7479 = vunpack.c.l.b16 %v7466
          %v7480 = vunpack.c.l.b16 %v7467
          %v7481 = vpack.c.b16 %v7478, %v7477
          %v7482 = vpack.c.b16 %v7480, %v7479
          %v7486 = vsel %vm6413, %v7472, 0
          %7488 = vmatprep.subr.bf16.mxu0 0
          %7489 = vmatpush1.bf16.msra.mxu0 %v7481
          %7490 = vmatprep.subr.bf16.mxu0 0
          %7491 = vmatpush1.bf16.msra.mxu0 %v7482
          %7492 = vmatprep.subr.bf16.mxu0 0
          %7493 = vmatpush1.bf16.msra.mxu0 0
          %7494 = vmatprep.subr.bf16.mxu0 0
          %7495 = vmatpush1.bf16.msra.mxu0 0
          %7496 = vmatprep.subr.bf16.mxu0 0
          %7497 = vmatpush1.bf16.msra.mxu0 0
          %7498 = vmatprep.subr.bf16.mxu0 0
          %7499 = vmatpush1.bf16.msra.mxu0 0
          %7500 = vmatprep.subr.bf16.mxu0 0
          %7501 = vmatpush1.bf16.msra.mxu0 0
          %7502 = vmatprep.subr.bf16.mxu0 0
          %7503 = vmatpush1.bf16.msra.mxu0 0
          %7504 = vmatprep.subr.bf16.mxu0 0
          %7505 = vmatpush1.bf16.msra.mxu0 0
          %7506 = vmatprep.subr.bf16.mxu0 0
          %7507 = vmatpush1.bf16.msra.mxu0 0
          %7508 = vmatprep.subr.bf16.mxu0 0
          %7509 = vmatpush1.bf16.msra.mxu0 0
          %7510 = vmatprep.subr.bf16.mxu0 0
          %7511 = vmatpush1.bf16.msra.mxu0 0
          %7512 = vmatprep.subr.bf16.mxu0 0
          %7513 = vmatpush1.bf16.msra.mxu0 0
          %7514 = vmatprep.subr.bf16.mxu0 0
          %7515 = vmatpush1.bf16.msra.mxu0 0
          %7516 = vmatprep.subr.bf16.mxu0 0
          %7517 = vmatpush1.bf16.msra.mxu0 0
          %7518 = vmatprep.subr.bf16.mxu0 0
          %7519 = vmatpush1.bf16.msra.mxu0 0
          %7520 = vmatprep.mubr.bf16.mxu0 0
          %7521 = vmatmul.mubr.bf16.gmra.mrb[0].mxu0 %v7486
          %v7522 = vpop.f32.mrb[0].mxu0
          %v7523 = vadd.f32 0.0, %v7522
          %v7524 = vpop.f32.mrb[0].mxu0
          %v7525 = vpop.f32.mrb[0].mxu0
          %v7526 = vadd.f32 0.0, %v7525
          %v7527 = vpop.f32.mrb[0].mxu0
          %7528 = vdwg.mxu0
          %v7529 = vadd.f32 %v7455, %v7523
          %v7530 = vadd.f32 %v7456, %v7526
          %s7531 = scalar_lea.vmem %s7, 256
          %v7532 = vld [vmem:[%s7531] sm:$0xf]
          %v7533 = vld [vmem:[%s7531 + $0x4] sm:$0xf]
          %v7534 = vld [vmem:[%s7531 + $0x8] sm:$0xf]
          %v7535 = vld [vmem:[%s7531 + $0xc] sm:$0xf]
          %v7536 = vshrl.u32 %v7472, 16
          %v7538 = vshll.u32 %v7472, 16
          %v7540 = vrot.slane %v7538, 1
          %v7541 = vor.u32 %v7536, %v7540
          %v7546 = vunpack.c.l.b16 %v7532
          %v7547 = vunpack.c.l.b16 %v7533
          %v7548 = vunpack.c.l.b16 %v7534
          %v7549 = vunpack.c.l.b16 %v7535
          %v7550 = vpack.c.b16 %v7547, %v7546
          %v7551 = vpack.c.b16 %v7549, %v7548
          %v7555 = vsel %vm6413, %v7541, 0
          %7557 = vmatprep.subr.bf16.mxu0 0
          %7558 = vmatpush1.bf16.msra.mxu0 %v7550
          %7559 = vmatprep.subr.bf16.mxu0 0
          %7560 = vmatpush1.bf16.msra.mxu0 %v7551
          %7561 = vmatprep.subr.bf16.mxu0 0
          %7562 = vmatpush1.bf16.msra.mxu0 0
          %7563 = vmatprep.subr.bf16.mxu0 0
          %7564 = vmatpush1.bf16.msra.mxu0 0
          %7565 = vmatprep.subr.bf16.mxu0 0
          %7566 = vmatpush1.bf16.msra.mxu0 0
          %7567 = vmatprep.subr.bf16.mxu0 0
          %7568 = vmatpush1.bf16.msra.mxu0 0
          %7569 = vmatprep.subr.bf16.mxu0 0
          %7570 = vmatpush1.bf16.msra.mxu0 0
          %7571 = vmatprep.subr.bf16.mxu0 0
          %7572 = vmatpush1.bf16.msra.mxu0 0
          %7573 = vmatprep.subr.bf16.mxu0 0
          %7574 = vmatpush1.bf16.msra.mxu0 0
          %7575 = vmatprep.subr.bf16.mxu0 0
          %7576 = vmatpush1.bf16.msra.mxu0 0
          %7577 = vmatprep.subr.bf16.mxu0 0
          %7578 = vmatpush1.bf16.msra.mxu0 0
          %7579 = vmatprep.subr.bf16.mxu0 0
          %7580 = vmatpush1.bf16.msra.mxu0 0
          %7581 = vmatprep.subr.bf16.mxu0 0
          %7582 = vmatpush1.bf16.msra.mxu0 0
          %7583 = vmatprep.subr.bf16.mxu0 0
          %7584 = vmatpush1.bf16.msra.mxu0 0
          %7585 = vmatprep.subr.bf16.mxu0 0
          %7586 = vmatpush1.bf16.msra.mxu0 0
          %7587 = vmatprep.subr.bf16.mxu0 0
          %7588 = vmatpush1.bf16.msra.mxu0 0
          %7589 = vmatprep.mubr.bf16.mxu0 0
          %7590 = vmatmul.mubr.bf16.gmra.mrb[0].mxu0 %v7555
          %v7591 = vpop.f32.mrb[0].mxu0
          %v7592 = vadd.f32 0.0, %v7591
          %v7593 = vpop.f32.mrb[0].mxu0
          %v7594 = vpop.f32.mrb[0].mxu0
          %v7595 = vadd.f32 0.0, %v7594
          %v7596 = vpop.f32.mrb[0].mxu0
          %7597 = vdwg.mxu0
          %v7598 = vadd.f32 %v7529, %v7592
          %v7599 = vadd.f32 %v7530, %v7595
          %v7600 = vld [vmem:[%s7460] sm:$0xe]
          %v7601 = vld [vmem:[%s7460 + $0x4] sm:$0xf]
          %s7602 = scalar_lea.vmem %s7, 272
          %v7603 = vld [vmem:[%s7602] sm:$0xf]
          %v7604 = vld [vmem:[%s7602 + $0x4] sm:$0xf]
          %v7605 = vld [vmem:[%s7602 + $0x8] sm:$0xf]
          %v7606 = vld [vmem:[%s7602 + $0xc] sm:$0xf]
          %v7609 = vunpack.c.l.b16 %v7600
          %v7610 = vunpack.c.l.b16 %v7601
          %v7611 = vpack.c.b16 %v7610, %v7609
          %v7612 = vrot.slane %v7611, 1
          %v7617 = vunpack.c.l.b16 %v7603
          %v7618 = vunpack.c.l.b16 %v7604
          %v7619 = vunpack.c.l.b16 %v7605
          %v7620 = vunpack.c.l.b16 %v7606
          %v7621 = vpack.c.b16 %v7618, %v7617
          %v7622 = vpack.c.b16 %v7620, %v7619
          %v7626 = vsel %vm6413, %v7612, 0
          %7628 = vmatprep.subr.bf16.mxu0 0
          %7629 = vmatpush1.bf16.msra.mxu0 %v7621
          %7630 = vmatprep.subr.bf16.mxu0 0
          %7631 = vmatpush1.bf16.msra.mxu0 %v7622
          %7632 = vmatprep.subr.bf16.mxu0 0
          %7633 = vmatpush1.bf16.msra.mxu0 0
          %7634 = vmatprep.subr.bf16.mxu0 0
          %7635 = vmatpush1.bf16.msra.mxu0 0
          %7636 = vmatprep.subr.bf16.mxu0 0
          %7637 = vmatpush1.bf16.msra.mxu0 0
          %7638 = vmatprep.subr.bf16.mxu0 0
          %7639 = vmatpush1.bf16.msra.mxu0 0
          %7640 = vmatprep.subr.bf16.mxu0 0
          %7641 = vmatpush1.bf16.msra.mxu0 0
          %7642 = vmatprep.subr.bf16.mxu0 0
          %7643 = vmatpush1.bf16.msra.mxu0 0
          %7644 = vmatprep.subr.bf16.mxu0 0
          %7645 = vmatpush1.bf16.msra.mxu0 0
          %7646 = vmatprep.subr.bf16.mxu0 0
          %7647 = vmatpush1.bf16.msra.mxu0 0
          %7648 = vmatprep.subr.bf16.mxu0 0
          %7649 = vmatpush1.bf16.msra.mxu0 0
          %7650 = vmatprep.subr.bf16.mxu0 0
          %7651 = vmatpush1.bf16.msra.mxu0 0
          %7652 = vmatprep.subr.bf16.mxu0 0
          %7653 = vmatpush1.bf16.msra.mxu0 0
          %7654 = vmatprep.subr.bf16.mxu0 0
          %7655 = vmatpush1.bf16.msra.mxu0 0
          %7656 = vmatprep.subr.bf16.mxu0 0
          %7657 = vmatpush1.bf16.msra.mxu0 0
          %7658 = vmatprep.subr.bf16.mxu0 0
          %7659 = vmatpush1.bf16.msra.mxu0 0
          %7660 = vmatprep.mubr.bf16.mxu0 0
          %7661 = vmatmul.mubr.bf16.gmra.mrb[0].mxu0 %v7626
          %v7662 = vpop.f32.mrb[0].mxu0
          %v7663 = vadd.f32 0.0, %v7662
          %v7664 = vpop.f32.mrb[0].mxu0
          %v7665 = vpop.f32.mrb[0].mxu0
          %v7666 = vadd.f32 0.0, %v7665
          %v7667 = vpop.f32.mrb[0].mxu0
          %7668 = vdwg.mxu0
          %v7669 = vadd.f32 %v7598, %v7663
          %v7670 = vadd.f32 %v7599, %v7666
          %s7671 = scalar_lea.vmem %s7, 288
          %v7672 = vld [vmem:[%s7671] sm:$0xf]
          %v7673 = vld [vmem:[%s7671 + $0x4] sm:$0xf]
          %v7674 = vld [vmem:[%s7671 + $0x8] sm:$0xf]
          %v7675 = vld [vmem:[%s7671 + $0xc] sm:$0xf]
          %v7677 = vshrl.u32 %v7611, 16
          %v7679 = vrot.slane %v7677, 1
          %v7680 = vshll.u32 %v7611, 16
          %v7682 = vrot.slane %v7680, 2
          %v7683 = vor.u32 %v7679, %v7682
          %v7688 = vunpack.c.l.b16 %v7672
          %v7689 = vunpack.c.l.b16 %v7673
          %v7690 = vunpack.c.l.b16 %v7674
          %v7691 = vunpack.c.l.b16 %v7675
          %v7692 = vpack.c.b16 %v7689, %v7688
          %v7693 = vpack.c.b16 %v7691, %v7690
          %v7697 = vsel %vm6413, %v7683, 0
          %7699 = vmatprep.subr.bf16.mxu0 0
          %7700 = vmatpush1.bf16.msra.mxu0 %v7692
          %7701 = vmatprep.subr.bf16.mxu0 0
          %7702 = vmatpush1.bf16.msra.mxu0 %v7693
          %7703 = vmatprep.subr.bf16.mxu0 0
          %7704 = vmatpush1.bf16.msra.mxu0 0
          %7705 = vmatprep.subr.bf16.mxu0 0
          %7706 = vmatpush1.bf16.msra.mxu0 0
          %7707 = vmatprep.subr.bf16.mxu0 0
          %7708 = vmatpush1.bf16.msra.mxu0 0
          %7709 = vmatprep.subr.bf16.mxu0 0
          %7710 = vmatpush1.bf16.msra.mxu0 0
          %7711 = vmatprep.subr.bf16.mxu0 0
          %7712 = vmatpush1.bf16.msra.mxu0 0
          %7713 = vmatprep.subr.bf16.mxu0 0
          %7714 = vmatpush1.bf16.msra.mxu0 0
          %7715 = vmatprep.subr.bf16.mxu0 0
          %7716 = vmatpush1.bf16.msra.mxu0 0
          %7717 = vmatprep.subr.bf16.mxu0 0
          %7718 = vmatpush1.bf16.msra.mxu0 0
          %7719 = vmatprep.subr.bf16.mxu0 0
          %7720 = vmatpush1.bf16.msra.mxu0 0
          %7721 = vmatprep.subr.bf16.mxu0 0
          %7722 = vmatpush1.bf16.msra.mxu0 0
          %7723 = vmatprep.subr.bf16.mxu0 0
          %7724 = vmatpush1.bf16.msra.mxu0 0
          %7725 = vmatprep.subr.bf16.mxu0 0
          %7726 = vmatpush1.bf16.msra.mxu0 0
          %7727 = vmatprep.subr.bf16.mxu0 0
          %7728 = vmatpush1.bf16.msra.mxu0 0
          %7729 = vmatprep.subr.bf16.mxu0 0
          %7730 = vmatpush1.bf16.msra.mxu0 0
          %7731 = vmatprep.mubr.bf16.mxu0 0
          %7732 = vmatmul.mubr.bf16.gmra.mrb[0].mxu0 %v7697
          %v7733 = vpop.f32.mrb[0].mxu0
          %v7734 = vadd.f32 0.0, %v7733
          %v7735 = vpop.f32.mrb[0].mxu0
          %v7736 = vpop.f32.mrb[0].mxu0
          %v7737 = vadd.f32 0.0, %v7736
          %v7738 = vpop.f32.mrb[0].mxu0
          %7739 = vdwg.mxu0
          %v7740 = vadd.f32 %v7669, %v7734
          %v7741 = vadd.f32 %v7670, %v7737
          %v7742 = vld [vmem:[%s7460] sm:$0xc]
          %v7743 = vld [vmem:[%s7460 + $0x4] sm:$0xf]
          %v7744 = vld [vmem:[%s7460 + $0x8] sm:$0x1]
          %s7745 = scalar_lea.vmem %s7, 304
          %v7746 = vld [vmem:[%s7745] sm:$0xf]
          %v7747 = vld [vmem:[%s7745 + $0x4] sm:$0xf]
          %v7748 = vld [vmem:[%s7745 + $0x8] sm:$0xf]
          %v7749 = vld [vmem:[%s7745 + $0xc] sm:$0xf]
          %v7753 = vunpack.c.l.b16 %v7742
          %v7754 = vunpack.c.l.b16 %v7743
          %v7755 = vunpack.c.l.b16 %v7744
          %v7756 = vpack.c.b16 %v7754, %v7753
          %v7757 = vpack.c.b16 %v7755, %v7755
          %v7758 = vrot.slane %v7756, 2
          %v7759 = vrot.slane %v7757, 2
          %v7760 = vsel %vm6671, %v7758, %v7759
          %v7765 = vunpack.c.l.b16 %v7746
          %v7766 = vunpack.c.l.b16 %v7747
          %v7767 = vunpack.c.l.b16 %v7748
          %v7768 = vunpack.c.l.b16 %v7749
          %v7769 = vpack.c.b16 %v7766, %v7765
          %v7770 = vpack.c.b16 %v7768, %v7767
          %v7774 = vsel %vm6413, %v7760, 0
          %7776 = vmatprep.subr.bf16.mxu0 0
          %7777 = vmatpush1.bf16.msra.mxu0 %v7769
          %7778 = vmatprep.subr.bf16.mxu0 0
          %7779 = vmatpush1.bf16.msra.mxu0 %v7770
          %7780 = vmatprep.subr.bf16.mxu0 0
          %7781 = vmatpush1.bf16.msra.mxu0 0
          %7782 = vmatprep.subr.bf16.mxu0 0
          %7783 = vmatpush1.bf16.msra.mxu0 0
          %7784 = vmatprep.subr.bf16.mxu0 0
          %7785 = vmatpush1.bf16.msra.mxu0 0
          %7786 = vmatprep.subr.bf16.mxu0 0
          %7787 = vmatpush1.bf16.msra.mxu0 0
          %7788 = vmatprep.subr.bf16.mxu0 0
          %7789 = vmatpush1.bf16.msra.mxu0 0
          %7790 = vmatprep.subr.bf16.mxu0 0
          %7791 = vmatpush1.bf16.msra.mxu0 0
          %7792 = vmatprep.subr.bf16.mxu0 0
          %7793 = vmatpush1.bf16.msra.mxu0 0
          %7794 = vmatprep.subr.bf16.mxu0 0
          %7795 = vmatpush1.bf16.msra.mxu0 0
          %7796 = vmatprep.subr.bf16.mxu0 0
          %7797 = vmatpush1.bf16.msra.mxu0 0
          %7798 = vmatprep.subr.bf16.mxu0 0
          %7799 = vmatpush1.bf16.msra.mxu0 0
          %7800 = vmatprep.subr.bf16.mxu0 0
          %7801 = vmatpush1.bf16.msra.mxu0 0
          %7802 = vmatprep.subr.bf16.mxu0 0
          %7803 = vmatpush1.bf16.msra.mxu0 0
          %7804 = vmatprep.subr.bf16.mxu0 0
          %7805 = vmatpush1.bf16.msra.mxu0 0
          %7806 = vmatprep.subr.bf16.mxu0 0
          %7807 = vmatpush1.bf16.msra.mxu0 0
          %7808 = vmatprep.mubr.bf16.mxu0 0
          %7809 = vmatmul.mubr.bf16.gmra.mrb[0].mxu0 %v7774
          %v7810 = vpop.f32.mrb[0].mxu0
          %v7811 = vadd.f32 0.0, %v7810
          %v7812 = vpop.f32.mrb[0].mxu0
          %v7813 = vpop.f32.mrb[0].mxu0
          %v7814 = vadd.f32 0.0, %v7813
          %v7815 = vpop.f32.mrb[0].mxu0
          %7816 = vdwg.mxu0
          %v7817 = vadd.f32 %v7740, %v7811
          %v7818 = vadd.f32 %v7741, %v7814
          %s7819 = sadd.s32 %s6374, 4
          %s7820 = smul.u32 %s7819, 3
          %s7821 = smul.addr %s7820, 4
          %s7822 = scalar_lea.vmem [#allocation3], %s7821
          %v7823 = vld [vmem:[%s7822] sm:$0xf]
          %v7824 = vld [vmem:[%s7822 + $0x4] sm:$0x7]
          %s7825 = scalar_lea.vmem %s7, 320
          %v7826 = vld [vmem:[%s7825] sm:$0xf]
          %v7827 = vld [vmem:[%s7825 + $0x4] sm:$0xf]
          %v7828 = vld [vmem:[%s7825 + $0x8] sm:$0xf]
          %v7829 = vld [vmem:[%s7825 + $0xc] sm:$0xf]
          %v7832 = vunpack.c.l.b16 %v7823
          %v7833 = vunpack.c.l.b16 %v7824
          %v7834 = vpack.c.b16 %v7833, %v7832
          %v7839 = vunpack.c.l.b16 %v7826
          %v7840 = vunpack.c.l.b16 %v7827
          %v7841 = vunpack.c.l.b16 %v7828
          %v7842 = vunpack.c.l.b16 %v7829
          %v7843 = vpack.c.b16 %v7840, %v7839
          %v7844 = vpack.c.b16 %v7842, %v7841
          %v7848 = vsel %vm6413, %v7834, 0
          %7850 = vmatprep.subr.bf16.mxu0 0
          %7851 = vmatpush1.bf16.msra.mxu0 %v7843
          %7852 = vmatprep.subr.bf16.mxu0 0
          %7853 = vmatpush1.bf16.msra.mxu0 %v7844
          %7854 = vmatprep.subr.bf16.mxu0 0
          %7855 = vmatpush1.bf16.msra.mxu0 0
          %7856 = vmatprep.subr.bf16.mxu0 0
          %7857 = vmatpush1.bf16.msra.mxu0 0
          %7858 = vmatprep.subr.bf16.mxu0 0
          %7859 = vmatpush1.bf16.msra.mxu0 0
          %7860 = vmatprep.subr.bf16.mxu0 0
          %7861 = vmatpush1.bf16.msra.mxu0 0
          %7862 = vmatprep.subr.bf16.mxu0 0
          %7863 = vmatpush1.bf16.msra.mxu0 0
          %7864 = vmatprep.subr.bf16.mxu0 0
          %7865 = vmatpush1.bf16.msra.mxu0 0
          %7866 = vmatprep.subr.bf16.mxu0 0
          %7867 = vmatpush1.bf16.msra.mxu0 0
          %7868 = vmatprep.subr.bf16.mxu0 0
          %7869 = vmatpush1.bf16.msra.mxu0 0
          %7870 = vmatprep.subr.bf16.mxu0 0
          %7871 = vmatpush1.bf16.msra.mxu0 0
          %7872 = vmatprep.subr.bf16.mxu0 0
          %7873 = vmatpush1.bf16.msra.mxu0 0
          %7874 = vmatprep.subr.bf16.mxu0 0
          %7875 = vmatpush1.bf16.msra.mxu0 0
          %7876 = vmatprep.subr.bf16.mxu0 0
          %7877 = vmatpush1.bf16.msra.mxu0 0
          %7878 = vmatprep.subr.bf16.mxu0 0
          %7879 = vmatpush1.bf16.msra.mxu0 0
          %7880 = vmatprep.subr.bf16.mxu0 0
          %7881 = vmatpush1.bf16.msra.mxu0 0
          %7882 = vmatprep.mubr.bf16.mxu0 0
          %7883 = vmatmul.mubr.bf16.gmra.mrb[0].mxu0 %v7848
          %v7884 = vpop.f32.mrb[0].mxu0
          %v7885 = vadd.f32 0.0, %v7884
          %v7886 = vpop.f32.mrb[0].mxu0
          %v7887 = vpop.f32.mrb[0].mxu0
          %v7888 = vadd.f32 0.0, %v7887
          %v7889 = vpop.f32.mrb[0].mxu0
          %7890 = vdwg.mxu0
          %v7891 = vadd.f32 %v7817, %v7885
          %v7892 = vadd.f32 %v7818, %v7888
          %s7893 = scalar_lea.vmem %s7, 336
          %v7894 = vld [vmem:[%s7893] sm:$0xf]
          %v7895 = vld [vmem:[%s7893 + $0x4] sm:$0xf]
          %v7896 = vld [vmem:[%s7893 + $0x8] sm:$0xf]
          %v7897 = vld [vmem:[%s7893 + $0xc] sm:$0xf]
          %v7898 = vshrl.u32 %v7834, 16
          %v7900 = vshll.u32 %v7834, 16
          %v7902 = vrot.slane %v7900, 1
          %v7903 = vor.u32 %v7898, %v7902
          %v7908 = vunpack.c.l.b16 %v7894
          %v7909 = vunpack.c.l.b16 %v7895
          %v7910 = vunpack.c.l.b16 %v7896
          %v7911 = vunpack.c.l.b16 %v7897
          %v7912 = vpack.c.b16 %v7909, %v7908
          %v7913 = vpack.c.b16 %v7911, %v7910
          %v7917 = vsel %vm6413, %v7903, 0
          %7919 = vmatprep.subr.bf16.mxu0 0
          %7920 = vmatpush1.bf16.msra.mxu0 %v7912
          %7921 = vmatprep.subr.bf16.mxu0 0
          %7922 = vmatpush1.bf16.msra.mxu0 %v7913
          %7923 = vmatprep.subr.bf16.mxu0 0
          %7924 = vmatpush1.bf16.msra.mxu0 0
          %7925 = vmatprep.subr.bf16.mxu0 0
          %7926 = vmatpush1.bf16.msra.mxu0 0
          %7927 = vmatprep.subr.bf16.mxu0 0
          %7928 = vmatpush1.bf16.msra.mxu0 0
          %7929 = vmatprep.subr.bf16.mxu0 0
          %7930 = vmatpush1.bf16.msra.mxu0 0
          %7931 = vmatprep.subr.bf16.mxu0 0
          %7932 = vmatpush1.bf16.msra.mxu0 0
          %7933 = vmatprep.subr.bf16.mxu0 0
          %7934 = vmatpush1.bf16.msra.mxu0 0
          %7935 = vmatprep.subr.bf16.mxu0 0
          %7936 = vmatpush1.bf16.msra.mxu0 0
          %7937 = vmatprep.subr.bf16.mxu0 0
          %7938 = vmatpush1.bf16.msra.mxu0 0
          %7939 = vmatprep.subr.bf16.mxu0 0
          %7940 = vmatpush1.bf16.msra.mxu0 0
          %7941 = vmatprep.subr.bf16.mxu0 0
          %7942 = vmatpush1.bf16.msra.mxu0 0
          %7943 = vmatprep.subr.bf16.mxu0 0
          %7944 = vmatpush1.bf16.msra.mxu0 0
          %7945 = vmatprep.subr.bf16.mxu0 0
          %7946 = vmatpush1.bf16.msra.mxu0 0
          %7947 = vmatprep.subr.bf16.mxu0 0
          %7948 = vmatpush1.bf16.msra.mxu0 0
          %7949 = vmatprep.subr.bf16.mxu0 0
          %7950 = vmatpush1.bf16.msra.mxu0 0
          %7951 = vmatprep.mubr.bf16.mxu0 0
          %7952 = vmatmul.mubr.bf16.gmra.mrb[0].mxu0 %v7917
          %v7953 = vpop.f32.mrb[0].mxu0
          %v7954 = vadd.f32 0.0, %v7953
          %v7955 = vpop.f32.mrb[0].mxu0
          %v7956 = vpop.f32.mrb[0].mxu0
          %v7957 = vadd.f32 0.0, %v7956
          %v7958 = vpop.f32.mrb[0].mxu0
          %7959 = vdwg.mxu0
          %v7960 = vadd.f32 %v7891, %v7954
          %v7961 = vadd.f32 %v7892, %v7957
          %v7962 = vld [vmem:[%s7822] sm:$0xe]
          %v7963 = vld [vmem:[%s7822 + $0x4] sm:$0xf]
          %s7964 = scalar_lea.vmem %s7, 352
          %v7965 = vld [vmem:[%s7964] sm:$0xf]
          %v7966 = vld [vmem:[%s7964 + $0x4] sm:$0xf]
          %v7967 = vld [vmem:[%s7964 + $0x8] sm:$0xf]
          %v7968 = vld [vmem:[%s7964 + $0xc] sm:$0xf]
          %v7971 = vunpack.c.l.b16 %v7962
          %v7972 = vunpack.c.l.b16 %v7963
          %v7973 = vpack.c.b16 %v7972, %v7971
          %v7974 = vrot.slane %v7973, 1
          %v7979 = vunpack.c.l.b16 %v7965
          %v7980 = vunpack.c.l.b16 %v7966
          %v7981 = vunpack.c.l.b16 %v7967
          %v7982 = vunpack.c.l.b16 %v7968
          %v7983 = vpack.c.b16 %v7980, %v7979
          %v7984 = vpack.c.b16 %v7982, %v7981
          %v7988 = vsel %vm6413, %v7974, 0
          %7990 = vmatprep.subr.bf16.mxu0 0
          %7991 = vmatpush1.bf16.msra.mxu0 %v7983
          %7992 = vmatprep.subr.bf16.mxu0 0
          %7993 = vmatpush1.bf16.msra.mxu0 %v7984
          %7994 = vmatprep.subr.bf16.mxu0 0
          %7995 = vmatpush1.bf16.msra.mxu0 0
          %7996 = vmatprep.subr.bf16.mxu0 0
          %7997 = vmatpush1.bf16.msra.mxu0 0
          %7998 = vmatprep.subr.bf16.mxu0 0
          %7999 = vmatpush1.bf16.msra.mxu0 0
          %8000 = vmatprep.subr.bf16.mxu0 0
          %8001 = vmatpush1.bf16.msra.mxu0 0
          %8002 = vmatprep.subr.bf16.mxu0 0
          %8003 = vmatpush1.bf16.msra.mxu0 0
          %8004 = vmatprep.subr.bf16.mxu0 0
          %8005 = vmatpush1.bf16.msra.mxu0 0
          %8006 = vmatprep.subr.bf16.mxu0 0
          %8007 = vmatpush1.bf16.msra.mxu0 0
          %8008 = vmatprep.subr.bf16.mxu0 0
          %8009 = vmatpush1.bf16.msra.mxu0 0
          %8010 = vmatprep.subr.bf16.mxu0 0
          %8011 = vmatpush1.bf16.msra.mxu0 0
          %8012 = vmatprep.subr.bf16.mxu0 0
          %8013 = vmatpush1.bf16.msra.mxu0 0
          %8014 = vmatprep.subr.bf16.mxu0 0
          %8015 = vmatpush1.bf16.msra.mxu0 0
          %8016 = vmatprep.subr.bf16.mxu0 0
          %8017 = vmatpush1.bf16.msra.mxu0 0
          %8018 = vmatprep.subr.bf16.mxu0 0
          %8019 = vmatpush1.bf16.msra.mxu0 0
          %8020 = vmatprep.subr.bf16.mxu0 0
          %8021 = vmatpush1.bf16.msra.mxu0 0
          %8022 = vmatprep.mubr.bf16.mxu0 0
          %8023 = vmatmul.mubr.bf16.gmra.mrb[0].mxu0 %v7988
          %v8024 = vpop.f32.mrb[0].mxu0
          %v8025 = vadd.f32 0.0, %v8024
          %v8026 = vpop.f32.mrb[0].mxu0
          %v8027 = vpop.f32.mrb[0].mxu0
          %v8028 = vadd.f32 0.0, %v8027
          %v8029 = vpop.f32.mrb[0].mxu0
          %8030 = vdwg.mxu0
          %v8031 = vadd.f32 %v7960, %v8025
          %v8032 = vadd.f32 %v7961, %v8028
          %s8033 = scalar_lea.vmem %s7, 368
          %v8034 = vld [vmem:[%s8033] sm:$0xf]
          %v8035 = vld [vmem:[%s8033 + $0x4] sm:$0xf]
          %v8036 = vld [vmem:[%s8033 + $0x8] sm:$0xf]
          %v8037 = vld [vmem:[%s8033 + $0xc] sm:$0xf]
          %v8039 = vshrl.u32 %v7973, 16
          %v8041 = vrot.slane %v8039, 1
          %v8042 = vshll.u32 %v7973, 16
          %v8044 = vrot.slane %v8042, 2
          %v8045 = vor.u32 %v8041, %v8044
          %v8050 = vunpack.c.l.b16 %v8034
          %v8051 = vunpack.c.l.b16 %v8035
          %v8052 = vunpack.c.l.b16 %v8036
          %v8053 = vunpack.c.l.b16 %v8037
          %v8054 = vpack.c.b16 %v8051, %v8050
          %v8055 = vpack.c.b16 %v8053, %v8052
          %v8059 = vsel %vm6413, %v8045, 0
          %8061 = vmatprep.subr.bf16.mxu0 0
          %8062 = vmatpush1.bf16.msra.mxu0 %v8054
          %8063 = vmatprep.subr.bf16.mxu0 0
          %8064 = vmatpush1.bf16.msra.mxu0 %v8055
          %8065 = vmatprep.subr.bf16.mxu0 0
          %8066 = vmatpush1.bf16.msra.mxu0 0
          %8067 = vmatprep.subr.bf16.mxu0 0
          %8068 = vmatpush1.bf16.msra.mxu0 0
          %8069 = vmatprep.subr.bf16.mxu0 0
          %8070 = vmatpush1.bf16.msra.mxu0 0
          %8071 = vmatprep.subr.bf16.mxu0 0
          %8072 = vmatpush1.bf16.msra.mxu0 0
          %8073 = vmatprep.subr.bf16.mxu0 0
          %8074 = vmatpush1.bf16.msra.mxu0 0
          %8075 = vmatprep.subr.bf16.mxu0 0
          %8076 = vmatpush1.bf16.msra.mxu0 0
          %8077 = vmatprep.subr.bf16.mxu0 0
          %8078 = vmatpush1.bf16.msra.mxu0 0
          %8079 = vmatprep.subr.bf16.mxu0 0
          %8080 = vmatpush1.bf16.msra.mxu0 0
          %8081 = vmatprep.subr.bf16.mxu0 0
          %8082 = vmatpush1.bf16.msra.mxu0 0
          %8083 = vmatprep.subr.bf16.mxu0 0
          %8084 = vmatpush1.bf16.msra.mxu0 0
          %8085 = vmatprep.subr.bf16.mxu0 0
          %8086 = vmatpush1.bf16.msra.mxu0 0
          %8087 = vmatprep.subr.bf16.mxu0 0
          %8088 = vmatpush1.bf16.msra.mxu0 0
          %8089 = vmatprep.subr.bf16.mxu0 0
          %8090 = vmatpush1.bf16.msra.mxu0 0
          %8091 = vmatprep.subr.bf16.mxu0 0
          %8092 = vmatpush1.bf16.msra.mxu0 0
          %8093 = vmatprep.mubr.bf16.mxu0 0
          %8094 = vmatmul.mubr.bf16.gmra.mrb[0].mxu0 %v8059
          %v8095 = vpop.f32.mrb[0].mxu0
          %v8096 = vadd.f32 0.0, %v8095
          %v8097 = vpop.f32.mrb[0].mxu0
          %v8098 = vpop.f32.mrb[0].mxu0
          %v8099 = vadd.f32 0.0, %v8098
          %v8100 = vpop.f32.mrb[0].mxu0
          %8101 = vdwg.mxu0
          %v8102 = vadd.f32 %v8031, %v8096
          %v8103 = vadd.f32 %v8032, %v8099
          %v8104 = vld [vmem:[%s7822] sm:$0xc]
          %v8105 = vld [vmem:[%s7822 + $0x4] sm:$0xf]
          %v8106 = vld [vmem:[%s7822 + $0x8] sm:$0x1]
          %s8107 = scalar_lea.vmem %s7, 384
          %v8108 = vld [vmem:[%s8107] sm:$0xf]
          %v8109 = vld [vmem:[%s8107 + $0x4] sm:$0xf]
          %v8110 = vld [vmem:[%s8107 + $0x8] sm:$0xf]
          %v8111 = vld [vmem:[%s8107 + $0xc] sm:$0xf]
          %v8115 = vunpack.c.l.b16 %v8104
          %v8116 = vunpack.c.l.b16 %v8105
          %v8117 = vunpack.c.l.b16 %v8106
          %v8118 = vpack.c.b16 %v8116, %v8115
          %v8119 = vpack.c.b16 %v8117, %v8117
          %v8120 = vrot.slane %v8118, 2
          %v8121 = vrot.slane %v8119, 2
          %v8122 = vsel %vm6671, %v8120, %v8121
          %v8127 = vunpack.c.l.b16 %v8108
          %v8128 = vunpack.c.l.b16 %v8109
          %v8129 = vunpack.c.l.b16 %v8110
          %v8130 = vunpack.c.l.b16 %v8111
          %v8131 = vpack.c.b16 %v8128, %v8127
          %v8132 = vpack.c.b16 %v8130, %v8129
          %v8136 = vsel %vm6413, %v8122, 0
          %8138 = vmatprep.subr.bf16.mxu0 0
          %8139 = vmatpush1.bf16.msra.mxu0 %v8131
          %8140 = vmatprep.subr.bf16.mxu0 0
          %8141 = vmatpush1.bf16.msra.mxu0 %v8132
          %8142 = vmatprep.subr.bf16.mxu0 0
          %8143 = vmatpush1.bf16.msra.mxu0 0
          %8144 = vmatprep.subr.bf16.mxu0 0
          %8145 = vmatpush1.bf16.msra.mxu0 0
          %8146 = vmatprep.subr.bf16.mxu0 0
          %8147 = vmatpush1.bf16.msra.mxu0 0
          %8148 = vmatprep.subr.bf16.mxu0 0
          %8149 = vmatpush1.bf16.msra.mxu0 0
          %8150 = vmatprep.subr.bf16.mxu0 0
          %8151 = vmatpush1.bf16.msra.mxu0 0
          %8152 = vmatprep.subr.bf16.mxu0 0
          %8153 = vmatpush1.bf16.msra.mxu0 0
          %8154 = vmatprep.subr.bf16.mxu0 0
          %8155 = vmatpush1.bf16.msra.mxu0 0
          %8156 = vmatprep.subr.bf16.mxu0 0
          %8157 = vmatpush1.bf16.msra.mxu0 0
          %8158 = vmatprep.subr.bf16.mxu0 0
          %8159 = vmatpush1.bf16.msra.mxu0 0
          %8160 = vmatprep.subr.bf16.mxu0 0
          %8161 = vmatpush1.bf16.msra.mxu0 0
          %8162 = vmatprep.subr.bf16.mxu0 0
          %8163 = vmatpush1.bf16.msra.mxu0 0
          %8164 = vmatprep.subr.bf16.mxu0 0
          %8165 = vmatpush1.bf16.msra.mxu0 0
          %8166 = vmatprep.subr.bf16.mxu0 0
          %8167 = vmatpush1.bf16.msra.mxu0 0
          %8168 = vmatprep.subr.bf16.mxu0 0
          %8169 = vmatpush1.bf16.msra.mxu0 0
          %8170 = vmatprep.mubr.bf16.mxu0 0
          %8171 = vmatmul.mubr.bf16.gmra.mrb[0].mxu0 %v8136
          %v8172 = vpop.f32.mrb[0].mxu0
          %v8173 = vadd.f32 0.0, %v8172
          %v8174 = vpop.f32.mrb[0].mxu0
          %v8175 = vpop.f32.mrb[0].mxu0
          %v8176 = vadd.f32 0.0, %v8175
          %v8177 = vpop.f32.mrb[0].mxu0
          %8178 = vdwg.mxu0
          %v8179 = vadd.f32 %v8102, %v8173
          %v8180 = vadd.f32 %v8103, %v8176
          %v8182 = vlaneseq
          %v8183 = vshrl.u32 %v8182, 7
          %v8184 = vsub.s32 0, %v8183
          %v8185 = vrot.slane %v6367, %v8184
          %vm8187 = vcmask 105472
          %v8189 = vsel %vm8187, %v6366, 0
          %vm8191 = vcmask 1044480
          %v8193 = vsel %vm8191, %v8180, 0
          %8195 = vmatprep.subr.mxu0 0.0
          %8196 = vmatpush1.msra.mxu0 %v8179
          %8197 = vmatprep.subr.mxu0 0.0
          %8198 = vmatpush1.msra.mxu0 %v8193
          %8199 = vmatprep.subr.mxu0 0.0
          %8200 = vmatpush1.msra.mxu0 0.0
          %8201 = vmatprep.subr.mxu0 0.0
          %8202 = vmatpush1.msra.mxu0 0.0
          %8203 = vmatprep.subr.mxu0 0.0
          %8204 = vmatpush1.msra.mxu0 0.0
          %8205 = vmatprep.subr.mxu0 0.0
          %8206 = vmatpush1.msra.mxu0 0.0
          %8207 = vmatprep.subr.mxu0 0.0
          %8208 = vmatpush1.msra.mxu0 0.0
          %8209 = vmatprep.subr.mxu0 0.0
          %8210 = vmatpush1.msra.mxu0 0.0
          %8211 = vmatprep.subr.mxu0 0.0
          %8212 = vmatpush1.msra.mxu0 0.0
          %8213 = vmatprep.subr.mxu0 0.0
          %8214 = vmatpush1.msra.mxu0 0.0
          %8215 = vmatprep.subr.mxu0 0.0
          %8216 = vmatpush1.msra.mxu0 0.0
          %8217 = vmatprep.subr.mxu0 0.0
          %8218 = vmatpush1.msra.mxu0 0.0
          %8219 = vmatprep.subr.mxu0 0.0
          %8220 = vmatpush1.msra.mxu0 0.0
          %8221 = vmatprep.subr.mxu0 0.0
          %8222 = vmatpush1.msra.mxu0 0.0
          %8223 = vmatprep.subr.mxu0 0.0
          %8224 = vmatpush1.msra.mxu0 0.0
          %8225 = vmatprep.subr.mxu0 0.0
          %8226 = vmatpush1.msra.mxu0 0.0
          %8227 = vmatprep.subr.mxu0 0.0
          %8228 = vmatpush1.msra.mxu0 0.0
          %8229 = vmatprep.subr.mxu0 0.0
          %8230 = vmatpush1.msra.mxu0 0.0
          %8231 = vmatprep.subr.mxu0 0.0
          %8232 = vmatpush1.msra.mxu0 0.0
          %8233 = vmatprep.subr.mxu0 0.0
          %8234 = vmatpush1.msra.mxu0 0.0
          %8235 = vmatprep.subr.mxu0 0.0
          %8236 = vmatpush1.msra.mxu0 0.0
          %8237 = vmatprep.subr.mxu0 0.0
          %8238 = vmatpush1.msra.mxu0 0.0
          %8239 = vmatprep.subr.mxu0 0.0
          %8240 = vmatpush1.msra.mxu0 0.0
          %8241 = vmatprep.subr.mxu0 0.0
          %8242 = vmatpush1.msra.mxu0 0.0
          %8243 = vmatprep.subr.mxu0 0.0
          %8244 = vmatpush1.msra.mxu0 0.0
          %8245 = vmatprep.subr.mxu0 0.0
          %8246 = vmatpush1.msra.mxu0 0.0
          %8247 = vmatprep.subr.mxu0 0.0
          %8248 = vmatpush1.msra.mxu0 0.0
          %8249 = vmatprep.subr.mxu0 0.0
          %8250 = vmatpush1.msra.mxu0 0.0
          %8251 = vmatprep.subr.mxu0 0.0
          %8252 = vmatpush1.msra.mxu0 0.0
          %8253 = vmatprep.subr.mxu0 0.0
          %8254 = vmatpush1.msra.mxu0 0.0
          %8255 = vmatprep.subr.mxu0 0.0
          %8256 = vmatpush1.msra.mxu0 0.0
          %8257 = vmatprep.subr.mxu0 0.0
          %8258 = vmatpush1.msra.mxu0 0.0
          %8259 = vmatprep.mubr.f32.mxu0 0.0
          %8260 = vmatmul.mubr.f32.gmra.mrb[0].mxu0 %v8189
          %v8261 = vpop.f32.mrb[0].mxu0
          %v8262 = vadd.f32 %v8185, %v8261
          %v8263 = vpop.f32.mrb[0].mxu0
          %8264 = vdwg.mxu0
          %v8265 = vmax.f32 %v8262, 0.0
          %v8266 = vpack.c.bf16 %v8265, %v8265
          %s8267 = smul.addr %s6369, 4
          %s8268 = scalar_lea.vmem [#allocation4], %s8267
          %vm8269 = vcmask 257024
          %vm8270 = vsmask.f32 3328
          %vm8271 = vmand %vm8269, %vm8270
          %v8272 = vld [vmem:[%s8268] sm:$0xf]
          %v8273 = vsel %vm8271, %v8266, %v8272
          %8274 = vst [vmem:[%s8268] sm:$0xf] %v8273
        $region87: #{dqn_forward.1} parent=67 // loop_footer
          %s6373 = sadd.s32 1, %s6369
        $region88: #{dqn_forward.1} parent=67 // loop_footer_branch
          %6368 = sbr.rel target = $region84
        $region89: #{dqn_forward.1} parent=67 // loop_exit
          _
        %v8275 = vld [vmem:[#allocation4] sm:$0x1]
        %v8276 = vld [vmem:[%s10] sm:$0xf]
        %v8277 = vld [vmem:[%s10 + $0x4] sm:$0xf]
        %v8278 = vld [vmem:[%s10 + $0x8] sm:$0xf]
        %v8279 = vld [vmem:[%s10 + $0xc] sm:$0xf]
        %s8280 = scalar_lea.vmem %s10, 16
        %v8281 = vld [vmem:[%s8280] sm:$0xf]
        %v8282 = vld [vmem:[%s8280 + $0x4] sm:$0xf]
        %v8283 = vld [vmem:[%s8280 + $0x8] sm:$0xf]
        %v8284 = vld [vmem:[%s8280 + $0xc] sm:$0xf]
        %v8286 = vunpack.c.l.b16 %v8275
        %v8287 = vpack.c.b16 %v8286, %v8286
        %v8289 = vshrl.u32 %v8287, 16
        %v8295 = vunpack.c.l.b16 %v8281
        %v8296 = vunpack.c.l.b16 %v8282
        %v8297 = vunpack.c.l.b16 %v8283
        %v8298 = vunpack.c.l.b16 %v8284
        %v8299 = vpack.c.b16 %v8296, %v8295
        %v8300 = vpack.c.b16 %v8298, %v8297
        %vm8303 = vcmask 261120
        %v8305 = vsel %vm8303, %v8289, 0
        %8307 = vmatprep.subr.bf16.mxu0 0
        %8308 = vmatpush1.bf16.msra.mxu0 %v8299
        %8309 = vmatprep.subr.bf16.mxu0 0
        %8310 = vmatpush1.bf16.msra.mxu0 %v8300
        %8311 = vmatprep.subr.bf16.mxu0 0
        %8312 = vmatpush1.bf16.msra.mxu0 0
        %8313 = vmatprep.subr.bf16.mxu0 0
        %8314 = vmatpush1.bf16.msra.mxu0 0
        %8315 = vmatprep.subr.bf16.mxu0 0
        %8316 = vmatpush1.bf16.msra.mxu0 0
        %8317 = vmatprep.subr.bf16.mxu0 0
        %8318 = vmatpush1.bf16.msra.mxu0 0
        %8319 = vmatprep.subr.bf16.mxu0 0
        %8320 = vmatpush1.bf16.msra.mxu0 0
        %8321 = vmatprep.subr.bf16.mxu0 0
        %8322 = vmatpush1.bf16.msra.mxu0 0
        %8323 = vmatprep.subr.bf16.mxu0 0
        %8324 = vmatpush1.bf16.msra.mxu0 0
        %8325 = vmatprep.subr.bf16.mxu0 0
        %8326 = vmatpush1.bf16.msra.mxu0 0
        %8327 = vmatprep.subr.bf16.mxu0 0
        %8328 = vmatpush1.bf16.msra.mxu0 0
        %8329 = vmatprep.subr.bf16.mxu0 0
        %8330 = vmatpush1.bf16.msra.mxu0 0
        %8331 = vmatprep.subr.bf16.mxu0 0
        %8332 = vmatpush1.bf16.msra.mxu0 0
        %8333 = vmatprep.subr.bf16.mxu0 0
        %8334 = vmatpush1.bf16.msra.mxu0 0
        %8335 = vmatprep.subr.bf16.mxu0 0
        %8336 = vmatpush1.bf16.msra.mxu0 0
        %8337 = vmatprep.subr.bf16.mxu0 0
        %8338 = vmatpush1.bf16.msra.mxu0 0
        %8339 = vmatprep.mubr.bf16.mxu0 0
        %8340 = vmatmul.mubr.bf16.gmra.mrb[0].mxu0 %v8305
        %v8341 = vpop.f32.mrb[0].mxu0
        %v8342 = vadd.f32 0.0, %v8341
        %v8343 = vpop.f32.mrb[0].mxu0
        %v8344 = vpop.f32.mrb[0].mxu0
        %v8345 = vpop.f32.mrb[0].mxu0
        %8346 = vdwg.mxu0
        %v8351 = vunpack.c.l.b16 %v8276
        %v8352 = vunpack.c.l.b16 %v8277
        %v8353 = vunpack.c.l.b16 %v8278
        %v8354 = vunpack.c.l.b16 %v8279
        %v8355 = vpack.c.b16 %v8352, %v8351
        %v8356 = vpack.c.b16 %v8354, %v8353
        %v8360 = vsel %vm8303, %v8275, 0
        %8362 = vmatprep.subr.bf16.mxu0 0
        %8363 = vmatpush1.bf16.msra.mxu0 %v8355
        %8364 = vmatprep.subr.bf16.mxu0 0
        %8365 = vmatpush1.bf16.msra.mxu0 %v8356
        %8366 = vmatprep.subr.bf16.mxu0 0
        %8367 = vmatpush1.bf16.msra.mxu0 0
        %8368 = vmatprep.subr.bf16.mxu0 0
        %8369 = vmatpush1.bf16.msra.mxu0 0
        %8370 = vmatprep.subr.bf16.mxu0 0
        %8371 = vmatpush1.bf16.msra.mxu0 0
        %8372 = vmatprep.subr.bf16.mxu0 0
        %8373 = vmatpush1.bf16.msra.mxu0 0
        %8374 = vmatprep.subr.bf16.mxu0 0
        %8375 = vmatpush1.bf16.msra.mxu0 0
        %8376 = vmatprep.subr.bf16.mxu0 0
        %8377 = vmatpush1.bf16.msra.mxu0 0
        %8378 = vmatprep.subr.bf16.mxu0 0
        %8379 = vmatpush1.bf16.msra.mxu0 0
        %8380 = vmatprep.subr.bf16.mxu0 0
        %8381 = vmatpush1.bf16.msra.mxu0 0
        %8382 = vmatprep.subr.bf16.mxu0 0
        %8383 = vmatpush1.bf16.msra.mxu0 0
        %8384 = vmatprep.subr.bf16.mxu0 0
        %8385 = vmatpush1.bf16.msra.mxu0 0
        %8386 = vmatprep.subr.bf16.mxu0 0
        %8387 = vmatpush1.bf16.msra.mxu0 0
        %8388 = vmatprep.subr.bf16.mxu0 0
        %8389 = vmatpush1.bf16.msra.mxu0 0
        %8390 = vmatprep.subr.bf16.mxu0 0
        %8391 = vmatpush1.bf16.msra.mxu0 0
        %8392 = vmatprep.subr.bf16.mxu0 0
        %8393 = vmatpush1.bf16.msra.mxu0 0
        %8394 = vmatprep.mubr.bf16.mxu0 0
        %8395 = vmatmul.mubr.bf16.gmra.mrb[0].mxu0 %v8360
        %v8396 = vpop.f32.mrb[0].mxu0
        %v8397 = vadd.f32 %v8342, %v8396
        %v8398 = vpop.f32.mrb[0].mxu0
        %v8399 = vpop.f32.mrb[0].mxu0
        %v8400 = vpop.f32.mrb[0].mxu0
        %8401 = vdwg.mxu0
        %v8402 = vld [vmem:[#allocation4] sm:$0x2]
        %s8403 = scalar_lea.vmem %s10, 32
        %v8404 = vld [vmem:[%s8403] sm:$0xf]
        %v8405 = vld [vmem:[%s8403 + $0x4] sm:$0xf]
        %v8406 = vld [vmem:[%s8403 + $0x8] sm:$0xf]
        %v8407 = vld [vmem:[%s8403 + $0xc] sm:$0xf]
        %v8409 = vunpack.c.l.b16 %v8402
        %v8410 = vpack.c.b16 %v8409, %v8409
        %v8411 = vrot.slane %v8410, 1
        %v8416 = vunpack.c.l.b16 %v8404
        %v8417 = vunpack.c.l.b16 %v8405
        %v8418 = vunpack.c.l.b16 %v8406
        %v8419 = vunpack.c.l.b16 %v8407
        %v8420 = vpack.c.b16 %v8417, %v8416
        %v8421 = vpack.c.b16 %v8419, %v8418
        %v8425 = vsel %vm8303, %v8411, 0
        %8427 = vmatprep.subr.bf16.mxu0 0
        %8428 = vmatpush1.bf16.msra.mxu0 %v8420
        %8429 = vmatprep.subr.bf16.mxu0 0
        %8430 = vmatpush1.bf16.msra.mxu0 %v8421
        %8431 = vmatprep.subr.bf16.mxu0 0
        %8432 = vmatpush1.bf16.msra.mxu0 0
        %8433 = vmatprep.subr.bf16.mxu0 0
        %8434 = vmatpush1.bf16.msra.mxu0 0
        %8435 = vmatprep.subr.bf16.mxu0 0
        %8436 = vmatpush1.bf16.msra.mxu0 0
        %8437 = vmatprep.subr.bf16.mxu0 0
        %8438 = vmatpush1.bf16.msra.mxu0 0
        %8439 = vmatprep.subr.bf16.mxu0 0
        %8440 = vmatpush1.bf16.msra.mxu0 0
        %8441 = vmatprep.subr.bf16.mxu0 0
        %8442 = vmatpush1.bf16.msra.mxu0 0
        %8443 = vmatprep.subr.bf16.mxu0 0
        %8444 = vmatpush1.bf16.msra.mxu0 0
        %8445 = vmatprep.subr.bf16.mxu0 0
        %8446 = vmatpush1.bf16.msra.mxu0 0
        %8447 = vmatprep.subr.bf16.mxu0 0
        %8448 = vmatpush1.bf16.msra.mxu0 0
        %8449 = vmatprep.subr.bf16.mxu0 0
        %8450 = vmatpush1.bf16.msra.mxu0 0
        %8451 = vmatprep.subr.bf16.mxu0 0
        %8452 = vmatpush1.bf16.msra.mxu0 0
        %8453 = vmatprep.subr.bf16.mxu0 0
        %8454 = vmatpush1.bf16.msra.mxu0 0
        %8455 = vmatprep.subr.bf16.mxu0 0
        %8456 = vmatpush1.bf16.msra.mxu0 0
        %8457 = vmatprep.subr.bf16.mxu0 0
        %8458 = vmatpush1.bf16.msra.mxu0 0
        %8459 = vmatprep.mubr.bf16.mxu0 0
        %8460 = vmatmul.mubr.bf16.gmra.mrb[0].mxu0 %v8425
        %v8461 = vpop.f32.mrb[0].mxu0
        %v8462 = vadd.f32 0.0, %v8461
        %v8463 = vpop.f32.mrb[0].mxu0
        %v8464 = vpop.f32.mrb[0].mxu0
        %v8465 = vpop.f32.mrb[0].mxu0
        %8466 = vdwg.mxu0
        %v8467 = vadd.f32 %v8397, %v8462
        %s8468 = scalar_lea.vmem %s10, 48
        %v8469 = vld [vmem:[%s8468] sm:$0xf]
        %v8470 = vld [vmem:[%s8468 + $0x4] sm:$0xf]
        %v8471 = vld [vmem:[%s8468 + $0x8] sm:$0xf]
        %v8472 = vld [vmem:[%s8468 + $0xc] sm:$0xf]
        %v8474 = vshrl.u32 %v8410, 16
        %v8476 = vrot.slane %v8474, 1
        %v8481 = vunpack.c.l.b16 %v8469
        %v8482 = vunpack.c.l.b16 %v8470
        %v8483 = vunpack.c.l.b16 %v8471
        %v8484 = vunpack.c.l.b16 %v8472
        %v8485 = vpack.c.b16 %v8482, %v8481
        %v8486 = vpack.c.b16 %v8484, %v8483
        %v8490 = vsel %vm8303, %v8476, 0
        %8492 = vmatprep.subr.bf16.mxu0 0
        %8493 = vmatpush1.bf16.msra.mxu0 %v8485
        %8494 = vmatprep.subr.bf16.mxu0 0
        %8495 = vmatpush1.bf16.msra.mxu0 %v8486
        %8496 = vmatprep.subr.bf16.mxu0 0
        %8497 = vmatpush1.bf16.msra.mxu0 0
        %8498 = vmatprep.subr.bf16.mxu0 0
        %8499 = vmatpush1.bf16.msra.mxu0 0
        %8500 = vmatprep.subr.bf16.mxu0 0
        %8501 = vmatpush1.bf16.msra.mxu0 0
        %8502 = vmatprep.subr.bf16.mxu0 0
        %8503 = vmatpush1.bf16.msra.mxu0 0
        %8504 = vmatprep.subr.bf16.mxu0 0
        %8505 = vmatpush1.bf16.msra.mxu0 0
        %8506 = vmatprep.subr.bf16.mxu0 0
        %8507 = vmatpush1.bf16.msra.mxu0 0
        %8508 = vmatprep.subr.bf16.mxu0 0
        %8509 = vmatpush1.bf16.msra.mxu0 0
        %8510 = vmatprep.subr.bf16.mxu0 0
        %8511 = vmatpush1.bf16.msra.mxu0 0
        %8512 = vmatprep.subr.bf16.mxu0 0
        %8513 = vmatpush1.bf16.msra.mxu0 0
        %8514 = vmatprep.subr.bf16.mxu0 0
        %8515 = vmatpush1.bf16.msra.mxu0 0
        %8516 = vmatprep.subr.bf16.mxu0 0
        %8517 = vmatpush1.bf16.msra.mxu0 0
        %8518 = vmatprep.subr.bf16.mxu0 0
        %8519 = vmatpush1.bf16.msra.mxu0 0
        %8520 = vmatprep.subr.bf16.mxu0 0
        %8521 = vmatpush1.bf16.msra.mxu0 0
        %8522 = vmatprep.subr.bf16.mxu0 0
        %8523 = vmatpush1.bf16.msra.mxu0 0
        %8524 = vmatprep.mubr.bf16.mxu0 0
        %8525 = vmatmul.mubr.bf16.gmra.mrb[0].mxu0 %v8490
        %v8526 = vpop.f32.mrb[0].mxu0
        %v8527 = vadd.f32 0.0, %v8526
        %v8528 = vpop.f32.mrb[0].mxu0
        %v8529 = vpop.f32.mrb[0].mxu0
        %v8530 = vpop.f32.mrb[0].mxu0
        %8531 = vdwg.mxu0
        %v8532 = vadd.f32 %v8467, %v8527
        %v8533 = vld [vmem:[#allocation4] sm:$0x4]
        %s8534 = scalar_lea.vmem %s10, 64
        %v8535 = vld [vmem:[%s8534] sm:$0xf]
        %v8536 = vld [vmem:[%s8534 + $0x4] sm:$0xf]
        %v8537 = vld [vmem:[%s8534 + $0x8] sm:$0xf]
        %v8538 = vld [vmem:[%s8534 + $0xc] sm:$0xf]
        %v8540 = vunpack.c.l.b16 %v8533
        %v8541 = vpack.c.b16 %v8540, %v8540
        %v8542 = vrot.slane %v8541, 2
        %v8547 = vunpack.c.l.b16 %v8535
        %v8548 = vunpack.c.l.b16 %v8536
        %v8549 = vunpack.c.l.b16 %v8537
        %v8550 = vunpack.c.l.b16 %v8538
        %v8551 = vpack.c.b16 %v8548, %v8547
        %v8552 = vpack.c.b16 %v8550, %v8549
        %v8556 = vsel %vm8303, %v8542, 0
        %8558 = vmatprep.subr.bf16.mxu0 0
        %8559 = vmatpush1.bf16.msra.mxu0 %v8551
        %8560 = vmatprep.subr.bf16.mxu0 0
        %8561 = vmatpush1.bf16.msra.mxu0 %v8552
        %8562 = vmatprep.subr.bf16.mxu0 0
        %8563 = vmatpush1.bf16.msra.mxu0 0
        %8564 = vmatprep.subr.bf16.mxu0 0
        %8565 = vmatpush1.bf16.msra.mxu0 0
        %8566 = vmatprep.subr.bf16.mxu0 0
        %8567 = vmatpush1.bf16.msra.mxu0 0
        %8568 = vmatprep.subr.bf16.mxu0 0
        %8569 = vmatpush1.bf16.msra.mxu0 0
        %8570 = vmatprep.subr.bf16.mxu0 0
        %8571 = vmatpush1.bf16.msra.mxu0 0
        %8572 = vmatprep.subr.bf16.mxu0 0
        %8573 = vmatpush1.bf16.msra.mxu0 0
        %8574 = vmatprep.subr.bf16.mxu0 0
        %8575 = vmatpush1.bf16.msra.mxu0 0
        %8576 = vmatprep.subr.bf16.mxu0 0
        %8577 = vmatpush1.bf16.msra.mxu0 0
        %8578 = vmatprep.subr.bf16.mxu0 0
        %8579 = vmatpush1.bf16.msra.mxu0 0
        %8580 = vmatprep.subr.bf16.mxu0 0
        %8581 = vmatpush1.bf16.msra.mxu0 0
        %8582 = vmatprep.subr.bf16.mxu0 0
        %8583 = vmatpush1.bf16.msra.mxu0 0
        %8584 = vmatprep.subr.bf16.mxu0 0
        %8585 = vmatpush1.bf16.msra.mxu0 0
        %8586 = vmatprep.subr.bf16.mxu0 0
        %8587 = vmatpush1.bf16.msra.mxu0 0
        %8588 = vmatprep.subr.bf16.mxu0 0
        %8589 = vmatpush1.bf16.msra.mxu0 0
        %8590 = vmatprep.mubr.bf16.mxu0 0
        %8591 = vmatmul.mubr.bf16.gmra.mrb[0].mxu0 %v8556
        %v8592 = vpop.f32.mrb[0].mxu0
        %v8593 = vadd.f32 0.0, %v8592
        %v8594 = vpop.f32.mrb[0].mxu0
        %v8595 = vpop.f32.mrb[0].mxu0
        %v8596 = vpop.f32.mrb[0].mxu0
        %8597 = vdwg.mxu0
        %v8598 = vadd.f32 %v8532, %v8593
        %s8599 = scalar_lea.vmem %s10, 80
        %v8600 = vld [vmem:[%s8599] sm:$0xf]
        %v8601 = vld [vmem:[%s8599 + $0x4] sm:$0xf]
        %v8602 = vld [vmem:[%s8599 + $0x8] sm:$0xf]
        %v8603 = vld [vmem:[%s8599 + $0xc] sm:$0xf]
        %v8605 = vshrl.u32 %v8541, 16
        %v8607 = vrot.slane %v8605, 2
        %v8612 = vunpack.c.l.b16 %v8600
        %v8613 = vunpack.c.l.b16 %v8601
        %v8614 = vunpack.c.l.b16 %v8602
        %v8615 = vunpack.c.l.b16 %v8603
        %v8616 = vpack.c.b16 %v8613, %v8612
        %v8617 = vpack.c.b16 %v8615, %v8614
        %v8621 = vsel %vm8303, %v8607, 0
        %8623 = vmatprep.subr.bf16.mxu0 0
        %8624 = vmatpush1.bf16.msra.mxu0 %v8616
        %8625 = vmatprep.subr.bf16.mxu0 0
        %8626 = vmatpush1.bf16.msra.mxu0 %v8617
        %8627 = vmatprep.subr.bf16.mxu0 0
        %8628 = vmatpush1.bf16.msra.mxu0 0
        %8629 = vmatprep.subr.bf16.mxu0 0
        %8630 = vmatpush1.bf16.msra.mxu0 0
        %8631 = vmatprep.subr.bf16.mxu0 0
        %8632 = vmatpush1.bf16.msra.mxu0 0
        %8633 = vmatprep.subr.bf16.mxu0 0
        %8634 = vmatpush1.bf16.msra.mxu0 0
        %8635 = vmatprep.subr.bf16.mxu0 0
        %8636 = vmatpush1.bf16.msra.mxu0 0
        %8637 = vmatprep.subr.bf16.mxu0 0
        %8638 = vmatpush1.bf16.msra.mxu0 0
        %8639 = vmatprep.subr.bf16.mxu0 0
        %8640 = vmatpush1.bf16.msra.mxu0 0
        %8641 = vmatprep.subr.bf16.mxu0 0
        %8642 = vmatpush1.bf16.msra.mxu0 0
        %8643 = vmatprep.subr.bf16.mxu0 0
        %8644 = vmatpush1.bf16.msra.mxu0 0
        %8645 = vmatprep.subr.bf16.mxu0 0
        %8646 = vmatpush1.bf16.msra.mxu0 0
        %8647 = vmatprep.subr.bf16.mxu0 0
        %8648 = vmatpush1.bf16.msra.mxu0 0
        %8649 = vmatprep.subr.bf16.mxu0 0
        %8650 = vmatpush1.bf16.msra.mxu0 0
        %8651 = vmatprep.subr.bf16.mxu0 0
        %8652 = vmatpush1.bf16.msra.mxu0 0
        %8653 = vmatprep.subr.bf16.mxu0 0
        %8654 = vmatpush1.bf16.msra.mxu0 0
        %8655 = vmatprep.mubr.bf16.mxu0 0
        %8656 = vmatmul.mubr.bf16.gmra.mrb[0].mxu0 %v8621
        %v8657 = vpop.f32.mrb[0].mxu0
        %v8658 = vadd.f32 0.0, %v8657
        %v8659 = vpop.f32.mrb[0].mxu0
        %v8660 = vpop.f32.mrb[0].mxu0
        %v8661 = vpop.f32.mrb[0].mxu0
        %8662 = vdwg.mxu0
        %v8663 = vadd.f32 %v8598, %v8658
        %v8664 = vld [vmem:[#allocation4] sm:$0x8]
        %s8665 = scalar_lea.vmem %s10, 96
        %v8666 = vld [vmem:[%s8665] sm:$0xf]
        %v8667 = vld [vmem:[%s8665 + $0x4] sm:$0xf]
        %v8668 = vld [vmem:[%s8665 + $0x8] sm:$0xf]
        %v8669 = vld [vmem:[%s8665 + $0xc] sm:$0xf]
        %v8671 = vunpack.c.l.b16 %v8664
        %v8672 = vpack.c.b16 %v8671, %v8671
        %v8673 = vrot.slane %v8672, 3
        %v8678 = vunpack.c.l.b16 %v8666
        %v8679 = vunpack.c.l.b16 %v8667
        %v8680 = vunpack.c.l.b16 %v8668
        %v8681 = vunpack.c.l.b16 %v8669
        %v8682 = vpack.c.b16 %v8679, %v8678
        %v8683 = vpack.c.b16 %v8681, %v8680
        %v8687 = vsel %vm8303, %v8673, 0
        %8689 = vmatprep.subr.bf16.mxu0 0
        %8690 = vmatpush1.bf16.msra.mxu0 %v8682
        %8691 = vmatprep.subr.bf16.mxu0 0
        %8692 = vmatpush1.bf16.msra.mxu0 %v8683
        %8693 = vmatprep.subr.bf16.mxu0 0
        %8694 = vmatpush1.bf16.msra.mxu0 0
        %8695 = vmatprep.subr.bf16.mxu0 0
        %8696 = vmatpush1.bf16.msra.mxu0 0
        %8697 = vmatprep.subr.bf16.mxu0 0
        %8698 = vmatpush1.bf16.msra.mxu0 0
        %8699 = vmatprep.subr.bf16.mxu0 0
        %8700 = vmatpush1.bf16.msra.mxu0 0
        %8701 = vmatprep.subr.bf16.mxu0 0
        %8702 = vmatpush1.bf16.msra.mxu0 0
        %8703 = vmatprep.subr.bf16.mxu0 0
        %8704 = vmatpush1.bf16.msra.mxu0 0
        %8705 = vmatprep.subr.bf16.mxu0 0
        %8706 = vmatpush1.bf16.msra.mxu0 0
        %8707 = vmatprep.subr.bf16.mxu0 0
        %8708 = vmatpush1.bf16.msra.mxu0 0
        %8709 = vmatprep.subr.bf16.mxu0 0
        %8710 = vmatpush1.bf16.msra.mxu0 0
        %8711 = vmatprep.subr.bf16.mxu0 0
        %8712 = vmatpush1.bf16.msra.mxu0 0
        %8713 = vmatprep.subr.bf16.mxu0 0
        %8714 = vmatpush1.bf16.msra.mxu0 0
        %8715 = vmatprep.subr.bf16.mxu0 0
        %8716 = vmatpush1.bf16.msra.mxu0 0
        %8717 = vmatprep.subr.bf16.mxu0 0
        %8718 = vmatpush1.bf16.msra.mxu0 0
        %8719 = vmatprep.subr.bf16.mxu0 0
        %8720 = vmatpush1.bf16.msra.mxu0 0
        %8721 = vmatprep.mubr.bf16.mxu0 0
        %8722 = vmatmul.mubr.bf16.gmra.mrb[0].mxu0 %v8687
        %v8723 = vpop.f32.mrb[0].mxu0
        %v8724 = vadd.f32 0.0, %v8723
        %v8725 = vpop.f32.mrb[0].mxu0
        %v8726 = vpop.f32.mrb[0].mxu0
        %v8727 = vpop.f32.mrb[0].mxu0
        %8728 = vdwg.mxu0
        %v8729 = vadd.f32 %v8663, %v8724
        %s8730 = scalar_lea.vmem [#allocation4], 4
        %v8731 = vld [vmem:[%s8730] sm:$0x1]
        %s8732 = scalar_lea.vmem %s10, 112
        %v8733 = vld [vmem:[%s8732] sm:$0xf]
        %v8734 = vld [vmem:[%s8732 + $0x4] sm:$0xf]
        %v8735 = vld [vmem:[%s8732 + $0x8] sm:$0xf]
        %v8736 = vld [vmem:[%s8732 + $0xc] sm:$0xf]
        %v8741 = vunpack.c.l.b16 %v8733
        %v8742 = vunpack.c.l.b16 %v8734
        %v8743 = vunpack.c.l.b16 %v8735
        %v8744 = vunpack.c.l.b16 %v8736
        %v8745 = vpack.c.b16 %v8742, %v8741
        %v8746 = vpack.c.b16 %v8744, %v8743
        %v8750 = vsel %vm8303, %v8731, 0
        %8752 = vmatprep.subr.bf16.mxu0 0
        %8753 = vmatpush1.bf16.msra.mxu0 %v8745
        %8754 = vmatprep.subr.bf16.mxu0 0
        %8755 = vmatpush1.bf16.msra.mxu0 %v8746
        %8756 = vmatprep.subr.bf16.mxu0 0
        %8757 = vmatpush1.bf16.msra.mxu0 0
        %8758 = vmatprep.subr.bf16.mxu0 0
        %8759 = vmatpush1.bf16.msra.mxu0 0
        %8760 = vmatprep.subr.bf16.mxu0 0
        %8761 = vmatpush1.bf16.msra.mxu0 0
        %8762 = vmatprep.subr.bf16.mxu0 0
        %8763 = vmatpush1.bf16.msra.mxu0 0
        %8764 = vmatprep.subr.bf16.mxu0 0
        %8765 = vmatpush1.bf16.msra.mxu0 0
        %8766 = vmatprep.subr.bf16.mxu0 0
        %8767 = vmatpush1.bf16.msra.mxu0 0
        %8768 = vmatprep.subr.bf16.mxu0 0
        %8769 = vmatpush1.bf16.msra.mxu0 0
        %8770 = vmatprep.subr.bf16.mxu0 0
        %8771 = vmatpush1.bf16.msra.mxu0 0
        %8772 = vmatprep.subr.bf16.mxu0 0
        %8773 = vmatpush1.bf16.msra.mxu0 0
        %8774 = vmatprep.subr.bf16.mxu0 0
        %8775 = vmatpush1.bf16.msra.mxu0 0
        %8776 = vmatprep.subr.bf16.mxu0 0
        %8777 = vmatpush1.bf16.msra.mxu0 0
        %8778 = vmatprep.subr.bf16.mxu0 0
        %8779 = vmatpush1.bf16.msra.mxu0 0
        %8780 = vmatprep.subr.bf16.mxu0 0
        %8781 = vmatpush1.bf16.msra.mxu0 0
        %8782 = vmatprep.subr.bf16.mxu0 0
        %8783 = vmatpush1.bf16.msra.mxu0 0
        %8784 = vmatprep.mubr.bf16.mxu0 0
        %8785 = vmatmul.mubr.bf16.gmra.mrb[0].mxu0 %v8750
        %v8786 = vpop.f32.mrb[0].mxu0
        %v8787 = vadd.f32 0.0, %v8786
        %v8788 = vpop.f32.mrb[0].mxu0
        %v8789 = vpop.f32.mrb[0].mxu0
        %v8790 = vpop.f32.mrb[0].mxu0
        %8791 = vdwg.mxu0
        %v8792 = vadd.f32 %v8729, %v8787
        %s8793 = scalar_lea.vmem %s10, 128
        %v8794 = vld [vmem:[%s8793] sm:$0xf]
        %v8795 = vld [vmem:[%s8793 + $0x4] sm:$0xf]
        %v8796 = vld [vmem:[%s8793 + $0x8] sm:$0xf]
        %v8797 = vld [vmem:[%s8793 + $0xc] sm:$0xf]
        %v8799 = vunpack.c.l.b16 %v8731
        %v8800 = vpack.c.b16 %v8799, %v8799
        %v8802 = vshrl.u32 %v8800, 16
        %v8808 = vunpack.c.l.b16 %v8794
        %v8809 = vunpack.c.l.b16 %v8795
        %v8810 = vunpack.c.l.b16 %v8796
        %v8811 = vunpack.c.l.b16 %v8797
        %v8812 = vpack.c.b16 %v8809, %v8808
        %v8813 = vpack.c.b16 %v8811, %v8810
        %v8817 = vsel %vm8303, %v8802, 0
        %8819 = vmatprep.subr.bf16.mxu0 0
        %8820 = vmatpush1.bf16.msra.mxu0 %v8812
        %8821 = vmatprep.subr.bf16.mxu0 0
        %8822 = vmatpush1.bf16.msra.mxu0 %v8813
        %8823 = vmatprep.subr.bf16.mxu0 0
        %8824 = vmatpush1.bf16.msra.mxu0 0
        %8825 = vmatprep.subr.bf16.mxu0 0
        %8826 = vmatpush1.bf16.msra.mxu0 0
        %8827 = vmatprep.subr.bf16.mxu0 0
        %8828 = vmatpush1.bf16.msra.mxu0 0
        %8829 = vmatprep.subr.bf16.mxu0 0
        %8830 = vmatpush1.bf16.msra.mxu0 0
        %8831 = vmatprep.subr.bf16.mxu0 0
        %8832 = vmatpush1.bf16.msra.mxu0 0
        %8833 = vmatprep.subr.bf16.mxu0 0
        %8834 = vmatpush1.bf16.msra.mxu0 0
        %8835 = vmatprep.subr.bf16.mxu0 0
        %8836 = vmatpush1.bf16.msra.mxu0 0
        %8837 = vmatprep.subr.bf16.mxu0 0
        %8838 = vmatpush1.bf16.msra.mxu0 0
        %8839 = vmatprep.subr.bf16.mxu0 0
        %8840 = vmatpush1.bf16.msra.mxu0 0
        %8841 = vmatprep.subr.bf16.mxu0 0
        %8842 = vmatpush1.bf16.msra.mxu0 0
        %8843 = vmatprep.subr.bf16.mxu0 0
        %8844 = vmatpush1.bf16.msra.mxu0 0
        %8845 = vmatprep.subr.bf16.mxu0 0
        %8846 = vmatpush1.bf16.msra.mxu0 0
        %8847 = vmatprep.subr.bf16.mxu0 0
        %8848 = vmatpush1.bf16.msra.mxu0 0
        %8849 = vmatprep.subr.bf16.mxu0 0
        %8850 = vmatpush1.bf16.msra.mxu0 0
        %8851 = vmatprep.mubr.bf16.mxu0 0
        %8852 = vmatmul.mubr.bf16.gmra.mrb[0].mxu0 %v8817
        %v8853 = vpop.f32.mrb[0].mxu0
        %v8854 = vadd.f32 0.0, %v8853
        %v8855 = vpop.f32.mrb[0].mxu0
        %v8856 = vpop.f32.mrb[0].mxu0
        %v8857 = vpop.f32.mrb[0].mxu0
        %8858 = vdwg.mxu0
        %v8859 = vadd.f32 %v8792, %v8854
        %v8860 = vld [vmem:[%s8730] sm:$0x2]
        %s8861 = scalar_lea.vmem %s10, 144
        %v8862 = vld [vmem:[%s8861] sm:$0xf]
        %v8863 = vld [vmem:[%s8861 + $0x4] sm:$0xf]
        %v8864 = vld [vmem:[%s8861 + $0x8] sm:$0xf]
        %v8865 = vld [vmem:[%s8861 + $0xc] sm:$0xf]
        %v8867 = vunpack.c.l.b16 %v8860
        %v8868 = vpack.c.b16 %v8867, %v8867
        %v8869 = vrot.slane %v8868, 1
        %v8874 = vunpack.c.l.b16 %v8862
        %v8875 = vunpack.c.l.b16 %v8863
        %v8876 = vunpack.c.l.b16 %v8864
        %v8877 = vunpack.c.l.b16 %v8865
        %v8878 = vpack.c.b16 %v8875, %v8874
        %v8879 = vpack.c.b16 %v8877, %v8876
        %v8883 = vsel %vm8303, %v8869, 0
        %8885 = vmatprep.subr.bf16.mxu0 0
        %8886 = vmatpush1.bf16.msra.mxu0 %v8878
        %8887 = vmatprep.subr.bf16.mxu0 0
        %8888 = vmatpush1.bf16.msra.mxu0 %v8879
        %8889 = vmatprep.subr.bf16.mxu0 0
        %8890 = vmatpush1.bf16.msra.mxu0 0
        %8891 = vmatprep.subr.bf16.mxu0 0
        %8892 = vmatpush1.bf16.msra.mxu0 0
        %8893 = vmatprep.subr.bf16.mxu0 0
        %8894 = vmatpush1.bf16.msra.mxu0 0
        %8895 = vmatprep.subr.bf16.mxu0 0
        %8896 = vmatpush1.bf16.msra.mxu0 0
        %8897 = vmatprep.subr.bf16.mxu0 0
        %8898 = vmatpush1.bf16.msra.mxu0 0
        %8899 = vmatprep.subr.bf16.mxu0 0
        %8900 = vmatpush1.bf16.msra.mxu0 0
        %8901 = vmatprep.subr.bf16.mxu0 0
        %8902 = vmatpush1.bf16.msra.mxu0 0
        %8903 = vmatprep.subr.bf16.mxu0 0
        %8904 = vmatpush1.bf16.msra.mxu0 0
        %8905 = vmatprep.subr.bf16.mxu0 0
        %8906 = vmatpush1.bf16.msra.mxu0 0
        %8907 = vmatprep.subr.bf16.mxu0 0
        %8908 = vmatpush1.bf16.msra.mxu0 0
        %8909 = vmatprep.subr.bf16.mxu0 0
        %8910 = vmatpush1.bf16.msra.mxu0 0
        %8911 = vmatprep.subr.bf16.mxu0 0
        %8912 = vmatpush1.bf16.msra.mxu0 0
        %8913 = vmatprep.subr.bf16.mxu0 0
        %8914 = vmatpush1.bf16.msra.mxu0 0
        %8915 = vmatprep.subr.bf16.mxu0 0
        %8916 = vmatpush1.bf16.msra.mxu0 0
        %8917 = vmatprep.mubr.bf16.mxu0 0
        %8918 = vmatmul.mubr.bf16.gmra.mrb[0].mxu0 %v8883
        %v8919 = vpop.f32.mrb[0].mxu0
        %v8920 = vadd.f32 0.0, %v8919
        %v8921 = vpop.f32.mrb[0].mxu0
        %v8922 = vpop.f32.mrb[0].mxu0
        %v8923 = vpop.f32.mrb[0].mxu0
        %8924 = vdwg.mxu0
        %v8925 = vadd.f32 %v8859, %v8920
        %s8926 = scalar_lea.vmem %s10, 160
        %v8927 = vld [vmem:[%s8926] sm:$0xf]
        %v8928 = vld [vmem:[%s8926 + $0x4] sm:$0xf]
        %v8929 = vld [vmem:[%s8926 + $0x8] sm:$0xf]
        %v8930 = vld [vmem:[%s8926 + $0xc] sm:$0xf]
        %v8932 = vshrl.u32 %v8868, 16
        %v8934 = vrot.slane %v8932, 1
        %v8939 = vunpack.c.l.b16 %v8927
        %v8940 = vunpack.c.l.b16 %v8928
        %v8941 = vunpack.c.l.b16 %v8929
        %v8942 = vunpack.c.l.b16 %v8930
        %v8943 = vpack.c.b16 %v8940, %v8939
        %v8944 = vpack.c.b16 %v8942, %v8941
        %v8948 = vsel %vm8303, %v8934, 0
        %8950 = vmatprep.subr.bf16.mxu0 0
        %8951 = vmatpush1.bf16.msra.mxu0 %v8943
        %8952 = vmatprep.subr.bf16.mxu0 0
        %8953 = vmatpush1.bf16.msra.mxu0 %v8944
        %8954 = vmatprep.subr.bf16.mxu0 0
        %8955 = vmatpush1.bf16.msra.mxu0 0
        %8956 = vmatprep.subr.bf16.mxu0 0
        %8957 = vmatpush1.bf16.msra.mxu0 0
        %8958 = vmatprep.subr.bf16.mxu0 0
        %8959 = vmatpush1.bf16.msra.mxu0 0
        %8960 = vmatprep.subr.bf16.mxu0 0
        %8961 = vmatpush1.bf16.msra.mxu0 0
        %8962 = vmatprep.subr.bf16.mxu0 0
        %8963 = vmatpush1.bf16.msra.mxu0 0
        %8964 = vmatprep.subr.bf16.mxu0 0
        %8965 = vmatpush1.bf16.msra.mxu0 0
        %8966 = vmatprep.subr.bf16.mxu0 0
        %8967 = vmatpush1.bf16.msra.mxu0 0
        %8968 = vmatprep.subr.bf16.mxu0 0
        %8969 = vmatpush1.bf16.msra.mxu0 0
        %8970 = vmatprep.subr.bf16.mxu0 0
        %8971 = vmatpush1.bf16.msra.mxu0 0
        %8972 = vmatprep.subr.bf16.mxu0 0
        %8973 = vmatpush1.bf16.msra.mxu0 0
        %8974 = vmatprep.subr.bf16.mxu0 0
        %8975 = vmatpush1.bf16.msra.mxu0 0
        %8976 = vmatprep.subr.bf16.mxu0 0
        %8977 = vmatpush1.bf16.msra.mxu0 0
        %8978 = vmatprep.subr.bf16.mxu0 0
        %8979 = vmatpush1.bf16.msra.mxu0 0
        %8980 = vmatprep.subr.bf16.mxu0 0
        %8981 = vmatpush1.bf16.msra.mxu0 0
        %8982 = vmatprep.mubr.bf16.mxu0 0
        %8983 = vmatmul.mubr.bf16.gmra.mrb[0].mxu0 %v8948
        %v8984 = vpop.f32.mrb[0].mxu0
        %v8985 = vadd.f32 0.0, %v8984
        %v8986 = vpop.f32.mrb[0].mxu0
        %v8987 = vpop.f32.mrb[0].mxu0
        %v8988 = vpop.f32.mrb[0].mxu0
        %8989 = vdwg.mxu0
        %v8990 = vadd.f32 %v8925, %v8985
        %v8991 = vld [vmem:[%s8730] sm:$0x4]
        %s8992 = scalar_lea.vmem %s10, 176
        %v8993 = vld [vmem:[%s8992] sm:$0xf]
        %v8994 = vld [vmem:[%s8992 + $0x4] sm:$0xf]
        %v8995 = vld [vmem:[%s8992 + $0x8] sm:$0xf]
        %v8996 = vld [vmem:[%s8992 + $0xc] sm:$0xf]
        %v8998 = vunpack.c.l.b16 %v8991
        %v8999 = vpack.c.b16 %v8998, %v8998
        %v9000 = vrot.slane %v8999, 2
        %v9005 = vunpack.c.l.b16 %v8993
        %v9006 = vunpack.c.l.b16 %v8994
        %v9007 = vunpack.c.l.b16 %v8995
        %v9008 = vunpack.c.l.b16 %v8996
        %v9009 = vpack.c.b16 %v9006, %v9005
        %v9010 = vpack.c.b16 %v9008, %v9007
        %v9014 = vsel %vm8303, %v9000, 0
        %9016 = vmatprep.subr.bf16.mxu0 0
        %9017 = vmatpush1.bf16.msra.mxu0 %v9009
        %9018 = vmatprep.subr.bf16.mxu0 0
        %9019 = vmatpush1.bf16.msra.mxu0 %v9010
        %9020 = vmatprep.subr.bf16.mxu0 0
        %9021 = vmatpush1.bf16.msra.mxu0 0
        %9022 = vmatprep.subr.bf16.mxu0 0
        %9023 = vmatpush1.bf16.msra.mxu0 0
        %9024 = vmatprep.subr.bf16.mxu0 0
        %9025 = vmatpush1.bf16.msra.mxu0 0
        %9026 = vmatprep.subr.bf16.mxu0 0
        %9027 = vmatpush1.bf16.msra.mxu0 0
        %9028 = vmatprep.subr.bf16.mxu0 0
        %9029 = vmatpush1.bf16.msra.mxu0 0
        %9030 = vmatprep.subr.bf16.mxu0 0
        %9031 = vmatpush1.bf16.msra.mxu0 0
        %9032 = vmatprep.subr.bf16.mxu0 0
        %9033 = vmatpush1.bf16.msra.mxu0 0
        %9034 = vmatprep.subr.bf16.mxu0 0
        %9035 = vmatpush1.bf16.msra.mxu0 0
        %9036 = vmatprep.subr.bf16.mxu0 0
        %9037 = vmatpush1.bf16.msra.mxu0 0
        %9038 = vmatprep.subr.bf16.mxu0 0
        %9039 = vmatpush1.bf16.msra.mxu0 0
        %9040 = vmatprep.subr.bf16.mxu0 0
        %9041 = vmatpush1.bf16.msra.mxu0 0
        %9042 = vmatprep.subr.bf16.mxu0 0
        %9043 = vmatpush1.bf16.msra.mxu0 0
        %9044 = vmatprep.subr.bf16.mxu0 0
        %9045 = vmatpush1.bf16.msra.mxu0 0
        %9046 = vmatprep.subr.bf16.mxu0 0
        %9047 = vmatpush1.bf16.msra.mxu0 0
        %9048 = vmatprep.mubr.bf16.mxu0 0
        %9049 = vmatmul.mubr.bf16.gmra.mrb[0].mxu0 %v9014
        %v9050 = vpop.f32.mrb[0].mxu0
        %v9051 = vadd.f32 0.0, %v9050
        %v9052 = vpop.f32.mrb[0].mxu0
        %v9053 = vpop.f32.mrb[0].mxu0
        %v9054 = vpop.f32.mrb[0].mxu0
        %9055 = vdwg.mxu0
        %v9056 = vadd.f32 %v8990, %v9051
        %s9057 = scalar_lea.vmem %s10, 192
        %v9058 = vld [vmem:[%s9057] sm:$0xf]
        %v9059 = vld [vmem:[%s9057 + $0x4] sm:$0xf]
        %v9060 = vld [vmem:[%s9057 + $0x8] sm:$0xf]
        %v9061 = vld [vmem:[%s9057 + $0xc] sm:$0xf]
        %v9063 = vshrl.u32 %v8999, 16
        %v9065 = vrot.slane %v9063, 2
        %v9070 = vunpack.c.l.b16 %v9058
        %v9071 = vunpack.c.l.b16 %v9059
        %v9072 = vunpack.c.l.b16 %v9060
        %v9073 = vunpack.c.l.b16 %v9061
        %v9074 = vpack.c.b16 %v9071, %v9070
        %v9075 = vpack.c.b16 %v9073, %v9072
        %v9079 = vsel %vm8303, %v9065, 0
        %9081 = vmatprep.subr.bf16.mxu0 0
        %9082 = vmatpush1.bf16.msra.mxu0 %v9074
        %9083 = vmatprep.subr.bf16.mxu0 0
        %9084 = vmatpush1.bf16.msra.mxu0 %v9075
        %9085 = vmatprep.subr.bf16.mxu0 0
        %9086 = vmatpush1.bf16.msra.mxu0 0
        %9087 = vmatprep.subr.bf16.mxu0 0
        %9088 = vmatpush1.bf16.msra.mxu0 0
        %9089 = vmatprep.subr.bf16.mxu0 0
        %9090 = vmatpush1.bf16.msra.mxu0 0
        %9091 = vmatprep.subr.bf16.mxu0 0
        %9092 = vmatpush1.bf16.msra.mxu0 0
        %9093 = vmatprep.subr.bf16.mxu0 0
        %9094 = vmatpush1.bf16.msra.mxu0 0
        %9095 = vmatprep.subr.bf16.mxu0 0
        %9096 = vmatpush1.bf16.msra.mxu0 0
        %9097 = vmatprep.subr.bf16.mxu0 0
        %9098 = vmatpush1.bf16.msra.mxu0 0
        %9099 = vmatprep.subr.bf16.mxu0 0
        %9100 = vmatpush1.bf16.msra.mxu0 0
        %9101 = vmatprep.subr.bf16.mxu0 0
        %9102 = vmatpush1.bf16.msra.mxu0 0
        %9103 = vmatprep.subr.bf16.mxu0 0
        %9104 = vmatpush1.bf16.msra.mxu0 0
        %9105 = vmatprep.subr.bf16.mxu0 0
        %9106 = vmatpush1.bf16.msra.mxu0 0
        %9107 = vmatprep.subr.bf16.mxu0 0
        %9108 = vmatpush1.bf16.msra.mxu0 0
        %9109 = vmatprep.subr.bf16.mxu0 0
        %9110 = vmatpush1.bf16.msra.mxu0 0
        %9111 = vmatprep.subr.bf16.mxu0 0
        %9112 = vmatpush1.bf16.msra.mxu0 0
        %9113 = vmatprep.mubr.bf16.mxu0 0
        %9114 = vmatmul.mubr.bf16.gmra.mrb[0].mxu0 %v9079
        %v9115 = vpop.f32.mrb[0].mxu0
        %v9116 = vadd.f32 0.0, %v9115
        %v9117 = vpop.f32.mrb[0].mxu0
        %v9118 = vpop.f32.mrb[0].mxu0
        %v9119 = vpop.f32.mrb[0].mxu0
        %9120 = vdwg.mxu0
        %v9121 = vadd.f32 %v9056, %v9116
        %v9122 = vld [vmem:[%s8730] sm:$0x8]
        %s9123 = scalar_lea.vmem %s10, 208
        %v9124 = vld [vmem:[%s9123] sm:$0xf]
        %v9125 = vld [vmem:[%s9123 + $0x4] sm:$0xf]
        %v9126 = vld [vmem:[%s9123 + $0x8] sm:$0xf]
        %v9127 = vld [vmem:[%s9123 + $0xc] sm:$0xf]
        %v9129 = vunpack.c.l.b16 %v9122
        %v9130 = vpack.c.b16 %v9129, %v9129
        %v9131 = vrot.slane %v9130, 3
        %v9136 = vunpack.c.l.b16 %v9124
        %v9137 = vunpack.c.l.b16 %v9125
        %v9138 = vunpack.c.l.b16 %v9126
        %v9139 = vunpack.c.l.b16 %v9127
        %v9140 = vpack.c.b16 %v9137, %v9136
        %v9141 = vpack.c.b16 %v9139, %v9138
        %v9145 = vsel %vm8303, %v9131, 0
        %9147 = vmatprep.subr.bf16.mxu0 0
        %9148 = vmatpush1.bf16.msra.mxu0 %v9140
        %9149 = vmatprep.subr.bf16.mxu0 0
        %9150 = vmatpush1.bf16.msra.mxu0 %v9141
        %9151 = vmatprep.subr.bf16.mxu0 0
        %9152 = vmatpush1.bf16.msra.mxu0 0
        %9153 = vmatprep.subr.bf16.mxu0 0
        %9154 = vmatpush1.bf16.msra.mxu0 0
        %9155 = vmatprep.subr.bf16.mxu0 0
        %9156 = vmatpush1.bf16.msra.mxu0 0
        %9157 = vmatprep.subr.bf16.mxu0 0
        %9158 = vmatpush1.bf16.msra.mxu0 0
        %9159 = vmatprep.subr.bf16.mxu0 0
        %9160 = vmatpush1.bf16.msra.mxu0 0
        %9161 = vmatprep.subr.bf16.mxu0 0
        %9162 = vmatpush1.bf16.msra.mxu0 0
        %9163 = vmatprep.subr.bf16.mxu0 0
        %9164 = vmatpush1.bf16.msra.mxu0 0
        %9165 = vmatprep.subr.bf16.mxu0 0
        %9166 = vmatpush1.bf16.msra.mxu0 0
        %9167 = vmatprep.subr.bf16.mxu0 0
        %9168 = vmatpush1.bf16.msra.mxu0 0
        %9169 = vmatprep.subr.bf16.mxu0 0
        %9170 = vmatpush1.bf16.msra.mxu0 0
        %9171 = vmatprep.subr.bf16.mxu0 0
        %9172 = vmatpush1.bf16.msra.mxu0 0
        %9173 = vmatprep.subr.bf16.mxu0 0
        %9174 = vmatpush1.bf16.msra.mxu0 0
        %9175 = vmatprep.subr.bf16.mxu0 0
        %9176 = vmatpush1.bf16.msra.mxu0 0
        %9177 = vmatprep.subr.bf16.mxu0 0
        %9178 = vmatpush1.bf16.msra.mxu0 0
        %9179 = vmatprep.mubr.bf16.mxu0 0
        %9180 = vmatmul.mubr.bf16.gmra.mrb[0].mxu0 %v9145
        %v9181 = vpop.f32.mrb[0].mxu0
        %v9182 = vadd.f32 0.0, %v9181
        %v9183 = vpop.f32.mrb[0].mxu0
        %v9184 = vpop.f32.mrb[0].mxu0
        %v9185 = vpop.f32.mrb[0].mxu0
        %9186 = vdwg.mxu0
        %v9187 = vadd.f32 %v9121, %v9182
        %v9188 = vld [vmem:[%s11] sm:$0x1]
        %v9189 = vadd.f32 %v9187, %v9188
        %vm9190 = vcmask 8192
        %9191 = vst.msk [vmem:[%s405] sm:$0x1] %vm9190, %v9189
        %s9192 = sand.u32 %s291, 1
        %s9193 = scalar_lea.sflag [#allocation6], %s9192
        %s9194 = sand.u32 %s291, 1
        %s9195 = scalar_lea.vmem [#allocation5], %s9194
        // Predicated region
        $region90: #{dqn_forward.1} parent=67 // pred_check
          %p9196 = pneg %p301
        $region91: #{dqn_forward.1} parent=67 // pred_check_branch
          %9198 = sbr.rel (%p9196) target = $region93
        $region92: #{dqn_forward.1} parent=67 // pred_region
          %s9200 = ssub.s32 16, 16
          %9201 = vsyncadd %s9193, %s9200
          %s9202 = smul.addr %s26, 16
          %s9203 = scalar_lea.hbm %s12, %s9202
          %s9205 = sshll.u32 %s9195, 4
          %s9206 = int_to_ptr.vmem [resolvable:$true] %s9205
          %9208 = dma.vmem_to_hbm [thread:$0]  %s9206, 16, %s9203, %s9193
        $region93: #{dqn_forward.1} parent=67 // pred_fallthru
          _
      $region68: #{dqn_forward.1} parent=5 // pred_fallthru
        _
      %p9209 = scmp.le.s32.totalorder 2, %s21
      // Predicated region
      $region94: #{dqn_forward.1} parent=5 // pred_check
        %p9210 = pneg %p9209
      $region95: #{dqn_forward.1} parent=5 // pred_check_branch
        %9212 = sbr.rel (%p9210) target = $region97
      $region96: #{dqn_forward.1} parent=5 // pred_region
        %s9213 = ssub.s32 %s21, 2
        // Predicated region
        $region98: #{dqn_forward.1} parent=96 // pred_check
          %p9214 = pneg %p307
        $region99: #{dqn_forward.1} parent=96 // pred_check_branch
          %9216 = sbr.rel (%p9214) target = $region101
        $region100: #{dqn_forward.1} parent=96 // pred_region
          %s9217 = sand.u32 %s292, 1
          %s9218 = scalar_lea.sflag [#allocation6], %s9217
          %s9219 = sand.u32 %s292, 1
          %s9220 = scalar_lea.vmem [#allocation5], %s9219
          %9221 = dma.done %s9218, 16
        $region101: #{dqn_forward.1} parent=96 // pred_fallthru
          _
      $region97: #{dqn_forward.1} parent=5 // pred_fallthru
        _
    $region6: #{dqn_forward.1} parent=1 // loop_footer
      %s25 = sadd.s32 1, %s21
    $region7: #{dqn_forward.1} parent=1 // loop_footer_branch
      %20 = sbr.rel target = $region3
    $region8: #{dqn_forward.1} parent=1 // loop_exit
      _
    %9222 = vsyncpa [#allocation6], 1
    %s9223 = scalar_lea.sflag [#allocation6], 1
    %9224 = vsyncpa %s9223, 1

</llo_original>
